<compile_context>
chip_gen: v7x
topology: tpu7x:2x2x1
jax: 0.10.0
libtpu: 0.0.40
codegen_flags: <defaults>
</compile_context>

<pallas_src>
import jax
import jax.numpy as jnp
from jax.experimental import pallas as pl
from jax.experimental.pallas import tpu as pltpu


H = 256        # LSTM hidden size
C3 = 128       # conv3 output channels
L = 24         # sequence length implied by LSTMCell(3072, 256): 3072 = 128*24
LC = 8         # timesteps per streamed W_ih chunk (chunk = LC*128 = 1024 rows)
NK = L // LC   # grid steps along the streamed-weight (reduction) axis


def _detect_nsplit():
    # v7x exposes 2 TensorCores per chip; split gate columns across them.
    try:
        kind = jax.devices()[0].device_kind.lower()
    except Exception:
        kind = ""
    return 2 if "v7" in kind else 1


NSPLIT = _detect_nsplit()


# ----------------------------------------------------------------------------
# Fused kernel: conv1/2/3 (+LeakyReLU) -> LSTMCell gates -> actor head
# ----------------------------------------------------------------------------
def actor_fused_kernel(x_ref,                        # (L*BP, Cin) f32, row = l*BP + b
                       w1_ref, w2_ref, w3_ref,       # (3, Cin, 64), (3, 64, 64), (3, 64, 128)
                       bias_ref,                     # (1, 384) packed conv biases
                       blstm_ref,                    # (1, 4*HS) f32 (this core's slice)
                       wih_ref,                      # (LC*128, 4*HS) bf16 (streamed chunk)
                       whh_ref,                      # (H, 4*HS) f32
                       hx_ref, cx_ref,               # (B, H) f32, (B, HS) f32
                       wact_ref,                     # (HS, A) f32
                       out_ref, hxo_ref, cxo_ref,    # (1, B, A), (B, HS), (B, HS)
                       h3_s, gates_s):               # scratch: (L*BP, 128), (BP, 4*HS) f32
    k = pl.program_id(1)
    nk = pl.num_programs(1)
    BP = gates_s.shape[0]              # padded batch rows (multiple of 8)
    LBP = x_ref.shape[0]               # L * BP
    B = hxo_ref.shape[0]               # true batch size
    HS = cx_ref.shape[1]               # hidden slice handled by this core
    LCk = wih_ref.shape[0] // C3       # timesteps covered by this W_ih chunk

    # --- first chunk: conv stack (batch rows padded to a full sublane group,
    #     so every per-timestep slice below is (8,128)-tile aligned) ----------
    @pl.when(k == 0)
    def _init():
        def conv1d_lrelu(x, w_ref, b):
            # Shifting the whole l-major stack by BP rows moves every sequence
            # by exactly one timestep; the zero-filled rows land on the l==0 /
            # l==L-1 padding positions, so no boundary masks are needed.
            cin = x.shape[1]
            zpad = jnp.zeros((BP, cin), jnp.float32)
            xm1 = jnp.concatenate([zpad, x[:LBP - BP, :]], axis=0)   # t-1
            xp1 = jnp.concatenate([x[BP:, :], zpad], axis=0)         # t+1
            y = (jnp.dot(xm1, w_ref[0], preferred_element_type=jnp.float32)
                 + jnp.dot(x,   w_ref[1], preferred_element_type=jnp.float32)
                 + jnp.dot(xp1, w_ref[2], preferred_element_type=jnp.float32)
                 + b)
            return jnp.maximum(y, 0.1 * y)                           # LeakyReLU(0.1)

        h = conv1d_lrelu(x_ref[...], w1_ref, bias_ref[:, 0:64])
        h = conv1d_lrelu(h, w2_ref, bias_ref[:, 128:192])
        h = conv1d_lrelu(h, w3_ref, bias_ref[:, 256:384])
        h3_s[...] = h                                                # (L*BP, 128)
        gates_s[...] = jnp.zeros_like(gates_s)

    # --- every chunk: accumulate x @ W_ih for this chunk's timesteps --------
    # (bf16 weights stream through the MXU with f32 accumulation; the chunk's
    #  DMA for step k+1 overlaps this compute via the BlockSpec pipeline.)
    row0 = pl.multiple_of(k * (LCk * BP), 8)
    hh = h3_s[pl.ds(row0, LCk * BP), :]                              # (LC*BP, 128) f32
    acc = gates_s[...]
    for l in range(LCk):
        acc = acc + jnp.dot(hh[l * BP:(l + 1) * BP, :].astype(jnp.bfloat16),
                            wih_ref[l * C3:(l + 1) * C3, :],
                            preferred_element_type=jnp.float32)
    gates_s[...] = acc

    # --- last chunk: recurrent term, LSTM nonlinearity, actor head ----------
    @pl.when(k == nk - 1)
    def _finalize():
        g = (gates_s[...][:B, :]
             + jnp.dot(hx_ref[...], whh_ref[...],
                       preferred_element_type=jnp.float32)
             + blstm_ref[...])
        # PyTorch LSTMCell gate order: input, forget, cell(g), output
        i_g = jax.nn.sigmoid(g[:, 0:HS])
        f_g = jax.nn.sigmoid(g[:, HS:2 * HS])
        c_g = jnp.tanh(g[:, 2 * HS:3 * HS])
        o_g = jax.nn.sigmoid(g[:, 3 * HS:4 * HS])
        c_new = f_g * cx_ref[...] + i_g * c_g
        h_new = o_g * jnp.tanh(c_new)
        hxo_ref[...] = h_new
        cxo_ref[...] = c_new
        # Partial actor logits for this core's hidden slice; cross-core sum,
        # bias and softsign happen in the (tiny) wrapper epilogue.
        out_ref[0] = jnp.dot(h_new, wact_ref[...],
                             preferred_element_type=jnp.float32)


# ----------------------------------------------------------------------------
# Wrapper
# ----------------------------------------------------------------------------
def _build_actor_call(B, bp, Cin, A, nsplit):
    HS = H // nsplit
    return pl.pallas_call(
        actor_fused_kernel,
        grid=(nsplit, NK),
        in_specs=[
            pl.BlockSpec((L * bp, Cin), lambda s, k: (0, 0)),        # x (l-major)
            pl.BlockSpec((3, Cin, 64), lambda s, k: (0, 0, 0)),      # conv1 w
            pl.BlockSpec((3, 64, 64), lambda s, k: (0, 0, 0)),       # conv2 w
            pl.BlockSpec((3, 64, 128), lambda s, k: (0, 0, 0)),      # conv3 w
            pl.BlockSpec((1, 384), lambda s, k: (0, 0)),             # packed conv biases
            pl.BlockSpec((1, 4 * HS), lambda s, k: (0, s)),          # lstm bias slice
            pl.BlockSpec((LC * C3, 4 * HS), lambda s, k: (k, s)),    # W_ih chunk (streamed)
            pl.BlockSpec((H, 4 * HS), lambda s, k: (0, s)),          # W_hh slice
            pl.BlockSpec((B, H), lambda s, k: (0, 0)),               # hx
            pl.BlockSpec((B, HS), lambda s, k: (0, s)),              # cx slice
            pl.BlockSpec((HS, A), lambda s, k: (s, 0)),              # actor weight rows
        ],
        out_specs=(
            pl.BlockSpec((1, B, A), lambda s, k: (s, 0, 0)),         # partial logits
            pl.BlockSpec((B, HS), lambda s, k: (0, s)),              # new hx
            pl.BlockSpec((B, HS), lambda s, k: (0, s)),              # new cx
        ),
        out_shape=(
            jax.ShapeDtypeStruct((nsplit, B, A), jnp.float32),
            jax.ShapeDtypeStruct((B, H), jnp.float32),
            jax.ShapeDtypeStruct((B, H), jnp.float32),
        ),
        scratch_shapes=[
            pltpu.VMEM((L * bp, C3), jnp.float32),                   # conv3 output
            pltpu.VMEM((bp, 4 * H // nsplit), jnp.float32),          # gate accumulator
        ],
        compiler_params=pltpu.CompilerParams(
            dimension_semantics=("parallel", "arbitrary")),
    )


@jax.jit
def actor_forward(state_ncw, hx, cx, params):
    """state_ncw: (B, num_inputs, L) (PyTorch NCW).  Returns (action, hx, cx)."""
    B, Cin, Lx = state_ncw.shape
    assert Lx == L, "LSTMCell(3072, 256) implies a sequence length of 24"
    A = params["b_act"].shape[-1]
    bp = max(8, ((B + 7) // 8) * 8)          # batch rows padded to sublane groups

    # NCW -> l-major rows, batch zero-padded to bp: row l*bp + b = state[b, :, l].
    x_lb = jnp.transpose(state_ncw, (2, 0, 1))                       # (L, B, Cin)
    x_lb = jnp.pad(x_lb, ((0, 0), (0, bp - B), (0, 0))).reshape(Lx * bp, Cin)

    call = _build_actor_call(B, bp, Cin, A, NSPLIT)
    part, h_new, c_new = call(
        x_lb,
        params["w1"], params["w2"], params["w3"],
        params["bias_conv"], params["b_lstm"],
        params["wih"], params["whh"],
        hx, cx, params["wact_t"])

    # Tiny epilogue: cross-core partial-sum of the actor head, bias, softsign.
    logits = jnp.sum(part, axis=0) + params["b_act"]
    action = logits / (1.0 + jnp.abs(logits))
    return action, h_new, c_new


# ----------------------------------------------------------------------------
# Deterministic synthetic parameter init (mirrors the shapes in __init__)
# ----------------------------------------------------------------------------
def init_params(key, num_inputs, action_space, nsplit=NSPLIT):
    keys = jax.random.split(key, 6)
    # calculate_gain('leaky_relu') uses its default slope 0.01 even though the
    # forward uses LeakyReLU(0.1) -- intentional, mirrors the PyTorch reference.
    lrelu_gain = (2.0 / (1.0 + 0.01 ** 2)) ** 0.5

    def conv_w(k, cout, cin, ksz):
        fan_in = cin * ksz
        w = jax.random.normal(k, (cout, cin, ksz), jnp.float32) / jnp.sqrt(fan_in)
        return w * lrelu_gain

    def to_taps(w):   # (Cout, Cin, K) -> (K, Cin, Cout): per-tap matmul weights
        return jnp.transpose(w, (2, 1, 0))

    w1 = to_taps(conv_w(keys[0], 64, num_inputs, 3))
    w2 = to_taps(conv_w(keys[1], 64, 64, 3))
    w3 = to_taps(conv_w(keys[2], 128, 64, 3))
    # Packed conv biases, 128-lane-aligned slots: [0:64]=b1, [128:192]=b2,
    # [256:384]=b3.  All zero under the reference init.
    bias_conv = jnp.zeros((1, 384), jnp.float32)

    # LSTMCell(3072, 256): PyTorch U(-1/sqrt(H), 1/sqrt(H)); both biases .fill_(0).
    bound = 1.0 / jnp.sqrt(jnp.float32(H))
    w_ih = jax.random.uniform(keys[3], (4 * H, C3 * L), jnp.float32, -bound, bound)
    w_hh = jax.random.uniform(keys[4], (4 * H, H), jnp.float32, -bound, bound)

    # Row permutation: fold PyTorch's channel-major flatten (feature = c*L + l)
    # into the kernel's timestep-major row order (row = l*C3 + c).
    r = jnp.arange(C3 * L)
    row_perm = (r % C3) * L + r // C3
    # Column permutation: fold the per-core gate-column split.
    #   new col = s*(4*HS) + g*HS + u   <-   old col = g*H + s*HS + u
    hs = H // nsplit
    c = jnp.arange(4 * H)
    s_idx = c // (4 * hs)
    rem = c % (4 * hs)
    col_perm = (rem // hs) * H + s_idx * hs + (rem % hs)

    wih = w_ih.T[row_perm][:, col_perm].astype(jnp.bfloat16)    # (3072, 1024) bf16
    whh = w_hh.T[:, col_perm]                                   # (256, 1024)  f32
    b_lstm = (jnp.zeros((4 * H,), jnp.float32)                  # bias_ih + bias_hh
              + jnp.zeros((4 * H,), jnp.float32))[col_perm][None, :]

    # actor_linear: norm_col_init(std=0.01), bias zero.
    w_act = jax.random.normal(keys[5], (action_space, H), jnp.float32)
    w_act = w_act * 0.01 / jnp.sqrt(jnp.sum(w_act ** 2, axis=1, keepdims=True))
    b_act = jnp.zeros((1, action_space), jnp.float32)

    return {
        "w1": w1, "w2": w2, "w3": w3,
        "bias_conv": bias_conv,
        "wih": wih,           # (3072, 4H) bf16, flatten- & split-permuted
        "whh": whh,           # (256, 4H)  f32, split-permuted
        "b_lstm": b_lstm,     # (1, 4H)    f32
        "wact_t": w_act.T,    # (256, A)   f32
        "b_act": b_act,       # (1, A)     f32
    }


if __name__ == "__main__":
    B = 2
    NUM_INPUTS = 4
    ACTION_SPACE = 6

    key = jax.random.PRNGKey(0)
    k_state, k_params = jax.random.split(key)

    state = jax.random.normal(k_state, (B, NUM_INPUTS, L), jnp.float32)  # NCW
    hx = jnp.zeros((B, H), jnp.float32)
    cx = jnp.zeros((B, H), jnp.float32)
    params = init_params(k_params, NUM_INPUTS, ACTION_SPACE)

    action, hx_new, cx_new = actor_forward(state, hx, cx, params)
    jax.block_until_ready((action, hx_new, cx_new))

    assert action.shape == (B, ACTION_SPACE)
    assert hx_new.shape == (B, H) and cx_new.shape == (B, H)
    assert bool(jnp.all(jnp.isfinite(action)))
    assert bool(jnp.all(jnp.abs(action) < 1.0))   # softsign range
    print("KERNEL_OK")
</pallas_src>

<mosaic_0001>
module attributes {stable_mosaic.version = 11 : i64} {
  func.func @actor_fused_kernel(%arg0: i32, %arg1: i32, %arg2: memref<192x4xf32, #tpu.memory_space<vmem>>, %arg3: memref<3x4x64xf32, #tpu.memory_space<vmem>>, %arg4: memref<3x64x64xf32, #tpu.memory_space<vmem>>, %arg5: memref<3x64x128xf32, #tpu.memory_space<vmem>>, %arg6: memref<1x384xf32, #tpu.memory_space<vmem>>, %arg7: memref<1x1024xf32, #tpu.memory_space<vmem>>, %arg8: memref<1024x1024xbf16, #tpu.memory_space<vmem>>, %arg9: memref<256x1024xf32, #tpu.memory_space<vmem>>, %arg10: memref<2x256xf32, #tpu.memory_space<vmem>>, %arg11: memref<2x256xf32, #tpu.memory_space<vmem>>, %arg12: memref<256x6xf32, #tpu.memory_space<vmem>>, %arg13: memref<1x2x6xf32, #tpu.memory_space<vmem>>, %arg14: memref<2x256xf32, #tpu.memory_space<vmem>>, %arg15: memref<2x256xf32, #tpu.memory_space<vmem>>, %arg16: memref<192x128xf32, #tpu.memory_space<vmem>>, %arg17: memref<8x1024xf32, #tpu.memory_space<vmem>>) attributes {dimension_semantics = [#tpu.dimension_semantics<parallel>, #tpu.dimension_semantics<arbitrary>], iteration_bounds = array<i64: 1, 3>, scalar_prefetch = 0 : i64, scratch_operands = 2 : i64, tpu.core_type = #tpu.core_type<tc>, window_params = [{pipeline_mode = #tpu.pipeline_mode<synchronous>, transform_indices = @transform_0, window_bounds = array<i64: 192, 4>}, {pipeline_mode = #tpu.pipeline_mode<synchronous>, transform_indices = @transform_1, window_bounds = array<i64: 3, 4, 64>}, {pipeline_mode = #tpu.pipeline_mode<synchronous>, transform_indices = @transform_2, window_bounds = array<i64: 3, 64, 64>}, {pipeline_mode = #tpu.pipeline_mode<synchronous>, transform_indices = @transform_3, window_bounds = array<i64: 3, 64, 128>}, {pipeline_mode = #tpu.pipeline_mode<synchronous>, transform_indices = @transform_4, window_bounds = array<i64: 1, 384>}, {transform_indices = @transform_5, window_bounds = array<i64: 1, 1024>}, {transform_indices = @transform_6, window_bounds = array<i64: 1024, 1024>}, {transform_indices = @transform_7, window_bounds = array<i64: 256, 1024>}, {pipeline_mode = #tpu.pipeline_mode<synchronous>, transform_indices = @transform_8, window_bounds = array<i64: 2, 256>}, {transform_indices = @transform_9, window_bounds = array<i64: 2, 256>}, {transform_indices = @transform_10, window_bounds = array<i64: 256, 6>}, {transform_indices = @transform_11, window_bounds = array<i64: 1, 2, 6>}, {transform_indices = @transform_12, window_bounds = array<i64: 2, 256>}, {transform_indices = @transform_13, window_bounds = array<i64: 2, 256>}]} {
    %c0_i32 = arith.constant 0 : i32
    %0 = arith.cmpi eq, %arg1, %c0_i32 : i32
    %1 = arith.extui %0 : i1 to i32
    %c0_i32_0 = arith.constant 0 : i32
    %2 = arith.cmpi ne, %1, %c0_i32_0 : i32
    scf.if %2 {
      %c0_22 = arith.constant 0 : index
      %c0_23 = arith.constant 0 : index
      %52 = vector.load %arg2[%c0_22, %c0_23] : memref<192x4xf32, #tpu.memory_space<vmem>>, vector<192x4xf32>
      %c0_24 = arith.constant 0 : index
      %c0_25 = arith.constant 0 : index
      %53 = vector.load %arg6[%c0_24, %c0_25] : memref<1x384xf32, #tpu.memory_space<vmem>>, vector<1x64xf32>
      %cst_26 = arith.constant 0.000000e+00 : f32
      %54 = vector.broadcast %cst_26 : f32 to vector<8x4xf32>
      %55 = vector.extract_strided_slice %52 {offsets = [0, 0], sizes = [184, 4], strides = [1, 1]} : vector<192x4xf32> to vector<184x4xf32>
      %56 = tpu.concatenate %54, %55 in 0 : vector<8x4xf32>, vector<184x4xf32> -> vector<192x4xf32>
      %57 = vector.extract_strided_slice %52 {offsets = [8, 0], sizes = [184, 4], strides = [1, 1]} : vector<192x4xf32> to vector<184x4xf32>
      %58 = tpu.concatenate %57, %54 in 0 : vector<184x4xf32>, vector<8x4xf32> -> vector<192x4xf32>
      %c0_27 = arith.constant 0 : index
      %c0_28 = arith.constant 0 : index
      %c0_29 = arith.constant 0 : index
      %59 = vector.load %arg3[%c0_27, %c0_28, %c0_29] : memref<3x4x64xf32, #tpu.memory_space<vmem>>, vector<1x4x64xf32>
      %60 = vector.shape_cast %59 : vector<1x4x64xf32> to vector<4x64xf32>
      %cst_30 = arith.constant dense<0.000000e+00> : vector<192x64xf32>
      %61 = tpu.matmul %56, %60, %cst_30 {dimension_numbers = #tpu.dot_dimension_numbers<[1], [0], [0], [1], [0, 0, 1, 1], [], []>} : vector<192x4xf32>, vector<4x64xf32>, vector<192x64xf32> -> vector<192x64xf32>
      %c1 = arith.constant 1 : index
      %c0_31 = arith.constant 0 : index
      %c0_32 = arith.constant 0 : index
      %62 = vector.load %arg3[%c1, %c0_31, %c0_32] : memref<3x4x64xf32, #tpu.memory_space<vmem>>, vector<1x4x64xf32>
      %63 = vector.shape_cast %62 : vector<1x4x64xf32> to vector<4x64xf32>
      %cst_33 = arith.constant dense<0.000000e+00> : vector<192x64xf32>
      %64 = tpu.matmul %52, %63, %cst_33 {dimension_numbers = #tpu.dot_dimension_numbers<[1], [0], [0], [1], [0, 0, 1, 1], [], []>} : vector<192x4xf32>, vector<4x64xf32>, vector<192x64xf32> -> vector<192x64xf32>
      %65 = arith.addf %61, %64 : vector<192x64xf32>
      %c2 = arith.constant 2 : index
      %c0_34 = arith.constant 0 : index
      %c0_35 = arith.constant 0 : index
      %66 = vector.load %arg3[%c2, %c0_34, %c0_35] : memref<3x4x64xf32, #tpu.memory_space<vmem>>, vector<1x4x64xf32>
      %67 = vector.shape_cast %66 : vector<1x4x64xf32> to vector<4x64xf32>
      %cst_36 = arith.constant dense<0.000000e+00> : vector<192x64xf32>
      %68 = tpu.matmul %58, %67, %cst_36 {dimension_numbers = #tpu.dot_dimension_numbers<[1], [0], [0], [1], [0, 0, 1, 1], [], []>} : vector<192x4xf32>, vector<4x64xf32>, vector<192x64xf32> -> vector<192x64xf32>
      %69 = arith.addf %65, %68 : vector<192x64xf32>
      %70 = vector.broadcast %53 : vector<1x64xf32> to vector<192x64xf32>
      %71 = arith.addf %69, %70 : vector<192x64xf32>
      %cst_37 = arith.constant 1.000000e-01 : f32
      %72 = vector.broadcast %cst_37 : f32 to vector<192x64xf32>
      %73 = arith.mulf %72, %71 : vector<192x64xf32>
      %74 = arith.maximumf %71, %73 : vector<192x64xf32>
      %c0_38 = arith.constant 0 : index
      %c128_39 = arith.constant 128 : index
      %75 = vector.load %arg6[%c0_38, %c128_39] : memref<1x384xf32, #tpu.memory_space<vmem>>, vector<1x64xf32>
      %cst_40 = arith.constant 0.000000e+00 : f32
      %76 = vector.broadcast %cst_40 : f32 to vector<8x64xf32>
      %77 = vector.extract_strided_slice %74 {offsets = [0, 0], sizes = [184, 64], strides = [1, 1]} : vector<192x64xf32> to vector<184x64xf32>
      %78 = tpu.concatenate %76, %77 in 0 : vector<8x64xf32>, vector<184x64xf32> -> vector<192x64xf32>
      %79 = vector.extract_strided_slice %74 {offsets = [8, 0], sizes = [184, 64], strides = [1, 1]} : vector<192x64xf32> to vector<184x64xf32>
      %80 = tpu.concatenate %79, %76 in 0 : vector<184x64xf32>, vector<8x64xf32> -> vector<192x64xf32>
      %c0_41 = arith.constant 0 : index
      %c0_42 = arith.constant 0 : index
      %c0_43 = arith.constant 0 : index
      %81 = vector.load %arg4[%c0_41, %c0_42, %c0_43] : memref<3x64x64xf32, #tpu.memory_space<vmem>>, vector<1x64x64xf32>
      %82 = vector.shape_cast %81 : vector<1x64x64xf32> to vector<64x64xf32>
      %cst_44 = arith.constant dense<0.000000e+00> : vector<192x64xf32>
      %83 = tpu.matmul %78, %82, %cst_44 {dimension_numbers = #tpu.dot_dimension_numbers<[1], [0], [0], [1], [0, 0, 1, 1], [], []>} : vector<192x64xf32>, vector<64x64xf32>, vector<192x64xf32> -> vector<192x64xf32>
      %c1_45 = arith.constant 1 : index
      %c0_46 = arith.constant 0 : index
      %c0_47 = arith.constant 0 : index
      %84 = vector.load %arg4[%c1_45, %c0_46, %c0_47] : memref<3x64x64xf32, #tpu.memory_space<vmem>>, vector<1x64x64xf32>
      %85 = vector.shape_cast %84 : vector<1x64x64xf32> to vector<64x64xf32>
      %cst_48 = arith.constant dense<0.000000e+00> : vector<192x64xf32>
      %86 = tpu.matmul %74, %85, %cst_48 {dimension_numbers = #tpu.dot_dimension_numbers<[1], [0], [0], [1], [0, 0, 1, 1], [], []>} : vector<192x64xf32>, vector<64x64xf32>, vector<192x64xf32> -> vector<192x64xf32>
      %87 = arith.addf %83, %86 : vector<192x64xf32>
      %c2_49 = arith.constant 2 : index
      %c0_50 = arith.constant 0 : index
      %c0_51 = arith.constant 0 : index
      %88 = vector.load %arg4[%c2_49, %c0_50, %c0_51] : memref<3x64x64xf32, #tpu.memory_space<vmem>>, vector<1x64x64xf32>
      %89 = vector.shape_cast %88 : vector<1x64x64xf32> to vector<64x64xf32>
      %cst_52 = arith.constant dense<0.000000e+00> : vector<192x64xf32>
      %90 = tpu.matmul %80, %89, %cst_52 {dimension_numbers = #tpu.dot_dimension_numbers<[1], [0], [0], [1], [0, 0, 1, 1], [], []>} : vector<192x64xf32>, vector<64x64xf32>, vector<192x64xf32> -> vector<192x64xf32>
      %91 = arith.addf %87, %90 : vector<192x64xf32>
      %92 = vector.broadcast %75 : vector<1x64xf32> to vector<192x64xf32>
      %93 = arith.addf %91, %92 : vector<192x64xf32>
      %cst_53 = arith.constant 1.000000e-01 : f32
      %94 = vector.broadcast %cst_53 : f32 to vector<192x64xf32>
      %95 = arith.mulf %94, %93 : vector<192x64xf32>
      %96 = arith.maximumf %93, %95 : vector<192x64xf32>
      %c0_54 = arith.constant 0 : index
      %c256_55 = arith.constant 256 : index
      %97 = vector.load %arg6[%c0_54, %c256_55] : memref<1x384xf32, #tpu.memory_space<vmem>>, vector<1x128xf32>
      %cst_56 = arith.constant 0.000000e+00 : f32
      %98 = vector.broadcast %cst_56 : f32 to vector<8x64xf32>
      %99 = vector.extract_strided_slice %96 {offsets = [0, 0], sizes = [184, 64], strides = [1, 1]} : vector<192x64xf32> to vector<184x64xf32>
      %100 = tpu.concatenate %98, %99 in 0 : vector<8x64xf32>, vector<184x64xf32> -> vector<192x64xf32>
      %101 = vector.extract_strided_slice %96 {offsets = [8, 0], sizes = [184, 64], strides = [1, 1]} : vector<192x64xf32> to vector<184x64xf32>
      %102 = tpu.concatenate %101, %98 in 0 : vector<184x64xf32>, vector<8x64xf32> -> vector<192x64xf32>
      %c0_57 = arith.constant 0 : index
      %c0_58 = arith.constant 0 : index
      %c0_59 = arith.constant 0 : index
      %103 = vector.load %arg5[%c0_57, %c0_58, %c0_59] : memref<3x64x128xf32, #tpu.memory_space<vmem>>, vector<1x64x128xf32>
      %104 = vector.shape_cast %103 : vector<1x64x128xf32> to vector<64x128xf32>
      %cst_60 = arith.constant dense<0.000000e+00> : vector<192x128xf32>
      %105 = tpu.matmul %100, %104, %cst_60 {dimension_numbers = #tpu.dot_dimension_numbers<[1], [0], [0], [1], [0, 0, 1, 1], [], []>} : vector<192x64xf32>, vector<64x128xf32>, vector<192x128xf32> -> vector<192x128xf32>
      %c1_61 = arith.constant 1 : index
      %c0_62 = arith.constant 0 : index
      %c0_63 = arith.constant 0 : index
      %106 = vector.load %arg5[%c1_61, %c0_62, %c0_63] : memref<3x64x128xf32, #tpu.memory_space<vmem>>, vector<1x64x128xf32>
      %107 = vector.shape_cast %106 : vector<1x64x128xf32> to vector<64x128xf32>
      %cst_64 = arith.constant dense<0.000000e+00> : vector<192x128xf32>
      %108 = tpu.matmul %96, %107, %cst_64 {dimension_numbers = #tpu.dot_dimension_numbers<[1], [0], [0], [1], [0, 0, 1, 1], [], []>} : vector<192x64xf32>, vector<64x128xf32>, vector<192x128xf32> -> vector<192x128xf32>
      %109 = arith.addf %105, %108 : vector<192x128xf32>
      %c2_65 = arith.constant 2 : index
      %c0_66 = arith.constant 0 : index
      %c0_67 = arith.constant 0 : index
      %110 = vector.load %arg5[%c2_65, %c0_66, %c0_67] : memref<3x64x128xf32, #tpu.memory_space<vmem>>, vector<1x64x128xf32>
      %111 = vector.shape_cast %110 : vector<1x64x128xf32> to vector<64x128xf32>
      %cst_68 = arith.constant dense<0.000000e+00> : vector<192x128xf32>
      %112 = tpu.matmul %102, %111, %cst_68 {dimension_numbers = #tpu.dot_dimension_numbers<[1], [0], [0], [1], [0, 0, 1, 1], [], []>} : vector<192x64xf32>, vector<64x128xf32>, vector<192x128xf32> -> vector<192x128xf32>
      %113 = arith.addf %109, %112 : vector<192x128xf32>
      %114 = vector.broadcast %97 : vector<1x128xf32> to vector<192x128xf32>
      %115 = arith.addf %113, %114 : vector<192x128xf32>
      %cst_69 = arith.constant 1.000000e-01 : f32
      %116 = vector.broadcast %cst_69 : f32 to vector<192x128xf32>
      %117 = arith.mulf %116, %115 : vector<192x128xf32>
      %118 = arith.maximumf %115, %117 : vector<192x128xf32>
      %c0_70 = arith.constant 0 : index
      %c0_71 = arith.constant 0 : index
      %119 = vector.load %arg16[%c0_70, %c0_71] : memref<192x128xf32, #tpu.memory_space<vmem>>, vector<192x128xf32>
      tpu.vector_store %arg16[%c0_70, %c0_71], %118 {strides = array<i32>} : memref<192x128xf32, #tpu.memory_space<vmem>>, vector<192x128xf32>,
      %cst_72 = arith.constant 0.000000e+00 : f32
      %120 = vector.broadcast %cst_72 : f32 to vector<8x1024xf32>
      %c0_73 = arith.constant 0 : index
      %c0_74 = arith.constant 0 : index
      %121 = vector.load %arg17[%c0_73, %c0_74] : memref<8x1024xf32, #tpu.memory_space<vmem>>, vector<8x1024xf32>
      tpu.vector_store %arg17[%c0_73, %c0_74], %120 {strides = array<i32>} : memref<8x1024xf32, #tpu.memory_space<vmem>>, vector<8x1024xf32>,
    } else {
    }
    %c64_i32 = arith.constant 64 : i32
    %3 = arith.muli %arg1, %c64_i32 : i32
    %4 = tpu.assume_multiple %3, 8 : i32
    %5 = arith.index_cast %4 : i32 to index
    %c0 = arith.constant 0 : index
    %6 = vector.load %arg16[%5, %c0] : memref<192x128xf32, #tpu.memory_space<vmem>>, vector<64x128xf32>
    %c0_1 = arith.constant 0 : index
    %c0_2 = arith.constant 0 : index
    %7 = vector.load %arg17[%c0_1, %c0_2] : memref<8x1024xf32, #tpu.memory_space<vmem>>, vector<8x1024xf32>
    %8 = vector.extract_strided_slice %6 {offsets = [0, 0], sizes = [8, 128], strides = [1, 1]} : vector<64x128xf32> to vector<8x128xf32>
    %9 = arith.truncf %8 : vector<8x128xf32> to vector<8x128xbf16>
    %c0_3 = arith.constant 0 : index
    %c0_4 = arith.constant 0 : index
    %10 = vector.load %arg8[%c0_3, %c0_4] : memref<1024x1024xbf16, #tpu.memory_space<vmem>>, vector<128x1024xbf16>
    %cst = arith.constant dense<0.000000e+00> : vector<8x1024xf32>
    %11 = tpu.matmul %9, %10, %cst {dimension_numbers = #tpu.dot_dimension_numbers<[1], [0], [0], [1], [0, 0, 1, 1], [], []>} : vector<8x128xbf16>, vector<128x1024xbf16>, vector<8x1024xf32> -> vector<8x1024xf32>
    %12 = arith.addf %7, %11 : vector<8x1024xf32>
    %13 = vector.extract_strided_slice %6 {offsets = [8, 0], sizes = [8, 128], strides = [1, 1]} : vector<64x128xf32> to vector<8x128xf32>
    %14 = arith.truncf %13 : vector<8x128xf32> to vector<8x128xbf16>
    %c128 = arith.constant 128 : index
    %c0_5 = arith.constant 0 : index
    %15 = vector.load %arg8[%c128, %c0_5] : memref<1024x1024xbf16, #tpu.memory_space<vmem>>, vector<128x1024xbf16>
    %cst_6 = arith.constant dense<0.000000e+00> : vector<8x1024xf32>
    %16 = tpu.matmul %14, %15, %cst_6 {dimension_numbers = #tpu.dot_dimension_numbers<[1], [0], [0], [1], [0, 0, 1, 1], [], []>} : vector<8x128xbf16>, vector<128x1024xbf16>, vector<8x1024xf32> -> vector<8x1024xf32>
    %17 = arith.addf %12, %16 : vector<8x1024xf32>
    %18 = vector.extract_strided_slice %6 {offsets = [16, 0], sizes = [8, 128], strides = [1, 1]} : vector<64x128xf32> to vector<8x128xf32>
    %19 = arith.truncf %18 : vector<8x128xf32> to vector<8x128xbf16>
    %c256 = arith.constant 256 : index
    %c0_7 = arith.constant 0 : index
    %20 = vector.load %arg8[%c256, %c0_7] : memref<1024x1024xbf16, #tpu.memory_space<vmem>>, vector<128x1024xbf16>
    %cst_8 = arith.constant dense<0.000000e+00> : vector<8x1024xf32>
    %21 = tpu.matmul %19, %20, %cst_8 {dimension_numbers = #tpu.dot_dimension_numbers<[1], [0], [0], [1], [0, 0, 1, 1], [], []>} : vector<8x128xbf16>, vector<128x1024xbf16>, vector<8x1024xf32> -> vector<8x1024xf32>
    %22 = arith.addf %17, %21 : vector<8x1024xf32>
    %23 = vector.extract_strided_slice %6 {offsets = [24, 0], sizes = [8, 128], strides = [1, 1]} : vector<64x128xf32> to vector<8x128xf32>
    %24 = arith.truncf %23 : vector<8x128xf32> to vector<8x128xbf16>
    %c384 = arith.constant 384 : index
    %c0_9 = arith.constant 0 : index
    %25 = vector.load %arg8[%c384, %c0_9] : memref<1024x1024xbf16, #tpu.memory_space<vmem>>, vector<128x1024xbf16>
    %cst_10 = arith.constant dense<0.000000e+00> : vector<8x1024xf32>
    %26 = tpu.matmul %24, %25, %cst_10 {dimension_numbers = #tpu.dot_dimension_numbers<[1], [0], [0], [1], [0, 0, 1, 1], [], []>} : vector<8x128xbf16>, vector<128x1024xbf16>, vector<8x1024xf32> -> vector<8x1024xf32>
    %27 = arith.addf %22, %26 : vector<8x1024xf32>
    %28 = vector.extract_strided_slice %6 {offsets = [32, 0], sizes = [8, 128], strides = [1, 1]} : vector<64x128xf32> to vector<8x128xf32>
    %29 = arith.truncf %28 : vector<8x128xf32> to vector<8x128xbf16>
    %c512 = arith.constant 512 : index
    %c0_11 = arith.constant 0 : index
    %30 = vector.load %arg8[%c512, %c0_11] : memref<1024x1024xbf16, #tpu.memory_space<vmem>>, vector<128x1024xbf16>
    %cst_12 = arith.constant dense<0.000000e+00> : vector<8x1024xf32>
    %31 = tpu.matmul %29, %30, %cst_12 {dimension_numbers = #tpu.dot_dimension_numbers<[1], [0], [0], [1], [0, 0, 1, 1], [], []>} : vector<8x128xbf16>, vector<128x1024xbf16>, vector<8x1024xf32> -> vector<8x1024xf32>
    %32 = arith.addf %27, %31 : vector<8x1024xf32>
    %33 = vector.extract_strided_slice %6 {offsets = [40, 0], sizes = [8, 128], strides = [1, 1]} : vector<64x128xf32> to vector<8x128xf32>
    %34 = arith.truncf %33 : vector<8x128xf32> to vector<8x128xbf16>
    %c640 = arith.constant 640 : index
    %c0_13 = arith.constant 0 : index
    %35 = vector.load %arg8[%c640, %c0_13] : memref<1024x1024xbf16, #tpu.memory_space<vmem>>, vector<128x1024xbf16>
    %cst_14 = arith.constant dense<0.000000e+00> : vector<8x1024xf32>
    %36 = tpu.matmul %34, %35, %cst_14 {dimension_numbers = #tpu.dot_dimension_numbers<[1], [0], [0], [1], [0, 0, 1, 1], [], []>} : vector<8x128xbf16>, vector<128x1024xbf16>, vector<8x1024xf32> -> vector<8x1024xf32>
    %37 = arith.addf %32, %36 : vector<8x1024xf32>
    %38 = vector.extract_strided_slice %6 {offsets = [48, 0], sizes = [8, 128], strides = [1, 1]} : vector<64x128xf32> to vector<8x128xf32>
    %39 = arith.truncf %38 : vector<8x128xf32> to vector<8x128xbf16>
    %c768 = arith.constant 768 : index
    %c0_15 = arith.constant 0 : index
    %40 = vector.load %arg8[%c768, %c0_15] : memref<1024x1024xbf16, #tpu.memory_space<vmem>>, vector<128x1024xbf16>
    %cst_16 = arith.constant dense<0.000000e+00> : vector<8x1024xf32>
    %41 = tpu.matmul %39, %40, %cst_16 {dimension_numbers = #tpu.dot_dimension_numbers<[1], [0], [0], [1], [0, 0, 1, 1], [], []>} : vector<8x128xbf16>, vector<128x1024xbf16>, vector<8x1024xf32> -> vector<8x1024xf32>
    %42 = arith.addf %37, %41 : vector<8x1024xf32>
    %43 = vector.extract_strided_slice %6 {offsets = [56, 0], sizes = [8, 128], strides = [1, 1]} : vector<64x128xf32> to vector<8x128xf32>
    %44 = arith.truncf %43 : vector<8x128xf32> to vector<8x128xbf16>
    %c896 = arith.constant 896 : index
    %c0_17 = arith.constant 0 : index
    %45 = vector.load %arg8[%c896, %c0_17] : memref<1024x1024xbf16, #tpu.memory_space<vmem>>, vector<128x1024xbf16>
    %cst_18 = arith.constant dense<0.000000e+00> : vector<8x1024xf32>
    %46 = tpu.matmul %44, %45, %cst_18 {dimension_numbers = #tpu.dot_dimension_numbers<[1], [0], [0], [1], [0, 0, 1, 1], [], []>} : vector<8x128xbf16>, vector<128x1024xbf16>, vector<8x1024xf32> -> vector<8x1024xf32>
    %47 = arith.addf %42, %46 : vector<8x1024xf32>
    %c0_19 = arith.constant 0 : index
    %c0_20 = arith.constant 0 : index
    %48 = vector.load %arg17[%c0_19, %c0_20] : memref<8x1024xf32, #tpu.memory_space<vmem>>, vector<8x1024xf32>
    tpu.vector_store %arg17[%c0_19, %c0_20], %47 {strides = array<i32>} : memref<8x1024xf32, #tpu.memory_space<vmem>>, vector<8x1024xf32>,
    %c2_i32 = arith.constant 2 : i32
    %49 = arith.cmpi eq, %arg1, %c2_i32 : i32
    %50 = arith.extui %49 : i1 to i32
    %c0_i32_21 = arith.constant 0 : i32
    %51 = arith.cmpi ne, %50, %c0_i32_21 : i32
    scf.if %51 {
      %c0_22 = arith.constant 0 : index
      %c0_23 = arith.constant 0 : index
      %52 = vector.load %arg17[%c0_22, %c0_23] : memref<8x1024xf32, #tpu.memory_space<vmem>>, vector<8x1024xf32>
      %53 = vector.extract_strided_slice %52 {offsets = [0, 0], sizes = [2, 1024], strides = [1, 1]} : vector<8x1024xf32> to vector<2x1024xf32>
      %c0_24 = arith.constant 0 : index
      %c0_25 = arith.constant 0 : index
      %54 = vector.load %arg10[%c0_24, %c0_25] : memref<2x256xf32, #tpu.memory_space<vmem>>, vector<2x256xf32>
      %c0_26 = arith.constant 0 : index
      %c0_27 = arith.constant 0 : index
      %55 = vector.load %arg9[%c0_26, %c0_27] : memref<256x1024xf32, #tpu.memory_space<vmem>>, vector<256x1024xf32>
      %cst_28 = arith.constant dense<0.000000e+00> : vector<2x1024xf32>
      %56 = tpu.matmul %54, %55, %cst_28 {dimension_numbers = #tpu.dot_dimension_numbers<[1], [0], [0], [1], [0, 0, 1, 1], [], []>} : vector<2x256xf32>, vector<256x1024xf32>, vector<2x1024xf32> -> vector<2x1024xf32>
      %57 = arith.addf %53, %56 : vector<2x1024xf32>
      %c0_29 = arith.constant 0 : index
      %c0_30 = arith.constant 0 : index
      %58 = vector.load %arg7[%c0_29, %c0_30] : memref<1x1024xf32, #tpu.memory_space<vmem>>, vector<1x1024xf32>
      %59 = vector.broadcast %58 : vector<1x1024xf32> to vector<2x1024xf32>
      %60 = arith.addf %57, %59 : vector<2x1024xf32>
      %61 = vector.extract_strided_slice %60 {offsets = [0, 0], sizes = [2, 256], strides = [1, 1]} : vector<2x1024xf32> to vector<2x256xf32>
      %62 = arith.negf %61 : vector<2x256xf32>
      %63 = math.exp %62 : vector<2x256xf32>
      %cst_31 = arith.constant 1.000000e+00 : f32
      %64 = vector.broadcast %cst_31 : f32 to vector<2x256xf32>
      %65 = arith.addf %64, %63 : vector<2x256xf32>
      %66 = arith.divf %64, %65 : vector<2x256xf32>
      %67 = vector.extract_strided_slice %60 {offsets = [0, 256], sizes = [2, 256], strides = [1, 1]} : vector<2x1024xf32> to vector<2x256xf32>
      %68 = arith.negf %67 : vector<2x256xf32>
      %69 = math.exp %68 : vector<2x256xf32>
      %cst_32 = arith.constant 1.000000e+00 : f32
      %70 = vector.broadcast %cst_32 : f32 to vector<2x256xf32>
      %71 = arith.addf %70, %69 : vector<2x256xf32>
      %72 = arith.divf %70, %71 : vector<2x256xf32>
      %73 = vector.extract_strided_slice %60 {offsets = [0, 512], sizes = [2, 256], strides = [1, 1]} : vector<2x1024xf32> to vector<2x256xf32>
      %74 = math.tanh %73 : vector<2x256xf32>
      %75 = vector.extract_strided_slice %60 {offsets = [0, 768], sizes = [2, 256], strides = [1, 1]} : vector<2x1024xf32> to vector<2x256xf32>
      %76 = arith.negf %75 : vector<2x256xf32>
      %77 = math.exp %76 : vector<2x256xf32>
      %cst_33 = arith.constant 1.000000e+00 : f32
      %78 = vector.broadcast %cst_33 : f32 to vector<2x256xf32>
      %79 = arith.addf %78, %77 : vector<2x256xf32>
      %80 = arith.divf %78, %79 : vector<2x256xf32>
      %c0_34 = arith.constant 0 : index
      %c0_35 = arith.constant 0 : index
      %81 = vector.load %arg11[%c0_34, %c0_35] : memref<2x256xf32, #tpu.memory_space<vmem>>, vector<2x256xf32>
      %82 = arith.mulf %72, %81 : vector<2x256xf32>
      %83 = arith.mulf %66, %74 : vector<2x256xf32>
      %84 = arith.addf %82, %83 : vector<2x256xf32>
      %85 = math.tanh %84 : vector<2x256xf32>
      %86 = arith.mulf %80, %85 : vector<2x256xf32>
      %c0_36 = arith.constant 0 : index
      %c0_37 = arith.constant 0 : index
      %87 = vector.load %arg14[%c0_36, %c0_37] : memref<2x256xf32, #tpu.memory_space<vmem>>, vector<2x256xf32>
      tpu.vector_store %arg14[%c0_36, %c0_37], %86 {strides = array<i32>} : memref<2x256xf32, #tpu.memory_space<vmem>>, vector<2x256xf32>,
      %c0_38 = arith.constant 0 : index
      %c0_39 = arith.constant 0 : index
      %88 = vector.load %arg15[%c0_38, %c0_39] : memref<2x256xf32, #tpu.memory_space<vmem>>, vector<2x256xf32>
      tpu.vector_store %arg15[%c0_38, %c0_39], %84 {strides = array<i32>} : memref<2x256xf32, #tpu.memory_space<vmem>>, vector<2x256xf32>,
      %c0_40 = arith.constant 0 : index
      %c0_41 = arith.constant 0 : index
      %89 = vector.load %arg12[%c0_40, %c0_41] : memref<256x6xf32, #tpu.memory_space<vmem>>, vector<256x6xf32>
      %cst_42 = arith.constant dense<0.000000e+00> : vector<2x6xf32>
      %90 = tpu.matmul %86, %89, %cst_42 {dimension_numbers = #tpu.dot_dimension_numbers<[1], [0], [0], [1], [0, 0, 1, 1], [], []>} : vector<2x256xf32>, vector<256x6xf32>, vector<2x6xf32> -> vector<2x6xf32>
      %c0_43 = arith.constant 0 : index
      %c0_44 = arith.constant 0 : index
      %c0_45 = arith.constant 0 : index
      %91 = vector.load %arg13[%c0_43, %c0_44, %c0_45] : memref<1x2x6xf32, #tpu.memory_space<vmem>>, vector<1x2x6xf32>
      %92 = vector.shape_cast %91 : vector<1x2x6xf32> to vector<2x6xf32>
      %93 = vector.shape_cast %90 : vector<2x6xf32> to vector<1x2x6xf32>
      tpu.vector_store %arg13[%c0_43, %c0_44, %c0_45], %93 {strides = array<i32>} : memref<1x2x6xf32, #tpu.memory_space<vmem>>, vector<1x2x6xf32>,
    } else {
    }
    return
  }
  func.func @transform_0(%arg0: i32, %arg1: i32) -> (i32, i32) {
    %c0_i32 = arith.constant 0 : i32
    %c0_i32_0 = arith.constant 0 : i32
    %c0_i32_1 = arith.constant 0 : i32
    return %c0_i32, %c0_i32_0 : i32, i32
  }
  func.func @transform_1(%arg0: i32, %arg1: i32) -> (i32, i32, i32) {
    %c0_i32 = arith.constant 0 : i32
    %c0_i32_0 = arith.constant 0 : i32
    %c0_i32_1 = arith.constant 0 : i32
    %c0_i32_2 = arith.constant 0 : i32
    return %c0_i32, %c0_i32_0, %c0_i32_1 : i32, i32, i32
  }
  func.func @transform_2(%arg0: i32, %arg1: i32) -> (i32, i32, i32) {
    %c0_i32 = arith.constant 0 : i32
    %c0_i32_0 = arith.constant 0 : i32
    %c0_i32_1 = arith.constant 0 : i32
    %c0_i32_2 = arith.constant 0 : i32
    return %c0_i32, %c0_i32_0, %c0_i32_1 : i32, i32, i32
  }
  func.func @transform_3(%arg0: i32, %arg1: i32) -> (i32, i32, i32) {
    %c0_i32 = arith.constant 0 : i32
    %c0_i32_0 = arith.constant 0 : i32
    %c0_i32_1 = arith.constant 0 : i32
    %c0_i32_2 = arith.constant 0 : i32
    return %c0_i32, %c0_i32_0, %c0_i32_1 : i32, i32, i32
  }
  func.func @transform_4(%arg0: i32, %arg1: i32) -> (i32, i32) {
    %c0_i32 = arith.constant 0 : i32
    %c0_i32_0 = arith.constant 0 : i32
    %c0_i32_1 = arith.constant 0 : i32
    return %c0_i32, %c0_i32_0 : i32, i32
  }
  func.func @transform_5(%arg0: i32, %arg1: i32) -> (i32, i32) {
    %c0_i32 = arith.constant 0 : i32
    %c0_i32_0 = arith.constant 0 : i32
    return %c0_i32, %arg0 : i32, i32
  }
  func.func @transform_6(%arg0: i32, %arg1: i32) -> (i32, i32) {
    %c0_i32 = arith.constant 0 : i32
    return %arg1, %arg0 : i32, i32
  }
  func.func @transform_7(%arg0: i32, %arg1: i32) -> (i32, i32) {
    %c0_i32 = arith.constant 0 : i32
    %c0_i32_0 = arith.constant 0 : i32
    return %c0_i32, %arg0 : i32, i32
  }
  func.func @transform_8(%arg0: i32, %arg1: i32) -> (i32, i32) {
    %c0_i32 = arith.constant 0 : i32
    %c0_i32_0 = arith.constant 0 : i32
    %c0_i32_1 = arith.constant 0 : i32
    return %c0_i32, %c0_i32_0 : i32, i32
  }
  func.func @transform_9(%arg0: i32, %arg1: i32) -> (i32, i32) {
    %c0_i32 = arith.constant 0 : i32
    %c0_i32_0 = arith.constant 0 : i32
    return %c0_i32, %arg0 : i32, i32
  }
  func.func @transform_10(%arg0: i32, %arg1: i32) -> (i32, i32) {
    %c0_i32 = arith.constant 0 : i32
    %c0_i32_0 = arith.constant 0 : i32
    return %arg0, %c0_i32 : i32, i32
  }
  func.func @transform_11(%arg0: i32, %arg1: i32) -> (i32, i32, i32) {
    %c0_i32 = arith.constant 0 : i32
    %c0_i32_0 = arith.constant 0 : i32
    %c0_i32_1 = arith.constant 0 : i32
    return %arg0, %c0_i32, %c0_i32_0 : i32, i32, i32
  }
  func.func @transform_12(%arg0: i32, %arg1: i32) -> (i32, i32) {
    %c0_i32 = arith.constant 0 : i32
    %c0_i32_0 = arith.constant 0 : i32
    return %c0_i32, %arg0 : i32, i32
  }
  func.func @transform_13(%arg0: i32, %arg1: i32) -> (i32, i32) {
    %c0_i32 = arith.constant 0 : i32
    %c0_i32_0 = arith.constant 0 : i32
    return %c0_i32, %arg0 : i32, i32
  }
}

</mosaic_0001>

<llo_original>
// kernel: actor_forward.1
$region0: #{actor_forward.1}
  #allocation0 [shape = 'u32[]', space=smem, size = 0x4, offset = 0x4, fixed_abs, tag = 'smem constant byte address 0x4 - core index']
  #allocation1 [shape = 'u32[144,128]{1,0:T(1,128)}', space=vmem, size = 0x12000, scoped, tag = 'internal scratch']
  #allocation2 [shape = 'f32[192,128]{1,0:T(8,128)}', space=vmem, size = 0x18000, scoped, tag = 'scratch operand']
  #allocation3 [shape = 'f32[8,1024]{1,0:T(8,128)}', space=vmem, size = 0x8000, scoped, tag = 'scratch operand']
  %s0 = inlined_call_operand.vmem [shape: f32[192,4], index: 0, kind: input, shape index: {}]
  %s1 = inlined_call_operand.hbm [shape: f32[3,4,64], index: 1, kind: input, shape index: {}]
  %s2 = inlined_call_operand.hbm [shape: f32[3,64,64], index: 2, kind: input, shape index: {}]
  %s3 = inlined_call_operand.hbm [shape: f32[3,64,128], index: 3, kind: input, shape index: {}]
  %s4 = inlined_call_operand.hbm [shape: f32[1,384], index: 4, kind: input, shape index: {}]
  %s5 = inlined_call_operand.hbm [shape: f32[1,1024], index: 5, kind: input, shape index: {}]
  %s6 = inlined_call_operand.hbm [shape: bf16[3072,1024], index: 6, kind: input, shape index: {}]
  %s7 = inlined_call_operand.hbm [shape: f32[256,1024], index: 7, kind: input, shape index: {}]
  %s8 = inlined_call_operand.hbm [shape: f32[2,256], index: 8, kind: input, shape index: {}]
  %s9 = inlined_call_operand.hbm [shape: f32[2,256], index: 9, kind: input, shape index: {}]
  %s10 = inlined_call_operand.vmem [shape: f32[256,6], index: 10, kind: input, shape index: {}]
  %s11 = inlined_call_operand.vmem [shape: f32[1,2,6], index: 11, kind: output, shape index: {0}]
  %s12 = inlined_call_operand.hbm [shape: f32[2,256], index: 12, kind: output, shape index: {1}]
  %s13 = inlined_call_operand.hbm [shape: f32[2,256], index: 13, kind: output, shape index: {2}]
  %14 = xla_tuple %s11, %s12, %s13
  %s15 = sld [smem:[#allocation0]]
  $region137: #{actor_forward.1} parent=0
    _
  %s17 = ssub.s32 1, %s15
  %s18 = scalar_select 0, %s17, %s15
  $region1: #{actor_forward.1} parent=0
    #allocation4 [shape = 'u8[6144]{0}', space=vmem, size = 0x1800, scoped, tag = 'input window, operand 1, single buffered']
    #allocation5 [shape = 's32[2]{0}', space=sflag, size = 0x8, scoped, tag = 'scoped memory for actor_forward.1']
    #allocation6 [shape = 's32[2]{0}', space=sflag, size = 0x8, scoped, tag = 'scoped memory for actor_forward.1']
    #allocation7 [shape = 'u8[98304]{0}', space=vmem, size = 0x18000, scoped, tag = 'input window, operand 2, single buffered']
    #allocation8 [shape = 's32[1]{0}', space=sflag, size = 0x4, scoped, tag = 'scoped memory for actor_forward.1']
    #allocation9 [shape = 'u8[98304]{0}', space=vmem, size = 0x18000, scoped, tag = 'input window, operand 3, single buffered']
    #allocation10 [shape = 'u8[1536]{0}', space=vmem, size = 0x800, scoped, tag = 'input window, operand 4, single buffered']
    #allocation11 [shape = 's32[1]{0}', space=sflag, size = 0x4, scoped, tag = 'scoped memory for actor_forward.1']
    #allocation12 [shape = 'u8[4096]{0}', space=vmem, size = 0x1000, scoped, tag = 'input window, operand 5, single buffered']
    #allocation13 [shape = 'u8[4194304]{0}', space=vmem, size = 0x400000, scoped, tag = 'input window, operand 6']
    #allocation14 [shape = 's32[2]{0}', space=sflag, size = 0x8, scoped, tag = 'scoped memory for actor_forward.1']
    #allocation15 [shape = 'u8[1048576]{0}', space=vmem, size = 0x100000, scoped, tag = 'input window, operand 7, single buffered']
    #allocation16 [shape = 'u8[2048]{0}', space=vmem, size = 0x800, scoped, tag = 'input window, operand 8, single buffered']
    #allocation17 [shape = 's32[1]{0}', space=sflag, size = 0x4, scoped, tag = 'scoped memory for actor_forward.1']
    #allocation18 [shape = 'u8[2048]{0}', space=vmem, size = 0x800, scoped, tag = 'input window, operand 9, single buffered']
    #allocation19 [shape = 'u8[2048]{0}', space=vmem, size = 0x800, scoped, tag = 'output window, operand 1, single buffered']
    #allocation20 [shape = 'u8[2048]{0}', space=vmem, size = 0x800, scoped, tag = 'output window, operand 2, single buffered']
    #allocation21 [shape = 's32[1]{0}', space=sflag, size = 0x4, scoped, tag = 'scoped memory for actor_forward.1']
    %19 = vsyncpa [#allocation5], 0
    %20 = vsyncpa [#allocation8], 0
    %21 = vsyncpa [#allocation11], 0
    %22 = vsyncpa [#allocation14], 0
    %s23 = scalar_lea.sflag [#allocation14], 1
    %24 = vsyncpa %s23, 0
    %25 = vsyncpa [#allocation17], 0
    %26 = vsyncpa [#allocation6], 0
    %27 = vsyncpa [#allocation21], 0
    loop: start=0, step=1, limit=5
    $region2: #{actor_forward.1} parent=1 // loop_pre_header
      _
    $region3: #{actor_forward.1} parent=1 // loop_header
      %s29 = sphi 0, %s33
      %p30 = scmp.ge.s32.totalorder %s29, 5
      %s36 = sphi 0, %s48
      %s37 = sphi 0, %s44
      %s38 = sphi 0, %s36
      %s39 = sphi 0, %s37
      %s40 = sphi 0, %s38
      %s41 = sphi 0, %s39
      %s49 = sphi 0, %s49
      %s51 = sphi 0, %s49
      %s52 = sphi 0, %s51
      %s66 = sphi 0, %s52
      %s70 = sphi 0, %s70
      %s72 = sphi 0, %s70
      %s73 = sphi 0, %s72
      %s87 = sphi 0, %s73
      %s91 = sphi 0, %s91
      %s93 = sphi 0, %s91
      %s94 = sphi 0, %s93
      %s108 = sphi 0, %s94
      %s112 = sphi 0, %s112
      %s114 = sphi 0, %s112
      %s115 = sphi 0, %s114
      %s129 = sphi 0, %s115
      %s133 = sphi 0, %s133
      %s135 = sphi 0, %s133
      %s136 = sphi 0, %s135
      %s150 = sphi 0, %s136
      %s156 = sphi 0, %s158
      %s159 = sphi 0, %s156
      %s160 = sphi 0, %s159
      %s176 = sphi 0, %s160
      %s184 = sphi 0, %s186
      %s187 = sphi 0, %s184
      %s188 = sphi 0, %s187
      %s204 = sphi 0, %s188
      %s210 = sphi 0, %s212
      %s213 = sphi 0, %s210
      %s214 = sphi 0, %s213
      %s230 = sphi 0, %s214
      %s234 = sphi 0, %s234
      %s236 = sphi 0, %s234
      %s237 = sphi 0, %s236
      %s251 = sphi 0, %s237
      %s257 = sphi 0, %s259
      %s260 = sphi 0, %s257
      %s261 = sphi 0, %s260
      %s277 = sphi 0, %s261
      %s283 = sphi 0, %s285
      %s286 = sphi 0, %s283
      %s287 = sphi 0, %s286
      %s303 = sphi 0, %s287
      %s309 = sphi 0, %s311
      %s312 = sphi 0, %s309
      %s313 = sphi 0, %s312
      %s329 = sphi 0, %s313
      %s335 = sphi 0, %s337
      %s338 = sphi 0, %s335
      %s339 = sphi 0, %s338
      %s355 = sphi 0, %s339
      %s361 = sphi 0, %s363
      %s364 = sphi 0, %s361
      %s365 = sphi 0, %s364
      %s381 = sphi 0, %s365
    $region4: #{actor_forward.1} parent=1 // loop_header_branch
      %32 = sbr.rel (%p30) target = $region8
    $region5: #{actor_forward.1} parent=1 // loop_body
      %s34 = ssub.s32 %s29, 1
      %s35 = ssub.s32 %s29, 2
      %s42 = sadd.s32 1, %s37
      %p43 = scmp.ge.s32.totalorder %s42, 3
      %s44 = scalar_select %p43, 0, %s42
      %s45 = sadd.s32 1, %s36
      %s46 = scalar_select %p43, %s45, %s36
      %p47 = scmp.ge.s32.totalorder %s46, 1
      %s48 = scalar_select %p47, 0, %s46
      %s50 = sadd.s32 %s49, 1
      %p53 = scmp.eq.s32.totalorder %s29, 2
      %p54 = scmp.ne.s32.totalorder %s49, %s51
      %p55 = scmp.eq.s32.totalorder %s29, 0
      %p56 = por %p54, %p55
      %p57 = scmp.ne.s32.totalorder %s49, %s51
      %p58 = scmp.eq.s32.totalorder %s34, 2
      %p59 = por %p57, %p58
      %p60 = scmp.ne.s32.totalorder %s51, %s52
      %p61 = scmp.eq.s32.totalorder %s34, 0
      %p62 = por %p60, %p61
      %p63 = scmp.ne.s32.totalorder %s51, %s52
      %p64 = scmp.eq.s32.totalorder %s35, 2
      %p65 = por %p63, %p64
      %p67 = scmp.ne.s32.totalorder %s52, %s66
      %p68 = scmp.eq.s32.totalorder %s35, 0
      %p69 = por %p67, %p68
      %s71 = sadd.s32 %s70, 1
      %p74 = scmp.eq.s32.totalorder %s29, 2
      %p75 = scmp.ne.s32.totalorder %s70, %s72
      %p76 = scmp.eq.s32.totalorder %s29, 0
      %p77 = por %p75, %p76
      %p78 = scmp.ne.s32.totalorder %s70, %s72
      %p79 = scmp.eq.s32.totalorder %s34, 2
      %p80 = por %p78, %p79
      %p81 = scmp.ne.s32.totalorder %s72, %s73
      %p82 = scmp.eq.s32.totalorder %s34, 0
      %p83 = por %p81, %p82
      %p84 = scmp.ne.s32.totalorder %s72, %s73
      %p85 = scmp.eq.s32.totalorder %s35, 2
      %p86 = por %p84, %p85
      %p88 = scmp.ne.s32.totalorder %s73, %s87
      %p89 = scmp.eq.s32.totalorder %s35, 0
      %p90 = por %p88, %p89
      %s92 = sadd.s32 %s91, 1
      %p95 = scmp.eq.s32.totalorder %s29, 2
      %p96 = scmp.ne.s32.totalorder %s91, %s93
      %p97 = scmp.eq.s32.totalorder %s29, 0
      %p98 = por %p96, %p97
      %p99 = scmp.ne.s32.totalorder %s91, %s93
      %p100 = scmp.eq.s32.totalorder %s34, 2
      %p101 = por %p99, %p100
      %p102 = scmp.ne.s32.totalorder %s93, %s94
      %p103 = scmp.eq.s32.totalorder %s34, 0
      %p104 = por %p102, %p103
      %p105 = scmp.ne.s32.totalorder %s93, %s94
      %p106 = scmp.eq.s32.totalorder %s35, 2
      %p107 = por %p105, %p106
      %p109 = scmp.ne.s32.totalorder %s94, %s108
      %p110 = scmp.eq.s32.totalorder %s35, 0
      %p111 = por %p109, %p110
      %s113 = sadd.s32 %s112, 1
      %p116 = scmp.eq.s32.totalorder %s29, 2
      %p117 = scmp.ne.s32.totalorder %s112, %s114
      %p118 = scmp.eq.s32.totalorder %s29, 0
      %p119 = por %p117, %p118
      %p120 = scmp.ne.s32.totalorder %s112, %s114
      %p121 = scmp.eq.s32.totalorder %s34, 2
      %p122 = por %p120, %p121
      %p123 = scmp.ne.s32.totalorder %s114, %s115
      %p124 = scmp.eq.s32.totalorder %s34, 0
      %p125 = por %p123, %p124
      %p126 = scmp.ne.s32.totalorder %s114, %s115
      %p127 = scmp.eq.s32.totalorder %s35, 2
      %p128 = por %p126, %p127
      %p130 = scmp.ne.s32.totalorder %s115, %s129
      %p131 = scmp.eq.s32.totalorder %s35, 0
      %p132 = por %p130, %p131
      %s134 = sadd.s32 %s133, 1
      %p137 = scmp.eq.s32.totalorder %s29, 2
      %p138 = scmp.ne.s32.totalorder %s133, %s135
      %p139 = scmp.eq.s32.totalorder %s29, 0
      %p140 = por %p138, %p139
      %p141 = scmp.ne.s32.totalorder %s133, %s135
      %p142 = scmp.eq.s32.totalorder %s34, 2
      %p143 = por %p141, %p142
      %p144 = scmp.ne.s32.totalorder %s135, %s136
      %p145 = scmp.eq.s32.totalorder %s34, 0
      %p146 = por %p144, %p145
      %p147 = scmp.ne.s32.totalorder %s135, %s136
      %p148 = scmp.eq.s32.totalorder %s35, 2
      %p149 = por %p147, %p148
      %p151 = scmp.ne.s32.totalorder %s136, %s150
      %p152 = scmp.eq.s32.totalorder %s35, 0
      %p153 = por %p151, %p152
      %s154 = ssub.s32 %s36, %s48
      %p155 = scmp.eq.s32.totalorder %s154, 0
      %s157 = sadd.s32 %s156, 1
      %s158 = scalar_select %p155, %s156, %s157
      %p161 = pneg %p155
      %p162 = scmp.eq.s32.totalorder %s29, 2
      %p163 = por %p161, %p162
      %p164 = scmp.ne.s32.totalorder %s156, %s159
      %p165 = scmp.eq.s32.totalorder %s29, 0
      %p166 = por %p164, %p165
      %p167 = scmp.ne.s32.totalorder %s156, %s159
      %p168 = scmp.eq.s32.totalorder %s34, 2
      %p169 = por %p167, %p168
      %p170 = scmp.ne.s32.totalorder %s159, %s160
      %p171 = scmp.eq.s32.totalorder %s34, 0
      %p172 = por %p170, %p171
      %p173 = scmp.ne.s32.totalorder %s159, %s160
      %p174 = scmp.eq.s32.totalorder %s35, 2
      %p175 = por %p173, %p174
      %p177 = scmp.ne.s32.totalorder %s160, %s176
      %p178 = scmp.eq.s32.totalorder %s35, 0
      %p179 = por %p177, %p178
      %s180 = ssub.s32 %s37, %s44
      %s181 = ssub.s32 %s36, %s48
      %s182 = sor.u32 %s180, %s181
      %p183 = scmp.eq.s32.totalorder %s182, 0
      %s185 = sadd.s32 %s184, 1
      %s186 = scalar_select %p183, %s184, %s185
      %p189 = pneg %p183
      %p190 = scmp.eq.s32.totalorder %s29, 2
      %p191 = por %p189, %p190
      %p192 = scmp.ne.s32.totalorder %s184, %s187
      %p193 = scmp.eq.s32.totalorder %s29, 0
      %p194 = por %p192, %p193
      %p195 = scmp.ne.s32.totalorder %s184, %s187
      %p196 = scmp.eq.s32.totalorder %s34, 2
      %p197 = por %p195, %p196
      %p198 = scmp.ne.s32.totalorder %s187, %s188
      %p199 = scmp.eq.s32.totalorder %s34, 0
      %p200 = por %p198, %p199
      %p201 = scmp.ne.s32.totalorder %s187, %s188
      %p202 = scmp.eq.s32.totalorder %s35, 2
      %p203 = por %p201, %p202
      %p205 = scmp.ne.s32.totalorder %s188, %s204
      %p206 = scmp.eq.s32.totalorder %s35, 0
      %p207 = por %p205, %p206
      %s208 = ssub.s32 %s36, %s48
      %p209 = scmp.eq.s32.totalorder %s208, 0
      %s211 = sadd.s32 %s210, 1
      %s212 = scalar_select %p209, %s210, %s211
      %p215 = pneg %p209
      %p216 = scmp.eq.s32.totalorder %s29, 2
      %p217 = por %p215, %p216
      %p218 = scmp.ne.s32.totalorder %s210, %s213
      %p219 = scmp.eq.s32.totalorder %s29, 0
      %p220 = por %p218, %p219
      %p221 = scmp.ne.s32.totalorder %s210, %s213
      %p222 = scmp.eq.s32.totalorder %s34, 2
      %p223 = por %p221, %p222
      %p224 = scmp.ne.s32.totalorder %s213, %s214
      %p225 = scmp.eq.s32.totalorder %s34, 0
      %p226 = por %p224, %p225
      %p227 = scmp.ne.s32.totalorder %s213, %s214
      %p228 = scmp.eq.s32.totalorder %s35, 2
      %p229 = por %p227, %p228
      %p231 = scmp.ne.s32.totalorder %s214, %s230
      %p232 = scmp.eq.s32.totalorder %s35, 0
      %p233 = por %p231, %p232
      %s235 = sadd.s32 %s234, 1
      %p238 = scmp.eq.s32.totalorder %s29, 2
      %p239 = scmp.ne.s32.totalorder %s234, %s236
      %p240 = scmp.eq.s32.totalorder %s29, 0
      %p241 = por %p239, %p240
      %p242 = scmp.ne.s32.totalorder %s234, %s236
      %p243 = scmp.eq.s32.totalorder %s34, 2
      %p244 = por %p242, %p243
      %p245 = scmp.ne.s32.totalorder %s236, %s237
      %p246 = scmp.eq.s32.totalorder %s34, 0
      %p247 = por %p245, %p246
      %p248 = scmp.ne.s32.totalorder %s236, %s237
      %p249 = scmp.eq.s32.totalorder %s35, 2
      %p250 = por %p248, %p249
      %p252 = scmp.ne.s32.totalorder %s237, %s251
      %p253 = scmp.eq.s32.totalorder %s35, 0
      %p254 = por %p252, %p253
      %s255 = ssub.s32 %s36, %s48
      %p256 = scmp.eq.s32.totalorder %s255, 0
      %s258 = sadd.s32 %s257, 1
      %s259 = scalar_select %p256, %s257, %s258
      %p262 = pneg %p256
      %p263 = scmp.eq.s32.totalorder %s29, 2
      %p264 = por %p262, %p263
      %p265 = scmp.ne.s32.totalorder %s257, %s260
      %p266 = scmp.eq.s32.totalorder %s29, 0
      %p267 = por %p265, %p266
      %p268 = scmp.ne.s32.totalorder %s257, %s260
      %p269 = scmp.eq.s32.totalorder %s34, 2
      %p270 = por %p268, %p269
      %p271 = scmp.ne.s32.totalorder %s260, %s261
      %p272 = scmp.eq.s32.totalorder %s34, 0
      %p273 = por %p271, %p272
      %p274 = scmp.ne.s32.totalorder %s260, %s261
      %p275 = scmp.eq.s32.totalorder %s35, 2
      %p276 = por %p274, %p275
      %p278 = scmp.ne.s32.totalorder %s261, %s277
      %p279 = scmp.eq.s32.totalorder %s35, 0
      %p280 = por %p278, %p279
      %s281 = ssub.s32 %s36, %s48
      %p282 = scmp.eq.s32.totalorder %s281, 0
      %s284 = sadd.s32 %s283, 1
      %s285 = scalar_select %p282, %s283, %s284
      %p288 = pneg %p282
      %p289 = scmp.eq.s32.totalorder %s29, 2
      %p290 = por %p288, %p289
      %p291 = scmp.ne.s32.totalorder %s283, %s286
      %p292 = scmp.eq.s32.totalorder %s29, 0
      %p293 = por %p291, %p292
      %p294 = scmp.ne.s32.totalorder %s283, %s286
      %p295 = scmp.eq.s32.totalorder %s34, 2
      %p296 = por %p294, %p295
      %p297 = scmp.ne.s32.totalorder %s286, %s287
      %p298 = scmp.eq.s32.totalorder %s34, 0
      %p299 = por %p297, %p298
      %p300 = scmp.ne.s32.totalorder %s286, %s287
      %p301 = scmp.eq.s32.totalorder %s35, 2
      %p302 = por %p300, %p301
      %p304 = scmp.ne.s32.totalorder %s287, %s303
      %p305 = scmp.eq.s32.totalorder %s35, 0
      %p306 = por %p304, %p305
      %s307 = ssub.s32 %s36, %s48
      %p308 = scmp.eq.s32.totalorder %s307, 0
      %s310 = sadd.s32 %s309, 1
      %s311 = scalar_select %p308, %s309, %s310
      %p314 = pneg %p308
      %p315 = scmp.eq.s32.totalorder %s29, 2
      %p316 = por %p314, %p315
      %p317 = scmp.ne.s32.totalorder %s309, %s312
      %p318 = scmp.eq.s32.totalorder %s29, 0
      %p319 = por %p317, %p318
      %p320 = scmp.ne.s32.totalorder %s309, %s312
      %p321 = scmp.eq.s32.totalorder %s34, 2
      %p322 = por %p320, %p321
      %p323 = scmp.ne.s32.totalorder %s312, %s313
      %p324 = scmp.eq.s32.totalorder %s34, 0
      %p325 = por %p323, %p324
      %p326 = scmp.ne.s32.totalorder %s312, %s313
      %p327 = scmp.eq.s32.totalorder %s35, 2
      %p328 = por %p326, %p327
      %p330 = scmp.ne.s32.totalorder %s313, %s329
      %p331 = scmp.eq.s32.totalorder %s35, 0
      %p332 = por %p330, %p331
      %s333 = ssub.s32 %s36, %s48
      %p334 = scmp.eq.s32.totalorder %s333, 0
      %s336 = sadd.s32 %s335, 1
      %s337 = scalar_select %p334, %s335, %s336
      %p340 = pneg %p334
      %p341 = scmp.eq.s32.totalorder %s29, 2
      %p342 = por %p340, %p341
      %p343 = scmp.ne.s32.totalorder %s335, %s338
      %p344 = scmp.eq.s32.totalorder %s29, 0
      %p345 = por %p343, %p344
      %p346 = scmp.ne.s32.totalorder %s335, %s338
      %p347 = scmp.eq.s32.totalorder %s34, 2
      %p348 = por %p346, %p347
      %p349 = scmp.ne.s32.totalorder %s338, %s339
      %p350 = scmp.eq.s32.totalorder %s34, 0
      %p351 = por %p349, %p350
      %p352 = scmp.ne.s32.totalorder %s338, %s339
      %p353 = scmp.eq.s32.totalorder %s35, 2
      %p354 = por %p352, %p353
      %p356 = scmp.ne.s32.totalorder %s339, %s355
      %p357 = scmp.eq.s32.totalorder %s35, 0
      %p358 = por %p356, %p357
      %s359 = ssub.s32 %s36, %s48
      %p360 = scmp.eq.s32.totalorder %s359, 0
      %s362 = sadd.s32 %s361, 1
      %s363 = scalar_select %p360, %s361, %s362
      %p366 = pneg %p360
      %p367 = scmp.eq.s32.totalorder %s29, 2
      %p368 = por %p366, %p367
      %p369 = scmp.ne.s32.totalorder %s361, %s364
      %p370 = scmp.eq.s32.totalorder %s29, 0
      %p371 = por %p369, %p370
      %p372 = scmp.ne.s32.totalorder %s361, %s364
      %p373 = scmp.eq.s32.totalorder %s34, 2
      %p374 = por %p372, %p373
      %p375 = scmp.ne.s32.totalorder %s364, %s365
      %p376 = scmp.eq.s32.totalorder %s34, 0
      %p377 = por %p375, %p376
      %p378 = scmp.ne.s32.totalorder %s364, %s365
      %p379 = scmp.eq.s32.totalorder %s35, 2
      %p380 = por %p378, %p379
      %p382 = scmp.ne.s32.totalorder %s365, %s381
      %p383 = scmp.eq.s32.totalorder %s35, 0
      %p384 = por %p382, %p383
      %p385 = scmp.le.s32.totalorder 1, %s29
      %p386 = scmp.lt.s32.totalorder %s29, 4
      %p387 = pnand %p385, %p386
      %p388 = pneg %p387
      // Predicated region
      $region9: #{actor_forward.1} parent=5 // pred_check
        _
      $region10: #{actor_forward.1} parent=5 // pred_check_branch
        %390 = sbr.rel (%p387) target = $region12
      $region11: #{actor_forward.1} parent=5 // pred_region
        %s391 = ssub.s32 %s29, 1
        // Predicated region
        $region13: #{actor_forward.1} parent=11 // pred_check
          %p392 = pneg %p62
        $region14: #{actor_forward.1} parent=11 // pred_check_branch
          %394 = sbr.rel (%p392) target = $region16
        $region15: #{actor_forward.1} parent=11 // pred_region
          _
        $region16: #{actor_forward.1} parent=11 // pred_fallthru
          _
        // Predicated region
        $region17: #{actor_forward.1} parent=11 // pred_check
          %p395 = pneg %p83
        $region18: #{actor_forward.1} parent=11 // pred_check_branch
          %397 = sbr.rel (%p395) target = $region20
        $region19: #{actor_forward.1} parent=11 // pred_region
          %s399 = ssub.s32 192, 192
          %400 = vsyncadd [#allocation5], %s399
          %s401 = sshll.u32 [#allocation4], 4
          %s402 = int_to_ptr.vmem [resolvable:$true] %s401
          %407 = dma.hbm_to_vmem [thread:$0]  %s1, 192, %s402, [#allocation5], 64, 64, 4
        $region20: #{actor_forward.1} parent=11 // pred_fallthru
          _
        // Predicated region
        $region21: #{actor_forward.1} parent=11 // pred_check
          %p408 = pneg %p104
        $region22: #{actor_forward.1} parent=11 // pred_check_branch
          %410 = sbr.rel (%p408) target = $region24
        $region23: #{actor_forward.1} parent=11 // pred_region
          %s412 = ssub.s32 3072, 3072
          %413 = vsyncadd [#allocation8], %s412
          %s414 = sshll.u32 [#allocation7], 4
          %s415 = int_to_ptr.vmem [resolvable:$true] %s414
          %420 = dma.hbm_to_vmem [thread:$0]  %s2, 3072, %s415, [#allocation8], 128, 128, 8
        $region24: #{actor_forward.1} parent=11 // pred_fallthru
          _
        // Predicated region
        $region25: #{actor_forward.1} parent=11 // pred_check
          %p421 = pneg %p125
        $region26: #{actor_forward.1} parent=11 // pred_check_branch
          %423 = sbr.rel (%p421) target = $region28
        $region27: #{actor_forward.1} parent=11 // pred_region
          %s425 = ssub.s32 3072, 3072
          %426 = vsyncadd [#allocation8], %s425
          %s427 = sshll.u32 [#allocation9], 4
          %s428 = int_to_ptr.vmem [resolvable:$true] %s427
          %433 = dma.hbm_to_vmem [thread:$0]  %s3, 3072, %s428, [#allocation8], 128, 128, 8
        $region28: #{actor_forward.1} parent=11 // pred_fallthru
          _
        // Predicated region
        $region29: #{actor_forward.1} parent=11 // pred_check
          %p434 = pneg %p146
        $region30: #{actor_forward.1} parent=11 // pred_check_branch
          %436 = sbr.rel (%p434) target = $region32
        $region31: #{actor_forward.1} parent=11 // pred_region
          %s438 = ssub.s32 48, 48
          %439 = vsyncadd [#allocation11], %s438
          %s441 = sshll.u32 [#allocation10], 4
          %s442 = int_to_ptr.vmem [resolvable:$true] %s441
          %444 = dma.hbm_to_vmem [thread:$0]  %s4, 48, %s442, [#allocation11]
        $region32: #{actor_forward.1} parent=11 // pred_fallthru
          _
        // Predicated region
        $region33: #{actor_forward.1} parent=11 // pred_check
          %p445 = pneg %p172
        $region34: #{actor_forward.1} parent=11 // pred_check_branch
          %447 = sbr.rel (%p445) target = $region36
        $region35: #{actor_forward.1} parent=11 // pred_region
          %s448 = smul.u32 8, %s38
          %s450 = ssub.s32 128, 128
          %451 = vsyncadd [#allocation11], %s450
          %s452 = smul.addr %s448, 16
          %s453 = scalar_lea.hbm %s5, %s452
          %s455 = sshll.u32 [#allocation12], 4
          %s456 = int_to_ptr.vmem [resolvable:$true] %s455
          %458 = dma.hbm_to_vmem [thread:$0]  %s453, 128, %s456, [#allocation11]
        $region36: #{actor_forward.1} parent=11 // pred_fallthru
          _
        // Predicated region
        $region37: #{actor_forward.1} parent=11 // pred_check
          %p459 = pneg %p226
        $region38: #{actor_forward.1} parent=11 // pred_check_branch
          %461 = sbr.rel (%p459) target = $region40
        $region39: #{actor_forward.1} parent=11 // pred_region
          %s462 = smul.u32 8, %s38
          %s464 = ssub.s32 32768, 32768
          %465 = vsyncadd [#allocation14], %s464
          %s466 = smul.addr %s462, 128
          %s467 = scalar_lea.hbm %s7, %s466
          %s468 = sshll.u32 [#allocation15], 4
          %s469 = int_to_ptr.vmem [resolvable:$true] %s468
          %474 = dma.hbm_to_vmem [thread:$0]  %s467, 32768, %s469, [#allocation14], 1024, 1024, 64
        $region40: #{actor_forward.1} parent=11 // pred_fallthru
          _
        // Predicated region
        $region41: #{actor_forward.1} parent=11 // pred_check
          %p475 = pneg %p247
        $region42: #{actor_forward.1} parent=11 // pred_check_branch
          %477 = sbr.rel (%p475) target = $region44
        $region43: #{actor_forward.1} parent=11 // pred_region
          %s479 = ssub.s32 64, 64
          %480 = vsyncadd [#allocation17], %s479
          %s482 = sshll.u32 [#allocation16], 4
          %s483 = int_to_ptr.vmem [resolvable:$true] %s482
          %485 = dma.hbm_to_vmem [thread:$0]  %s8, 64, %s483, [#allocation17]
        $region44: #{actor_forward.1} parent=11 // pred_fallthru
          _
        // Predicated region
        $region45: #{actor_forward.1} parent=11 // pred_check
          %p486 = pneg %p273
        $region46: #{actor_forward.1} parent=11 // pred_check_branch
          %488 = sbr.rel (%p486) target = $region48
        $region47: #{actor_forward.1} parent=11 // pred_region
          %s489 = smul.u32 2, %s38
          %s491 = ssub.s32 64, 64
          %492 = vsyncadd [#allocation17], %s491
          %s493 = smul.addr %s489, 32
          %s494 = scalar_lea.hbm %s9, %s493
          %s496 = sshll.u32 [#allocation18], 4
          %s497 = int_to_ptr.vmem [resolvable:$true] %s496
          %499 = dma.hbm_to_vmem [thread:$0]  %s494, 64, %s497, [#allocation17]
        $region48: #{actor_forward.1} parent=11 // pred_fallthru
          _
        // Predicated region
        $region49: #{actor_forward.1} parent=11 // pred_check
          %p500 = pneg %p299
        $region50: #{actor_forward.1} parent=11 // pred_check_branch
          %502 = sbr.rel (%p500) target = $region52
        $region51: #{actor_forward.1} parent=11 // pred_region
          %s503 = smul.u32 32, %s38
          %p504 = scmp.lt.s32.totalorder %s503, 31
          %s505 = scalar_select %p504, %s503, 31
          %s506 = smul.addr %s505, 8
          %s507 = scalar_lea.vmem %s10, %s506
          %s508 = smul.u32 32, %s38
        $region52: #{actor_forward.1} parent=11 // pred_fallthru
          _
      $region12: #{actor_forward.1} parent=5 // pred_fallthru
        _
      %p509 = scmp.lt.s32.totalorder %s29, 3
      // Predicated region
      $region53: #{actor_forward.1} parent=5 // pred_check
        %p510 = pneg %p509
      $region54: #{actor_forward.1} parent=5 // pred_check_branch
        %512 = sbr.rel (%p510) target = $region56
      $region55: #{actor_forward.1} parent=5 // pred_region
        // Predicated region
        $region57: #{actor_forward.1} parent=55 // pred_check
          %p513 = pneg %p194
        $region58: #{actor_forward.1} parent=55 // pred_check_branch
          %515 = sbr.rel (%p513) target = $region60
        $region59: #{actor_forward.1} parent=55 // pred_region
          %s516 = sand.u32 %s29, 1
          %s517 = scalar_lea.sflag [#allocation14], %s516
          %s518 = sand.u32 %s184, 1
          %s519 = smul.addr %s518, 4096
          %s520 = scalar_lea.vmem [#allocation13], %s519
          %s521 = smul.u32 128, %s37
          %s522 = smul.u32 8, %s36
          %s524 = ssub.s32 65536, 65536
          %525 = vsyncadd %s517, %s524
          %s526 = smul.addr %s521, 8
          %s527 = sadd.s32 %s522, %s526
          %s528 = smul.addr %s527, 64
          %s529 = scalar_lea.hbm %s6, %s528
          %s530 = sshll.u32 %s520, 4
          %s531 = int_to_ptr.vmem [resolvable:$true] %s530
          %536 = dma.hbm_to_vmem [thread:$0]  %s529, 65536, %s531, %s517, 512, 512, 32
        $region60: #{actor_forward.1} parent=55 // pred_fallthru
          _
      $region56: #{actor_forward.1} parent=5 // pred_fallthru
        _
      %p537 = scmp.le.s32.totalorder 1, %s29
      %p538 = scmp.lt.s32.totalorder %s29, 4
      %p539 = pnand %p537, %p538
      %p540 = pneg %p539
      // Predicated region
      $region61: #{actor_forward.1} parent=5 // pred_check
        _
      $region62: #{actor_forward.1} parent=5 // pred_check_branch
        %542 = sbr.rel (%p539) target = $region64
      $region63: #{actor_forward.1} parent=5 // pred_region
        %s543 = ssub.s32 %s29, 1
        // Predicated region
        $region65: #{actor_forward.1} parent=63 // pred_check
          %p544 = pneg %p83
        $region66: #{actor_forward.1} parent=63 // pred_check_branch
          %546 = sbr.rel (%p544) target = $region68
        $region67: #{actor_forward.1} parent=63 // pred_region
          %547 = dma.done [#allocation5], 192
        $region68: #{actor_forward.1} parent=63 // pred_fallthru
          _
        // Predicated region
        $region69: #{actor_forward.1} parent=63 // pred_check
          %p548 = pneg %p104
        $region70: #{actor_forward.1} parent=63 // pred_check_branch
          %550 = sbr.rel (%p548) target = $region72
        $region71: #{actor_forward.1} parent=63 // pred_region
          %551 = dma.done [#allocation8], 3072
        $region72: #{actor_forward.1} parent=63 // pred_fallthru
          _
        // Predicated region
        $region73: #{actor_forward.1} parent=63 // pred_check
          %p552 = pneg %p125
        $region74: #{actor_forward.1} parent=63 // pred_check_branch
          %554 = sbr.rel (%p552) target = $region76
        $region75: #{actor_forward.1} parent=63 // pred_region
          %555 = dma.done [#allocation8], 3072
        $region76: #{actor_forward.1} parent=63 // pred_fallthru
          _
        // Predicated region
        $region77: #{actor_forward.1} parent=63 // pred_check
          %p556 = pneg %p146
        $region78: #{actor_forward.1} parent=63 // pred_check_branch
          %558 = sbr.rel (%p556) target = $region80
        $region79: #{actor_forward.1} parent=63 // pred_region
          %559 = dma.done [#allocation11], 48
        $region80: #{actor_forward.1} parent=63 // pred_fallthru
          _
        // Predicated region
        $region81: #{actor_forward.1} parent=63 // pred_check
          %p560 = pneg %p172
        $region82: #{actor_forward.1} parent=63 // pred_check_branch
          %562 = sbr.rel (%p560) target = $region84
        $region83: #{actor_forward.1} parent=63 // pred_region
          %563 = dma.done [#allocation11], 128
        $region84: #{actor_forward.1} parent=63 // pred_fallthru
          _
        %s564 = sand.u32 %s34, 1
        %s565 = scalar_lea.sflag [#allocation14], %s564
        %s566 = sand.u32 %s187, 1
        %s567 = smul.addr %s566, 4096
        %s568 = scalar_lea.vmem [#allocation13], %s567
        // Predicated region
        $region85: #{actor_forward.1} parent=63 // pred_check
          %p569 = pneg %p200
        $region86: #{actor_forward.1} parent=63 // pred_check_branch
          %571 = sbr.rel (%p569) target = $region88
        $region87: #{actor_forward.1} parent=63 // pred_region
          %572 = dma.done %s565, 65536
        $region88: #{actor_forward.1} parent=63 // pred_fallthru
          _
        // Predicated region
        $region89: #{actor_forward.1} parent=63 // pred_check
          %p573 = pneg %p226
        $region90: #{actor_forward.1} parent=63 // pred_check_branch
          %575 = sbr.rel (%p573) target = $region92
        $region91: #{actor_forward.1} parent=63 // pred_region
          %576 = dma.done [#allocation14], 32768
        $region92: #{actor_forward.1} parent=63 // pred_fallthru
          _
        // Predicated region
        $region93: #{actor_forward.1} parent=63 // pred_check
          %p577 = pneg %p247
        $region94: #{actor_forward.1} parent=63 // pred_check_branch
          %579 = sbr.rel (%p577) target = $region96
        $region95: #{actor_forward.1} parent=63 // pred_region
          %580 = dma.done [#allocation17], 64
        $region96: #{actor_forward.1} parent=63 // pred_fallthru
          _
        // Predicated region
        $region97: #{actor_forward.1} parent=63 // pred_check
          %p581 = pneg %p273
        $region98: #{actor_forward.1} parent=63 // pred_check_branch
          %583 = sbr.rel (%p581) target = $region100
        $region99: #{actor_forward.1} parent=63 // pred_region
          %584 = dma.done [#allocation17], 64
        $region100: #{actor_forward.1} parent=63 // pred_fallthru
          _
        %p585 = pneg %p62
        %p586 = pneg %p59
        %p587 = pneg %p83
        %p588 = pneg %p80
        %p589 = pneg %p104
        %p590 = pneg %p101
        %p591 = pneg %p125
        %p592 = pneg %p122
        %p593 = pneg %p146
        %p594 = pneg %p143
        %p595 = pneg %p172
        %p596 = pneg %p169
        %s597 = sand.u32 %s34, 1
        %s598 = scalar_lea.sflag [#allocation14], %s597
        %s599 = sand.u32 %s187, 1
        %s600 = smul.addr %s599, 4096
        %s601 = scalar_lea.vmem [#allocation13], %s600
        %p602 = pneg %p200
        %p603 = pneg %p197
        %p604 = pneg %p226
        %p605 = pneg %p223
        %p606 = pneg %p247
        %p607 = pneg %p244
        %p608 = pneg %p273
        %p609 = pneg %p270
        %s610 = smul.u32 32, %s38
        %p611 = scmp.lt.s32.totalorder %s610, 31
        %s612 = scalar_select %p611, %s610, 31
        %s613 = smul.addr %s612, 8
        %s614 = scalar_lea.vmem %s10, %s613
        %p615 = pneg %p299
        %p616 = pneg %p296
        %p617 = pneg %p325
        %p618 = pneg %p322
        %p619 = scmp.lt.s32.totalorder %s38, 0
        %s620 = scalar_select %p619, %s38, 0
        %s621 = smul.addr %s620, 2
        %s622 = scalar_lea.vmem %s11, %s621
        %p623 = pneg %p351
        %p624 = pneg %p348
        %p625 = pneg %p377
        %p626 = pneg %p374
        %s627 = smul.u32 8, %s38
        %s628 = smul.u32 128, %s39
        %s629 = smul.u32 8, %s38
        %s630 = smul.u32 8, %s38
        %s631 = smul.u32 2, %s38
        %s632 = smul.u32 32, %s38
        %p633 = scmp.lt.s32.totalorder %s632, 31
        %s634 = scalar_select %p633, %s632, 31
        %s635 = smul.addr %s634, 8
        %s636 = scalar_lea.vmem %s10, %s635
        %s637 = smul.u32 32, %s38
        %p638 = scmp.lt.s32.totalorder %s38, 0
        %s639 = scalar_select %p638, %s38, 0
        %s640 = smul.addr %s639, 2
        %s641 = scalar_lea.vmem %s11, %s640
        %s642 = smul.u32 2, %s38
        %s643 = smul.u32 2, %s38
        %p645 = scmp.eq.s32.totalorder %s39, 0
        // Predicated region
        $region101: #{actor_forward.1} parent=63 // pred_check
          %p646 = pneg %p645
        $region102: #{actor_forward.1} parent=63 // pred_check_branch
          %648 = sbr.rel (%p646) target = $region104
        $region103: #{actor_forward.1} parent=63 // pred_region
          %v649 = vld [vmem:[%s0] sm:$0xff]
          %v650 = vld [vmem:[%s0 + $0x8] sm:$0xff]
          %v651 = vld [vmem:[%s0 + $0x10] sm:$0xff]
          %v652 = vld [vmem:[%s0 + $0x18] sm:$0xff]
          %v653 = vld [vmem:[%s0 + $0x20] sm:$0xff]
          %v654 = vld [vmem:[%s0 + $0x28] sm:$0xff]
          %v655 = vld [vmem:[%s0 + $0x30] sm:$0xff]
          %v656 = vld [vmem:[%s0 + $0x38] sm:$0xff]
          %v657 = vld [vmem:[%s0 + $0x40] sm:$0xff]
          %v658 = vld [vmem:[%s0 + $0x48] sm:$0xff]
          %v659 = vld [vmem:[%s0 + $0x50] sm:$0xff]
          %v660 = vld [vmem:[%s0 + $0x58] sm:$0xff]
          %v661 = vld [vmem:[%s0 + $0x60] sm:$0xff]
          %v662 = vld [vmem:[%s0 + $0x68] sm:$0xff]
          %v663 = vld [vmem:[%s0 + $0x70] sm:$0xff]
          %v664 = vld [vmem:[%s0 + $0x78] sm:$0xff]
          %v665 = vld [vmem:[%s0 + $0x80] sm:$0xff]
          %v666 = vld [vmem:[%s0 + $0x88] sm:$0xff]
          %v667 = vld [vmem:[%s0 + $0x90] sm:$0xff]
          %v668 = vld [vmem:[%s0 + $0x98] sm:$0xff]
          %v669 = vld [vmem:[%s0 + $0xa0] sm:$0xff]
          %v670 = vld [vmem:[%s0 + $0xa8] sm:$0xff]
          %v671 = vld [vmem:[%s0 + $0xb0] sm:$0xff]
          %v672 = vld [vmem:[%s0 + $0xb8] sm:$0xff]
          %v673 = vld [vmem:[#allocation10] sm:$0x1]
          %v674 = vld [vmem:[#allocation4] sm:$0xf]
          %s675 = scalar_lea.vmem [#allocation4], 4
          %v676 = vld [vmem:[%s675] sm:$0xf]
          %vm677 = vcmask 31744
          %v679 = vsel %vm677, %v649, 0
          %v682 = vsel %vm677, %v650, 0
          %v685 = vsel %vm677, %v651, 0
          %v688 = vsel %vm677, %v652, 0
          %v691 = vsel %vm677, %v653, 0
          %v694 = vsel %vm677, %v654, 0
          %v697 = vsel %vm677, %v655, 0
          %v700 = vsel %vm677, %v656, 0
          %v703 = vsel %vm677, %v657, 0
          %v706 = vsel %vm677, %v658, 0
          %v709 = vsel %vm677, %v659, 0
          %v712 = vsel %vm677, %v660, 0
          %v715 = vsel %vm677, %v661, 0
          %v718 = vsel %vm677, %v662, 0
          %v721 = vsel %vm677, %v663, 0
          %v724 = vsel %vm677, %v664, 0
          %v727 = vsel %vm677, %v665, 0
          %v730 = vsel %vm677, %v666, 0
          %v733 = vsel %vm677, %v667, 0
          %v736 = vsel %vm677, %v668, 0
          %v739 = vsel %vm677, %v669, 0
          %v742 = vsel %vm677, %v670, 0
          %v745 = vsel %vm677, %v671, 0
          %v748 = vsel %vm677, %v672, 0
          %vm750 = vcmask 1043456
          %v752 = vsel %vm750, %v676, 0
          %754 = vmatprep.subr.mxu0 0.0
          %755 = vmatpush1.msra.mxu0 %v752
          %756 = vmatprep.subr.mxu0 0.0
          %757 = vmatpush1.msra.mxu0 0.0
          %758 = vmatprep.subr.mxu0 0.0
          %759 = vmatpush1.msra.mxu0 0.0
          %760 = vmatprep.subr.mxu0 0.0
          %761 = vmatpush1.msra.mxu0 0.0
          %762 = vmatprep.subr.mxu0 0.0
          %763 = vmatpush1.msra.mxu0 0.0
          %764 = vmatprep.subr.mxu0 0.0
          %765 = vmatpush1.msra.mxu0 0.0
          %766 = vmatprep.subr.mxu0 0.0
          %767 = vmatpush1.msra.mxu0 0.0
          %768 = vmatprep.subr.mxu0 0.0
          %769 = vmatpush1.msra.mxu0 0.0
          %770 = vmatprep.subr.mxu0 0.0
          %771 = vmatpush1.msra.mxu0 0.0
          %772 = vmatprep.subr.mxu0 0.0
          %773 = vmatpush1.msra.mxu0 0.0
          %774 = vmatprep.subr.mxu0 0.0
          %775 = vmatpush1.msra.mxu0 0.0
          %776 = vmatprep.subr.mxu0 0.0
          %777 = vmatpush1.msra.mxu0 0.0
          %778 = vmatprep.subr.mxu0 0.0
          %779 = vmatpush1.msra.mxu0 0.0
          %780 = vmatprep.subr.mxu0 0.0
          %781 = vmatpush1.msra.mxu0 0.0
          %782 = vmatprep.subr.mxu0 0.0
          %783 = vmatpush1.msra.mxu0 0.0
          %784 = vmatprep.subr.mxu0 0.0
          %785 = vmatpush1.msra.mxu0 0.0
          %786 = vmatprep.subr.mxu0 0.0
          %787 = vmatpush1.msra.mxu0 0.0
          %788 = vmatprep.subr.mxu0 0.0
          %789 = vmatpush1.msra.mxu0 0.0
          %790 = vmatprep.subr.mxu0 0.0
          %791 = vmatpush1.msra.mxu0 0.0
          %792 = vmatprep.subr.mxu0 0.0
          %793 = vmatpush1.msra.mxu0 0.0
          %794 = vmatprep.subr.mxu0 0.0
          %795 = vmatpush1.msra.mxu0 0.0
          %796 = vmatprep.subr.mxu0 0.0
          %797 = vmatpush1.msra.mxu0 0.0
          %798 = vmatprep.subr.mxu0 0.0
          %799 = vmatpush1.msra.mxu0 0.0
          %800 = vmatprep.subr.mxu0 0.0
          %801 = vmatpush1.msra.mxu0 0.0
          %802 = vmatprep.subr.mxu0 0.0
          %803 = vmatpush1.msra.mxu0 0.0
          %804 = vmatprep.subr.mxu0 0.0
          %805 = vmatpush1.msra.mxu0 0.0
          %806 = vmatprep.subr.mxu0 0.0
          %807 = vmatpush1.msra.mxu0 0.0
          %808 = vmatprep.subr.mxu0 0.0
          %809 = vmatpush1.msra.mxu0 0.0
          %810 = vmatprep.subr.mxu0 0.0
          %811 = vmatpush1.msra.mxu0 0.0
          %812 = vmatprep.subr.mxu0 0.0
          %813 = vmatpush1.msra.mxu0 0.0
          %814 = vmatprep.subr.mxu0 0.0
          %815 = vmatpush1.msra.mxu0 0.0
          %816 = vmatprep.subr.mxu0 0.0
          %817 = vmatpush1.msra.mxu0 0.0
          %818 = vmatprep.mubr.f32.mxu0 0.0
          %819 = vmatmul.mubr.f32.gmra.mrb[0].mxu0 %v679
          %v820 = vpop.f32.mrb[0].mxu0
          %v821 = vadd.f32 0.0, %v820
          %v822 = vpop.f32.mrb[0].mxu0
          %823 = vmatprep.mubr.f32.mxu0 0.0
          %824 = vmatmul.mubr.f32.gmra.mrb[0].mxu0 %v682
          %v825 = vpop.f32.mrb[0].mxu0
          %v826 = vadd.f32 0.0, %v825
          %v827 = vpop.f32.mrb[0].mxu0
          %828 = vmatprep.mubr.f32.mxu0 0.0
          %829 = vmatmul.mubr.f32.gmra.mrb[0].mxu0 %v685
          %v830 = vpop.f32.mrb[0].mxu0
          %v831 = vadd.f32 0.0, %v830
          %v832 = vpop.f32.mrb[0].mxu0
          %833 = vmatprep.mubr.f32.mxu0 0.0
          %834 = vmatmul.mubr.f32.gmra.mrb[0].mxu0 %v688
          %v835 = vpop.f32.mrb[0].mxu0
          %v836 = vadd.f32 0.0, %v835
          %v837 = vpop.f32.mrb[0].mxu0
          %838 = vmatprep.mubr.f32.mxu0 0.0
          %839 = vmatmul.mubr.f32.gmra.mrb[0].mxu0 %v691
          %v840 = vpop.f32.mrb[0].mxu0
          %v841 = vadd.f32 0.0, %v840
          %v842 = vpop.f32.mrb[0].mxu0
          %843 = vmatprep.mubr.f32.mxu0 0.0
          %844 = vmatmul.mubr.f32.gmra.mrb[0].mxu0 %v694
          %v845 = vpop.f32.mrb[0].mxu0
          %v846 = vadd.f32 0.0, %v845
          %v847 = vpop.f32.mrb[0].mxu0
          %848 = vmatprep.mubr.f32.mxu0 0.0
          %849 = vmatmul.mubr.f32.gmra.mrb[0].mxu0 %v697
          %v850 = vpop.f32.mrb[0].mxu0
          %v851 = vadd.f32 0.0, %v850
          %v852 = vpop.f32.mrb[0].mxu0
          %853 = vmatprep.mubr.f32.mxu0 0.0
          %854 = vmatmul.mubr.f32.gmra.mrb[0].mxu0 %v700
          %v855 = vpop.f32.mrb[0].mxu0
          %v856 = vadd.f32 0.0, %v855
          %v857 = vpop.f32.mrb[0].mxu0
          %858 = vmatprep.mubr.f32.mxu0 0.0
          %859 = vmatmul.mubr.f32.gmra.mrb[0].mxu0 %v703
          %v860 = vpop.f32.mrb[0].mxu0
          %v861 = vadd.f32 0.0, %v860
          %v862 = vpop.f32.mrb[0].mxu0
          %863 = vmatprep.mubr.f32.mxu0 0.0
          %864 = vmatmul.mubr.f32.gmra.mrb[0].mxu0 %v706
          %v865 = vpop.f32.mrb[0].mxu0
          %v866 = vadd.f32 0.0, %v865
          %v867 = vpop.f32.mrb[0].mxu0
          %868 = vmatprep.mubr.f32.mxu0 0.0
          %869 = vmatmul.mubr.f32.gmra.mrb[0].mxu0 %v709
          %v870 = vpop.f32.mrb[0].mxu0
          %v871 = vadd.f32 0.0, %v870
          %v872 = vpop.f32.mrb[0].mxu0
          %873 = vmatprep.mubr.f32.mxu0 0.0
          %874 = vmatmul.mubr.f32.gmra.mrb[0].mxu0 %v712
          %v875 = vpop.f32.mrb[0].mxu0
          %v876 = vadd.f32 0.0, %v875
          %v877 = vpop.f32.mrb[0].mxu0
          %878 = vmatprep.mubr.f32.mxu0 0.0
          %879 = vmatmul.mubr.f32.gmra.mrb[0].mxu0 %v715
          %v880 = vpop.f32.mrb[0].mxu0
          %v881 = vadd.f32 0.0, %v880
          %v882 = vpop.f32.mrb[0].mxu0
          %883 = vmatprep.mubr.f32.mxu0 0.0
          %884 = vmatmul.mubr.f32.gmra.mrb[0].mxu0 %v718
          %v885 = vpop.f32.mrb[0].mxu0
          %v886 = vadd.f32 0.0, %v885
          %v887 = vpop.f32.mrb[0].mxu0
          %888 = vmatprep.mubr.f32.mxu0 0.0
          %889 = vmatmul.mubr.f32.gmra.mrb[0].mxu0 %v721
          %v890 = vpop.f32.mrb[0].mxu0
          %v891 = vadd.f32 0.0, %v890
          %v892 = vpop.f32.mrb[0].mxu0
          %893 = vmatprep.mubr.f32.mxu0 0.0
          %894 = vmatmul.mubr.f32.gmra.mrb[0].mxu0 %v724
          %v895 = vpop.f32.mrb[0].mxu0
          %v896 = vadd.f32 0.0, %v895
          %v897 = vpop.f32.mrb[0].mxu0
          %898 = vmatprep.mubr.f32.mxu0 0.0
          %899 = vmatmul.mubr.f32.gmra.mrb[0].mxu0 %v727
          %v900 = vpop.f32.mrb[0].mxu0
          %v901 = vadd.f32 0.0, %v900
          %v902 = vpop.f32.mrb[0].mxu0
          %903 = vmatprep.mubr.f32.mxu0 0.0
          %904 = vmatmul.mubr.f32.gmra.mrb[0].mxu0 %v730
          %v905 = vpop.f32.mrb[0].mxu0
          %v906 = vadd.f32 0.0, %v905
          %v907 = vpop.f32.mrb[0].mxu0
          %908 = vmatprep.mubr.f32.mxu0 0.0
          %909 = vmatmul.mubr.f32.gmra.mrb[0].mxu0 %v733
          %v910 = vpop.f32.mrb[0].mxu0
          %v911 = vadd.f32 0.0, %v910
          %v912 = vpop.f32.mrb[0].mxu0
          %913 = vmatprep.mubr.f32.mxu0 0.0
          %914 = vmatmul.mubr.f32.gmra.mrb[0].mxu0 %v736
          %v915 = vpop.f32.mrb[0].mxu0
          %v916 = vadd.f32 0.0, %v915
          %v917 = vpop.f32.mrb[0].mxu0
          %918 = vmatprep.mubr.f32.mxu0 0.0
          %919 = vmatmul.mubr.f32.gmra.mrb[0].mxu0 %v739
          %v920 = vpop.f32.mrb[0].mxu0
          %v921 = vadd.f32 0.0, %v920
          %v922 = vpop.f32.mrb[0].mxu0
          %923 = vmatprep.mubr.f32.mxu0 0.0
          %924 = vmatmul.mubr.f32.gmra.mrb[0].mxu0 %v742
          %v925 = vpop.f32.mrb[0].mxu0
          %v926 = vadd.f32 0.0, %v925
          %v927 = vpop.f32.mrb[0].mxu0
          %928 = vmatprep.mubr.f32.mxu0 0.0
          %929 = vmatmul.mubr.f32.gmra.mrb[0].mxu0 %v745
          %v930 = vpop.f32.mrb[0].mxu0
          %v931 = vadd.f32 0.0, %v930
          %v932 = vpop.f32.mrb[0].mxu0
          %933 = vmatprep.mubr.f32.mxu0 0.0
          %934 = vmatmul.mubr.f32.gmra.mrb[0].mxu0 %v748
          %v935 = vpop.f32.mrb[0].mxu0
          %v936 = vadd.f32 0.0, %v935
          %v937 = vpop.f32.mrb[0].mxu0
          %938 = vdwg.mxu0
          %v940 = vsel %vm677, 0.0, 0
          %v943 = vsel %vm750, %v674, 0
          %945 = vmatprep.subr.mxu0 0.0
          %946 = vmatpush1.msra.mxu0 %v943
          %947 = vmatprep.subr.mxu0 0.0
          %948 = vmatpush1.msra.mxu0 0.0
          %949 = vmatprep.subr.mxu0 0.0
          %950 = vmatpush1.msra.mxu0 0.0
          %951 = vmatprep.subr.mxu0 0.0
          %952 = vmatpush1.msra.mxu0 0.0
          %953 = vmatprep.subr.mxu0 0.0
          %954 = vmatpush1.msra.mxu0 0.0
          %955 = vmatprep.subr.mxu0 0.0
          %956 = vmatpush1.msra.mxu0 0.0
          %957 = vmatprep.subr.mxu0 0.0
          %958 = vmatpush1.msra.mxu0 0.0
          %959 = vmatprep.subr.mxu0 0.0
          %960 = vmatpush1.msra.mxu0 0.0
          %961 = vmatprep.subr.mxu0 0.0
          %962 = vmatpush1.msra.mxu0 0.0
          %963 = vmatprep.subr.mxu0 0.0
          %964 = vmatpush1.msra.mxu0 0.0
          %965 = vmatprep.subr.mxu0 0.0
          %966 = vmatpush1.msra.mxu0 0.0
          %967 = vmatprep.subr.mxu0 0.0
          %968 = vmatpush1.msra.mxu0 0.0
          %969 = vmatprep.subr.mxu0 0.0
          %970 = vmatpush1.msra.mxu0 0.0
          %971 = vmatprep.subr.mxu0 0.0
          %972 = vmatpush1.msra.mxu0 0.0
          %973 = vmatprep.subr.mxu0 0.0
          %974 = vmatpush1.msra.mxu0 0.0
          %975 = vmatprep.subr.mxu0 0.0
          %976 = vmatpush1.msra.mxu0 0.0
          %977 = vmatprep.subr.mxu0 0.0
          %978 = vmatpush1.msra.mxu0 0.0
          %979 = vmatprep.subr.mxu0 0.0
          %980 = vmatpush1.msra.mxu0 0.0
          %981 = vmatprep.subr.mxu0 0.0
          %982 = vmatpush1.msra.mxu0 0.0
          %983 = vmatprep.subr.mxu0 0.0
          %984 = vmatpush1.msra.mxu0 0.0
          %985 = vmatprep.subr.mxu0 0.0
          %986 = vmatpush1.msra.mxu0 0.0
          %987 = vmatprep.subr.mxu0 0.0
          %988 = vmatpush1.msra.mxu0 0.0
          %989 = vmatprep.subr.mxu0 0.0
          %990 = vmatpush1.msra.mxu0 0.0
          %991 = vmatprep.subr.mxu0 0.0
          %992 = vmatpush1.msra.mxu0 0.0
          %993 = vmatprep.subr.mxu0 0.0
          %994 = vmatpush1.msra.mxu0 0.0
          %995 = vmatprep.subr.mxu0 0.0
          %996 = vmatpush1.msra.mxu0 0.0
          %997 = vmatprep.subr.mxu0 0.0
          %998 = vmatpush1.msra.mxu0 0.0
          %999 = vmatprep.subr.mxu0 0.0
          %1000 = vmatpush1.msra.mxu0 0.0
          %1001 = vmatprep.subr.mxu0 0.0
          %1002 = vmatpush1.msra.mxu0 0.0
          %1003 = vmatprep.subr.mxu0 0.0
          %1004 = vmatpush1.msra.mxu0 0.0
          %1005 = vmatprep.subr.mxu0 0.0
          %1006 = vmatpush1.msra.mxu0 0.0
          %1007 = vmatprep.subr.mxu0 0.0
          %1008 = vmatpush1.msra.mxu0 0.0
          %1009 = vmatprep.mubr.f32.mxu0 0.0
          %1010 = vmatmul.mubr.f32.gmra.mrb[0].mxu0 %v940
          %v1011 = vpop.f32.mrb[0].mxu0
          %v1012 = vadd.f32 %v821, %v1011
          %v1013 = vpop.f32.mrb[0].mxu0
          %1014 = vmatprep.mubr.f32.mxu0 0.0
          %1015 = vmatmul.mubr.f32.gmra.mrb[0].mxu0 %v679
          %v1016 = vpop.f32.mrb[0].mxu0
          %v1017 = vadd.f32 %v826, %v1016
          %v1018 = vpop.f32.mrb[0].mxu0
          %1019 = vmatprep.mubr.f32.mxu0 0.0
          %1020 = vmatmul.mubr.f32.gmra.mrb[0].mxu0 %v682
          %v1021 = vpop.f32.mrb[0].mxu0
          %v1022 = vadd.f32 %v831, %v1021
          %v1023 = vpop.f32.mrb[0].mxu0
          %1024 = vmatprep.mubr.f32.mxu0 0.0
          %1025 = vmatmul.mubr.f32.gmra.mrb[0].mxu0 %v685
          %v1026 = vpop.f32.mrb[0].mxu0
          %v1027 = vadd.f32 %v836, %v1026
          %v1028 = vpop.f32.mrb[0].mxu0
          %1029 = vmatprep.mubr.f32.mxu0 0.0
          %1030 = vmatmul.mubr.f32.gmra.mrb[0].mxu0 %v688
          %v1031 = vpop.f32.mrb[0].mxu0
          %v1032 = vadd.f32 %v841, %v1031
          %v1033 = vpop.f32.mrb[0].mxu0
          %1034 = vmatprep.mubr.f32.mxu0 0.0
          %1035 = vmatmul.mubr.f32.gmra.mrb[0].mxu0 %v691
          %v1036 = vpop.f32.mrb[0].mxu0
          %v1037 = vadd.f32 %v846, %v1036
          %v1038 = vpop.f32.mrb[0].mxu0
          %1039 = vmatprep.mubr.f32.mxu0 0.0
          %1040 = vmatmul.mubr.f32.gmra.mrb[0].mxu0 %v694
          %v1041 = vpop.f32.mrb[0].mxu0
          %v1042 = vadd.f32 %v851, %v1041
          %v1043 = vpop.f32.mrb[0].mxu0
          %1044 = vmatprep.mubr.f32.mxu0 0.0
          %1045 = vmatmul.mubr.f32.gmra.mrb[0].mxu0 %v697
          %v1046 = vpop.f32.mrb[0].mxu0
          %v1047 = vadd.f32 %v856, %v1046
          %v1048 = vpop.f32.mrb[0].mxu0
          %1049 = vmatprep.mubr.f32.mxu0 0.0
          %1050 = vmatmul.mubr.f32.gmra.mrb[0].mxu0 %v700
          %v1051 = vpop.f32.mrb[0].mxu0
          %v1052 = vadd.f32 %v861, %v1051
          %v1053 = vpop.f32.mrb[0].mxu0
          %1054 = vmatprep.mubr.f32.mxu0 0.0
          %1055 = vmatmul.mubr.f32.gmra.mrb[0].mxu0 %v703
          %v1056 = vpop.f32.mrb[0].mxu0
          %v1057 = vadd.f32 %v866, %v1056
          %v1058 = vpop.f32.mrb[0].mxu0
          %1059 = vmatprep.mubr.f32.mxu0 0.0
          %1060 = vmatmul.mubr.f32.gmra.mrb[0].mxu0 %v706
          %v1061 = vpop.f32.mrb[0].mxu0
          %v1062 = vadd.f32 %v871, %v1061
          %v1063 = vpop.f32.mrb[0].mxu0
          %1064 = vmatprep.mubr.f32.mxu0 0.0
          %1065 = vmatmul.mubr.f32.gmra.mrb[0].mxu0 %v709
          %v1066 = vpop.f32.mrb[0].mxu0
          %v1067 = vadd.f32 %v876, %v1066
          %v1068 = vpop.f32.mrb[0].mxu0
          %1069 = vmatprep.mubr.f32.mxu0 0.0
          %1070 = vmatmul.mubr.f32.gmra.mrb[0].mxu0 %v712
          %v1071 = vpop.f32.mrb[0].mxu0
          %v1072 = vadd.f32 %v881, %v1071
          %v1073 = vpop.f32.mrb[0].mxu0
          %1074 = vmatprep.mubr.f32.mxu0 0.0
          %1075 = vmatmul.mubr.f32.gmra.mrb[0].mxu0 %v715
          %v1076 = vpop.f32.mrb[0].mxu0
          %v1077 = vadd.f32 %v886, %v1076
          %v1078 = vpop.f32.mrb[0].mxu0
          %1079 = vmatprep.mubr.f32.mxu0 0.0
          %1080 = vmatmul.mubr.f32.gmra.mrb[0].mxu0 %v718
          %v1081 = vpop.f32.mrb[0].mxu0
          %v1082 = vadd.f32 %v891, %v1081
          %v1083 = vpop.f32.mrb[0].mxu0
          %1084 = vmatprep.mubr.f32.mxu0 0.0
          %1085 = vmatmul.mubr.f32.gmra.mrb[0].mxu0 %v721
          %v1086 = vpop.f32.mrb[0].mxu0
          %v1087 = vadd.f32 %v896, %v1086
          %v1088 = vpop.f32.mrb[0].mxu0
          %1089 = vmatprep.mubr.f32.mxu0 0.0
          %1090 = vmatmul.mubr.f32.gmra.mrb[0].mxu0 %v724
          %v1091 = vpop.f32.mrb[0].mxu0
          %v1092 = vadd.f32 %v901, %v1091
          %v1093 = vpop.f32.mrb[0].mxu0
          %1094 = vmatprep.mubr.f32.mxu0 0.0
          %1095 = vmatmul.mubr.f32.gmra.mrb[0].mxu0 %v727
          %v1096 = vpop.f32.mrb[0].mxu0
          %v1097 = vadd.f32 %v906, %v1096
          %v1098 = vpop.f32.mrb[0].mxu0
          %1099 = vmatprep.mubr.f32.mxu0 0.0
          %1100 = vmatmul.mubr.f32.gmra.mrb[0].mxu0 %v730
          %v1101 = vpop.f32.mrb[0].mxu0
          %v1102 = vadd.f32 %v911, %v1101
          %v1103 = vpop.f32.mrb[0].mxu0
          %1104 = vmatprep.mubr.f32.mxu0 0.0
          %1105 = vmatmul.mubr.f32.gmra.mrb[0].mxu0 %v733
          %v1106 = vpop.f32.mrb[0].mxu0
          %v1107 = vadd.f32 %v916, %v1106
          %v1108 = vpop.f32.mrb[0].mxu0
          %1109 = vmatprep.mubr.f32.mxu0 0.0
          %1110 = vmatmul.mubr.f32.gmra.mrb[0].mxu0 %v736
          %v1111 = vpop.f32.mrb[0].mxu0
          %v1112 = vadd.f32 %v921, %v1111
          %v1113 = vpop.f32.mrb[0].mxu0
          %1114 = vmatprep.mubr.f32.mxu0 0.0
          %1115 = vmatmul.mubr.f32.gmra.mrb[0].mxu0 %v739
          %v1116 = vpop.f32.mrb[0].mxu0
          %v1117 = vadd.f32 %v926, %v1116
          %v1118 = vpop.f32.mrb[0].mxu0
          %1119 = vmatprep.mubr.f32.mxu0 0.0
          %1120 = vmatmul.mubr.f32.gmra.mrb[0].mxu0 %v742
          %v1121 = vpop.f32.mrb[0].mxu0
          %v1122 = vadd.f32 %v931, %v1121
          %v1123 = vpop.f32.mrb[0].mxu0
          %1124 = vmatprep.mubr.f32.mxu0 0.0
          %1125 = vmatmul.mubr.f32.gmra.mrb[0].mxu0 %v745
          %v1126 = vpop.f32.mrb[0].mxu0
          %v1127 = vadd.f32 %v936, %v1126
          %v1128 = vpop.f32.mrb[0].mxu0
          %1129 = vdwg.mxu0
          %s1130 = scalar_lea.vmem [#allocation4], 8
          %v1131 = vld [vmem:[%s1130] sm:$0xf]
          %v1133 = vsel %vm750, %v1131, 0
          %1135 = vmatprep.subr.mxu0 0.0
          %1136 = vmatpush1.msra.mxu0 %v1133
          %1137 = vmatprep.subr.mxu0 0.0
          %1138 = vmatpush1.msra.mxu0 0.0
          %1139 = vmatprep.subr.mxu0 0.0
          %1140 = vmatpush1.msra.mxu0 0.0
          %1141 = vmatprep.subr.mxu0 0.0
          %1142 = vmatpush1.msra.mxu0 0.0
          %1143 = vmatprep.subr.mxu0 0.0
          %1144 = vmatpush1.msra.mxu0 0.0
          %1145 = vmatprep.subr.mxu0 0.0
          %1146 = vmatpush1.msra.mxu0 0.0
          %1147 = vmatprep.subr.mxu0 0.0
          %1148 = vmatpush1.msra.mxu0 0.0
          %1149 = vmatprep.subr.mxu0 0.0
          %1150 = vmatpush1.msra.mxu0 0.0
          %1151 = vmatprep.subr.mxu0 0.0
          %1152 = vmatpush1.msra.mxu0 0.0
          %1153 = vmatprep.subr.mxu0 0.0
          %1154 = vmatpush1.msra.mxu0 0.0
          %1155 = vmatprep.subr.mxu0 0.0
          %1156 = vmatpush1.msra.mxu0 0.0
          %1157 = vmatprep.subr.mxu0 0.0
          %1158 = vmatpush1.msra.mxu0 0.0
          %1159 = vmatprep.subr.mxu0 0.0
          %1160 = vmatpush1.msra.mxu0 0.0
          %1161 = vmatprep.subr.mxu0 0.0
          %1162 = vmatpush1.msra.mxu0 0.0
          %1163 = vmatprep.subr.mxu0 0.0
          %1164 = vmatpush1.msra.mxu0 0.0
          %1165 = vmatprep.subr.mxu0 0.0
          %1166 = vmatpush1.msra.mxu0 0.0
          %1167 = vmatprep.subr.mxu0 0.0
          %1168 = vmatpush1.msra.mxu0 0.0
          %1169 = vmatprep.subr.mxu0 0.0
          %1170 = vmatpush1.msra.mxu0 0.0
          %1171 = vmatprep.subr.mxu0 0.0
          %1172 = vmatpush1.msra.mxu0 0.0
          %1173 = vmatprep.subr.mxu0 0.0
          %1174 = vmatpush1.msra.mxu0 0.0
          %1175 = vmatprep.subr.mxu0 0.0
          %1176 = vmatpush1.msra.mxu0 0.0
          %1177 = vmatprep.subr.mxu0 0.0
          %1178 = vmatpush1.msra.mxu0 0.0
          %1179 = vmatprep.subr.mxu0 0.0
          %1180 = vmatpush1.msra.mxu0 0.0
          %1181 = vmatprep.subr.mxu0 0.0
          %1182 = vmatpush1.msra.mxu0 0.0
          %1183 = vmatprep.subr.mxu0 0.0
          %1184 = vmatpush1.msra.mxu0 0.0
          %1185 = vmatprep.subr.mxu0 0.0
          %1186 = vmatpush1.msra.mxu0 0.0
          %1187 = vmatprep.subr.mxu0 0.0
          %1188 = vmatpush1.msra.mxu0 0.0
          %1189 = vmatprep.subr.mxu0 0.0
          %1190 = vmatpush1.msra.mxu0 0.0
          %1191 = vmatprep.subr.mxu0 0.0
          %1192 = vmatpush1.msra.mxu0 0.0
          %1193 = vmatprep.subr.mxu0 0.0
          %1194 = vmatpush1.msra.mxu0 0.0
          %1195 = vmatprep.subr.mxu0 0.0
          %1196 = vmatpush1.msra.mxu0 0.0
          %1197 = vmatprep.subr.mxu0 0.0
          %1198 = vmatpush1.msra.mxu0 0.0
          %1199 = vmatprep.mubr.f32.mxu0 0.0
          %1200 = vmatmul.mubr.f32.gmra.mrb[0].mxu0 %v682
          %v1201 = vpop.f32.mrb[0].mxu0
          %v1202 = vadd.f32 0.0, %v1201
          %v1203 = vpop.f32.mrb[0].mxu0
          %1204 = vmatprep.mubr.f32.mxu0 0.0
          %1205 = vmatmul.mubr.f32.gmra.mrb[0].mxu0 %v685
          %v1206 = vpop.f32.mrb[0].mxu0
          %v1207 = vadd.f32 0.0, %v1206
          %v1208 = vpop.f32.mrb[0].mxu0
          %1209 = vmatprep.mubr.f32.mxu0 0.0
          %1210 = vmatmul.mubr.f32.gmra.mrb[0].mxu0 %v688
          %v1211 = vpop.f32.mrb[0].mxu0
          %v1212 = vadd.f32 0.0, %v1211
          %v1213 = vpop.f32.mrb[0].mxu0
          %1214 = vmatprep.mubr.f32.mxu0 0.0
          %1215 = vmatmul.mubr.f32.gmra.mrb[0].mxu0 %v691
          %v1216 = vpop.f32.mrb[0].mxu0
          %v1217 = vadd.f32 0.0, %v1216
          %v1218 = vpop.f32.mrb[0].mxu0
          %1219 = vmatprep.mubr.f32.mxu0 0.0
          %1220 = vmatmul.mubr.f32.gmra.mrb[0].mxu0 %v694
          %v1221 = vpop.f32.mrb[0].mxu0
          %v1222 = vadd.f32 0.0, %v1221
          %v1223 = vpop.f32.mrb[0].mxu0
          %1224 = vmatprep.mubr.f32.mxu0 0.0
          %1225 = vmatmul.mubr.f32.gmra.mrb[0].mxu0 %v697
          %v1226 = vpop.f32.mrb[0].mxu0
          %v1227 = vadd.f32 0.0, %v1226
          %v1228 = vpop.f32.mrb[0].mxu0
          %1229 = vmatprep.mubr.f32.mxu0 0.0
          %1230 = vmatmul.mubr.f32.gmra.mrb[0].mxu0 %v700
          %v1231 = vpop.f32.mrb[0].mxu0
          %v1232 = vadd.f32 0.0, %v1231
          %v1233 = vpop.f32.mrb[0].mxu0
          %1234 = vmatprep.mubr.f32.mxu0 0.0
          %1235 = vmatmul.mubr.f32.gmra.mrb[0].mxu0 %v703
          %v1236 = vpop.f32.mrb[0].mxu0
          %v1237 = vadd.f32 0.0, %v1236
          %v1238 = vpop.f32.mrb[0].mxu0
          %1239 = vmatprep.mubr.f32.mxu0 0.0
          %1240 = vmatmul.mubr.f32.gmra.mrb[0].mxu0 %v706
          %v1241 = vpop.f32.mrb[0].mxu0
          %v1242 = vadd.f32 0.0, %v1241
          %v1243 = vpop.f32.mrb[0].mxu0
          %1244 = vmatprep.mubr.f32.mxu0 0.0
          %1245 = vmatmul.mubr.f32.gmra.mrb[0].mxu0 %v709
          %v1246 = vpop.f32.mrb[0].mxu0
          %v1247 = vadd.f32 0.0, %v1246
          %v1248 = vpop.f32.mrb[0].mxu0
          %1249 = vmatprep.mubr.f32.mxu0 0.0
          %1250 = vmatmul.mubr.f32.gmra.mrb[0].mxu0 %v712
          %v1251 = vpop.f32.mrb[0].mxu0
          %v1252 = vadd.f32 0.0, %v1251
          %v1253 = vpop.f32.mrb[0].mxu0
          %1254 = vmatprep.mubr.f32.mxu0 0.0
          %1255 = vmatmul.mubr.f32.gmra.mrb[0].mxu0 %v715
          %v1256 = vpop.f32.mrb[0].mxu0
          %v1257 = vadd.f32 0.0, %v1256
          %v1258 = vpop.f32.mrb[0].mxu0
          %1259 = vmatprep.mubr.f32.mxu0 0.0
          %1260 = vmatmul.mubr.f32.gmra.mrb[0].mxu0 %v718
          %v1261 = vpop.f32.mrb[0].mxu0
          %v1262 = vadd.f32 0.0, %v1261
          %v1263 = vpop.f32.mrb[0].mxu0
          %1264 = vmatprep.mubr.f32.mxu0 0.0
          %1265 = vmatmul.mubr.f32.gmra.mrb[0].mxu0 %v721
          %v1266 = vpop.f32.mrb[0].mxu0
          %v1267 = vadd.f32 0.0, %v1266
          %v1268 = vpop.f32.mrb[0].mxu0
          %1269 = vmatprep.mubr.f32.mxu0 0.0
          %1270 = vmatmul.mubr.f32.gmra.mrb[0].mxu0 %v724
          %v1271 = vpop.f32.mrb[0].mxu0
          %v1272 = vadd.f32 0.0, %v1271
          %v1273 = vpop.f32.mrb[0].mxu0
          %1274 = vmatprep.mubr.f32.mxu0 0.0
          %1275 = vmatmul.mubr.f32.gmra.mrb[0].mxu0 %v727
          %v1276 = vpop.f32.mrb[0].mxu0
          %v1277 = vadd.f32 0.0, %v1276
          %v1278 = vpop.f32.mrb[0].mxu0
          %1279 = vmatprep.mubr.f32.mxu0 0.0
          %1280 = vmatmul.mubr.f32.gmra.mrb[0].mxu0 %v730
          %v1281 = vpop.f32.mrb[0].mxu0
          %v1282 = vadd.f32 0.0, %v1281
          %v1283 = vpop.f32.mrb[0].mxu0
          %1284 = vmatprep.mubr.f32.mxu0 0.0
          %1285 = vmatmul.mubr.f32.gmra.mrb[0].mxu0 %v733
          %v1286 = vpop.f32.mrb[0].mxu0
          %v1287 = vadd.f32 0.0, %v1286
          %v1288 = vpop.f32.mrb[0].mxu0
          %1289 = vmatprep.mubr.f32.mxu0 0.0
          %1290 = vmatmul.mubr.f32.gmra.mrb[0].mxu0 %v736
          %v1291 = vpop.f32.mrb[0].mxu0
          %v1292 = vadd.f32 0.0, %v1291
          %v1293 = vpop.f32.mrb[0].mxu0
          %1294 = vmatprep.mubr.f32.mxu0 0.0
          %1295 = vmatmul.mubr.f32.gmra.mrb[0].mxu0 %v739
          %v1296 = vpop.f32.mrb[0].mxu0
          %v1297 = vadd.f32 0.0, %v1296
          %v1298 = vpop.f32.mrb[0].mxu0
          %1299 = vmatprep.mubr.f32.mxu0 0.0
          %1300 = vmatmul.mubr.f32.gmra.mrb[0].mxu0 %v742
          %v1301 = vpop.f32.mrb[0].mxu0
          %v1302 = vadd.f32 0.0, %v1301
          %v1303 = vpop.f32.mrb[0].mxu0
          %1304 = vmatprep.mubr.f32.mxu0 0.0
          %1305 = vmatmul.mubr.f32.gmra.mrb[0].mxu0 %v745
          %v1306 = vpop.f32.mrb[0].mxu0
          %v1307 = vadd.f32 0.0, %v1306
          %v1308 = vpop.f32.mrb[0].mxu0
          %1309 = vmatprep.mubr.f32.mxu0 0.0
          %1310 = vmatmul.mubr.f32.gmra.mrb[0].mxu0 %v748
          %v1311 = vpop.f32.mrb[0].mxu0
          %v1312 = vadd.f32 0.0, %v1311
          %v1313 = vpop.f32.mrb[0].mxu0
          %1314 = vmatprep.mubr.f32.mxu0 0.0
          %1315 = vmatmul.mubr.f32.gmra.mrb[0].mxu0 %v940
          %v1316 = vpop.f32.mrb[0].mxu0
          %v1317 = vadd.f32 0.0, %v1316
          %v1318 = vpop.f32.mrb[0].mxu0
          %1319 = vdwg.mxu0
          %v1320 = vadd.f32 %v1012, %v1202
          %v1321 = vadd.f32 %v1017, %v1207
          %v1322 = vadd.f32 %v1022, %v1212
          %v1323 = vadd.f32 %v1027, %v1217
          %v1324 = vadd.f32 %v1032, %v1222
          %v1325 = vadd.f32 %v1037, %v1227
          %v1326 = vadd.f32 %v1042, %v1232
          %v1327 = vadd.f32 %v1047, %v1237
          %v1328 = vadd.f32 %v1052, %v1242
          %v1329 = vadd.f32 %v1057, %v1247
          %v1330 = vadd.f32 %v1062, %v1252
          %v1331 = vadd.f32 %v1067, %v1257
          %v1332 = vadd.f32 %v1072, %v1262
          %v1333 = vadd.f32 %v1077, %v1267
          %v1334 = vadd.f32 %v1082, %v1272
          %v1335 = vadd.f32 %v1087, %v1277
          %v1336 = vadd.f32 %v1092, %v1282
          %v1337 = vadd.f32 %v1097, %v1287
          %v1338 = vadd.f32 %v1102, %v1292
          %v1339 = vadd.f32 %v1107, %v1297
          %v1340 = vadd.f32 %v1112, %v1302
          %v1341 = vadd.f32 %v1117, %v1307
          %v1342 = vadd.f32 %v1122, %v1312
          %v1343 = vadd.f32 %v1127, %v1317
          %v1345 = vlaneseq
          %v1346 = vshrl.u32 %v1345, 7
          %v1347 = vsub.s32 0, %v1346
          %v1348 = vrot.slane %v673, %v1347
          %v1350 = vadd.f32 %v1320, %v1348
          %v1351 = vadd.f32 %v1321, %v1348
          %v1352 = vadd.f32 %v1322, %v1348
          %v1353 = vadd.f32 %v1323, %v1348
          %v1354 = vadd.f32 %v1324, %v1348
          %v1355 = vadd.f32 %v1325, %v1348
          %v1356 = vadd.f32 %v1326, %v1348
          %v1357 = vadd.f32 %v1327, %v1348
          %v1358 = vadd.f32 %v1328, %v1348
          %v1359 = vadd.f32 %v1329, %v1348
          %v1360 = vadd.f32 %v1330, %v1348
          %v1361 = vadd.f32 %v1331, %v1348
          %v1362 = vadd.f32 %v1332, %v1348
          %v1363 = vadd.f32 %v1333, %v1348
          %v1364 = vadd.f32 %v1334, %v1348
          %v1365 = vadd.f32 %v1335, %v1348
          %v1366 = vadd.f32 %v1336, %v1348
          %v1367 = vadd.f32 %v1337, %v1348
          %v1368 = vadd.f32 %v1338, %v1348
          %v1369 = vadd.f32 %v1339, %v1348
          %v1370 = vadd.f32 %v1340, %v1348
          %v1371 = vadd.f32 %v1341, %v1348
          %v1372 = vadd.f32 %v1342, %v1348
          %v1373 = vadd.f32 %v1343, %v1348
          %v1374 = vmul.f32 %v1350, 0.1
          %v1375 = vmul.f32 %v1351, 0.1
          %v1376 = vmul.f32 %v1352, 0.1
          %v1377 = vmul.f32 %v1353, 0.1
          %v1378 = vmul.f32 %v1354, 0.1
          %v1379 = vmul.f32 %v1355, 0.1
          %v1380 = vmul.f32 %v1356, 0.1
          %v1381 = vmul.f32 %v1357, 0.1
          %v1382 = vmul.f32 %v1358, 0.1
          %v1383 = vmul.f32 %v1359, 0.1
          %v1384 = vmul.f32 %v1360, 0.1
          %v1385 = vmul.f32 %v1361, 0.1
          %v1386 = vmul.f32 %v1362, 0.1
          %v1387 = vmul.f32 %v1363, 0.1
          %v1388 = vmul.f32 %v1364, 0.1
          %v1389 = vmul.f32 %v1365, 0.1
          %v1390 = vmul.f32 %v1366, 0.1
          %v1391 = vmul.f32 %v1367, 0.1
          %v1392 = vmul.f32 %v1368, 0.1
          %v1393 = vmul.f32 %v1369, 0.1
          %v1394 = vmul.f32 %v1370, 0.1
          %v1395 = vmul.f32 %v1371, 0.1
          %v1396 = vmul.f32 %v1372, 0.1
          %v1397 = vmul.f32 %v1373, 0.1
          %v1398 = vmax.f32 %v1350, %v1374
          %v1399 = vmax.f32 %v1351, %v1375
          %v1400 = vmax.f32 %v1352, %v1376
          %v1401 = vmax.f32 %v1353, %v1377
          %v1402 = vmax.f32 %v1354, %v1378
          %v1403 = vmax.f32 %v1355, %v1379
          %v1404 = vmax.f32 %v1356, %v1380
          %v1405 = vmax.f32 %v1357, %v1381
          %v1406 = vmax.f32 %v1358, %v1382
          %v1407 = vmax.f32 %v1359, %v1383
          %v1408 = vmax.f32 %v1360, %v1384
          %v1409 = vmax.f32 %v1361, %v1385
          %v1410 = vmax.f32 %v1362, %v1386
          %v1411 = vmax.f32 %v1363, %v1387
          %v1412 = vmax.f32 %v1364, %v1388
          %v1413 = vmax.f32 %v1365, %v1389
          %v1414 = vmax.f32 %v1366, %v1390
          %v1415 = vmax.f32 %v1367, %v1391
          %v1416 = vmax.f32 %v1368, %v1392
          %v1417 = vmax.f32 %v1369, %v1393
          %v1418 = vmax.f32 %v1370, %v1394
          %v1419 = vmax.f32 %v1371, %v1395
          %v1420 = vmax.f32 %v1372, %v1396
          %v1421 = vmax.f32 %v1373, %v1397
          %v1422 = vld [vmem:[#allocation10 + $0x1] sm:$0x1]
          %v1423 = vld [vmem:[#allocation7] sm:$0xff]
          %v1424 = vld [vmem:[#allocation7 + $0x8] sm:$0xff]
          %v1425 = vld [vmem:[#allocation7 + $0x10] sm:$0xff]
          %v1426 = vld [vmem:[#allocation7 + $0x18] sm:$0xff]
          %v1427 = vld [vmem:[#allocation7 + $0x20] sm:$0xff]
          %v1428 = vld [vmem:[#allocation7 + $0x28] sm:$0xff]
          %v1429 = vld [vmem:[#allocation7 + $0x30] sm:$0xff]
          %v1430 = vld [vmem:[#allocation7 + $0x38] sm:$0xff]
          %s1431 = scalar_lea.vmem [#allocation7], 64
          %v1432 = vld [vmem:[%s1431] sm:$0xff]
          %v1433 = vld [vmem:[%s1431 + $0x8] sm:$0xff]
          %v1434 = vld [vmem:[%s1431 + $0x10] sm:$0xff]
          %v1435 = vld [vmem:[%s1431 + $0x18] sm:$0xff]
          %v1436 = vld [vmem:[%s1431 + $0x20] sm:$0xff]
          %v1437 = vld [vmem:[%s1431 + $0x28] sm:$0xff]
          %v1438 = vld [vmem:[%s1431 + $0x30] sm:$0xff]
          %v1439 = vld [vmem:[%s1431 + $0x38] sm:$0xff]
          %vm1440 = vcmask 523264
          %v1442 = vsel %vm1440, %v1398, 0
          %v1445 = vsel %vm1440, %v1399, 0
          %v1448 = vsel %vm1440, %v1400, 0
          %v1451 = vsel %vm1440, %v1401, 0
          %v1454 = vsel %vm1440, %v1402, 0
          %v1457 = vsel %vm1440, %v1403, 0
          %v1460 = vsel %vm1440, %v1404, 0
          %v1463 = vsel %vm1440, %v1405, 0
          %v1466 = vsel %vm1440, %v1406, 0
          %v1469 = vsel %vm1440, %v1407, 0
          %v1472 = vsel %vm1440, %v1408, 0
          %v1475 = vsel %vm1440, %v1409, 0
          %v1478 = vsel %vm1440, %v1410, 0
          %v1481 = vsel %vm1440, %v1411, 0
          %v1484 = vsel %vm1440, %v1412, 0
          %v1487 = vsel %vm1440, %v1413, 0
          %v1490 = vsel %vm1440, %v1414, 0
          %v1493 = vsel %vm1440, %v1415, 0
          %v1496 = vsel %vm1440, %v1416, 0
          %v1499 = vsel %vm1440, %v1417, 0
          %v1502 = vsel %vm1440, %v1418, 0
          %v1505 = vsel %vm1440, %v1419, 0
          %v1508 = vsel %vm1440, %v1420, 0
          %v1511 = vsel %vm1440, %v1421, 0
          %1513 = vmatprep.subr.mxu0 0.0
          %1514 = vmatpush1.msra.mxu0 %v1432
          %1515 = vmatprep.subr.mxu0 0.0
          %1516 = vmatpush1.msra.mxu0 %v1433
          %1517 = vmatprep.subr.mxu0 0.0
          %1518 = vmatpush1.msra.mxu0 %v1434
          %1519 = vmatprep.subr.mxu0 0.0
          %1520 = vmatpush1.msra.mxu0 %v1435
          %1521 = vmatprep.subr.mxu0 0.0
          %1522 = vmatpush1.msra.mxu0 %v1436
          %1523 = vmatprep.subr.mxu0 0.0
          %1524 = vmatpush1.msra.mxu0 %v1437
          %1525 = vmatprep.subr.mxu0 0.0
          %1526 = vmatpush1.msra.mxu0 %v1438
          %1527 = vmatprep.subr.mxu0 0.0
          %1528 = vmatpush1.msra.mxu0 %v1439
          %1529 = vmatprep.subr.mxu0 0.0
          %1530 = vmatpush1.msra.mxu0 0.0
          %1531 = vmatprep.subr.mxu0 0.0
          %1532 = vmatpush1.msra.mxu0 0.0
          %1533 = vmatprep.subr.mxu0 0.0
          %1534 = vmatpush1.msra.mxu0 0.0
          %1535 = vmatprep.subr.mxu0 0.0
          %1536 = vmatpush1.msra.mxu0 0.0
          %1537 = vmatprep.subr.mxu0 0.0
          %1538 = vmatpush1.msra.mxu0 0.0
          %1539 = vmatprep.subr.mxu0 0.0
          %1540 = vmatpush1.msra.mxu0 0.0
          %1541 = vmatprep.subr.mxu0 0.0
          %1542 = vmatpush1.msra.mxu0 0.0
          %1543 = vmatprep.subr.mxu0 0.0
          %1544 = vmatpush1.msra.mxu0 0.0
          %1545 = vmatprep.subr.mxu0 0.0
          %1546 = vmatpush1.msra.mxu0 0.0
          %1547 = vmatprep.subr.mxu0 0.0
          %1548 = vmatpush1.msra.mxu0 0.0
          %1549 = vmatprep.subr.mxu0 0.0
          %1550 = vmatpush1.msra.mxu0 0.0
          %1551 = vmatprep.subr.mxu0 0.0
          %1552 = vmatpush1.msra.mxu0 0.0
          %1553 = vmatprep.subr.mxu0 0.0
          %1554 = vmatpush1.msra.mxu0 0.0
          %1555 = vmatprep.subr.mxu0 0.0
          %1556 = vmatpush1.msra.mxu0 0.0
          %1557 = vmatprep.subr.mxu0 0.0
          %1558 = vmatpush1.msra.mxu0 0.0
          %1559 = vmatprep.subr.mxu0 0.0
          %1560 = vmatpush1.msra.mxu0 0.0
          %1561 = vmatprep.subr.mxu0 0.0
          %1562 = vmatpush1.msra.mxu0 0.0
          %1563 = vmatprep.subr.mxu0 0.0
          %1564 = vmatpush1.msra.mxu0 0.0
          %1565 = vmatprep.subr.mxu0 0.0
          %1566 = vmatpush1.msra.mxu0 0.0
          %1567 = vmatprep.subr.mxu0 0.0
          %1568 = vmatpush1.msra.mxu0 0.0
          %1569 = vmatprep.subr.mxu0 0.0
          %1570 = vmatpush1.msra.mxu0 0.0
          %1571 = vmatprep.subr.mxu0 0.0
          %1572 = vmatpush1.msra.mxu0 0.0
          %1573 = vmatprep.subr.mxu0 0.0
          %1574 = vmatpush1.msra.mxu0 0.0
          %1575 = vmatprep.subr.mxu0 0.0
          %1576 = vmatpush1.msra.mxu0 0.0
          %1577 = vmatprep.mubr.f32.mxu0 0.0
          %1578 = vmatmul.mubr.f32.gmra.mrb[0].mxu0 %v1442
          %v1579 = vpop.f32.mrb[0].mxu0
          %v1580 = vadd.f32 0.0, %v1579
          %v1581 = vpop.f32.mrb[0].mxu0
          %1582 = vmatprep.mubr.f32.mxu0 0.0
          %1583 = vmatmul.mubr.f32.gmra.mrb[0].mxu0 %v1445
          %v1584 = vpop.f32.mrb[0].mxu0
          %v1585 = vadd.f32 0.0, %v1584
          %v1586 = vpop.f32.mrb[0].mxu0
          %1587 = vmatprep.mubr.f32.mxu0 0.0
          %1588 = vmatmul.mubr.f32.gmra.mrb[0].mxu0 %v1448
          %v1589 = vpop.f32.mrb[0].mxu0
          %v1590 = vadd.f32 0.0, %v1589
          %v1591 = vpop.f32.mrb[0].mxu0
          %1592 = vmatprep.mubr.f32.mxu0 0.0
          %1593 = vmatmul.mubr.f32.gmra.mrb[0].mxu0 %v1451
          %v1594 = vpop.f32.mrb[0].mxu0
          %v1595 = vadd.f32 0.0, %v1594
          %v1596 = vpop.f32.mrb[0].mxu0
          %1597 = vmatprep.mubr.f32.mxu0 0.0
          %1598 = vmatmul.mubr.f32.gmra.mrb[0].mxu0 %v1454
          %v1599 = vpop.f32.mrb[0].mxu0
          %v1600 = vadd.f32 0.0, %v1599
          %v1601 = vpop.f32.mrb[0].mxu0
          %1602 = vmatprep.mubr.f32.mxu0 0.0
          %1603 = vmatmul.mubr.f32.gmra.mrb[0].mxu0 %v1457
          %v1604 = vpop.f32.mrb[0].mxu0
          %v1605 = vadd.f32 0.0, %v1604
          %v1606 = vpop.f32.mrb[0].mxu0
          %1607 = vmatprep.mubr.f32.mxu0 0.0
          %1608 = vmatmul.mubr.f32.gmra.mrb[0].mxu0 %v1460
          %v1609 = vpop.f32.mrb[0].mxu0
          %v1610 = vadd.f32 0.0, %v1609
          %v1611 = vpop.f32.mrb[0].mxu0
          %1612 = vmatprep.mubr.f32.mxu0 0.0
          %1613 = vmatmul.mubr.f32.gmra.mrb[0].mxu0 %v1463
          %v1614 = vpop.f32.mrb[0].mxu0
          %v1615 = vadd.f32 0.0, %v1614
          %v1616 = vpop.f32.mrb[0].mxu0
          %1617 = vmatprep.mubr.f32.mxu0 0.0
          %1618 = vmatmul.mubr.f32.gmra.mrb[0].mxu0 %v1466
          %v1619 = vpop.f32.mrb[0].mxu0
          %v1620 = vadd.f32 0.0, %v1619
          %v1621 = vpop.f32.mrb[0].mxu0
          %1622 = vmatprep.mubr.f32.mxu0 0.0
          %1623 = vmatmul.mubr.f32.gmra.mrb[0].mxu0 %v1469
          %v1624 = vpop.f32.mrb[0].mxu0
          %v1625 = vadd.f32 0.0, %v1624
          %v1626 = vpop.f32.mrb[0].mxu0
          %1627 = vmatprep.mubr.f32.mxu0 0.0
          %1628 = vmatmul.mubr.f32.gmra.mrb[0].mxu0 %v1472
          %v1629 = vpop.f32.mrb[0].mxu0
          %v1630 = vadd.f32 0.0, %v1629
          %v1631 = vpop.f32.mrb[0].mxu0
          %1632 = vmatprep.mubr.f32.mxu0 0.0
          %1633 = vmatmul.mubr.f32.gmra.mrb[0].mxu0 %v1475
          %v1634 = vpop.f32.mrb[0].mxu0
          %v1635 = vadd.f32 0.0, %v1634
          %v1636 = vpop.f32.mrb[0].mxu0
          %1637 = vmatprep.mubr.f32.mxu0 0.0
          %1638 = vmatmul.mubr.f32.gmra.mrb[0].mxu0 %v1478
          %v1639 = vpop.f32.mrb[0].mxu0
          %v1640 = vadd.f32 0.0, %v1639
          %v1641 = vpop.f32.mrb[0].mxu0
          %1642 = vmatprep.mubr.f32.mxu0 0.0
          %1643 = vmatmul.mubr.f32.gmra.mrb[0].mxu0 %v1481
          %v1644 = vpop.f32.mrb[0].mxu0
          %v1645 = vadd.f32 0.0, %v1644
          %v1646 = vpop.f32.mrb[0].mxu0
          %1647 = vmatprep.mubr.f32.mxu0 0.0
          %1648 = vmatmul.mubr.f32.gmra.mrb[0].mxu0 %v1484
          %v1649 = vpop.f32.mrb[0].mxu0
          %v1650 = vadd.f32 0.0, %v1649
          %v1651 = vpop.f32.mrb[0].mxu0
          %1652 = vmatprep.mubr.f32.mxu0 0.0
          %1653 = vmatmul.mubr.f32.gmra.mrb[0].mxu0 %v1487
          %v1654 = vpop.f32.mrb[0].mxu0
          %v1655 = vadd.f32 0.0, %v1654
          %v1656 = vpop.f32.mrb[0].mxu0
          %1657 = vmatprep.mubr.f32.mxu0 0.0
          %1658 = vmatmul.mubr.f32.gmra.mrb[0].mxu0 %v1490
          %v1659 = vpop.f32.mrb[0].mxu0
          %v1660 = vadd.f32 0.0, %v1659
          %v1661 = vpop.f32.mrb[0].mxu0
          %1662 = vmatprep.mubr.f32.mxu0 0.0
          %1663 = vmatmul.mubr.f32.gmra.mrb[0].mxu0 %v1493
          %v1664 = vpop.f32.mrb[0].mxu0
          %v1665 = vadd.f32 0.0, %v1664
          %v1666 = vpop.f32.mrb[0].mxu0
          %1667 = vmatprep.mubr.f32.mxu0 0.0
          %1668 = vmatmul.mubr.f32.gmra.mrb[0].mxu0 %v1496
          %v1669 = vpop.f32.mrb[0].mxu0
          %v1670 = vadd.f32 0.0, %v1669
          %v1671 = vpop.f32.mrb[0].mxu0
          %1672 = vmatprep.mubr.f32.mxu0 0.0
          %1673 = vmatmul.mubr.f32.gmra.mrb[0].mxu0 %v1499
          %v1674 = vpop.f32.mrb[0].mxu0
          %v1675 = vadd.f32 0.0, %v1674
          %v1676 = vpop.f32.mrb[0].mxu0
          %1677 = vmatprep.mubr.f32.mxu0 0.0
          %1678 = vmatmul.mubr.f32.gmra.mrb[0].mxu0 %v1502
          %v1679 = vpop.f32.mrb[0].mxu0
          %v1680 = vadd.f32 0.0, %v1679
          %v1681 = vpop.f32.mrb[0].mxu0
          %1682 = vmatprep.mubr.f32.mxu0 0.0
          %1683 = vmatmul.mubr.f32.gmra.mrb[0].mxu0 %v1505
          %v1684 = vpop.f32.mrb[0].mxu0
          %v1685 = vadd.f32 0.0, %v1684
          %v1686 = vpop.f32.mrb[0].mxu0
          %1687 = vmatprep.mubr.f32.mxu0 0.0
          %1688 = vmatmul.mubr.f32.gmra.mrb[0].mxu0 %v1508
          %v1689 = vpop.f32.mrb[0].mxu0
          %v1690 = vadd.f32 0.0, %v1689
          %v1691 = vpop.f32.mrb[0].mxu0
          %1692 = vmatprep.mubr.f32.mxu0 0.0
          %1693 = vmatmul.mubr.f32.gmra.mrb[0].mxu0 %v1511
          %v1694 = vpop.f32.mrb[0].mxu0
          %v1695 = vadd.f32 0.0, %v1694
          %v1696 = vpop.f32.mrb[0].mxu0
          %1697 = vdwg.mxu0
          %v1698 = vsel %vm1440, 0.0, 0
          %1700 = vmatprep.subr.mxu0 0.0
          %1701 = vmatpush1.msra.mxu0 %v1423
          %1702 = vmatprep.subr.mxu0 0.0
          %1703 = vmatpush1.msra.mxu0 %v1424
          %1704 = vmatprep.subr.mxu0 0.0
          %1705 = vmatpush1.msra.mxu0 %v1425
          %1706 = vmatprep.subr.mxu0 0.0
          %1707 = vmatpush1.msra.mxu0 %v1426
          %1708 = vmatprep.subr.mxu0 0.0
          %1709 = vmatpush1.msra.mxu0 %v1427
          %1710 = vmatprep.subr.mxu0 0.0
          %1711 = vmatpush1.msra.mxu0 %v1428
          %1712 = vmatprep.subr.mxu0 0.0
          %1713 = vmatpush1.msra.mxu0 %v1429
          %1714 = vmatprep.subr.mxu0 0.0
          %1715 = vmatpush1.msra.mxu0 %v1430
          %1716 = vmatprep.subr.mxu0 0.0
          %1717 = vmatpush1.msra.mxu0 0.0
          %1718 = vmatprep.subr.mxu0 0.0
          %1719 = vmatpush1.msra.mxu0 0.0
          %1720 = vmatprep.subr.mxu0 0.0
          %1721 = vmatpush1.msra.mxu0 0.0
          %1722 = vmatprep.subr.mxu0 0.0
          %1723 = vmatpush1.msra.mxu0 0.0
          %1724 = vmatprep.subr.mxu0 0.0
          %1725 = vmatpush1.msra.mxu0 0.0
          %1726 = vmatprep.subr.mxu0 0.0
          %1727 = vmatpush1.msra.mxu0 0.0
          %1728 = vmatprep.subr.mxu0 0.0
          %1729 = vmatpush1.msra.mxu0 0.0
          %1730 = vmatprep.subr.mxu0 0.0
          %1731 = vmatpush1.msra.mxu0 0.0
          %1732 = vmatprep.subr.mxu0 0.0
          %1733 = vmatpush1.msra.mxu0 0.0
          %1734 = vmatprep.subr.mxu0 0.0
          %1735 = vmatpush1.msra.mxu0 0.0
          %1736 = vmatprep.subr.mxu0 0.0
          %1737 = vmatpush1.msra.mxu0 0.0
          %1738 = vmatprep.subr.mxu0 0.0
          %1739 = vmatpush1.msra.mxu0 0.0
          %1740 = vmatprep.subr.mxu0 0.0
          %1741 = vmatpush1.msra.mxu0 0.0
          %1742 = vmatprep.subr.mxu0 0.0
          %1743 = vmatpush1.msra.mxu0 0.0
          %1744 = vmatprep.subr.mxu0 0.0
          %1745 = vmatpush1.msra.mxu0 0.0
          %1746 = vmatprep.subr.mxu0 0.0
          %1747 = vmatpush1.msra.mxu0 0.0
          %1748 = vmatprep.subr.mxu0 0.0
          %1749 = vmatpush1.msra.mxu0 0.0
          %1750 = vmatprep.subr.mxu0 0.0
          %1751 = vmatpush1.msra.mxu0 0.0
          %1752 = vmatprep.subr.mxu0 0.0
          %1753 = vmatpush1.msra.mxu0 0.0
          %1754 = vmatprep.subr.mxu0 0.0
          %1755 = vmatpush1.msra.mxu0 0.0
          %1756 = vmatprep.subr.mxu0 0.0
          %1757 = vmatpush1.msra.mxu0 0.0
          %1758 = vmatprep.subr.mxu0 0.0
          %1759 = vmatpush1.msra.mxu0 0.0
          %1760 = vmatprep.subr.mxu0 0.0
          %1761 = vmatpush1.msra.mxu0 0.0
          %1762 = vmatprep.subr.mxu0 0.0
          %1763 = vmatpush1.msra.mxu0 0.0
          %1764 = vmatprep.mubr.f32.mxu0 0.0
          %1765 = vmatmul.mubr.f32.gmra.mrb[0].mxu0 %v1698
          %v1766 = vpop.f32.mrb[0].mxu0
          %v1767 = vadd.f32 %v1580, %v1766
          %v1768 = vpop.f32.mrb[0].mxu0
          %1769 = vmatprep.mubr.f32.mxu0 0.0
          %1770 = vmatmul.mubr.f32.gmra.mrb[0].mxu0 %v1442
          %v1771 = vpop.f32.mrb[0].mxu0
          %v1772 = vadd.f32 %v1585, %v1771
          %v1773 = vpop.f32.mrb[0].mxu0
          %1774 = vmatprep.mubr.f32.mxu0 0.0
          %1775 = vmatmul.mubr.f32.gmra.mrb[0].mxu0 %v1445
          %v1776 = vpop.f32.mrb[0].mxu0
          %v1777 = vadd.f32 %v1590, %v1776
          %v1778 = vpop.f32.mrb[0].mxu0
          %1779 = vmatprep.mubr.f32.mxu0 0.0
          %1780 = vmatmul.mubr.f32.gmra.mrb[0].mxu0 %v1448
          %v1781 = vpop.f32.mrb[0].mxu0
          %v1782 = vadd.f32 %v1595, %v1781
          %v1783 = vpop.f32.mrb[0].mxu0
          %1784 = vmatprep.mubr.f32.mxu0 0.0
          %1785 = vmatmul.mubr.f32.gmra.mrb[0].mxu0 %v1451
          %v1786 = vpop.f32.mrb[0].mxu0
          %v1787 = vadd.f32 %v1600, %v1786
          %v1788 = vpop.f32.mrb[0].mxu0
          %1789 = vmatprep.mubr.f32.mxu0 0.0
          %1790 = vmatmul.mubr.f32.gmra.mrb[0].mxu0 %v1454
          %v1791 = vpop.f32.mrb[0].mxu0
          %v1792 = vadd.f32 %v1605, %v1791
          %v1793 = vpop.f32.mrb[0].mxu0
          %1794 = vmatprep.mubr.f32.mxu0 0.0
          %1795 = vmatmul.mubr.f32.gmra.mrb[0].mxu0 %v1457
          %v1796 = vpop.f32.mrb[0].mxu0
          %v1797 = vadd.f32 %v1610, %v1796
          %v1798 = vpop.f32.mrb[0].mxu0
          %1799 = vmatprep.mubr.f32.mxu0 0.0
          %1800 = vmatmul.mubr.f32.gmra.mrb[0].mxu0 %v1460
          %v1801 = vpop.f32.mrb[0].mxu0
          %v1802 = vadd.f32 %v1615, %v1801
          %v1803 = vpop.f32.mrb[0].mxu0
          %1804 = vmatprep.mubr.f32.mxu0 0.0
          %1805 = vmatmul.mubr.f32.gmra.mrb[0].mxu0 %v1463
          %v1806 = vpop.f32.mrb[0].mxu0
          %v1807 = vadd.f32 %v1620, %v1806
          %v1808 = vpop.f32.mrb[0].mxu0
          %1809 = vmatprep.mubr.f32.mxu0 0.0
          %1810 = vmatmul.mubr.f32.gmra.mrb[0].mxu0 %v1466
          %v1811 = vpop.f32.mrb[0].mxu0
          %v1812 = vadd.f32 %v1625, %v1811
          %v1813 = vpop.f32.mrb[0].mxu0
          %1814 = vmatprep.mubr.f32.mxu0 0.0
          %1815 = vmatmul.mubr.f32.gmra.mrb[0].mxu0 %v1469
          %v1816 = vpop.f32.mrb[0].mxu0
          %v1817 = vadd.f32 %v1630, %v1816
          %v1818 = vpop.f32.mrb[0].mxu0
          %1819 = vmatprep.mubr.f32.mxu0 0.0
          %1820 = vmatmul.mubr.f32.gmra.mrb[0].mxu0 %v1472
          %v1821 = vpop.f32.mrb[0].mxu0
          %v1822 = vadd.f32 %v1635, %v1821
          %v1823 = vpop.f32.mrb[0].mxu0
          %1824 = vmatprep.mubr.f32.mxu0 0.0
          %1825 = vmatmul.mubr.f32.gmra.mrb[0].mxu0 %v1475
          %v1826 = vpop.f32.mrb[0].mxu0
          %v1827 = vadd.f32 %v1640, %v1826
          %v1828 = vpop.f32.mrb[0].mxu0
          %1829 = vmatprep.mubr.f32.mxu0 0.0
          %1830 = vmatmul.mubr.f32.gmra.mrb[0].mxu0 %v1478
          %v1831 = vpop.f32.mrb[0].mxu0
          %v1832 = vadd.f32 %v1645, %v1831
          %v1833 = vpop.f32.mrb[0].mxu0
          %1834 = vmatprep.mubr.f32.mxu0 0.0
          %1835 = vmatmul.mubr.f32.gmra.mrb[0].mxu0 %v1481
          %v1836 = vpop.f32.mrb[0].mxu0
          %v1837 = vadd.f32 %v1650, %v1836
          %v1838 = vpop.f32.mrb[0].mxu0
          %1839 = vmatprep.mubr.f32.mxu0 0.0
          %1840 = vmatmul.mubr.f32.gmra.mrb[0].mxu0 %v1484
          %v1841 = vpop.f32.mrb[0].mxu0
          %v1842 = vadd.f32 %v1655, %v1841
          %v1843 = vpop.f32.mrb[0].mxu0
          %1844 = vmatprep.mubr.f32.mxu0 0.0
          %1845 = vmatmul.mubr.f32.gmra.mrb[0].mxu0 %v1487
          %v1846 = vpop.f32.mrb[0].mxu0
          %v1847 = vadd.f32 %v1660, %v1846
          %v1848 = vpop.f32.mrb[0].mxu0
          %1849 = vmatprep.mubr.f32.mxu0 0.0
          %1850 = vmatmul.mubr.f32.gmra.mrb[0].mxu0 %v1490
          %v1851 = vpop.f32.mrb[0].mxu0
          %v1852 = vadd.f32 %v1665, %v1851
          %v1853 = vpop.f32.mrb[0].mxu0
          %1854 = vmatprep.mubr.f32.mxu0 0.0
          %1855 = vmatmul.mubr.f32.gmra.mrb[0].mxu0 %v1493
          %v1856 = vpop.f32.mrb[0].mxu0
          %v1857 = vadd.f32 %v1670, %v1856
          %v1858 = vpop.f32.mrb[0].mxu0
          %1859 = vmatprep.mubr.f32.mxu0 0.0
          %1860 = vmatmul.mubr.f32.gmra.mrb[0].mxu0 %v1496
          %v1861 = vpop.f32.mrb[0].mxu0
          %v1862 = vadd.f32 %v1675, %v1861
          %v1863 = vpop.f32.mrb[0].mxu0
          %1864 = vmatprep.mubr.f32.mxu0 0.0
          %1865 = vmatmul.mubr.f32.gmra.mrb[0].mxu0 %v1499
          %v1866 = vpop.f32.mrb[0].mxu0
          %v1867 = vadd.f32 %v1680, %v1866
          %v1868 = vpop.f32.mrb[0].mxu0
          %1869 = vmatprep.mubr.f32.mxu0 0.0
          %1870 = vmatmul.mubr.f32.gmra.mrb[0].mxu0 %v1502
          %v1871 = vpop.f32.mrb[0].mxu0
          %v1872 = vadd.f32 %v1685, %v1871
          %v1873 = vpop.f32.mrb[0].mxu0
          %1874 = vmatprep.mubr.f32.mxu0 0.0
          %1875 = vmatmul.mubr.f32.gmra.mrb[0].mxu0 %v1505
          %v1876 = vpop.f32.mrb[0].mxu0
          %v1877 = vadd.f32 %v1690, %v1876
          %v1878 = vpop.f32.mrb[0].mxu0
          %1879 = vmatprep.mubr.f32.mxu0 0.0
          %1880 = vmatmul.mubr.f32.gmra.mrb[0].mxu0 %v1508
          %v1881 = vpop.f32.mrb[0].mxu0
          %v1882 = vadd.f32 %v1695, %v1881
          %v1883 = vpop.f32.mrb[0].mxu0
          %1884 = vdwg.mxu0
          %s1885 = scalar_lea.vmem [#allocation7], 128
          %v1886 = vld [vmem:[%s1885] sm:$0xff]
          %v1887 = vld [vmem:[%s1885 + $0x8] sm:$0xff]
          %v1888 = vld [vmem:[%s1885 + $0x10] sm:$0xff]
          %v1889 = vld [vmem:[%s1885 + $0x18] sm:$0xff]
          %v1890 = vld [vmem:[%s1885 + $0x20] sm:$0xff]
          %v1891 = vld [vmem:[%s1885 + $0x28] sm:$0xff]
          %v1892 = vld [vmem:[%s1885 + $0x30] sm:$0xff]
          %v1893 = vld [vmem:[%s1885 + $0x38] sm:$0xff]
          %1894 = vmatprep.subr.mxu0 0.0
          %1895 = vmatpush1.msra.mxu0 %v1886
          %1896 = vmatprep.subr.mxu0 0.0
          %1897 = vmatpush1.msra.mxu0 %v1887
          %1898 = vmatprep.subr.mxu0 0.0
          %1899 = vmatpush1.msra.mxu0 %v1888
          %1900 = vmatprep.subr.mxu0 0.0
          %1901 = vmatpush1.msra.mxu0 %v1889
          %1902 = vmatprep.subr.mxu0 0.0
          %1903 = vmatpush1.msra.mxu0 %v1890
          %1904 = vmatprep.subr.mxu0 0.0
          %1905 = vmatpush1.msra.mxu0 %v1891
          %1906 = vmatprep.subr.mxu0 0.0
          %1907 = vmatpush1.msra.mxu0 %v1892
          %1908 = vmatprep.subr.mxu0 0.0
          %1909 = vmatpush1.msra.mxu0 %v1893
          %1910 = vmatprep.subr.mxu0 0.0
          %1911 = vmatpush1.msra.mxu0 0.0
          %1912 = vmatprep.subr.mxu0 0.0
          %1913 = vmatpush1.msra.mxu0 0.0
          %1914 = vmatprep.subr.mxu0 0.0
          %1915 = vmatpush1.msra.mxu0 0.0
          %1916 = vmatprep.subr.mxu0 0.0
          %1917 = vmatpush1.msra.mxu0 0.0
          %1918 = vmatprep.subr.mxu0 0.0
          %1919 = vmatpush1.msra.mxu0 0.0
          %1920 = vmatprep.subr.mxu0 0.0
          %1921 = vmatpush1.msra.mxu0 0.0
          %1922 = vmatprep.subr.mxu0 0.0
          %1923 = vmatpush1.msra.mxu0 0.0
          %1924 = vmatprep.subr.mxu0 0.0
          %1925 = vmatpush1.msra.mxu0 0.0
          %1926 = vmatprep.subr.mxu0 0.0
          %1927 = vmatpush1.msra.mxu0 0.0
          %1928 = vmatprep.subr.mxu0 0.0
          %1929 = vmatpush1.msra.mxu0 0.0
          %1930 = vmatprep.subr.mxu0 0.0
          %1931 = vmatpush1.msra.mxu0 0.0
          %1932 = vmatprep.subr.mxu0 0.0
          %1933 = vmatpush1.msra.mxu0 0.0
          %1934 = vmatprep.subr.mxu0 0.0
          %1935 = vmatpush1.msra.mxu0 0.0
          %1936 = vmatprep.subr.mxu0 0.0
          %1937 = vmatpush1.msra.mxu0 0.0
          %1938 = vmatprep.subr.mxu0 0.0
          %1939 = vmatpush1.msra.mxu0 0.0
          %1940 = vmatprep.subr.mxu0 0.0
          %1941 = vmatpush1.msra.mxu0 0.0
          %1942 = vmatprep.subr.mxu0 0.0
          %1943 = vmatpush1.msra.mxu0 0.0
          %1944 = vmatprep.subr.mxu0 0.0
          %1945 = vmatpush1.msra.mxu0 0.0
          %1946 = vmatprep.subr.mxu0 0.0
          %1947 = vmatpush1.msra.mxu0 0.0
          %1948 = vmatprep.subr.mxu0 0.0
          %1949 = vmatpush1.msra.mxu0 0.0
          %1950 = vmatprep.subr.mxu0 0.0
          %1951 = vmatpush1.msra.mxu0 0.0
          %1952 = vmatprep.subr.mxu0 0.0
          %1953 = vmatpush1.msra.mxu0 0.0
          %1954 = vmatprep.subr.mxu0 0.0
          %1955 = vmatpush1.msra.mxu0 0.0
          %1956 = vmatprep.subr.mxu0 0.0
          %1957 = vmatpush1.msra.mxu0 0.0
          %1958 = vmatprep.mubr.f32.mxu0 0.0
          %1959 = vmatmul.mubr.f32.gmra.mrb[0].mxu0 %v1445
          %v1960 = vpop.f32.mrb[0].mxu0
          %v1961 = vadd.f32 0.0, %v1960
          %v1962 = vpop.f32.mrb[0].mxu0
          %1963 = vmatprep.mubr.f32.mxu0 0.0
          %1964 = vmatmul.mubr.f32.gmra.mrb[0].mxu0 %v1448
          %v1965 = vpop.f32.mrb[0].mxu0
          %v1966 = vadd.f32 0.0, %v1965
          %v1967 = vpop.f32.mrb[0].mxu0
          %1968 = vmatprep.mubr.f32.mxu0 0.0
          %1969 = vmatmul.mubr.f32.gmra.mrb[0].mxu0 %v1451
          %v1970 = vpop.f32.mrb[0].mxu0
          %v1971 = vadd.f32 0.0, %v1970
          %v1972 = vpop.f32.mrb[0].mxu0
          %1973 = vmatprep.mubr.f32.mxu0 0.0
          %1974 = vmatmul.mubr.f32.gmra.mrb[0].mxu0 %v1454
          %v1975 = vpop.f32.mrb[0].mxu0
          %v1976 = vadd.f32 0.0, %v1975
          %v1977 = vpop.f32.mrb[0].mxu0
          %1978 = vmatprep.mubr.f32.mxu0 0.0
          %1979 = vmatmul.mubr.f32.gmra.mrb[0].mxu0 %v1457
          %v1980 = vpop.f32.mrb[0].mxu0
          %v1981 = vadd.f32 0.0, %v1980
          %v1982 = vpop.f32.mrb[0].mxu0
          %1983 = vmatprep.mubr.f32.mxu0 0.0
          %1984 = vmatmul.mubr.f32.gmra.mrb[0].mxu0 %v1460
          %v1985 = vpop.f32.mrb[0].mxu0
          %v1986 = vadd.f32 0.0, %v1985
          %v1987 = vpop.f32.mrb[0].mxu0
          %1988 = vmatprep.mubr.f32.mxu0 0.0
          %1989 = vmatmul.mubr.f32.gmra.mrb[0].mxu0 %v1463
          %v1990 = vpop.f32.mrb[0].mxu0
          %v1991 = vadd.f32 0.0, %v1990
          %v1992 = vpop.f32.mrb[0].mxu0
          %1993 = vmatprep.mubr.f32.mxu0 0.0
          %1994 = vmatmul.mubr.f32.gmra.mrb[0].mxu0 %v1466
          %v1995 = vpop.f32.mrb[0].mxu0
          %v1996 = vadd.f32 0.0, %v1995
          %v1997 = vpop.f32.mrb[0].mxu0
          %1998 = vmatprep.mubr.f32.mxu0 0.0
          %1999 = vmatmul.mubr.f32.gmra.mrb[0].mxu0 %v1469
          %v2000 = vpop.f32.mrb[0].mxu0
          %v2001 = vadd.f32 0.0, %v2000
          %v2002 = vpop.f32.mrb[0].mxu0
          %2003 = vmatprep.mubr.f32.mxu0 0.0
          %2004 = vmatmul.mubr.f32.gmra.mrb[0].mxu0 %v1472
          %v2005 = vpop.f32.mrb[0].mxu0
          %v2006 = vadd.f32 0.0, %v2005
          %v2007 = vpop.f32.mrb[0].mxu0
          %2008 = vmatprep.mubr.f32.mxu0 0.0
          %2009 = vmatmul.mubr.f32.gmra.mrb[0].mxu0 %v1475
          %v2010 = vpop.f32.mrb[0].mxu0
          %v2011 = vadd.f32 0.0, %v2010
          %v2012 = vpop.f32.mrb[0].mxu0
          %2013 = vmatprep.mubr.f32.mxu0 0.0
          %2014 = vmatmul.mubr.f32.gmra.mrb[0].mxu0 %v1478
          %v2015 = vpop.f32.mrb[0].mxu0
          %v2016 = vadd.f32 0.0, %v2015
          %v2017 = vpop.f32.mrb[0].mxu0
          %2018 = vmatprep.mubr.f32.mxu0 0.0
          %2019 = vmatmul.mubr.f32.gmra.mrb[0].mxu0 %v1481
          %v2020 = vpop.f32.mrb[0].mxu0
          %v2021 = vadd.f32 0.0, %v2020
          %v2022 = vpop.f32.mrb[0].mxu0
          %2023 = vmatprep.mubr.f32.mxu0 0.0
          %2024 = vmatmul.mubr.f32.gmra.mrb[0].mxu0 %v1484
          %v2025 = vpop.f32.mrb[0].mxu0
          %v2026 = vadd.f32 0.0, %v2025
          %v2027 = vpop.f32.mrb[0].mxu0
          %2028 = vmatprep.mubr.f32.mxu0 0.0
          %2029 = vmatmul.mubr.f32.gmra.mrb[0].mxu0 %v1487
          %v2030 = vpop.f32.mrb[0].mxu0
          %v2031 = vadd.f32 0.0, %v2030
          %v2032 = vpop.f32.mrb[0].mxu0
          %2033 = vmatprep.mubr.f32.mxu0 0.0
          %2034 = vmatmul.mubr.f32.gmra.mrb[0].mxu0 %v1490
          %v2035 = vpop.f32.mrb[0].mxu0
          %v2036 = vadd.f32 0.0, %v2035
          %v2037 = vpop.f32.mrb[0].mxu0
          %2038 = vmatprep.mubr.f32.mxu0 0.0
          %2039 = vmatmul.mubr.f32.gmra.mrb[0].mxu0 %v1493
          %v2040 = vpop.f32.mrb[0].mxu0
          %v2041 = vadd.f32 0.0, %v2040
          %v2042 = vpop.f32.mrb[0].mxu0
          %2043 = vmatprep.mubr.f32.mxu0 0.0
          %2044 = vmatmul.mubr.f32.gmra.mrb[0].mxu0 %v1496
          %v2045 = vpop.f32.mrb[0].mxu0
          %v2046 = vadd.f32 0.0, %v2045
          %v2047 = vpop.f32.mrb[0].mxu0
          %2048 = vmatprep.mubr.f32.mxu0 0.0
          %2049 = vmatmul.mubr.f32.gmra.mrb[0].mxu0 %v1499
          %v2050 = vpop.f32.mrb[0].mxu0
          %v2051 = vadd.f32 0.0, %v2050
          %v2052 = vpop.f32.mrb[0].mxu0
          %2053 = vmatprep.mubr.f32.mxu0 0.0
          %2054 = vmatmul.mubr.f32.gmra.mrb[0].mxu0 %v1502
          %v2055 = vpop.f32.mrb[0].mxu0
          %v2056 = vadd.f32 0.0, %v2055
          %v2057 = vpop.f32.mrb[0].mxu0
          %2058 = vmatprep.mubr.f32.mxu0 0.0
          %2059 = vmatmul.mubr.f32.gmra.mrb[0].mxu0 %v1505
          %v2060 = vpop.f32.mrb[0].mxu0
          %v2061 = vadd.f32 0.0, %v2060
          %v2062 = vpop.f32.mrb[0].mxu0
          %2063 = vmatprep.mubr.f32.mxu0 0.0
          %2064 = vmatmul.mubr.f32.gmra.mrb[0].mxu0 %v1508
          %v2065 = vpop.f32.mrb[0].mxu0
          %v2066 = vadd.f32 0.0, %v2065
          %v2067 = vpop.f32.mrb[0].mxu0
          %2068 = vmatprep.mubr.f32.mxu0 0.0
          %2069 = vmatmul.mubr.f32.gmra.mrb[0].mxu0 %v1511
          %v2070 = vpop.f32.mrb[0].mxu0
          %v2071 = vadd.f32 0.0, %v2070
          %v2072 = vpop.f32.mrb[0].mxu0
          %2073 = vmatprep.mubr.f32.mxu0 0.0
          %2074 = vmatmul.mubr.f32.gmra.mrb[0].mxu0 %v1698
          %v2075 = vpop.f32.mrb[0].mxu0
          %v2076 = vadd.f32 0.0, %v2075
          %v2077 = vpop.f32.mrb[0].mxu0
          %2078 = vdwg.mxu0
          %v2079 = vadd.f32 %v1767, %v1961
          %v2080 = vadd.f32 %v1772, %v1966
          %v2081 = vadd.f32 %v1777, %v1971
          %v2082 = vadd.f32 %v1782, %v1976
          %v2083 = vadd.f32 %v1787, %v1981
          %v2084 = vadd.f32 %v1792, %v1986
          %v2085 = vadd.f32 %v1797, %v1991
          %v2086 = vadd.f32 %v1802, %v1996
          %v2087 = vadd.f32 %v1807, %v2001
          %v2088 = vadd.f32 %v1812, %v2006
          %v2089 = vadd.f32 %v1817, %v2011
          %v2090 = vadd.f32 %v1822, %v2016
          %v2091 = vadd.f32 %v1827, %v2021
          %v2092 = vadd.f32 %v1832, %v2026
          %v2093 = vadd.f32 %v1837, %v2031
          %v2094 = vadd.f32 %v1842, %v2036
          %v2095 = vadd.f32 %v1847, %v2041
          %v2096 = vadd.f32 %v1852, %v2046
          %v2097 = vadd.f32 %v1857, %v2051
          %v2098 = vadd.f32 %v1862, %v2056
          %v2099 = vadd.f32 %v1867, %v2061
          %v2100 = vadd.f32 %v1872, %v2066
          %v2101 = vadd.f32 %v1877, %v2071
          %v2102 = vadd.f32 %v1882, %v2076
          %v2104 = vlaneseq
          %v2105 = vshrl.u32 %v2104, 7
          %v2106 = vsub.s32 0, %v2105
          %v2107 = vrot.slane %v1422, %v2106
          %v2109 = vadd.f32 %v2079, %v2107
          %v2110 = vadd.f32 %v2080, %v2107
          %v2111 = vadd.f32 %v2081, %v2107
          %v2112 = vadd.f32 %v2082, %v2107
          %v2113 = vadd.f32 %v2083, %v2107
          %v2114 = vadd.f32 %v2084, %v2107
          %v2115 = vadd.f32 %v2085, %v2107
          %v2116 = vadd.f32 %v2086, %v2107
          %v2117 = vadd.f32 %v2087, %v2107
          %v2118 = vadd.f32 %v2088, %v2107
          %v2119 = vadd.f32 %v2089, %v2107
          %v2120 = vadd.f32 %v2090, %v2107
          %v2121 = vadd.f32 %v2091, %v2107
          %v2122 = vadd.f32 %v2092, %v2107
          %v2123 = vadd.f32 %v2093, %v2107
          %v2124 = vadd.f32 %v2094, %v2107
          %v2125 = vadd.f32 %v2095, %v2107
          %v2126 = vadd.f32 %v2096, %v2107
          %v2127 = vadd.f32 %v2097, %v2107
          %v2128 = vadd.f32 %v2098, %v2107
          %v2129 = vadd.f32 %v2099, %v2107
          %v2130 = vadd.f32 %v2100, %v2107
          %v2131 = vadd.f32 %v2101, %v2107
          %v2132 = vadd.f32 %v2102, %v2107
          %v2133 = vmul.f32 %v2109, 0.1
          %v2134 = vmul.f32 %v2110, 0.1
          %v2135 = vmul.f32 %v2111, 0.1
          %v2136 = vmul.f32 %v2112, 0.1
          %v2137 = vmul.f32 %v2113, 0.1
          %v2138 = vmul.f32 %v2114, 0.1
          %v2139 = vmul.f32 %v2115, 0.1
          %v2140 = vmul.f32 %v2116, 0.1
          %v2141 = vmul.f32 %v2117, 0.1
          %v2142 = vmul.f32 %v2118, 0.1
          %v2143 = vmul.f32 %v2119, 0.1
          %v2144 = vmul.f32 %v2120, 0.1
          %v2145 = vmul.f32 %v2121, 0.1
          %v2146 = vmul.f32 %v2122, 0.1
          %v2147 = vmul.f32 %v2123, 0.1
          %v2148 = vmul.f32 %v2124, 0.1
          %v2149 = vmul.f32 %v2125, 0.1
          %v2150 = vmul.f32 %v2126, 0.1
          %v2151 = vmul.f32 %v2127, 0.1
          %v2152 = vmul.f32 %v2128, 0.1
          %v2153 = vmul.f32 %v2129, 0.1
          %v2154 = vmul.f32 %v2130, 0.1
          %v2155 = vmul.f32 %v2131, 0.1
          %v2156 = vmul.f32 %v2132, 0.1
          %v2157 = vmax.f32 %v2109, %v2133
          %v2158 = vmax.f32 %v2110, %v2134
          %v2159 = vmax.f32 %v2111, %v2135
          %v2160 = vmax.f32 %v2112, %v2136
          %v2161 = vmax.f32 %v2113, %v2137
          %v2162 = vmax.f32 %v2114, %v2138
          %v2163 = vmax.f32 %v2115, %v2139
          %v2164 = vmax.f32 %v2116, %v2140
          %v2165 = vmax.f32 %v2117, %v2141
          %v2166 = vmax.f32 %v2118, %v2142
          %v2167 = vmax.f32 %v2119, %v2143
          %v2168 = vmax.f32 %v2120, %v2144
          %v2169 = vmax.f32 %v2121, %v2145
          %v2170 = vmax.f32 %v2122, %v2146
          %v2171 = vmax.f32 %v2123, %v2147
          %v2172 = vmax.f32 %v2124, %v2148
          %v2173 = vmax.f32 %v2125, %v2149
          %v2174 = vmax.f32 %v2126, %v2150
          %v2175 = vmax.f32 %v2127, %v2151
          %v2176 = vmax.f32 %v2128, %v2152
          %v2177 = vmax.f32 %v2129, %v2153
          %v2178 = vmax.f32 %v2130, %v2154
          %v2179 = vmax.f32 %v2131, %v2155
          %v2180 = vmax.f32 %v2132, %v2156
          %v2181 = vld [vmem:[#allocation10 + $0x2] sm:$0x1]
          %v2182 = vld [vmem:[#allocation9] sm:$0xff]
          %v2183 = vld [vmem:[#allocation9 + $0x8] sm:$0xff]
          %v2184 = vld [vmem:[#allocation9 + $0x10] sm:$0xff]
          %v2185 = vld [vmem:[#allocation9 + $0x18] sm:$0xff]
          %v2186 = vld [vmem:[#allocation9 + $0x20] sm:$0xff]
          %v2187 = vld [vmem:[#allocation9 + $0x28] sm:$0xff]
          %v2188 = vld [vmem:[#allocation9 + $0x30] sm:$0xff]
          %v2189 = vld [vmem:[#allocation9 + $0x38] sm:$0xff]
          %s2190 = scalar_lea.vmem [#allocation9], 64
          %v2191 = vld [vmem:[%s2190] sm:$0xff]
          %v2192 = vld [vmem:[%s2190 + $0x8] sm:$0xff]
          %v2193 = vld [vmem:[%s2190 + $0x10] sm:$0xff]
          %v2194 = vld [vmem:[%s2190 + $0x18] sm:$0xff]
          %v2195 = vld [vmem:[%s2190 + $0x20] sm:$0xff]
          %v2196 = vld [vmem:[%s2190 + $0x28] sm:$0xff]
          %v2197 = vld [vmem:[%s2190 + $0x30] sm:$0xff]
          %v2198 = vld [vmem:[%s2190 + $0x38] sm:$0xff]
          %v2200 = vsel %vm1440, %v2157, 0
          %v2203 = vsel %vm1440, %v2158, 0
          %v2206 = vsel %vm1440, %v2159, 0
          %v2209 = vsel %vm1440, %v2160, 0
          %v2212 = vsel %vm1440, %v2161, 0
          %v2215 = vsel %vm1440, %v2162, 0
          %v2218 = vsel %vm1440, %v2163, 0
          %v2221 = vsel %vm1440, %v2164, 0
          %v2224 = vsel %vm1440, %v2165, 0
          %v2227 = vsel %vm1440, %v2166, 0
          %v2230 = vsel %vm1440, %v2167, 0
          %v2233 = vsel %vm1440, %v2168, 0
          %v2236 = vsel %vm1440, %v2169, 0
          %v2239 = vsel %vm1440, %v2170, 0
          %v2242 = vsel %vm1440, %v2171, 0
          %v2245 = vsel %vm1440, %v2172, 0
          %v2248 = vsel %vm1440, %v2173, 0
          %v2251 = vsel %vm1440, %v2174, 0
          %v2254 = vsel %vm1440, %v2175, 0
          %v2257 = vsel %vm1440, %v2176, 0
          %v2260 = vsel %vm1440, %v2177, 0
          %v2263 = vsel %vm1440, %v2178, 0
          %v2266 = vsel %vm1440, %v2179, 0
          %v2269 = vsel %vm1440, %v2180, 0
          %2271 = vmatprep.subr.mxu0 0.0
          %2272 = vmatpush1.msra.mxu0 %v2191
          %2273 = vmatprep.subr.mxu0 0.0
          %2274 = vmatpush1.msra.mxu0 %v2192
          %2275 = vmatprep.subr.mxu0 0.0
          %2276 = vmatpush1.msra.mxu0 %v2193
          %2277 = vmatprep.subr.mxu0 0.0
          %2278 = vmatpush1.msra.mxu0 %v2194
          %2279 = vmatprep.subr.mxu0 0.0
          %2280 = vmatpush1.msra.mxu0 %v2195
          %2281 = vmatprep.subr.mxu0 0.0
          %2282 = vmatpush1.msra.mxu0 %v2196
          %2283 = vmatprep.subr.mxu0 0.0
          %2284 = vmatpush1.msra.mxu0 %v2197
          %2285 = vmatprep.subr.mxu0 0.0
          %2286 = vmatpush1.msra.mxu0 %v2198
          %2287 = vmatprep.subr.mxu0 0.0
          %2288 = vmatpush1.msra.mxu0 0.0
          %2289 = vmatprep.subr.mxu0 0.0
          %2290 = vmatpush1.msra.mxu0 0.0
          %2291 = vmatprep.subr.mxu0 0.0
          %2292 = vmatpush1.msra.mxu0 0.0
          %2293 = vmatprep.subr.mxu0 0.0
          %2294 = vmatpush1.msra.mxu0 0.0
          %2295 = vmatprep.subr.mxu0 0.0
          %2296 = vmatpush1.msra.mxu0 0.0
          %2297 = vmatprep.subr.mxu0 0.0
          %2298 = vmatpush1.msra.mxu0 0.0
          %2299 = vmatprep.subr.mxu0 0.0
          %2300 = vmatpush1.msra.mxu0 0.0
          %2301 = vmatprep.subr.mxu0 0.0
          %2302 = vmatpush1.msra.mxu0 0.0
          %2303 = vmatprep.subr.mxu0 0.0
          %2304 = vmatpush1.msra.mxu0 0.0
          %2305 = vmatprep.subr.mxu0 0.0
          %2306 = vmatpush1.msra.mxu0 0.0
          %2307 = vmatprep.subr.mxu0 0.0
          %2308 = vmatpush1.msra.mxu0 0.0
          %2309 = vmatprep.subr.mxu0 0.0
          %2310 = vmatpush1.msra.mxu0 0.0
          %2311 = vmatprep.subr.mxu0 0.0
          %2312 = vmatpush1.msra.mxu0 0.0
          %2313 = vmatprep.subr.mxu0 0.0
          %2314 = vmatpush1.msra.mxu0 0.0
          %2315 = vmatprep.subr.mxu0 0.0
          %2316 = vmatpush1.msra.mxu0 0.0
          %2317 = vmatprep.subr.mxu0 0.0
          %2318 = vmatpush1.msra.mxu0 0.0
          %2319 = vmatprep.subr.mxu0 0.0
          %2320 = vmatpush1.msra.mxu0 0.0
          %2321 = vmatprep.subr.mxu0 0.0
          %2322 = vmatpush1.msra.mxu0 0.0
          %2323 = vmatprep.subr.mxu0 0.0
          %2324 = vmatpush1.msra.mxu0 0.0
          %2325 = vmatprep.subr.mxu0 0.0
          %2326 = vmatpush1.msra.mxu0 0.0
          %2327 = vmatprep.subr.mxu0 0.0
          %2328 = vmatpush1.msra.mxu0 0.0
          %2329 = vmatprep.subr.mxu0 0.0
          %2330 = vmatpush1.msra.mxu0 0.0
          %2331 = vmatprep.subr.mxu0 0.0
          %2332 = vmatpush1.msra.mxu0 0.0
          %2333 = vmatprep.subr.mxu0 0.0
          %2334 = vmatpush1.msra.mxu0 0.0
          %2335 = vmatprep.mubr.f32.mxu0 0.0
          %2336 = vmatmul.mubr.f32.gmra.mrb[0].mxu0 %v2200
          %v2337 = vpop.f32.mrb[0].mxu0
          %v2338 = vadd.f32 0.0, %v2337
          %v2339 = vpop.f32.mrb[0].mxu0
          %2340 = vmatprep.mubr.f32.mxu0 0.0
          %2341 = vmatmul.mubr.f32.gmra.mrb[0].mxu0 %v2203
          %v2342 = vpop.f32.mrb[0].mxu0
          %v2343 = vadd.f32 0.0, %v2342
          %v2344 = vpop.f32.mrb[0].mxu0
          %2345 = vmatprep.mubr.f32.mxu0 0.0
          %2346 = vmatmul.mubr.f32.gmra.mrb[0].mxu0 %v2206
          %v2347 = vpop.f32.mrb[0].mxu0
          %v2348 = vadd.f32 0.0, %v2347
          %v2349 = vpop.f32.mrb[0].mxu0
          %2350 = vmatprep.mubr.f32.mxu0 0.0
          %2351 = vmatmul.mubr.f32.gmra.mrb[0].mxu0 %v2209
          %v2352 = vpop.f32.mrb[0].mxu0
          %v2353 = vadd.f32 0.0, %v2352
          %v2354 = vpop.f32.mrb[0].mxu0
          %2355 = vmatprep.mubr.f32.mxu0 0.0
          %2356 = vmatmul.mubr.f32.gmra.mrb[0].mxu0 %v2212
          %v2357 = vpop.f32.mrb[0].mxu0
          %v2358 = vadd.f32 0.0, %v2357
          %v2359 = vpop.f32.mrb[0].mxu0
          %2360 = vmatprep.mubr.f32.mxu0 0.0
          %2361 = vmatmul.mubr.f32.gmra.mrb[0].mxu0 %v2215
          %v2362 = vpop.f32.mrb[0].mxu0
          %v2363 = vadd.f32 0.0, %v2362
          %v2364 = vpop.f32.mrb[0].mxu0
          %2365 = vmatprep.mubr.f32.mxu0 0.0
          %2366 = vmatmul.mubr.f32.gmra.mrb[0].mxu0 %v2218
          %v2367 = vpop.f32.mrb[0].mxu0
          %v2368 = vadd.f32 0.0, %v2367
          %v2369 = vpop.f32.mrb[0].mxu0
          %2370 = vmatprep.mubr.f32.mxu0 0.0
          %2371 = vmatmul.mubr.f32.gmra.mrb[0].mxu0 %v2221
          %v2372 = vpop.f32.mrb[0].mxu0
          %v2373 = vadd.f32 0.0, %v2372
          %v2374 = vpop.f32.mrb[0].mxu0
          %2375 = vmatprep.mubr.f32.mxu0 0.0
          %2376 = vmatmul.mubr.f32.gmra.mrb[0].mxu0 %v2224
          %v2377 = vpop.f32.mrb[0].mxu0
          %v2378 = vadd.f32 0.0, %v2377
          %v2379 = vpop.f32.mrb[0].mxu0
          %2380 = vmatprep.mubr.f32.mxu0 0.0
          %2381 = vmatmul.mubr.f32.gmra.mrb[0].mxu0 %v2227
          %v2382 = vpop.f32.mrb[0].mxu0
          %v2383 = vadd.f32 0.0, %v2382
          %v2384 = vpop.f32.mrb[0].mxu0
          %2385 = vmatprep.mubr.f32.mxu0 0.0
          %2386 = vmatmul.mubr.f32.gmra.mrb[0].mxu0 %v2230
          %v2387 = vpop.f32.mrb[0].mxu0
          %v2388 = vadd.f32 0.0, %v2387
          %v2389 = vpop.f32.mrb[0].mxu0
          %2390 = vmatprep.mubr.f32.mxu0 0.0
          %2391 = vmatmul.mubr.f32.gmra.mrb[0].mxu0 %v2233
          %v2392 = vpop.f32.mrb[0].mxu0
          %v2393 = vadd.f32 0.0, %v2392
          %v2394 = vpop.f32.mrb[0].mxu0
          %2395 = vmatprep.mubr.f32.mxu0 0.0
          %2396 = vmatmul.mubr.f32.gmra.mrb[0].mxu0 %v2236
          %v2397 = vpop.f32.mrb[0].mxu0
          %v2398 = vadd.f32 0.0, %v2397
          %v2399 = vpop.f32.mrb[0].mxu0
          %2400 = vmatprep.mubr.f32.mxu0 0.0
          %2401 = vmatmul.mubr.f32.gmra.mrb[0].mxu0 %v2239
          %v2402 = vpop.f32.mrb[0].mxu0
          %v2403 = vadd.f32 0.0, %v2402
          %v2404 = vpop.f32.mrb[0].mxu0
          %2405 = vmatprep.mubr.f32.mxu0 0.0
          %2406 = vmatmul.mubr.f32.gmra.mrb[0].mxu0 %v2242
          %v2407 = vpop.f32.mrb[0].mxu0
          %v2408 = vadd.f32 0.0, %v2407
          %v2409 = vpop.f32.mrb[0].mxu0
          %2410 = vmatprep.mubr.f32.mxu0 0.0
          %2411 = vmatmul.mubr.f32.gmra.mrb[0].mxu0 %v2245
          %v2412 = vpop.f32.mrb[0].mxu0
          %v2413 = vadd.f32 0.0, %v2412
          %v2414 = vpop.f32.mrb[0].mxu0
          %2415 = vmatprep.mubr.f32.mxu0 0.0
          %2416 = vmatmul.mubr.f32.gmra.mrb[0].mxu0 %v2248
          %v2417 = vpop.f32.mrb[0].mxu0
          %v2418 = vadd.f32 0.0, %v2417
          %v2419 = vpop.f32.mrb[0].mxu0
          %2420 = vmatprep.mubr.f32.mxu0 0.0
          %2421 = vmatmul.mubr.f32.gmra.mrb[0].mxu0 %v2251
          %v2422 = vpop.f32.mrb[0].mxu0
          %v2423 = vadd.f32 0.0, %v2422
          %v2424 = vpop.f32.mrb[0].mxu0
          %2425 = vmatprep.mubr.f32.mxu0 0.0
          %2426 = vmatmul.mubr.f32.gmra.mrb[0].mxu0 %v2254
          %v2427 = vpop.f32.mrb[0].mxu0
          %v2428 = vadd.f32 0.0, %v2427
          %v2429 = vpop.f32.mrb[0].mxu0
          %2430 = vmatprep.mubr.f32.mxu0 0.0
          %2431 = vmatmul.mubr.f32.gmra.mrb[0].mxu0 %v2257
          %v2432 = vpop.f32.mrb[0].mxu0
          %v2433 = vadd.f32 0.0, %v2432
          %v2434 = vpop.f32.mrb[0].mxu0
          %2435 = vmatprep.mubr.f32.mxu0 0.0
          %2436 = vmatmul.mubr.f32.gmra.mrb[0].mxu0 %v2260
          %v2437 = vpop.f32.mrb[0].mxu0
          %v2438 = vadd.f32 0.0, %v2437
          %v2439 = vpop.f32.mrb[0].mxu0
          %2440 = vmatprep.mubr.f32.mxu0 0.0
          %2441 = vmatmul.mubr.f32.gmra.mrb[0].mxu0 %v2263
          %v2442 = vpop.f32.mrb[0].mxu0
          %v2443 = vadd.f32 0.0, %v2442
          %v2444 = vpop.f32.mrb[0].mxu0
          %2445 = vmatprep.mubr.f32.mxu0 0.0
          %2446 = vmatmul.mubr.f32.gmra.mrb[0].mxu0 %v2266
          %v2447 = vpop.f32.mrb[0].mxu0
          %v2448 = vadd.f32 0.0, %v2447
          %v2449 = vpop.f32.mrb[0].mxu0
          %2450 = vmatprep.mubr.f32.mxu0 0.0
          %2451 = vmatmul.mubr.f32.gmra.mrb[0].mxu0 %v2269
          %v2452 = vpop.f32.mrb[0].mxu0
          %v2453 = vadd.f32 0.0, %v2452
          %v2454 = vpop.f32.mrb[0].mxu0
          %2455 = vdwg.mxu0
          %2456 = vmatprep.subr.mxu0 0.0
          %2457 = vmatpush1.msra.mxu0 %v2182
          %2458 = vmatprep.subr.mxu0 0.0
          %2459 = vmatpush1.msra.mxu0 %v2183
          %2460 = vmatprep.subr.mxu0 0.0
          %2461 = vmatpush1.msra.mxu0 %v2184
          %2462 = vmatprep.subr.mxu0 0.0
          %2463 = vmatpush1.msra.mxu0 %v2185
          %2464 = vmatprep.subr.mxu0 0.0
          %2465 = vmatpush1.msra.mxu0 %v2186
          %2466 = vmatprep.subr.mxu0 0.0
          %2467 = vmatpush1.msra.mxu0 %v2187
          %2468 = vmatprep.subr.mxu0 0.0
          %2469 = vmatpush1.msra.mxu0 %v2188
          %2470 = vmatprep.subr.mxu0 0.0
          %2471 = vmatpush1.msra.mxu0 %v2189
          %2472 = vmatprep.subr.mxu0 0.0
          %2473 = vmatpush1.msra.mxu0 0.0
          %2474 = vmatprep.subr.mxu0 0.0
          %2475 = vmatpush1.msra.mxu0 0.0
          %2476 = vmatprep.subr.mxu0 0.0
          %2477 = vmatpush1.msra.mxu0 0.0
          %2478 = vmatprep.subr.mxu0 0.0
          %2479 = vmatpush1.msra.mxu0 0.0
          %2480 = vmatprep.subr.mxu0 0.0
          %2481 = vmatpush1.msra.mxu0 0.0
          %2482 = vmatprep.subr.mxu0 0.0
          %2483 = vmatpush1.msra.mxu0 0.0
          %2484 = vmatprep.subr.mxu0 0.0
          %2485 = vmatpush1.msra.mxu0 0.0
          %2486 = vmatprep.subr.mxu0 0.0
          %2487 = vmatpush1.msra.mxu0 0.0
          %2488 = vmatprep.subr.mxu0 0.0
          %2489 = vmatpush1.msra.mxu0 0.0
          %2490 = vmatprep.subr.mxu0 0.0
          %2491 = vmatpush1.msra.mxu0 0.0
          %2492 = vmatprep.subr.mxu0 0.0
          %2493 = vmatpush1.msra.mxu0 0.0
          %2494 = vmatprep.subr.mxu0 0.0
          %2495 = vmatpush1.msra.mxu0 0.0
          %2496 = vmatprep.subr.mxu0 0.0
          %2497 = vmatpush1.msra.mxu0 0.0
          %2498 = vmatprep.subr.mxu0 0.0
          %2499 = vmatpush1.msra.mxu0 0.0
          %2500 = vmatprep.subr.mxu0 0.0
          %2501 = vmatpush1.msra.mxu0 0.0
          %2502 = vmatprep.subr.mxu0 0.0
          %2503 = vmatpush1.msra.mxu0 0.0
          %2504 = vmatprep.subr.mxu0 0.0
          %2505 = vmatpush1.msra.mxu0 0.0
          %2506 = vmatprep.subr.mxu0 0.0
          %2507 = vmatpush1.msra.mxu0 0.0
          %2508 = vmatprep.subr.mxu0 0.0
          %2509 = vmatpush1.msra.mxu0 0.0
          %2510 = vmatprep.subr.mxu0 0.0
          %2511 = vmatpush1.msra.mxu0 0.0
          %2512 = vmatprep.subr.mxu0 0.0
          %2513 = vmatpush1.msra.mxu0 0.0
          %2514 = vmatprep.subr.mxu0 0.0
          %2515 = vmatpush1.msra.mxu0 0.0
          %2516 = vmatprep.subr.mxu0 0.0
          %2517 = vmatpush1.msra.mxu0 0.0
          %2518 = vmatprep.subr.mxu0 0.0
          %2519 = vmatpush1.msra.mxu0 0.0
          %2520 = vmatprep.mubr.f32.mxu0 0.0
          %2521 = vmatmul.mubr.f32.gmra.mrb[0].mxu0 %v1698
          %v2522 = vpop.f32.mrb[0].mxu0
          %v2523 = vadd.f32 %v2338, %v2522
          %v2524 = vpop.f32.mrb[0].mxu0
          %2525 = vmatprep.mubr.f32.mxu0 0.0
          %2526 = vmatmul.mubr.f32.gmra.mrb[0].mxu0 %v2200
          %v2527 = vpop.f32.mrb[0].mxu0
          %v2528 = vadd.f32 %v2343, %v2527
          %v2529 = vpop.f32.mrb[0].mxu0
          %2530 = vmatprep.mubr.f32.mxu0 0.0
          %2531 = vmatmul.mubr.f32.gmra.mrb[0].mxu0 %v2203
          %v2532 = vpop.f32.mrb[0].mxu0
          %v2533 = vadd.f32 %v2348, %v2532
          %v2534 = vpop.f32.mrb[0].mxu0
          %2535 = vmatprep.mubr.f32.mxu0 0.0
          %2536 = vmatmul.mubr.f32.gmra.mrb[0].mxu0 %v2206
          %v2537 = vpop.f32.mrb[0].mxu0
          %v2538 = vadd.f32 %v2353, %v2537
          %v2539 = vpop.f32.mrb[0].mxu0
          %2540 = vmatprep.mubr.f32.mxu0 0.0
          %2541 = vmatmul.mubr.f32.gmra.mrb[0].mxu0 %v2209
          %v2542 = vpop.f32.mrb[0].mxu0
          %v2543 = vadd.f32 %v2358, %v2542
          %v2544 = vpop.f32.mrb[0].mxu0
          %2545 = vmatprep.mubr.f32.mxu0 0.0
          %2546 = vmatmul.mubr.f32.gmra.mrb[0].mxu0 %v2212
          %v2547 = vpop.f32.mrb[0].mxu0
          %v2548 = vadd.f32 %v2363, %v2547
          %v2549 = vpop.f32.mrb[0].mxu0
          %2550 = vmatprep.mubr.f32.mxu0 0.0
          %2551 = vmatmul.mubr.f32.gmra.mrb[0].mxu0 %v2215
          %v2552 = vpop.f32.mrb[0].mxu0
          %v2553 = vadd.f32 %v2368, %v2552
          %v2554 = vpop.f32.mrb[0].mxu0
          %2555 = vmatprep.mubr.f32.mxu0 0.0
          %2556 = vmatmul.mubr.f32.gmra.mrb[0].mxu0 %v2218
          %v2557 = vpop.f32.mrb[0].mxu0
          %v2558 = vadd.f32 %v2373, %v2557
          %v2559 = vpop.f32.mrb[0].mxu0
          %2560 = vmatprep.mubr.f32.mxu0 0.0
          %2561 = vmatmul.mubr.f32.gmra.mrb[0].mxu0 %v2221
          %v2562 = vpop.f32.mrb[0].mxu0
          %v2563 = vadd.f32 %v2378, %v2562
          %v2564 = vpop.f32.mrb[0].mxu0
          %2565 = vmatprep.mubr.f32.mxu0 0.0
          %2566 = vmatmul.mubr.f32.gmra.mrb[0].mxu0 %v2224
          %v2567 = vpop.f32.mrb[0].mxu0
          %v2568 = vadd.f32 %v2383, %v2567
          %v2569 = vpop.f32.mrb[0].mxu0
          %2570 = vmatprep.mubr.f32.mxu0 0.0
          %2571 = vmatmul.mubr.f32.gmra.mrb[0].mxu0 %v2227
          %v2572 = vpop.f32.mrb[0].mxu0
          %v2573 = vadd.f32 %v2388, %v2572
          %v2574 = vpop.f32.mrb[0].mxu0
          %2575 = vmatprep.mubr.f32.mxu0 0.0
          %2576 = vmatmul.mubr.f32.gmra.mrb[0].mxu0 %v2230
          %v2577 = vpop.f32.mrb[0].mxu0
          %v2578 = vadd.f32 %v2393, %v2577
          %v2579 = vpop.f32.mrb[0].mxu0
          %2580 = vmatprep.mubr.f32.mxu0 0.0
          %2581 = vmatmul.mubr.f32.gmra.mrb[0].mxu0 %v2233
          %v2582 = vpop.f32.mrb[0].mxu0
          %v2583 = vadd.f32 %v2398, %v2582
          %v2584 = vpop.f32.mrb[0].mxu0
          %2585 = vmatprep.mubr.f32.mxu0 0.0
          %2586 = vmatmul.mubr.f32.gmra.mrb[0].mxu0 %v2236
          %v2587 = vpop.f32.mrb[0].mxu0
          %v2588 = vadd.f32 %v2403, %v2587
          %v2589 = vpop.f32.mrb[0].mxu0
          %2590 = vmatprep.mubr.f32.mxu0 0.0
          %2591 = vmatmul.mubr.f32.gmra.mrb[0].mxu0 %v2239
          %v2592 = vpop.f32.mrb[0].mxu0
          %v2593 = vadd.f32 %v2408, %v2592
          %v2594 = vpop.f32.mrb[0].mxu0
          %2595 = vmatprep.mubr.f32.mxu0 0.0
          %2596 = vmatmul.mubr.f32.gmra.mrb[0].mxu0 %v2242
          %v2597 = vpop.f32.mrb[0].mxu0
          %v2598 = vadd.f32 %v2413, %v2597
          %v2599 = vpop.f32.mrb[0].mxu0
          %2600 = vmatprep.mubr.f32.mxu0 0.0
          %2601 = vmatmul.mubr.f32.gmra.mrb[0].mxu0 %v2245
          %v2602 = vpop.f32.mrb[0].mxu0
          %v2603 = vadd.f32 %v2418, %v2602
          %v2604 = vpop.f32.mrb[0].mxu0
          %2605 = vmatprep.mubr.f32.mxu0 0.0
          %2606 = vmatmul.mubr.f32.gmra.mrb[0].mxu0 %v2248
          %v2607 = vpop.f32.mrb[0].mxu0
          %v2608 = vadd.f32 %v2423, %v2607
          %v2609 = vpop.f32.mrb[0].mxu0
          %2610 = vmatprep.mubr.f32.mxu0 0.0
          %2611 = vmatmul.mubr.f32.gmra.mrb[0].mxu0 %v2251
          %v2612 = vpop.f32.mrb[0].mxu0
          %v2613 = vadd.f32 %v2428, %v2612
          %v2614 = vpop.f32.mrb[0].mxu0
          %2615 = vmatprep.mubr.f32.mxu0 0.0
          %2616 = vmatmul.mubr.f32.gmra.mrb[0].mxu0 %v2254
          %v2617 = vpop.f32.mrb[0].mxu0
          %v2618 = vadd.f32 %v2433, %v2617
          %v2619 = vpop.f32.mrb[0].mxu0
          %2620 = vmatprep.mubr.f32.mxu0 0.0
          %2621 = vmatmul.mubr.f32.gmra.mrb[0].mxu0 %v2257
          %v2622 = vpop.f32.mrb[0].mxu0
          %v2623 = vadd.f32 %v2438, %v2622
          %v2624 = vpop.f32.mrb[0].mxu0
          %2625 = vmatprep.mubr.f32.mxu0 0.0
          %2626 = vmatmul.mubr.f32.gmra.mrb[0].mxu0 %v2260
          %v2627 = vpop.f32.mrb[0].mxu0
          %v2628 = vadd.f32 %v2443, %v2627
          %v2629 = vpop.f32.mrb[0].mxu0
          %2630 = vmatprep.mubr.f32.mxu0 0.0
          %2631 = vmatmul.mubr.f32.gmra.mrb[0].mxu0 %v2263
          %v2632 = vpop.f32.mrb[0].mxu0
          %v2633 = vadd.f32 %v2448, %v2632
          %v2634 = vpop.f32.mrb[0].mxu0
          %2635 = vmatprep.mubr.f32.mxu0 0.0
          %2636 = vmatmul.mubr.f32.gmra.mrb[0].mxu0 %v2266
          %v2637 = vpop.f32.mrb[0].mxu0
          %v2638 = vadd.f32 %v2453, %v2637
          %v2639 = vpop.f32.mrb[0].mxu0
          %2640 = vdwg.mxu0
          %s2641 = scalar_lea.vmem [#allocation9], 128
          %v2642 = vld [vmem:[%s2641] sm:$0xff]
          %v2643 = vld [vmem:[%s2641 + $0x8] sm:$0xff]
          %v2644 = vld [vmem:[%s2641 + $0x10] sm:$0xff]
          %v2645 = vld [vmem:[%s2641 + $0x18] sm:$0xff]
          %v2646 = vld [vmem:[%s2641 + $0x20] sm:$0xff]
          %v2647 = vld [vmem:[%s2641 + $0x28] sm:$0xff]
          %v2648 = vld [vmem:[%s2641 + $0x30] sm:$0xff]
          %v2649 = vld [vmem:[%s2641 + $0x38] sm:$0xff]
          %2650 = vmatprep.subr.mxu0 0.0
          %2651 = vmatpush1.msra.mxu0 %v2642
          %2652 = vmatprep.subr.mxu0 0.0
          %2653 = vmatpush1.msra.mxu0 %v2643
          %2654 = vmatprep.subr.mxu0 0.0
          %2655 = vmatpush1.msra.mxu0 %v2644
          %2656 = vmatprep.subr.mxu0 0.0
          %2657 = vmatpush1.msra.mxu0 %v2645
          %2658 = vmatprep.subr.mxu0 0.0
          %2659 = vmatpush1.msra.mxu0 %v2646
          %2660 = vmatprep.subr.mxu0 0.0
          %2661 = vmatpush1.msra.mxu0 %v2647
          %2662 = vmatprep.subr.mxu0 0.0
          %2663 = vmatpush1.msra.mxu0 %v2648
          %2664 = vmatprep.subr.mxu0 0.0
          %2665 = vmatpush1.msra.mxu0 %v2649
          %2666 = vmatprep.subr.mxu0 0.0
          %2667 = vmatpush1.msra.mxu0 0.0
          %2668 = vmatprep.subr.mxu0 0.0
          %2669 = vmatpush1.msra.mxu0 0.0
          %2670 = vmatprep.subr.mxu0 0.0
          %2671 = vmatpush1.msra.mxu0 0.0
          %2672 = vmatprep.subr.mxu0 0.0
          %2673 = vmatpush1.msra.mxu0 0.0
          %2674 = vmatprep.subr.mxu0 0.0
          %2675 = vmatpush1.msra.mxu0 0.0
          %2676 = vmatprep.subr.mxu0 0.0
          %2677 = vmatpush1.msra.mxu0 0.0
          %2678 = vmatprep.subr.mxu0 0.0
          %2679 = vmatpush1.msra.mxu0 0.0
          %2680 = vmatprep.subr.mxu0 0.0
          %2681 = vmatpush1.msra.mxu0 0.0
          %2682 = vmatprep.subr.mxu0 0.0
          %2683 = vmatpush1.msra.mxu0 0.0
          %2684 = vmatprep.subr.mxu0 0.0
          %2685 = vmatpush1.msra.mxu0 0.0
          %2686 = vmatprep.subr.mxu0 0.0
          %2687 = vmatpush1.msra.mxu0 0.0
          %2688 = vmatprep.subr.mxu0 0.0
          %2689 = vmatpush1.msra.mxu0 0.0
          %2690 = vmatprep.subr.mxu0 0.0
          %2691 = vmatpush1.msra.mxu0 0.0
          %2692 = vmatprep.subr.mxu0 0.0
          %2693 = vmatpush1.msra.mxu0 0.0
          %2694 = vmatprep.subr.mxu0 0.0
          %2695 = vmatpush1.msra.mxu0 0.0
          %2696 = vmatprep.subr.mxu0 0.0
          %2697 = vmatpush1.msra.mxu0 0.0
          %2698 = vmatprep.subr.mxu0 0.0
          %2699 = vmatpush1.msra.mxu0 0.0
          %2700 = vmatprep.subr.mxu0 0.0
          %2701 = vmatpush1.msra.mxu0 0.0
          %2702 = vmatprep.subr.mxu0 0.0
          %2703 = vmatpush1.msra.mxu0 0.0
          %2704 = vmatprep.subr.mxu0 0.0
          %2705 = vmatpush1.msra.mxu0 0.0
          %2706 = vmatprep.subr.mxu0 0.0
          %2707 = vmatpush1.msra.mxu0 0.0
          %2708 = vmatprep.subr.mxu0 0.0
          %2709 = vmatpush1.msra.mxu0 0.0
          %2710 = vmatprep.subr.mxu0 0.0
          %2711 = vmatpush1.msra.mxu0 0.0
          %2712 = vmatprep.subr.mxu0 0.0
          %2713 = vmatpush1.msra.mxu0 0.0
          %2714 = vmatprep.mubr.f32.mxu0 0.0
          %2715 = vmatmul.mubr.f32.gmra.mrb[0].mxu0 %v2203
          %v2716 = vpop.f32.mrb[0].mxu0
          %v2717 = vadd.f32 0.0, %v2716
          %v2718 = vpop.f32.mrb[0].mxu0
          %2719 = vmatprep.mubr.f32.mxu0 0.0
          %2720 = vmatmul.mubr.f32.gmra.mrb[0].mxu0 %v2206
          %v2721 = vpop.f32.mrb[0].mxu0
          %v2722 = vadd.f32 0.0, %v2721
          %v2723 = vpop.f32.mrb[0].mxu0
          %2724 = vmatprep.mubr.f32.mxu0 0.0
          %2725 = vmatmul.mubr.f32.gmra.mrb[0].mxu0 %v2209
          %v2726 = vpop.f32.mrb[0].mxu0
          %v2727 = vadd.f32 0.0, %v2726
          %v2728 = vpop.f32.mrb[0].mxu0
          %2729 = vmatprep.mubr.f32.mxu0 0.0
          %2730 = vmatmul.mubr.f32.gmra.mrb[0].mxu0 %v2212
          %v2731 = vpop.f32.mrb[0].mxu0
          %v2732 = vadd.f32 0.0, %v2731
          %v2733 = vpop.f32.mrb[0].mxu0
          %2734 = vmatprep.mubr.f32.mxu0 0.0
          %2735 = vmatmul.mubr.f32.gmra.mrb[0].mxu0 %v2215
          %v2736 = vpop.f32.mrb[0].mxu0
          %v2737 = vadd.f32 0.0, %v2736
          %v2738 = vpop.f32.mrb[0].mxu0
          %2739 = vmatprep.mubr.f32.mxu0 0.0
          %2740 = vmatmul.mubr.f32.gmra.mrb[0].mxu0 %v2218
          %v2741 = vpop.f32.mrb[0].mxu0
          %v2742 = vadd.f32 0.0, %v2741
          %v2743 = vpop.f32.mrb[0].mxu0
          %2744 = vmatprep.mubr.f32.mxu0 0.0
          %2745 = vmatmul.mubr.f32.gmra.mrb[0].mxu0 %v2221
          %v2746 = vpop.f32.mrb[0].mxu0
          %v2747 = vadd.f32 0.0, %v2746
          %v2748 = vpop.f32.mrb[0].mxu0
          %2749 = vmatprep.mubr.f32.mxu0 0.0
          %2750 = vmatmul.mubr.f32.gmra.mrb[0].mxu0 %v2224
          %v2751 = vpop.f32.mrb[0].mxu0
          %v2752 = vadd.f32 0.0, %v2751
          %v2753 = vpop.f32.mrb[0].mxu0
          %2754 = vmatprep.mubr.f32.mxu0 0.0
          %2755 = vmatmul.mubr.f32.gmra.mrb[0].mxu0 %v2227
          %v2756 = vpop.f32.mrb[0].mxu0
          %v2757 = vadd.f32 0.0, %v2756
          %v2758 = vpop.f32.mrb[0].mxu0
          %2759 = vmatprep.mubr.f32.mxu0 0.0
          %2760 = vmatmul.mubr.f32.gmra.mrb[0].mxu0 %v2230
          %v2761 = vpop.f32.mrb[0].mxu0
          %v2762 = vadd.f32 0.0, %v2761
          %v2763 = vpop.f32.mrb[0].mxu0
          %2764 = vmatprep.mubr.f32.mxu0 0.0
          %2765 = vmatmul.mubr.f32.gmra.mrb[0].mxu0 %v2233
          %v2766 = vpop.f32.mrb[0].mxu0
          %v2767 = vadd.f32 0.0, %v2766
          %v2768 = vpop.f32.mrb[0].mxu0
          %2769 = vmatprep.mubr.f32.mxu0 0.0
          %2770 = vmatmul.mubr.f32.gmra.mrb[0].mxu0 %v2236
          %v2771 = vpop.f32.mrb[0].mxu0
          %v2772 = vadd.f32 0.0, %v2771
          %v2773 = vpop.f32.mrb[0].mxu0
          %2774 = vmatprep.mubr.f32.mxu0 0.0
          %2775 = vmatmul.mubr.f32.gmra.mrb[0].mxu0 %v2239
          %v2776 = vpop.f32.mrb[0].mxu0
          %v2777 = vadd.f32 0.0, %v2776
          %v2778 = vpop.f32.mrb[0].mxu0
          %2779 = vmatprep.mubr.f32.mxu0 0.0
          %2780 = vmatmul.mubr.f32.gmra.mrb[0].mxu0 %v2242
          %v2781 = vpop.f32.mrb[0].mxu0
          %v2782 = vadd.f32 0.0, %v2781
          %v2783 = vpop.f32.mrb[0].mxu0
          %2784 = vmatprep.mubr.f32.mxu0 0.0
          %2785 = vmatmul.mubr.f32.gmra.mrb[0].mxu0 %v2245
          %v2786 = vpop.f32.mrb[0].mxu0
          %v2787 = vadd.f32 0.0, %v2786
          %v2788 = vpop.f32.mrb[0].mxu0
          %2789 = vmatprep.mubr.f32.mxu0 0.0
          %2790 = vmatmul.mubr.f32.gmra.mrb[0].mxu0 %v2248
          %v2791 = vpop.f32.mrb[0].mxu0
          %v2792 = vadd.f32 0.0, %v2791
          %v2793 = vpop.f32.mrb[0].mxu0
          %2794 = vmatprep.mubr.f32.mxu0 0.0
          %2795 = vmatmul.mubr.f32.gmra.mrb[0].mxu0 %v2251
          %v2796 = vpop.f32.mrb[0].mxu0
          %v2797 = vadd.f32 0.0, %v2796
          %v2798 = vpop.f32.mrb[0].mxu0
          %2799 = vmatprep.mubr.f32.mxu0 0.0
          %2800 = vmatmul.mubr.f32.gmra.mrb[0].mxu0 %v2254
          %v2801 = vpop.f32.mrb[0].mxu0
          %v2802 = vadd.f32 0.0, %v2801
          %v2803 = vpop.f32.mrb[0].mxu0
          %2804 = vmatprep.mubr.f32.mxu0 0.0
          %2805 = vmatmul.mubr.f32.gmra.mrb[0].mxu0 %v2257
          %v2806 = vpop.f32.mrb[0].mxu0
          %v2807 = vadd.f32 0.0, %v2806
          %v2808 = vpop.f32.mrb[0].mxu0
          %2809 = vmatprep.mubr.f32.mxu0 0.0
          %2810 = vmatmul.mubr.f32.gmra.mrb[0].mxu0 %v2260
          %v2811 = vpop.f32.mrb[0].mxu0
          %v2812 = vadd.f32 0.0, %v2811
          %v2813 = vpop.f32.mrb[0].mxu0
          %2814 = vmatprep.mubr.f32.mxu0 0.0
          %2815 = vmatmul.mubr.f32.gmra.mrb[0].mxu0 %v2263
          %v2816 = vpop.f32.mrb[0].mxu0
          %v2817 = vadd.f32 0.0, %v2816
          %v2818 = vpop.f32.mrb[0].mxu0
          %2819 = vmatprep.mubr.f32.mxu0 0.0
          %2820 = vmatmul.mubr.f32.gmra.mrb[0].mxu0 %v2266
          %v2821 = vpop.f32.mrb[0].mxu0
          %v2822 = vadd.f32 0.0, %v2821
          %v2823 = vpop.f32.mrb[0].mxu0
          %2824 = vmatprep.mubr.f32.mxu0 0.0
          %2825 = vmatmul.mubr.f32.gmra.mrb[0].mxu0 %v2269
          %v2826 = vpop.f32.mrb[0].mxu0
          %v2827 = vadd.f32 0.0, %v2826
          %v2828 = vpop.f32.mrb[0].mxu0
          %2829 = vmatprep.mubr.f32.mxu0 0.0
          %2830 = vmatmul.mubr.f32.gmra.mrb[0].mxu0 %v1698
          %v2831 = vpop.f32.mrb[0].mxu0
          %v2832 = vadd.f32 0.0, %v2831
          %v2833 = vpop.f32.mrb[0].mxu0
          %2834 = vdwg.mxu0
          %v2835 = vadd.f32 %v2523, %v2717
          %v2836 = vadd.f32 %v2528, %v2722
          %v2837 = vadd.f32 %v2533, %v2727
          %v2838 = vadd.f32 %v2538, %v2732
          %v2839 = vadd.f32 %v2543, %v2737
          %v2840 = vadd.f32 %v2548, %v2742
          %v2841 = vadd.f32 %v2553, %v2747
          %v2842 = vadd.f32 %v2558, %v2752
          %v2843 = vadd.f32 %v2563, %v2757
          %v2844 = vadd.f32 %v2568, %v2762
          %v2845 = vadd.f32 %v2573, %v2767
          %v2846 = vadd.f32 %v2578, %v2772
          %v2847 = vadd.f32 %v2583, %v2777
          %v2848 = vadd.f32 %v2588, %v2782
          %v2849 = vadd.f32 %v2593, %v2787
          %v2850 = vadd.f32 %v2598, %v2792
          %v2851 = vadd.f32 %v2603, %v2797
          %v2852 = vadd.f32 %v2608, %v2802
          %v2853 = vadd.f32 %v2613, %v2807
          %v2854 = vadd.f32 %v2618, %v2812
          %v2855 = vadd.f32 %v2623, %v2817
          %v2856 = vadd.f32 %v2628, %v2822
          %v2857 = vadd.f32 %v2633, %v2827
          %v2858 = vadd.f32 %v2638, %v2832
          %v2860 = vlaneseq
          %v2861 = vshrl.u32 %v2860, 7
          %v2862 = vsub.s32 0, %v2861
          %v2863 = vrot.slane %v2181, %v2862
          %v2865 = vadd.f32 %v2835, %v2863
          %v2866 = vadd.f32 %v2836, %v2863
          %v2867 = vadd.f32 %v2837, %v2863
          %v2868 = vadd.f32 %v2838, %v2863
          %v2869 = vadd.f32 %v2839, %v2863
          %v2870 = vadd.f32 %v2840, %v2863
          %v2871 = vadd.f32 %v2841, %v2863
          %v2872 = vadd.f32 %v2842, %v2863
          %v2873 = vadd.f32 %v2843, %v2863
          %v2874 = vadd.f32 %v2844, %v2863
          %v2875 = vadd.f32 %v2845, %v2863
          %v2876 = vadd.f32 %v2846, %v2863
          %v2877 = vadd.f32 %v2847, %v2863
          %v2878 = vadd.f32 %v2848, %v2863
          %v2879 = vadd.f32 %v2849, %v2863
          %v2880 = vadd.f32 %v2850, %v2863
          %v2881 = vadd.f32 %v2851, %v2863
          %v2882 = vadd.f32 %v2852, %v2863
          %v2883 = vadd.f32 %v2853, %v2863
          %v2884 = vadd.f32 %v2854, %v2863
          %v2885 = vadd.f32 %v2855, %v2863
          %v2886 = vadd.f32 %v2856, %v2863
          %v2887 = vadd.f32 %v2857, %v2863
          %v2888 = vadd.f32 %v2858, %v2863
          %v2889 = vmul.f32 %v2865, 0.1
          %v2890 = vmul.f32 %v2866, 0.1
          %v2891 = vmul.f32 %v2867, 0.1
          %v2892 = vmul.f32 %v2868, 0.1
          %v2893 = vmul.f32 %v2869, 0.1
          %v2894 = vmul.f32 %v2870, 0.1
          %v2895 = vmul.f32 %v2871, 0.1
          %v2896 = vmul.f32 %v2872, 0.1
          %v2897 = vmul.f32 %v2873, 0.1
          %v2898 = vmul.f32 %v2874, 0.1
          %v2899 = vmul.f32 %v2875, 0.1
          %v2900 = vmul.f32 %v2876, 0.1
          %v2901 = vmul.f32 %v2877, 0.1
          %v2902 = vmul.f32 %v2878, 0.1
          %v2903 = vmul.f32 %v2879, 0.1
          %v2904 = vmul.f32 %v2880, 0.1
          %v2905 = vmul.f32 %v2881, 0.1
          %v2906 = vmul.f32 %v2882, 0.1
          %v2907 = vmul.f32 %v2883, 0.1
          %v2908 = vmul.f32 %v2884, 0.1
          %v2909 = vmul.f32 %v2885, 0.1
          %v2910 = vmul.f32 %v2886, 0.1
          %v2911 = vmul.f32 %v2887, 0.1
          %v2912 = vmul.f32 %v2888, 0.1
          %v2913 = vmax.f32 %v2865, %v2889
          %v2914 = vmax.f32 %v2866, %v2890
          %v2915 = vmax.f32 %v2867, %v2891
          %v2916 = vmax.f32 %v2868, %v2892
          %v2917 = vmax.f32 %v2869, %v2893
          %v2918 = vmax.f32 %v2870, %v2894
          %v2919 = vmax.f32 %v2871, %v2895
          %v2920 = vmax.f32 %v2872, %v2896
          %v2921 = vmax.f32 %v2873, %v2897
          %v2922 = vmax.f32 %v2874, %v2898
          %v2923 = vmax.f32 %v2875, %v2899
          %v2924 = vmax.f32 %v2876, %v2900
          %v2925 = vmax.f32 %v2877, %v2901
          %v2926 = vmax.f32 %v2878, %v2902
          %v2927 = vmax.f32 %v2879, %v2903
          %v2928 = vmax.f32 %v2880, %v2904
          %v2929 = vmax.f32 %v2881, %v2905
          %v2930 = vmax.f32 %v2882, %v2906
          %v2931 = vmax.f32 %v2883, %v2907
          %v2932 = vmax.f32 %v2884, %v2908
          %v2933 = vmax.f32 %v2885, %v2909
          %v2934 = vmax.f32 %v2886, %v2910
          %v2935 = vmax.f32 %v2887, %v2911
          %v2936 = vmax.f32 %v2888, %v2912
          %2937 = vst [vmem:[#allocation2] sm:$0xff] %v2913
          %2938 = vst [vmem:[#allocation2 + $0x8] sm:$0xff] %v2914
          %2939 = vst [vmem:[#allocation2 + $0x10] sm:$0xff] %v2915
          %2940 = vst [vmem:[#allocation2 + $0x18] sm:$0xff] %v2916
          %2941 = vst [vmem:[#allocation2 + $0x20] sm:$0xff] %v2917
          %2942 = vst [vmem:[#allocation2 + $0x28] sm:$0xff] %v2918
          %2943 = vst [vmem:[#allocation2 + $0x30] sm:$0xff] %v2919
          %2944 = vst [vmem:[#allocation2 + $0x38] sm:$0xff] %v2920
          %2945 = vst [vmem:[#allocation2 + $0x40] sm:$0xff] %v2921
          %2946 = vst [vmem:[#allocation2 + $0x48] sm:$0xff] %v2922
          %2947 = vst [vmem:[#allocation2 + $0x50] sm:$0xff] %v2923
          %2948 = vst [vmem:[#allocation2 + $0x58] sm:$0xff] %v2924
          %2949 = vst [vmem:[#allocation2 + $0x60] sm:$0xff] %v2925
          %2950 = vst [vmem:[#allocation2 + $0x68] sm:$0xff] %v2926
          %2951 = vst [vmem:[#allocation2 + $0x70] sm:$0xff] %v2927
          %2952 = vst [vmem:[#allocation2 + $0x78] sm:$0xff] %v2928
          %2953 = vst [vmem:[#allocation2 + $0x80] sm:$0xff] %v2929
          %2954 = vst [vmem:[#allocation2 + $0x88] sm:$0xff] %v2930
          %2955 = vst [vmem:[#allocation2 + $0x90] sm:$0xff] %v2931
          %2956 = vst [vmem:[#allocation2 + $0x98] sm:$0xff] %v2932
          %2957 = vst [vmem:[#allocation2 + $0xa0] sm:$0xff] %v2933
          %2958 = vst [vmem:[#allocation2 + $0xa8] sm:$0xff] %v2934
          %2959 = vst [vmem:[#allocation2 + $0xb0] sm:$0xff] %v2935
          %2960 = vst [vmem:[#allocation2 + $0xb8] sm:$0xff] %v2936
          %2961 = vst [vmem:[#allocation3] sm:$0xff] 0.0
          %2962 = vst [vmem:[#allocation3 + $0x8] sm:$0xff] 0.0
          %2963 = vst [vmem:[#allocation3 + $0x10] sm:$0xff] 0.0
          %2964 = vst [vmem:[#allocation3 + $0x18] sm:$0xff] 0.0
          %2965 = vst [vmem:[#allocation3 + $0x20] sm:$0xff] 0.0
          %2966 = vst [vmem:[#allocation3 + $0x28] sm:$0xff] 0.0
          %2967 = vst [vmem:[#allocation3 + $0x30] sm:$0xff] 0.0
          %2968 = vst [vmem:[#allocation3 + $0x38] sm:$0xff] 0.0
        $region104: #{actor_forward.1} parent=63 // pred_fallthru
          _
        %s2969 = smul.u32 %s39, 64
        %s2970 = scalar_lea.vmem [#allocation2], %s2969
        %v2971 = vld [vmem:[%s2970] sm:$0xff]
        %v2972 = vld [vmem:[%s2970 + $0x8] sm:$0xff]
        %v2973 = vld [vmem:[%s2970 + $0x10] sm:$0xff]
        %v2974 = vld [vmem:[%s2970 + $0x18] sm:$0xff]
        %v2975 = vld [vmem:[%s2970 + $0x20] sm:$0xff]
        %v2976 = vld [vmem:[%s2970 + $0x28] sm:$0xff]
        %v2977 = vld [vmem:[%s2970 + $0x30] sm:$0xff]
        %v2978 = vld [vmem:[%s2970 + $0x38] sm:$0xff]
        %v2979 = vld [vmem:[#allocation3] sm:$0xff]
        %v2980 = vld [vmem:[#allocation3 + $0x8] sm:$0xff]
        %v2981 = vld [vmem:[#allocation3 + $0x10] sm:$0xff]
        %v2982 = vld [vmem:[#allocation3 + $0x18] sm:$0xff]
        %v2983 = vld [vmem:[#allocation3 + $0x20] sm:$0xff]
        %v2984 = vld [vmem:[#allocation3 + $0x28] sm:$0xff]
        %v2985 = vld [vmem:[#allocation3 + $0x30] sm:$0xff]
        %v2986 = vld [vmem:[#allocation3 + $0x38] sm:$0xff]
        %v2987 = vpack.c.bf16 %v2971, %v2971
        %v2988 = vld [vmem:[%s568] sm:$0xff]
        %v2989 = vld [vmem:[%s568 + $0x8] sm:$0xff]
        %v2990 = vld [vmem:[%s568 + $0x10] sm:$0xff]
        %v2991 = vld [vmem:[%s568 + $0x18] sm:$0xff]
        %v2992 = vld [vmem:[%s568 + $0x20] sm:$0xff]
        %v2993 = vld [vmem:[%s568 + $0x28] sm:$0xff]
        %v2994 = vld [vmem:[%s568 + $0x30] sm:$0xff]
        %v2995 = vld [vmem:[%s568 + $0x38] sm:$0xff]
        %v2996 = vld [vmem:[%s568 + $0x40] sm:$0xff]
        %v2997 = vld [vmem:[%s568 + $0x48] sm:$0xff]
        %v2998 = vld [vmem:[%s568 + $0x50] sm:$0xff]
        %v2999 = vld [vmem:[%s568 + $0x58] sm:$0xff]
        %v3000 = vld [vmem:[%s568 + $0x60] sm:$0xff]
        %v3001 = vld [vmem:[%s568 + $0x68] sm:$0xff]
        %v3002 = vld [vmem:[%s568 + $0x70] sm:$0xff]
        %v3003 = vld [vmem:[%s568 + $0x78] sm:$0xff]
        %v3004 = vld [vmem:[%s568 + $0x80] sm:$0xff]
        %v3005 = vld [vmem:[%s568 + $0x88] sm:$0xff]
        %v3006 = vld [vmem:[%s568 + $0x90] sm:$0xff]
        %v3007 = vld [vmem:[%s568 + $0x98] sm:$0xff]
        %v3008 = vld [vmem:[%s568 + $0xa0] sm:$0xff]
        %v3009 = vld [vmem:[%s568 + $0xa8] sm:$0xff]
        %v3010 = vld [vmem:[%s568 + $0xb0] sm:$0xff]
        %v3011 = vld [vmem:[%s568 + $0xb8] sm:$0xff]
        %v3012 = vld [vmem:[%s568 + $0xc0] sm:$0xff]
        %v3013 = vld [vmem:[%s568 + $0xc8] sm:$0xff]
        %v3014 = vld [vmem:[%s568 + $0xd0] sm:$0xff]
        %v3015 = vld [vmem:[%s568 + $0xd8] sm:$0xff]
        %v3016 = vld [vmem:[%s568 + $0xe0] sm:$0xff]
        %v3017 = vld [vmem:[%s568 + $0xe8] sm:$0xff]
        %v3018 = vld [vmem:[%s568 + $0xf0] sm:$0xff]
        %v3019 = vld [vmem:[%s568 + $0xf8] sm:$0xff]
        %v3020 = vld [vmem:[%s568 + $0x100] sm:$0xff]
        %v3021 = vld [vmem:[%s568 + $0x108] sm:$0xff]
        %v3022 = vld [vmem:[%s568 + $0x110] sm:$0xff]
        %v3023 = vld [vmem:[%s568 + $0x118] sm:$0xff]
        %v3024 = vld [vmem:[%s568 + $0x120] sm:$0xff]
        %v3025 = vld [vmem:[%s568 + $0x128] sm:$0xff]
        %v3026 = vld [vmem:[%s568 + $0x130] sm:$0xff]
        %v3027 = vld [vmem:[%s568 + $0x138] sm:$0xff]
        %v3028 = vld [vmem:[%s568 + $0x140] sm:$0xff]
        %v3029 = vld [vmem:[%s568 + $0x148] sm:$0xff]
        %v3030 = vld [vmem:[%s568 + $0x150] sm:$0xff]
        %v3031 = vld [vmem:[%s568 + $0x158] sm:$0xff]
        %v3032 = vld [vmem:[%s568 + $0x160] sm:$0xff]
        %v3033 = vld [vmem:[%s568 + $0x168] sm:$0xff]
        %v3034 = vld [vmem:[%s568 + $0x170] sm:$0xff]
        %v3035 = vld [vmem:[%s568 + $0x178] sm:$0xff]
        %v3036 = vld [vmem:[%s568 + $0x180] sm:$0xff]
        %v3037 = vld [vmem:[%s568 + $0x188] sm:$0xff]
        %v3038 = vld [vmem:[%s568 + $0x190] sm:$0xff]
        %v3039 = vld [vmem:[%s568 + $0x198] sm:$0xff]
        %v3040 = vld [vmem:[%s568 + $0x1a0] sm:$0xff]
        %v3041 = vld [vmem:[%s568 + $0x1a8] sm:$0xff]
        %v3042 = vld [vmem:[%s568 + $0x1b0] sm:$0xff]
        %v3043 = vld [vmem:[%s568 + $0x1b8] sm:$0xff]
        %v3044 = vld [vmem:[%s568 + $0x1c0] sm:$0xff]
        %v3045 = vld [vmem:[%s568 + $0x1c8] sm:$0xff]
        %v3046 = vld [vmem:[%s568 + $0x1d0] sm:$0xff]
        %v3047 = vld [vmem:[%s568 + $0x1d8] sm:$0xff]
        %v3048 = vld [vmem:[%s568 + $0x1e0] sm:$0xff]
        %v3049 = vld [vmem:[%s568 + $0x1e8] sm:$0xff]
        %v3050 = vld [vmem:[%s568 + $0x1f0] sm:$0xff]
        %v3051 = vld [vmem:[%s568 + $0x1f8] sm:$0xff]
        %v3116 = vunpack.c.l.b16 %v2988
        %v3117 = vunpack.c.h.b16 %v2988
        %v3118 = vunpack.c.l.b16 %v2989
        %v3119 = vunpack.c.h.b16 %v2989
        %v3120 = vunpack.c.l.b16 %v2990
        %v3121 = vunpack.c.h.b16 %v2990
        %v3122 = vunpack.c.l.b16 %v2991
        %v3123 = vunpack.c.h.b16 %v2991
        %v3124 = vunpack.c.l.b16 %v2992
        %v3125 = vunpack.c.h.b16 %v2992
        %v3126 = vunpack.c.l.b16 %v2993
        %v3127 = vunpack.c.h.b16 %v2993
        %v3128 = vunpack.c.l.b16 %v2994
        %v3129 = vunpack.c.h.b16 %v2994
        %v3130 = vunpack.c.l.b16 %v2995
        %v3131 = vunpack.c.h.b16 %v2995
        %v3132 = vunpack.c.l.b16 %v2996
        %v3133 = vunpack.c.h.b16 %v2996
        %v3134 = vunpack.c.l.b16 %v2997
        %v3135 = vunpack.c.h.b16 %v2997
        %v3136 = vunpack.c.l.b16 %v2998
        %v3137 = vunpack.c.h.b16 %v2998
        %v3138 = vunpack.c.l.b16 %v2999
        %v3139 = vunpack.c.h.b16 %v2999
        %v3140 = vunpack.c.l.b16 %v3000
        %v3141 = vunpack.c.h.b16 %v3000
        %v3142 = vunpack.c.l.b16 %v3001
        %v3143 = vunpack.c.h.b16 %v3001
        %v3144 = vunpack.c.l.b16 %v3002
        %v3145 = vunpack.c.h.b16 %v3002
        %v3146 = vunpack.c.l.b16 %v3003
        %v3147 = vunpack.c.h.b16 %v3003
        %v3148 = vunpack.c.l.b16 %v3004
        %v3149 = vunpack.c.h.b16 %v3004
        %v3150 = vunpack.c.l.b16 %v3005
        %v3151 = vunpack.c.h.b16 %v3005
        %v3152 = vunpack.c.l.b16 %v3006
        %v3153 = vunpack.c.h.b16 %v3006
        %v3154 = vunpack.c.l.b16 %v3007
        %v3155 = vunpack.c.h.b16 %v3007
        %v3156 = vunpack.c.l.b16 %v3008
        %v3157 = vunpack.c.h.b16 %v3008
        %v3158 = vunpack.c.l.b16 %v3009
        %v3159 = vunpack.c.h.b16 %v3009
        %v3160 = vunpack.c.l.b16 %v3010
        %v3161 = vunpack.c.h.b16 %v3010
        %v3162 = vunpack.c.l.b16 %v3011
        %v3163 = vunpack.c.h.b16 %v3011
        %v3164 = vunpack.c.l.b16 %v3012
        %v3165 = vunpack.c.h.b16 %v3012
        %v3166 = vunpack.c.l.b16 %v3013
        %v3167 = vunpack.c.h.b16 %v3013
        %v3168 = vunpack.c.l.b16 %v3014
        %v3169 = vunpack.c.h.b16 %v3014
        %v3170 = vunpack.c.l.b16 %v3015
        %v3171 = vunpack.c.h.b16 %v3015
        %v3172 = vunpack.c.l.b16 %v3016
        %v3173 = vunpack.c.h.b16 %v3016
        %v3174 = vunpack.c.l.b16 %v3017
        %v3175 = vunpack.c.h.b16 %v3017
        %v3176 = vunpack.c.l.b16 %v3018
        %v3177 = vunpack.c.h.b16 %v3018
        %v3178 = vunpack.c.l.b16 %v3019
        %v3179 = vunpack.c.h.b16 %v3019
        %v3180 = vunpack.c.l.b16 %v3020
        %v3181 = vunpack.c.h.b16 %v3020
        %v3182 = vunpack.c.l.b16 %v3021
        %v3183 = vunpack.c.h.b16 %v3021
        %v3184 = vunpack.c.l.b16 %v3022
        %v3185 = vunpack.c.h.b16 %v3022
        %v3186 = vunpack.c.l.b16 %v3023
        %v3187 = vunpack.c.h.b16 %v3023
        %v3188 = vunpack.c.l.b16 %v3024
        %v3189 = vunpack.c.h.b16 %v3024
        %v3190 = vunpack.c.l.b16 %v3025
        %v3191 = vunpack.c.h.b16 %v3025
        %v3192 = vunpack.c.l.b16 %v3026
        %v3193 = vunpack.c.h.b16 %v3026
        %v3194 = vunpack.c.l.b16 %v3027
        %v3195 = vunpack.c.h.b16 %v3027
        %v3196 = vunpack.c.l.b16 %v3028
        %v3197 = vunpack.c.h.b16 %v3028
        %v3198 = vunpack.c.l.b16 %v3029
        %v3199 = vunpack.c.h.b16 %v3029
        %v3200 = vunpack.c.l.b16 %v3030
        %v3201 = vunpack.c.h.b16 %v3030
        %v3202 = vunpack.c.l.b16 %v3031
        %v3203 = vunpack.c.h.b16 %v3031
        %v3204 = vunpack.c.l.b16 %v3032
        %v3205 = vunpack.c.h.b16 %v3032
        %v3206 = vunpack.c.l.b16 %v3033
        %v3207 = vunpack.c.h.b16 %v3033
        %v3208 = vunpack.c.l.b16 %v3034
        %v3209 = vunpack.c.h.b16 %v3034
        %v3210 = vunpack.c.l.b16 %v3035
        %v3211 = vunpack.c.h.b16 %v3035
        %v3212 = vunpack.c.l.b16 %v3036
        %v3213 = vunpack.c.h.b16 %v3036
        %v3214 = vunpack.c.l.b16 %v3037
        %v3215 = vunpack.c.h.b16 %v3037
        %v3216 = vunpack.c.l.b16 %v3038
        %v3217 = vunpack.c.h.b16 %v3038
        %v3218 = vunpack.c.l.b16 %v3039
        %v3219 = vunpack.c.h.b16 %v3039
        %v3220 = vunpack.c.l.b16 %v3040
        %v3221 = vunpack.c.h.b16 %v3040
        %v3222 = vunpack.c.l.b16 %v3041
        %v3223 = vunpack.c.h.b16 %v3041
        %v3224 = vunpack.c.l.b16 %v3042
        %v3225 = vunpack.c.h.b16 %v3042
        %v3226 = vunpack.c.l.b16 %v3043
        %v3227 = vunpack.c.h.b16 %v3043
        %v3228 = vunpack.c.l.b16 %v3044
        %v3229 = vunpack.c.h.b16 %v3044
        %v3230 = vunpack.c.l.b16 %v3045
        %v3231 = vunpack.c.h.b16 %v3045
        %v3232 = vunpack.c.l.b16 %v3046
        %v3233 = vunpack.c.h.b16 %v3046
        %v3234 = vunpack.c.l.b16 %v3047
        %v3235 = vunpack.c.h.b16 %v3047
        %v3236 = vunpack.c.l.b16 %v3048
        %v3237 = vunpack.c.h.b16 %v3048
        %v3238 = vunpack.c.l.b16 %v3049
        %v3239 = vunpack.c.h.b16 %v3049
        %v3240 = vunpack.c.l.b16 %v3050
        %v3241 = vunpack.c.h.b16 %v3050
        %v3242 = vunpack.c.l.b16 %v3051
        %v3243 = vunpack.c.h.b16 %v3051
        %v3244 = vpack.c.b16 %v3124, %v3116
        %v3245 = vpack.c.b16 %v3125, %v3117
        %v3246 = vpack.c.b16 %v3126, %v3118
        %v3247 = vpack.c.b16 %v3127, %v3119
        %v3248 = vpack.c.b16 %v3128, %v3120
        %v3249 = vpack.c.b16 %v3129, %v3121
        %v3250 = vpack.c.b16 %v3130, %v3122
        %v3251 = vpack.c.b16 %v3131, %v3123
        %v3252 = vpack.c.b16 %v3140, %v3132
        %v3253 = vpack.c.b16 %v3141, %v3133
        %v3254 = vpack.c.b16 %v3142, %v3134
        %v3255 = vpack.c.b16 %v3143, %v3135
        %v3256 = vpack.c.b16 %v3144, %v3136
        %v3257 = vpack.c.b16 %v3145, %v3137
        %v3258 = vpack.c.b16 %v3146, %v3138
        %v3259 = vpack.c.b16 %v3147, %v3139
        %v3260 = vpack.c.b16 %v3156, %v3148
        %v3261 = vpack.c.b16 %v3157, %v3149
        %v3262 = vpack.c.b16 %v3158, %v3150
        %v3263 = vpack.c.b16 %v3159, %v3151
        %v3264 = vpack.c.b16 %v3160, %v3152
        %v3265 = vpack.c.b16 %v3161, %v3153
        %v3266 = vpack.c.b16 %v3162, %v3154
        %v3267 = vpack.c.b16 %v3163, %v3155
        %v3268 = vpack.c.b16 %v3172, %v3164
        %v3269 = vpack.c.b16 %v3173, %v3165
        %v3270 = vpack.c.b16 %v3174, %v3166
        %v3271 = vpack.c.b16 %v3175, %v3167
        %v3272 = vpack.c.b16 %v3176, %v3168
        %v3273 = vpack.c.b16 %v3177, %v3169
        %v3274 = vpack.c.b16 %v3178, %v3170
        %v3275 = vpack.c.b16 %v3179, %v3171
        %v3276 = vpack.c.b16 %v3188, %v3180
        %v3277 = vpack.c.b16 %v3189, %v3181
        %v3278 = vpack.c.b16 %v3190, %v3182
        %v3279 = vpack.c.b16 %v3191, %v3183
        %v3280 = vpack.c.b16 %v3192, %v3184
        %v3281 = vpack.c.b16 %v3193, %v3185
        %v3282 = vpack.c.b16 %v3194, %v3186
        %v3283 = vpack.c.b16 %v3195, %v3187
        %v3284 = vpack.c.b16 %v3204, %v3196
        %v3285 = vpack.c.b16 %v3205, %v3197
        %v3286 = vpack.c.b16 %v3206, %v3198
        %v3287 = vpack.c.b16 %v3207, %v3199
        %v3288 = vpack.c.b16 %v3208, %v3200
        %v3289 = vpack.c.b16 %v3209, %v3201
        %v3290 = vpack.c.b16 %v3210, %v3202
        %v3291 = vpack.c.b16 %v3211, %v3203
        %v3292 = vpack.c.b16 %v3220, %v3212
        %v3293 = vpack.c.b16 %v3221, %v3213
        %v3294 = vpack.c.b16 %v3222, %v3214
        %v3295 = vpack.c.b16 %v3223, %v3215
        %v3296 = vpack.c.b16 %v3224, %v3216
        %v3297 = vpack.c.b16 %v3225, %v3217
        %v3298 = vpack.c.b16 %v3226, %v3218
        %v3299 = vpack.c.b16 %v3227, %v3219
        %v3300 = vpack.c.b16 %v3236, %v3228
        %v3301 = vpack.c.b16 %v3237, %v3229
        %v3302 = vpack.c.b16 %v3238, %v3230
        %v3303 = vpack.c.b16 %v3239, %v3231
        %v3304 = vpack.c.b16 %v3240, %v3232
        %v3305 = vpack.c.b16 %v3241, %v3233
        %v3306 = vpack.c.b16 %v3242, %v3234
        %v3307 = vpack.c.b16 %v3243, %v3235
        %3372 = vmatprep.subr.bf16.mxu0 %v3245
        %3373 = vmatpush1.bf16.msra.mxu0 %v3244
        %3374 = vmatprep.subr.bf16.mxu0 %v3253
        %3375 = vmatpush1.bf16.msra.mxu0 %v3252
        %3376 = vmatprep.subr.bf16.mxu0 %v3261
        %3377 = vmatpush1.bf16.msra.mxu0 %v3260
        %3378 = vmatprep.subr.bf16.mxu0 %v3269
        %3379 = vmatpush1.bf16.msra.mxu0 %v3268
        %3380 = vmatprep.subr.bf16.mxu0 %v3277
        %3381 = vmatpush1.bf16.msra.mxu0 %v3276
        %3382 = vmatprep.subr.bf16.mxu0 %v3285
        %3383 = vmatpush1.bf16.msra.mxu0 %v3284
        %3384 = vmatprep.subr.bf16.mxu0 %v3293
        %3385 = vmatpush1.bf16.msra.mxu0 %v3292
        %3386 = vmatprep.subr.bf16.mxu0 %v3301
        %3387 = vmatpush1.bf16.msra.mxu0 %v3300
        %3388 = vmatprep.subr.bf16.mxu0 0
        %3389 = vmatpush1.bf16.msra.mxu0 0
        %3390 = vmatprep.subr.bf16.mxu0 0
        %3391 = vmatpush1.bf16.msra.mxu0 0
        %3392 = vmatprep.subr.bf16.mxu0 0
        %3393 = vmatpush1.bf16.msra.mxu0 0
        %3394 = vmatprep.subr.bf16.mxu0 0
        %3395 = vmatpush1.bf16.msra.mxu0 0
        %3396 = vmatprep.subr.bf16.mxu0 0
        %3397 = vmatpush1.bf16.msra.mxu0 0
        %3398 = vmatprep.subr.bf16.mxu0 0
        %3399 = vmatpush1.bf16.msra.mxu0 0
        %3400 = vmatprep.subr.bf16.mxu0 0
        %3401 = vmatpush1.bf16.msra.mxu0 0
        %3402 = vmatprep.subr.bf16.mxu0 0
        %3403 = vmatpush1.bf16.msra.mxu0 0
        %3404 = vmatprep.mubr.bf16.mxu0 0
        %3405 = vmatmul.mubr.bf16.gmra.mrb[0].mxu0 %v2987
        %v3406 = vpop.f32.mrb[0].mxu0
        %v3407 = vadd.f32 0.0, %v3406
        %v3408 = vpop.f32.mrb[0].mxu0
        %v3409 = vadd.f32 0.0, %v3408
        %v3410 = vpop.f32.mrb[0].mxu0
        %v3411 = vpop.f32.mrb[0].mxu0
        %3412 = vdwg.mxu0
        %3413 = vmatprep.subr.bf16.mxu0 %v3247
        %3414 = vmatpush1.bf16.msra.mxu0 %v3246
        %3415 = vmatprep.subr.bf16.mxu0 %v3255
        %3416 = vmatpush1.bf16.msra.mxu0 %v3254
        %3417 = vmatprep.subr.bf16.mxu0 %v3263
        %3418 = vmatpush1.bf16.msra.mxu0 %v3262
        %3419 = vmatprep.subr.bf16.mxu0 %v3271
        %3420 = vmatpush1.bf16.msra.mxu0 %v3270
        %3421 = vmatprep.subr.bf16.mxu0 %v3279
        %3422 = vmatpush1.bf16.msra.mxu0 %v3278
        %3423 = vmatprep.subr.bf16.mxu0 %v3287
        %3424 = vmatpush1.bf16.msra.mxu0 %v3286
        %3425 = vmatprep.subr.bf16.mxu0 %v3295
        %3426 = vmatpush1.bf16.msra.mxu0 %v3294
        %3427 = vmatprep.subr.bf16.mxu0 %v3303
        %3428 = vmatpush1.bf16.msra.mxu0 %v3302
        %3429 = vmatprep.subr.bf16.mxu0 0
        %3430 = vmatpush1.bf16.msra.mxu0 0
        %3431 = vmatprep.subr.bf16.mxu0 0
        %3432 = vmatpush1.bf16.msra.mxu0 0
        %3433 = vmatprep.subr.bf16.mxu0 0
        %3434 = vmatpush1.bf16.msra.mxu0 0
        %3435 = vmatprep.subr.bf16.mxu0 0
        %3436 = vmatpush1.bf16.msra.mxu0 0
        %3437 = vmatprep.subr.bf16.mxu0 0
        %3438 = vmatpush1.bf16.msra.mxu0 0
        %3439 = vmatprep.subr.bf16.mxu0 0
        %3440 = vmatpush1.bf16.msra.mxu0 0
        %3441 = vmatprep.subr.bf16.mxu0 0
        %3442 = vmatpush1.bf16.msra.mxu0 0
        %3443 = vmatprep.subr.bf16.mxu0 0
        %3444 = vmatpush1.bf16.msra.mxu0 0
        %3445 = vmatprep.mubr.bf16.mxu0 0
        %3446 = vmatmul.mubr.bf16.gmra.mrb[0].mxu0 %v2987
        %v3447 = vpop.f32.mrb[0].mxu0
        %v3448 = vadd.f32 0.0, %v3447
        %v3449 = vpop.f32.mrb[0].mxu0
        %v3450 = vadd.f32 0.0, %v3449
        %v3451 = vpop.f32.mrb[0].mxu0
        %v3452 = vpop.f32.mrb[0].mxu0
        %3453 = vdwg.mxu0
        %3454 = vmatprep.subr.bf16.mxu0 %v3249
        %3455 = vmatpush1.bf16.msra.mxu0 %v3248
        %3456 = vmatprep.subr.bf16.mxu0 %v3257
        %3457 = vmatpush1.bf16.msra.mxu0 %v3256
        %3458 = vmatprep.subr.bf16.mxu0 %v3265
        %3459 = vmatpush1.bf16.msra.mxu0 %v3264
        %3460 = vmatprep.subr.bf16.mxu0 %v3273
        %3461 = vmatpush1.bf16.msra.mxu0 %v3272
        %3462 = vmatprep.subr.bf16.mxu0 %v3281
        %3463 = vmatpush1.bf16.msra.mxu0 %v3280
        %3464 = vmatprep.subr.bf16.mxu0 %v3289
        %3465 = vmatpush1.bf16.msra.mxu0 %v3288
        %3466 = vmatprep.subr.bf16.mxu0 %v3297
        %3467 = vmatpush1.bf16.msra.mxu0 %v3296
        %3468 = vmatprep.subr.bf16.mxu0 %v3305
        %3469 = vmatpush1.bf16.msra.mxu0 %v3304
        %3470 = vmatprep.subr.bf16.mxu0 0
        %3471 = vmatpush1.bf16.msra.mxu0 0
        %3472 = vmatprep.subr.bf16.mxu0 0
        %3473 = vmatpush1.bf16.msra.mxu0 0
        %3474 = vmatprep.subr.bf16.mxu0 0
        %3475 = vmatpush1.bf16.msra.mxu0 0
        %3476 = vmatprep.subr.bf16.mxu0 0
        %3477 = vmatpush1.bf16.msra.mxu0 0
        %3478 = vmatprep.subr.bf16.mxu0 0
        %3479 = vmatpush1.bf16.msra.mxu0 0
        %3480 = vmatprep.subr.bf16.mxu0 0
        %3481 = vmatpush1.bf16.msra.mxu0 0
        %3482 = vmatprep.subr.bf16.mxu0 0
        %3483 = vmatpush1.bf16.msra.mxu0 0
        %3484 = vmatprep.subr.bf16.mxu0 0
        %3485 = vmatpush1.bf16.msra.mxu0 0
        %3486 = vmatprep.mubr.bf16.mxu0 0
        %3487 = vmatmul.mubr.bf16.gmra.mrb[0].mxu0 %v2987
        %v3488 = vpop.f32.mrb[0].mxu0
        %v3489 = vadd.f32 0.0, %v3488
        %v3490 = vpop.f32.mrb[0].mxu0
        %v3491 = vadd.f32 0.0, %v3490
        %v3492 = vpop.f32.mrb[0].mxu0
        %v3493 = vpop.f32.mrb[0].mxu0
        %3494 = vdwg.mxu0
        %3495 = vmatprep.subr.bf16.mxu0 %v3251
        %3496 = vmatpush1.bf16.msra.mxu0 %v3250
        %3497 = vmatprep.subr.bf16.mxu0 %v3259
        %3498 = vmatpush1.bf16.msra.mxu0 %v3258
        %3499 = vmatprep.subr.bf16.mxu0 %v3267
        %3500 = vmatpush1.bf16.msra.mxu0 %v3266
        %3501 = vmatprep.subr.bf16.mxu0 %v3275
        %3502 = vmatpush1.bf16.msra.mxu0 %v3274
        %3503 = vmatprep.subr.bf16.mxu0 %v3283
        %3504 = vmatpush1.bf16.msra.mxu0 %v3282
        %3505 = vmatprep.subr.bf16.mxu0 %v3291
        %3506 = vmatpush1.bf16.msra.mxu0 %v3290
        %3507 = vmatprep.subr.bf16.mxu0 %v3299
        %3508 = vmatpush1.bf16.msra.mxu0 %v3298
        %3509 = vmatprep.subr.bf16.mxu0 %v3307
        %3510 = vmatpush1.bf16.msra.mxu0 %v3306
        %3511 = vmatprep.subr.bf16.mxu0 0
        %3512 = vmatpush1.bf16.msra.mxu0 0
        %3513 = vmatprep.subr.bf16.mxu0 0
        %3514 = vmatpush1.bf16.msra.mxu0 0
        %3515 = vmatprep.subr.bf16.mxu0 0
        %3516 = vmatpush1.bf16.msra.mxu0 0
        %3517 = vmatprep.subr.bf16.mxu0 0
        %3518 = vmatpush1.bf16.msra.mxu0 0
        %3519 = vmatprep.subr.bf16.mxu0 0
        %3520 = vmatpush1.bf16.msra.mxu0 0
        %3521 = vmatprep.subr.bf16.mxu0 0
        %3522 = vmatpush1.bf16.msra.mxu0 0
        %3523 = vmatprep.subr.bf16.mxu0 0
        %3524 = vmatpush1.bf16.msra.mxu0 0
        %3525 = vmatprep.subr.bf16.mxu0 0
        %3526 = vmatpush1.bf16.msra.mxu0 0
        %3527 = vmatprep.mubr.bf16.mxu0 0
        %3528 = vmatmul.mubr.bf16.gmra.mrb[0].mxu0 %v2987
        %v3529 = vpop.f32.mrb[0].mxu0
        %v3530 = vadd.f32 0.0, %v3529
        %v3531 = vpop.f32.mrb[0].mxu0
        %v3532 = vadd.f32 0.0, %v3531
        %v3533 = vpop.f32.mrb[0].mxu0
        %v3534 = vpop.f32.mrb[0].mxu0
        %3535 = vdwg.mxu0
        %v3536 = vadd.f32 %v2979, %v3407
        %v3537 = vadd.f32 %v2980, %v3409
        %v3538 = vadd.f32 %v2981, %v3448
        %v3539 = vadd.f32 %v2982, %v3450
        %v3540 = vadd.f32 %v2983, %v3489
        %v3541 = vadd.f32 %v2984, %v3491
        %v3542 = vadd.f32 %v2985, %v3530
        %v3543 = vadd.f32 %v2986, %v3532
        %v3544 = vpack.c.bf16 %v2972, %v2972
        %v3545 = vld [vmem:[%s568 + $0x200] sm:$0xff]
        %v3546 = vld [vmem:[%s568 + $0x208] sm:$0xff]
        %v3547 = vld [vmem:[%s568 + $0x210] sm:$0xff]
        %v3548 = vld [vmem:[%s568 + $0x218] sm:$0xff]
        %v3549 = vld [vmem:[%s568 + $0x220] sm:$0xff]
        %v3550 = vld [vmem:[%s568 + $0x228] sm:$0xff]
        %v3551 = vld [vmem:[%s568 + $0x230] sm:$0xff]
        %v3552 = vld [vmem:[%s568 + $0x238] sm:$0xff]
        %v3553 = vld [vmem:[%s568 + $0x240] sm:$0xff]
        %v3554 = vld [vmem:[%s568 + $0x248] sm:$0xff]
        %v3555 = vld [vmem:[%s568 + $0x250] sm:$0xff]
        %v3556 = vld [vmem:[%s568 + $0x258] sm:$0xff]
        %v3557 = vld [vmem:[%s568 + $0x260] sm:$0xff]
        %v3558 = vld [vmem:[%s568 + $0x268] sm:$0xff]
        %v3559 = vld [vmem:[%s568 + $0x270] sm:$0xff]
        %v3560 = vld [vmem:[%s568 + $0x278] sm:$0xff]
        %v3561 = vld [vmem:[%s568 + $0x280] sm:$0xff]
        %v3562 = vld [vmem:[%s568 + $0x288] sm:$0xff]
        %v3563 = vld [vmem:[%s568 + $0x290] sm:$0xff]
        %v3564 = vld [vmem:[%s568 + $0x298] sm:$0xff]
        %v3565 = vld [vmem:[%s568 + $0x2a0] sm:$0xff]
        %v3566 = vld [vmem:[%s568 + $0x2a8] sm:$0xff]
        %v3567 = vld [vmem:[%s568 + $0x2b0] sm:$0xff]
        %v3568 = vld [vmem:[%s568 + $0x2b8] sm:$0xff]
        %v3569 = vld [vmem:[%s568 + $0x2c0] sm:$0xff]
        %v3570 = vld [vmem:[%s568 + $0x2c8] sm:$0xff]
        %v3571 = vld [vmem:[%s568 + $0x2d0] sm:$0xff]
        %v3572 = vld [vmem:[%s568 + $0x2d8] sm:$0xff]
        %v3573 = vld [vmem:[%s568 + $0x2e0] sm:$0xff]
        %v3574 = vld [vmem:[%s568 + $0x2e8] sm:$0xff]
        %v3575 = vld [vmem:[%s568 + $0x2f0] sm:$0xff]
        %v3576 = vld [vmem:[%s568 + $0x2f8] sm:$0xff]
        %v3577 = vld [vmem:[%s568 + $0x300] sm:$0xff]
        %v3578 = vld [vmem:[%s568 + $0x308] sm:$0xff]
        %v3579 = vld [vmem:[%s568 + $0x310] sm:$0xff]
        %v3580 = vld [vmem:[%s568 + $0x318] sm:$0xff]
        %v3581 = vld [vmem:[%s568 + $0x320] sm:$0xff]
        %v3582 = vld [vmem:[%s568 + $0x328] sm:$0xff]
        %v3583 = vld [vmem:[%s568 + $0x330] sm:$0xff]
        %v3584 = vld [vmem:[%s568 + $0x338] sm:$0xff]
        %v3585 = vld [vmem:[%s568 + $0x340] sm:$0xff]
        %v3586 = vld [vmem:[%s568 + $0x348] sm:$0xff]
        %v3587 = vld [vmem:[%s568 + $0x350] sm:$0xff]
        %v3588 = vld [vmem:[%s568 + $0x358] sm:$0xff]
        %v3589 = vld [vmem:[%s568 + $0x360] sm:$0xff]
        %v3590 = vld [vmem:[%s568 + $0x368] sm:$0xff]
        %v3591 = vld [vmem:[%s568 + $0x370] sm:$0xff]
        %v3592 = vld [vmem:[%s568 + $0x378] sm:$0xff]
        %v3593 = vld [vmem:[%s568 + $0x380] sm:$0xff]
        %v3594 = vld [vmem:[%s568 + $0x388] sm:$0xff]
        %v3595 = vld [vmem:[%s568 + $0x390] sm:$0xff]
        %v3596 = vld [vmem:[%s568 + $0x398] sm:$0xff]
        %v3597 = vld [vmem:[%s568 + $0x3a0] sm:$0xff]
        %v3598 = vld [vmem:[%s568 + $0x3a8] sm:$0xff]
        %v3599 = vld [vmem:[%s568 + $0x3b0] sm:$0xff]
        %v3600 = vld [vmem:[%s568 + $0x3b8] sm:$0xff]
        %v3601 = vld [vmem:[%s568 + $0x3c0] sm:$0xff]
        %v3602 = vld [vmem:[%s568 + $0x3c8] sm:$0xff]
        %v3603 = vld [vmem:[%s568 + $0x3d0] sm:$0xff]
        %v3604 = vld [vmem:[%s568 + $0x3d8] sm:$0xff]
        %v3605 = vld [vmem:[%s568 + $0x3e0] sm:$0xff]
        %v3606 = vld [vmem:[%s568 + $0x3e8] sm:$0xff]
        %v3607 = vld [vmem:[%s568 + $0x3f0] sm:$0xff]
        %v3608 = vld [vmem:[%s568 + $0x3f8] sm:$0xff]
        %v3673 = vunpack.c.l.b16 %v3545
        %v3674 = vunpack.c.h.b16 %v3545
        %v3675 = vunpack.c.l.b16 %v3546
        %v3676 = vunpack.c.h.b16 %v3546
        %v3677 = vunpack.c.l.b16 %v3547
        %v3678 = vunpack.c.h.b16 %v3547
        %v3679 = vunpack.c.l.b16 %v3548
        %v3680 = vunpack.c.h.b16 %v3548
        %v3681 = vunpack.c.l.b16 %v3549
        %v3682 = vunpack.c.h.b16 %v3549
        %v3683 = vunpack.c.l.b16 %v3550
        %v3684 = vunpack.c.h.b16 %v3550
        %v3685 = vunpack.c.l.b16 %v3551
        %v3686 = vunpack.c.h.b16 %v3551
        %v3687 = vunpack.c.l.b16 %v3552
        %v3688 = vunpack.c.h.b16 %v3552
        %v3689 = vunpack.c.l.b16 %v3553
        %v3690 = vunpack.c.h.b16 %v3553
        %v3691 = vunpack.c.l.b16 %v3554
        %v3692 = vunpack.c.h.b16 %v3554
        %v3693 = vunpack.c.l.b16 %v3555
        %v3694 = vunpack.c.h.b16 %v3555
        %v3695 = vunpack.c.l.b16 %v3556
        %v3696 = vunpack.c.h.b16 %v3556
        %v3697 = vunpack.c.l.b16 %v3557
        %v3698 = vunpack.c.h.b16 %v3557
        %v3699 = vunpack.c.l.b16 %v3558
        %v3700 = vunpack.c.h.b16 %v3558
        %v3701 = vunpack.c.l.b16 %v3559
        %v3702 = vunpack.c.h.b16 %v3559
        %v3703 = vunpack.c.l.b16 %v3560
        %v3704 = vunpack.c.h.b16 %v3560
        %v3705 = vunpack.c.l.b16 %v3561
        %v3706 = vunpack.c.h.b16 %v3561
        %v3707 = vunpack.c.l.b16 %v3562
        %v3708 = vunpack.c.h.b16 %v3562
        %v3709 = vunpack.c.l.b16 %v3563
        %v3710 = vunpack.c.h.b16 %v3563
        %v3711 = vunpack.c.l.b16 %v3564
        %v3712 = vunpack.c.h.b16 %v3564
        %v3713 = vunpack.c.l.b16 %v3565
        %v3714 = vunpack.c.h.b16 %v3565
        %v3715 = vunpack.c.l.b16 %v3566
        %v3716 = vunpack.c.h.b16 %v3566
        %v3717 = vunpack.c.l.b16 %v3567
        %v3718 = vunpack.c.h.b16 %v3567
        %v3719 = vunpack.c.l.b16 %v3568
        %v3720 = vunpack.c.h.b16 %v3568
        %v3721 = vunpack.c.l.b16 %v3569
        %v3722 = vunpack.c.h.b16 %v3569
        %v3723 = vunpack.c.l.b16 %v3570
        %v3724 = vunpack.c.h.b16 %v3570
        %v3725 = vunpack.c.l.b16 %v3571
        %v3726 = vunpack.c.h.b16 %v3571
        %v3727 = vunpack.c.l.b16 %v3572
        %v3728 = vunpack.c.h.b16 %v3572
        %v3729 = vunpack.c.l.b16 %v3573
        %v3730 = vunpack.c.h.b16 %v3573
        %v3731 = vunpack.c.l.b16 %v3574
        %v3732 = vunpack.c.h.b16 %v3574
        %v3733 = vunpack.c.l.b16 %v3575
        %v3734 = vunpack.c.h.b16 %v3575
        %v3735 = vunpack.c.l.b16 %v3576
        %v3736 = vunpack.c.h.b16 %v3576
        %v3737 = vunpack.c.l.b16 %v3577
        %v3738 = vunpack.c.h.b16 %v3577
        %v3739 = vunpack.c.l.b16 %v3578
        %v3740 = vunpack.c.h.b16 %v3578
        %v3741 = vunpack.c.l.b16 %v3579
        %v3742 = vunpack.c.h.b16 %v3579
        %v3743 = vunpack.c.l.b16 %v3580
        %v3744 = vunpack.c.h.b16 %v3580
        %v3745 = vunpack.c.l.b16 %v3581
        %v3746 = vunpack.c.h.b16 %v3581
        %v3747 = vunpack.c.l.b16 %v3582
        %v3748 = vunpack.c.h.b16 %v3582
        %v3749 = vunpack.c.l.b16 %v3583
        %v3750 = vunpack.c.h.b16 %v3583
        %v3751 = vunpack.c.l.b16 %v3584
        %v3752 = vunpack.c.h.b16 %v3584
        %v3753 = vunpack.c.l.b16 %v3585
        %v3754 = vunpack.c.h.b16 %v3585
        %v3755 = vunpack.c.l.b16 %v3586
        %v3756 = vunpack.c.h.b16 %v3586
        %v3757 = vunpack.c.l.b16 %v3587
        %v3758 = vunpack.c.h.b16 %v3587
        %v3759 = vunpack.c.l.b16 %v3588
        %v3760 = vunpack.c.h.b16 %v3588
        %v3761 = vunpack.c.l.b16 %v3589
        %v3762 = vunpack.c.h.b16 %v3589
        %v3763 = vunpack.c.l.b16 %v3590
        %v3764 = vunpack.c.h.b16 %v3590
        %v3765 = vunpack.c.l.b16 %v3591
        %v3766 = vunpack.c.h.b16 %v3591
        %v3767 = vunpack.c.l.b16 %v3592
        %v3768 = vunpack.c.h.b16 %v3592
        %v3769 = vunpack.c.l.b16 %v3593
        %v3770 = vunpack.c.h.b16 %v3593
        %v3771 = vunpack.c.l.b16 %v3594
        %v3772 = vunpack.c.h.b16 %v3594
        %v3773 = vunpack.c.l.b16 %v3595
        %v3774 = vunpack.c.h.b16 %v3595
        %v3775 = vunpack.c.l.b16 %v3596
        %v3776 = vunpack.c.h.b16 %v3596
        %v3777 = vunpack.c.l.b16 %v3597
        %v3778 = vunpack.c.h.b16 %v3597
        %v3779 = vunpack.c.l.b16 %v3598
        %v3780 = vunpack.c.h.b16 %v3598
        %v3781 = vunpack.c.l.b16 %v3599
        %v3782 = vunpack.c.h.b16 %v3599
        %v3783 = vunpack.c.l.b16 %v3600
        %v3784 = vunpack.c.h.b16 %v3600
        %v3785 = vunpack.c.l.b16 %v3601
        %v3786 = vunpack.c.h.b16 %v3601
        %v3787 = vunpack.c.l.b16 %v3602
        %v3788 = vunpack.c.h.b16 %v3602
        %v3789 = vunpack.c.l.b16 %v3603
        %v3790 = vunpack.c.h.b16 %v3603
        %v3791 = vunpack.c.l.b16 %v3604
        %v3792 = vunpack.c.h.b16 %v3604
        %v3793 = vunpack.c.l.b16 %v3605
        %v3794 = vunpack.c.h.b16 %v3605
        %v3795 = vunpack.c.l.b16 %v3606
        %v3796 = vunpack.c.h.b16 %v3606
        %v3797 = vunpack.c.l.b16 %v3607
        %v3798 = vunpack.c.h.b16 %v3607
        %v3799 = vunpack.c.l.b16 %v3608
        %v3800 = vunpack.c.h.b16 %v3608
        %v3801 = vpack.c.b16 %v3681, %v3673
        %v3802 = vpack.c.b16 %v3682, %v3674
        %v3803 = vpack.c.b16 %v3683, %v3675
        %v3804 = vpack.c.b16 %v3684, %v3676
        %v3805 = vpack.c.b16 %v3685, %v3677
        %v3806 = vpack.c.b16 %v3686, %v3678
        %v3807 = vpack.c.b16 %v3687, %v3679
        %v3808 = vpack.c.b16 %v3688, %v3680
        %v3809 = vpack.c.b16 %v3697, %v3689
        %v3810 = vpack.c.b16 %v3698, %v3690
        %v3811 = vpack.c.b16 %v3699, %v3691
        %v3812 = vpack.c.b16 %v3700, %v3692
        %v3813 = vpack.c.b16 %v3701, %v3693
        %v3814 = vpack.c.b16 %v3702, %v3694
        %v3815 = vpack.c.b16 %v3703, %v3695
        %v3816 = vpack.c.b16 %v3704, %v3696
        %v3817 = vpack.c.b16 %v3713, %v3705
        %v3818 = vpack.c.b16 %v3714, %v3706
        %v3819 = vpack.c.b16 %v3715, %v3707
        %v3820 = vpack.c.b16 %v3716, %v3708
        %v3821 = vpack.c.b16 %v3717, %v3709
        %v3822 = vpack.c.b16 %v3718, %v3710
        %v3823 = vpack.c.b16 %v3719, %v3711
        %v3824 = vpack.c.b16 %v3720, %v3712
        %v3825 = vpack.c.b16 %v3729, %v3721
        %v3826 = vpack.c.b16 %v3730, %v3722
        %v3827 = vpack.c.b16 %v3731, %v3723
        %v3828 = vpack.c.b16 %v3732, %v3724
        %v3829 = vpack.c.b16 %v3733, %v3725
        %v3830 = vpack.c.b16 %v3734, %v3726
        %v3831 = vpack.c.b16 %v3735, %v3727
        %v3832 = vpack.c.b16 %v3736, %v3728
        %v3833 = vpack.c.b16 %v3745, %v3737
        %v3834 = vpack.c.b16 %v3746, %v3738
        %v3835 = vpack.c.b16 %v3747, %v3739
        %v3836 = vpack.c.b16 %v3748, %v3740
        %v3837 = vpack.c.b16 %v3749, %v3741
        %v3838 = vpack.c.b16 %v3750, %v3742
        %v3839 = vpack.c.b16 %v3751, %v3743
        %v3840 = vpack.c.b16 %v3752, %v3744
        %v3841 = vpack.c.b16 %v3761, %v3753
        %v3842 = vpack.c.b16 %v3762, %v3754
        %v3843 = vpack.c.b16 %v3763, %v3755
        %v3844 = vpack.c.b16 %v3764, %v3756
        %v3845 = vpack.c.b16 %v3765, %v3757
        %v3846 = vpack.c.b16 %v3766, %v3758
        %v3847 = vpack.c.b16 %v3767, %v3759
        %v3848 = vpack.c.b16 %v3768, %v3760
        %v3849 = vpack.c.b16 %v3777, %v3769
        %v3850 = vpack.c.b16 %v3778, %v3770
        %v3851 = vpack.c.b16 %v3779, %v3771
        %v3852 = vpack.c.b16 %v3780, %v3772
        %v3853 = vpack.c.b16 %v3781, %v3773
        %v3854 = vpack.c.b16 %v3782, %v3774
        %v3855 = vpack.c.b16 %v3783, %v3775
        %v3856 = vpack.c.b16 %v3784, %v3776
        %v3857 = vpack.c.b16 %v3793, %v3785
        %v3858 = vpack.c.b16 %v3794, %v3786
        %v3859 = vpack.c.b16 %v3795, %v3787
        %v3860 = vpack.c.b16 %v3796, %v3788
        %v3861 = vpack.c.b16 %v3797, %v3789
        %v3862 = vpack.c.b16 %v3798, %v3790
        %v3863 = vpack.c.b16 %v3799, %v3791
        %v3864 = vpack.c.b16 %v3800, %v3792
        %3929 = vmatprep.subr.bf16.mxu0 %v3802
        %3930 = vmatpush1.bf16.msra.mxu0 %v3801
        %3931 = vmatprep.subr.bf16.mxu0 %v3810
        %3932 = vmatpush1.bf16.msra.mxu0 %v3809
        %3933 = vmatprep.subr.bf16.mxu0 %v3818
        %3934 = vmatpush1.bf16.msra.mxu0 %v3817
        %3935 = vmatprep.subr.bf16.mxu0 %v3826
        %3936 = vmatpush1.bf16.msra.mxu0 %v3825
        %3937 = vmatprep.subr.bf16.mxu0 %v3834
        %3938 = vmatpush1.bf16.msra.mxu0 %v3833
        %3939 = vmatprep.subr.bf16.mxu0 %v3842
        %3940 = vmatpush1.bf16.msra.mxu0 %v3841
        %3941 = vmatprep.subr.bf16.mxu0 %v3850
        %3942 = vmatpush1.bf16.msra.mxu0 %v3849
        %3943 = vmatprep.subr.bf16.mxu0 %v3858
        %3944 = vmatpush1.bf16.msra.mxu0 %v3857
        %3945 = vmatprep.subr.bf16.mxu0 0
        %3946 = vmatpush1.bf16.msra.mxu0 0
        %3947 = vmatprep.subr.bf16.mxu0 0
        %3948 = vmatpush1.bf16.msra.mxu0 0
        %3949 = vmatprep.subr.bf16.mxu0 0
        %3950 = vmatpush1.bf16.msra.mxu0 0
        %3951 = vmatprep.subr.bf16.mxu0 0
        %3952 = vmatpush1.bf16.msra.mxu0 0
        %3953 = vmatprep.subr.bf16.mxu0 0
        %3954 = vmatpush1.bf16.msra.mxu0 0
        %3955 = vmatprep.subr.bf16.mxu0 0
        %3956 = vmatpush1.bf16.msra.mxu0 0
        %3957 = vmatprep.subr.bf16.mxu0 0
        %3958 = vmatpush1.bf16.msra.mxu0 0
        %3959 = vmatprep.subr.bf16.mxu0 0
        %3960 = vmatpush1.bf16.msra.mxu0 0
        %3961 = vmatprep.mubr.bf16.mxu0 0
        %3962 = vmatmul.mubr.bf16.gmra.mrb[0].mxu0 %v3544
        %v3963 = vpop.f32.mrb[0].mxu0
        %v3964 = vadd.f32 0.0, %v3963
        %v3965 = vpop.f32.mrb[0].mxu0
        %v3966 = vadd.f32 0.0, %v3965
        %v3967 = vpop.f32.mrb[0].mxu0
        %v3968 = vpop.f32.mrb[0].mxu0
        %3969 = vdwg.mxu0
        %3970 = vmatprep.subr.bf16.mxu0 %v3804
        %3971 = vmatpush1.bf16.msra.mxu0 %v3803
        %3972 = vmatprep.subr.bf16.mxu0 %v3812
        %3973 = vmatpush1.bf16.msra.mxu0 %v3811
        %3974 = vmatprep.subr.bf16.mxu0 %v3820
        %3975 = vmatpush1.bf16.msra.mxu0 %v3819
        %3976 = vmatprep.subr.bf16.mxu0 %v3828
        %3977 = vmatpush1.bf16.msra.mxu0 %v3827
        %3978 = vmatprep.subr.bf16.mxu0 %v3836
        %3979 = vmatpush1.bf16.msra.mxu0 %v3835
        %3980 = vmatprep.subr.bf16.mxu0 %v3844
        %3981 = vmatpush1.bf16.msra.mxu0 %v3843
        %3982 = vmatprep.subr.bf16.mxu0 %v3852
        %3983 = vmatpush1.bf16.msra.mxu0 %v3851
        %3984 = vmatprep.subr.bf16.mxu0 %v3860
        %3985 = vmatpush1.bf16.msra.mxu0 %v3859
        %3986 = vmatprep.subr.bf16.mxu0 0
        %3987 = vmatpush1.bf16.msra.mxu0 0
        %3988 = vmatprep.subr.bf16.mxu0 0
        %3989 = vmatpush1.bf16.msra.mxu0 0
        %3990 = vmatprep.subr.bf16.mxu0 0
        %3991 = vmatpush1.bf16.msra.mxu0 0
        %3992 = vmatprep.subr.bf16.mxu0 0
        %3993 = vmatpush1.bf16.msra.mxu0 0
        %3994 = vmatprep.subr.bf16.mxu0 0
        %3995 = vmatpush1.bf16.msra.mxu0 0
        %3996 = vmatprep.subr.bf16.mxu0 0
        %3997 = vmatpush1.bf16.msra.mxu0 0
        %3998 = vmatprep.subr.bf16.mxu0 0
        %3999 = vmatpush1.bf16.msra.mxu0 0
        %4000 = vmatprep.subr.bf16.mxu0 0
        %4001 = vmatpush1.bf16.msra.mxu0 0
        %4002 = vmatprep.mubr.bf16.mxu0 0
        %4003 = vmatmul.mubr.bf16.gmra.mrb[0].mxu0 %v3544
        %v4004 = vpop.f32.mrb[0].mxu0
        %v4005 = vadd.f32 0.0, %v4004
        %v4006 = vpop.f32.mrb[0].mxu0
        %v4007 = vadd.f32 0.0, %v4006
        %v4008 = vpop.f32.mrb[0].mxu0
        %v4009 = vpop.f32.mrb[0].mxu0
        %4010 = vdwg.mxu0
        %4011 = vmatprep.subr.bf16.mxu0 %v3806
        %4012 = vmatpush1.bf16.msra.mxu0 %v3805
        %4013 = vmatprep.subr.bf16.mxu0 %v3814
        %4014 = vmatpush1.bf16.msra.mxu0 %v3813
        %4015 = vmatprep.subr.bf16.mxu0 %v3822
        %4016 = vmatpush1.bf16.msra.mxu0 %v3821
        %4017 = vmatprep.subr.bf16.mxu0 %v3830
        %4018 = vmatpush1.bf16.msra.mxu0 %v3829
        %4019 = vmatprep.subr.bf16.mxu0 %v3838
        %4020 = vmatpush1.bf16.msra.mxu0 %v3837
        %4021 = vmatprep.subr.bf16.mxu0 %v3846
        %4022 = vmatpush1.bf16.msra.mxu0 %v3845
        %4023 = vmatprep.subr.bf16.mxu0 %v3854
        %4024 = vmatpush1.bf16.msra.mxu0 %v3853
        %4025 = vmatprep.subr.bf16.mxu0 %v3862
        %4026 = vmatpush1.bf16.msra.mxu0 %v3861
        %4027 = vmatprep.subr.bf16.mxu0 0
        %4028 = vmatpush1.bf16.msra.mxu0 0
        %4029 = vmatprep.subr.bf16.mxu0 0
        %4030 = vmatpush1.bf16.msra.mxu0 0
        %4031 = vmatprep.subr.bf16.mxu0 0
        %4032 = vmatpush1.bf16.msra.mxu0 0
        %4033 = vmatprep.subr.bf16.mxu0 0
        %4034 = vmatpush1.bf16.msra.mxu0 0
        %4035 = vmatprep.subr.bf16.mxu0 0
        %4036 = vmatpush1.bf16.msra.mxu0 0
        %4037 = vmatprep.subr.bf16.mxu0 0
        %4038 = vmatpush1.bf16.msra.mxu0 0
        %4039 = vmatprep.subr.bf16.mxu0 0
        %4040 = vmatpush1.bf16.msra.mxu0 0
        %4041 = vmatprep.subr.bf16.mxu0 0
        %4042 = vmatpush1.bf16.msra.mxu0 0
        %4043 = vmatprep.mubr.bf16.mxu0 0
        %4044 = vmatmul.mubr.bf16.gmra.mrb[0].mxu0 %v3544
        %v4045 = vpop.f32.mrb[0].mxu0
        %v4046 = vadd.f32 0.0, %v4045
        %v4047 = vpop.f32.mrb[0].mxu0
        %v4048 = vadd.f32 0.0, %v4047
        %v4049 = vpop.f32.mrb[0].mxu0
        %v4050 = vpop.f32.mrb[0].mxu0
        %4051 = vdwg.mxu0
        %4052 = vmatprep.subr.bf16.mxu0 %v3808
        %4053 = vmatpush1.bf16.msra.mxu0 %v3807
        %4054 = vmatprep.subr.bf16.mxu0 %v3816
        %4055 = vmatpush1.bf16.msra.mxu0 %v3815
        %4056 = vmatprep.subr.bf16.mxu0 %v3824
        %4057 = vmatpush1.bf16.msra.mxu0 %v3823
        %4058 = vmatprep.subr.bf16.mxu0 %v3832
        %4059 = vmatpush1.bf16.msra.mxu0 %v3831
        %4060 = vmatprep.subr.bf16.mxu0 %v3840
        %4061 = vmatpush1.bf16.msra.mxu0 %v3839
        %4062 = vmatprep.subr.bf16.mxu0 %v3848
        %4063 = vmatpush1.bf16.msra.mxu0 %v3847
        %4064 = vmatprep.subr.bf16.mxu0 %v3856
        %4065 = vmatpush1.bf16.msra.mxu0 %v3855
        %4066 = vmatprep.subr.bf16.mxu0 %v3864
        %4067 = vmatpush1.bf16.msra.mxu0 %v3863
        %4068 = vmatprep.subr.bf16.mxu0 0
        %4069 = vmatpush1.bf16.msra.mxu0 0
        %4070 = vmatprep.subr.bf16.mxu0 0
        %4071 = vmatpush1.bf16.msra.mxu0 0
        %4072 = vmatprep.subr.bf16.mxu0 0
        %4073 = vmatpush1.bf16.msra.mxu0 0
        %4074 = vmatprep.subr.bf16.mxu0 0
        %4075 = vmatpush1.bf16.msra.mxu0 0
        %4076 = vmatprep.subr.bf16.mxu0 0
        %4077 = vmatpush1.bf16.msra.mxu0 0
        %4078 = vmatprep.subr.bf16.mxu0 0
        %4079 = vmatpush1.bf16.msra.mxu0 0
        %4080 = vmatprep.subr.bf16.mxu0 0
        %4081 = vmatpush1.bf16.msra.mxu0 0
        %4082 = vmatprep.subr.bf16.mxu0 0
        %4083 = vmatpush1.bf16.msra.mxu0 0
        %4084 = vmatprep.mubr.bf16.mxu0 0
        %4085 = vmatmul.mubr.bf16.gmra.mrb[0].mxu0 %v3544
        %v4086 = vpop.f32.mrb[0].mxu0
        %v4087 = vadd.f32 0.0, %v4086
        %v4088 = vpop.f32.mrb[0].mxu0
        %v4089 = vadd.f32 0.0, %v4088
        %v4090 = vpop.f32.mrb[0].mxu0
        %v4091 = vpop.f32.mrb[0].mxu0
        %4092 = vdwg.mxu0
        %v4093 = vadd.f32 %v3536, %v3964
        %v4094 = vadd.f32 %v3537, %v3966
        %v4095 = vadd.f32 %v3538, %v4005
        %v4096 = vadd.f32 %v3539, %v4007
        %v4097 = vadd.f32 %v3540, %v4046
        %v4098 = vadd.f32 %v3541, %v4048
        %v4099 = vadd.f32 %v3542, %v4087
        %v4100 = vadd.f32 %v3543, %v4089
        %v4101 = vpack.c.bf16 %v2973, %v2973
        %v4102 = vld [vmem:[%s568 + $0x400] sm:$0xff]
        %v4103 = vld [vmem:[%s568 + $0x408] sm:$0xff]
        %v4104 = vld [vmem:[%s568 + $0x410] sm:$0xff]
        %v4105 = vld [vmem:[%s568 + $0x418] sm:$0xff]
        %v4106 = vld [vmem:[%s568 + $0x420] sm:$0xff]
        %v4107 = vld [vmem:[%s568 + $0x428] sm:$0xff]
        %v4108 = vld [vmem:[%s568 + $0x430] sm:$0xff]
        %v4109 = vld [vmem:[%s568 + $0x438] sm:$0xff]
        %v4110 = vld [vmem:[%s568 + $0x440] sm:$0xff]
        %v4111 = vld [vmem:[%s568 + $0x448] sm:$0xff]
        %v4112 = vld [vmem:[%s568 + $0x450] sm:$0xff]
        %v4113 = vld [vmem:[%s568 + $0x458] sm:$0xff]
        %v4114 = vld [vmem:[%s568 + $0x460] sm:$0xff]
        %v4115 = vld [vmem:[%s568 + $0x468] sm:$0xff]
        %v4116 = vld [vmem:[%s568 + $0x470] sm:$0xff]
        %v4117 = vld [vmem:[%s568 + $0x478] sm:$0xff]
        %v4118 = vld [vmem:[%s568 + $0x480] sm:$0xff]
        %v4119 = vld [vmem:[%s568 + $0x488] sm:$0xff]
        %v4120 = vld [vmem:[%s568 + $0x490] sm:$0xff]
        %v4121 = vld [vmem:[%s568 + $0x498] sm:$0xff]
        %v4122 = vld [vmem:[%s568 + $0x4a0] sm:$0xff]
        %v4123 = vld [vmem:[%s568 + $0x4a8] sm:$0xff]
        %v4124 = vld [vmem:[%s568 + $0x4b0] sm:$0xff]
        %v4125 = vld [vmem:[%s568 + $0x4b8] sm:$0xff]
        %v4126 = vld [vmem:[%s568 + $0x4c0] sm:$0xff]
        %v4127 = vld [vmem:[%s568 + $0x4c8] sm:$0xff]
        %v4128 = vld [vmem:[%s568 + $0x4d0] sm:$0xff]
        %v4129 = vld [vmem:[%s568 + $0x4d8] sm:$0xff]
        %v4130 = vld [vmem:[%s568 + $0x4e0] sm:$0xff]
        %v4131 = vld [vmem:[%s568 + $0x4e8] sm:$0xff]
        %v4132 = vld [vmem:[%s568 + $0x4f0] sm:$0xff]
        %v4133 = vld [vmem:[%s568 + $0x4f8] sm:$0xff]
        %v4134 = vld [vmem:[%s568 + $0x500] sm:$0xff]
        %v4135 = vld [vmem:[%s568 + $0x508] sm:$0xff]
        %v4136 = vld [vmem:[%s568 + $0x510] sm:$0xff]
        %v4137 = vld [vmem:[%s568 + $0x518] sm:$0xff]
        %v4138 = vld [vmem:[%s568 + $0x520] sm:$0xff]
        %v4139 = vld [vmem:[%s568 + $0x528] sm:$0xff]
        %v4140 = vld [vmem:[%s568 + $0x530] sm:$0xff]
        %v4141 = vld [vmem:[%s568 + $0x538] sm:$0xff]
        %v4142 = vld [vmem:[%s568 + $0x540] sm:$0xff]
        %v4143 = vld [vmem:[%s568 + $0x548] sm:$0xff]
        %v4144 = vld [vmem:[%s568 + $0x550] sm:$0xff]
        %v4145 = vld [vmem:[%s568 + $0x558] sm:$0xff]
        %v4146 = vld [vmem:[%s568 + $0x560] sm:$0xff]
        %v4147 = vld [vmem:[%s568 + $0x568] sm:$0xff]
        %v4148 = vld [vmem:[%s568 + $0x570] sm:$0xff]
        %v4149 = vld [vmem:[%s568 + $0x578] sm:$0xff]
        %v4150 = vld [vmem:[%s568 + $0x580] sm:$0xff]
        %v4151 = vld [vmem:[%s568 + $0x588] sm:$0xff]
        %v4152 = vld [vmem:[%s568 + $0x590] sm:$0xff]
        %v4153 = vld [vmem:[%s568 + $0x598] sm:$0xff]
        %v4154 = vld [vmem:[%s568 + $0x5a0] sm:$0xff]
        %v4155 = vld [vmem:[%s568 + $0x5a8] sm:$0xff]
        %v4156 = vld [vmem:[%s568 + $0x5b0] sm:$0xff]
        %v4157 = vld [vmem:[%s568 + $0x5b8] sm:$0xff]
        %v4158 = vld [vmem:[%s568 + $0x5c0] sm:$0xff]
        %v4159 = vld [vmem:[%s568 + $0x5c8] sm:$0xff]
        %v4160 = vld [vmem:[%s568 + $0x5d0] sm:$0xff]
        %v4161 = vld [vmem:[%s568 + $0x5d8] sm:$0xff]
        %v4162 = vld [vmem:[%s568 + $0x5e0] sm:$0xff]
        %v4163 = vld [vmem:[%s568 + $0x5e8] sm:$0xff]
        %v4164 = vld [vmem:[%s568 + $0x5f0] sm:$0xff]
        %v4165 = vld [vmem:[%s568 + $0x5f8] sm:$0xff]
        %v4230 = vunpack.c.l.b16 %v4102
        %v4231 = vunpack.c.h.b16 %v4102
        %v4232 = vunpack.c.l.b16 %v4103
        %v4233 = vunpack.c.h.b16 %v4103
        %v4234 = vunpack.c.l.b16 %v4104
        %v4235 = vunpack.c.h.b16 %v4104
        %v4236 = vunpack.c.l.b16 %v4105
        %v4237 = vunpack.c.h.b16 %v4105
        %v4238 = vunpack.c.l.b16 %v4106
        %v4239 = vunpack.c.h.b16 %v4106
        %v4240 = vunpack.c.l.b16 %v4107
        %v4241 = vunpack.c.h.b16 %v4107
        %v4242 = vunpack.c.l.b16 %v4108
        %v4243 = vunpack.c.h.b16 %v4108
        %v4244 = vunpack.c.l.b16 %v4109
        %v4245 = vunpack.c.h.b16 %v4109
        %v4246 = vunpack.c.l.b16 %v4110
        %v4247 = vunpack.c.h.b16 %v4110
        %v4248 = vunpack.c.l.b16 %v4111
        %v4249 = vunpack.c.h.b16 %v4111
        %v4250 = vunpack.c.l.b16 %v4112
        %v4251 = vunpack.c.h.b16 %v4112
        %v4252 = vunpack.c.l.b16 %v4113
        %v4253 = vunpack.c.h.b16 %v4113
        %v4254 = vunpack.c.l.b16 %v4114
        %v4255 = vunpack.c.h.b16 %v4114
        %v4256 = vunpack.c.l.b16 %v4115
        %v4257 = vunpack.c.h.b16 %v4115
        %v4258 = vunpack.c.l.b16 %v4116
        %v4259 = vunpack.c.h.b16 %v4116
        %v4260 = vunpack.c.l.b16 %v4117
        %v4261 = vunpack.c.h.b16 %v4117
        %v4262 = vunpack.c.l.b16 %v4118
        %v4263 = vunpack.c.h.b16 %v4118
        %v4264 = vunpack.c.l.b16 %v4119
        %v4265 = vunpack.c.h.b16 %v4119
        %v4266 = vunpack.c.l.b16 %v4120
        %v4267 = vunpack.c.h.b16 %v4120
        %v4268 = vunpack.c.l.b16 %v4121
        %v4269 = vunpack.c.h.b16 %v4121
        %v4270 = vunpack.c.l.b16 %v4122
        %v4271 = vunpack.c.h.b16 %v4122
        %v4272 = vunpack.c.l.b16 %v4123
        %v4273 = vunpack.c.h.b16 %v4123
        %v4274 = vunpack.c.l.b16 %v4124
        %v4275 = vunpack.c.h.b16 %v4124
        %v4276 = vunpack.c.l.b16 %v4125
        %v4277 = vunpack.c.h.b16 %v4125
        %v4278 = vunpack.c.l.b16 %v4126
        %v4279 = vunpack.c.h.b16 %v4126
        %v4280 = vunpack.c.l.b16 %v4127
        %v4281 = vunpack.c.h.b16 %v4127
        %v4282 = vunpack.c.l.b16 %v4128
        %v4283 = vunpack.c.h.b16 %v4128
        %v4284 = vunpack.c.l.b16 %v4129
        %v4285 = vunpack.c.h.b16 %v4129
        %v4286 = vunpack.c.l.b16 %v4130
        %v4287 = vunpack.c.h.b16 %v4130
        %v4288 = vunpack.c.l.b16 %v4131
        %v4289 = vunpack.c.h.b16 %v4131
        %v4290 = vunpack.c.l.b16 %v4132
        %v4291 = vunpack.c.h.b16 %v4132
        %v4292 = vunpack.c.l.b16 %v4133
        %v4293 = vunpack.c.h.b16 %v4133
        %v4294 = vunpack.c.l.b16 %v4134
        %v4295 = vunpack.c.h.b16 %v4134
        %v4296 = vunpack.c.l.b16 %v4135
        %v4297 = vunpack.c.h.b16 %v4135
        %v4298 = vunpack.c.l.b16 %v4136
        %v4299 = vunpack.c.h.b16 %v4136
        %v4300 = vunpack.c.l.b16 %v4137
        %v4301 = vunpack.c.h.b16 %v4137
        %v4302 = vunpack.c.l.b16 %v4138
        %v4303 = vunpack.c.h.b16 %v4138
        %v4304 = vunpack.c.l.b16 %v4139
        %v4305 = vunpack.c.h.b16 %v4139
        %v4306 = vunpack.c.l.b16 %v4140
        %v4307 = vunpack.c.h.b16 %v4140
        %v4308 = vunpack.c.l.b16 %v4141
        %v4309 = vunpack.c.h.b16 %v4141
        %v4310 = vunpack.c.l.b16 %v4142
        %v4311 = vunpack.c.h.b16 %v4142
        %v4312 = vunpack.c.l.b16 %v4143
        %v4313 = vunpack.c.h.b16 %v4143
        %v4314 = vunpack.c.l.b16 %v4144
        %v4315 = vunpack.c.h.b16 %v4144
        %v4316 = vunpack.c.l.b16 %v4145
        %v4317 = vunpack.c.h.b16 %v4145
        %v4318 = vunpack.c.l.b16 %v4146
        %v4319 = vunpack.c.h.b16 %v4146
        %v4320 = vunpack.c.l.b16 %v4147
        %v4321 = vunpack.c.h.b16 %v4147
        %v4322 = vunpack.c.l.b16 %v4148
        %v4323 = vunpack.c.h.b16 %v4148
        %v4324 = vunpack.c.l.b16 %v4149
        %v4325 = vunpack.c.h.b16 %v4149
        %v4326 = vunpack.c.l.b16 %v4150
        %v4327 = vunpack.c.h.b16 %v4150
        %v4328 = vunpack.c.l.b16 %v4151
        %v4329 = vunpack.c.h.b16 %v4151
        %v4330 = vunpack.c.l.b16 %v4152
        %v4331 = vunpack.c.h.b16 %v4152
        %v4332 = vunpack.c.l.b16 %v4153
        %v4333 = vunpack.c.h.b16 %v4153
        %v4334 = vunpack.c.l.b16 %v4154
        %v4335 = vunpack.c.h.b16 %v4154
        %v4336 = vunpack.c.l.b16 %v4155
        %v4337 = vunpack.c.h.b16 %v4155
        %v4338 = vunpack.c.l.b16 %v4156
        %v4339 = vunpack.c.h.b16 %v4156
        %v4340 = vunpack.c.l.b16 %v4157
        %v4341 = vunpack.c.h.b16 %v4157
        %v4342 = vunpack.c.l.b16 %v4158
        %v4343 = vunpack.c.h.b16 %v4158
        %v4344 = vunpack.c.l.b16 %v4159
        %v4345 = vunpack.c.h.b16 %v4159
        %v4346 = vunpack.c.l.b16 %v4160
        %v4347 = vunpack.c.h.b16 %v4160
        %v4348 = vunpack.c.l.b16 %v4161
        %v4349 = vunpack.c.h.b16 %v4161
        %v4350 = vunpack.c.l.b16 %v4162
        %v4351 = vunpack.c.h.b16 %v4162
        %v4352 = vunpack.c.l.b16 %v4163
        %v4353 = vunpack.c.h.b16 %v4163
        %v4354 = vunpack.c.l.b16 %v4164
        %v4355 = vunpack.c.h.b16 %v4164
        %v4356 = vunpack.c.l.b16 %v4165
        %v4357 = vunpack.c.h.b16 %v4165
        %v4358 = vpack.c.b16 %v4238, %v4230
        %v4359 = vpack.c.b16 %v4239, %v4231
        %v4360 = vpack.c.b16 %v4240, %v4232
        %v4361 = vpack.c.b16 %v4241, %v4233
        %v4362 = vpack.c.b16 %v4242, %v4234
        %v4363 = vpack.c.b16 %v4243, %v4235
        %v4364 = vpack.c.b16 %v4244, %v4236
        %v4365 = vpack.c.b16 %v4245, %v4237
        %v4366 = vpack.c.b16 %v4254, %v4246
        %v4367 = vpack.c.b16 %v4255, %v4247
        %v4368 = vpack.c.b16 %v4256, %v4248
        %v4369 = vpack.c.b16 %v4257, %v4249
        %v4370 = vpack.c.b16 %v4258, %v4250
        %v4371 = vpack.c.b16 %v4259, %v4251
        %v4372 = vpack.c.b16 %v4260, %v4252
        %v4373 = vpack.c.b16 %v4261, %v4253
        %v4374 = vpack.c.b16 %v4270, %v4262
        %v4375 = vpack.c.b16 %v4271, %v4263
        %v4376 = vpack.c.b16 %v4272, %v4264
        %v4377 = vpack.c.b16 %v4273, %v4265
        %v4378 = vpack.c.b16 %v4274, %v4266
        %v4379 = vpack.c.b16 %v4275, %v4267
        %v4380 = vpack.c.b16 %v4276, %v4268
        %v4381 = vpack.c.b16 %v4277, %v4269
        %v4382 = vpack.c.b16 %v4286, %v4278
        %v4383 = vpack.c.b16 %v4287, %v4279
        %v4384 = vpack.c.b16 %v4288, %v4280
        %v4385 = vpack.c.b16 %v4289, %v4281
        %v4386 = vpack.c.b16 %v4290, %v4282
        %v4387 = vpack.c.b16 %v4291, %v4283
        %v4388 = vpack.c.b16 %v4292, %v4284
        %v4389 = vpack.c.b16 %v4293, %v4285
        %v4390 = vpack.c.b16 %v4302, %v4294
        %v4391 = vpack.c.b16 %v4303, %v4295
        %v4392 = vpack.c.b16 %v4304, %v4296
        %v4393 = vpack.c.b16 %v4305, %v4297
        %v4394 = vpack.c.b16 %v4306, %v4298
        %v4395 = vpack.c.b16 %v4307, %v4299
        %v4396 = vpack.c.b16 %v4308, %v4300
        %v4397 = vpack.c.b16 %v4309, %v4301
        %v4398 = vpack.c.b16 %v4318, %v4310
        %v4399 = vpack.c.b16 %v4319, %v4311
        %v4400 = vpack.c.b16 %v4320, %v4312
        %v4401 = vpack.c.b16 %v4321, %v4313
        %v4402 = vpack.c.b16 %v4322, %v4314
        %v4403 = vpack.c.b16 %v4323, %v4315
        %v4404 = vpack.c.b16 %v4324, %v4316
        %v4405 = vpack.c.b16 %v4325, %v4317
        %v4406 = vpack.c.b16 %v4334, %v4326
        %v4407 = vpack.c.b16 %v4335, %v4327
        %v4408 = vpack.c.b16 %v4336, %v4328
        %v4409 = vpack.c.b16 %v4337, %v4329
        %v4410 = vpack.c.b16 %v4338, %v4330
        %v4411 = vpack.c.b16 %v4339, %v4331
        %v4412 = vpack.c.b16 %v4340, %v4332
        %v4413 = vpack.c.b16 %v4341, %v4333
        %v4414 = vpack.c.b16 %v4350, %v4342
        %v4415 = vpack.c.b16 %v4351, %v4343
        %v4416 = vpack.c.b16 %v4352, %v4344
        %v4417 = vpack.c.b16 %v4353, %v4345
        %v4418 = vpack.c.b16 %v4354, %v4346
        %v4419 = vpack.c.b16 %v4355, %v4347
        %v4420 = vpack.c.b16 %v4356, %v4348
        %v4421 = vpack.c.b16 %v4357, %v4349
        %4486 = vmatprep.subr.bf16.mxu0 %v4359
        %4487 = vmatpush1.bf16.msra.mxu0 %v4358
        %4488 = vmatprep.subr.bf16.mxu0 %v4367
        %4489 = vmatpush1.bf16.msra.mxu0 %v4366
        %4490 = vmatprep.subr.bf16.mxu0 %v4375
        %4491 = vmatpush1.bf16.msra.mxu0 %v4374
        %4492 = vmatprep.subr.bf16.mxu0 %v4383
        %4493 = vmatpush1.bf16.msra.mxu0 %v4382
        %4494 = vmatprep.subr.bf16.mxu0 %v4391
        %4495 = vmatpush1.bf16.msra.mxu0 %v4390
        %4496 = vmatprep.subr.bf16.mxu0 %v4399
        %4497 = vmatpush1.bf16.msra.mxu0 %v4398
        %4498 = vmatprep.subr.bf16.mxu0 %v4407
        %4499 = vmatpush1.bf16.msra.mxu0 %v4406
        %4500 = vmatprep.subr.bf16.mxu0 %v4415
        %4501 = vmatpush1.bf16.msra.mxu0 %v4414
        %4502 = vmatprep.subr.bf16.mxu0 0
        %4503 = vmatpush1.bf16.msra.mxu0 0
        %4504 = vmatprep.subr.bf16.mxu0 0
        %4505 = vmatpush1.bf16.msra.mxu0 0
        %4506 = vmatprep.subr.bf16.mxu0 0
        %4507 = vmatpush1.bf16.msra.mxu0 0
        %4508 = vmatprep.subr.bf16.mxu0 0
        %4509 = vmatpush1.bf16.msra.mxu0 0
        %4510 = vmatprep.subr.bf16.mxu0 0
        %4511 = vmatpush1.bf16.msra.mxu0 0
        %4512 = vmatprep.subr.bf16.mxu0 0
        %4513 = vmatpush1.bf16.msra.mxu0 0
        %4514 = vmatprep.subr.bf16.mxu0 0
        %4515 = vmatpush1.bf16.msra.mxu0 0
        %4516 = vmatprep.subr.bf16.mxu0 0
        %4517 = vmatpush1.bf16.msra.mxu0 0
        %4518 = vmatprep.mubr.bf16.mxu0 0
        %4519 = vmatmul.mubr.bf16.gmra.mrb[0].mxu0 %v4101
        %v4520 = vpop.f32.mrb[0].mxu0
        %v4521 = vadd.f32 0.0, %v4520
        %v4522 = vpop.f32.mrb[0].mxu0
        %v4523 = vadd.f32 0.0, %v4522
        %v4524 = vpop.f32.mrb[0].mxu0
        %v4525 = vpop.f32.mrb[0].mxu0
        %4526 = vdwg.mxu0
        %4527 = vmatprep.subr.bf16.mxu0 %v4361
        %4528 = vmatpush1.bf16.msra.mxu0 %v4360
        %4529 = vmatprep.subr.bf16.mxu0 %v4369
        %4530 = vmatpush1.bf16.msra.mxu0 %v4368
        %4531 = vmatprep.subr.bf16.mxu0 %v4377
        %4532 = vmatpush1.bf16.msra.mxu0 %v4376
        %4533 = vmatprep.subr.bf16.mxu0 %v4385
        %4534 = vmatpush1.bf16.msra.mxu0 %v4384
        %4535 = vmatprep.subr.bf16.mxu0 %v4393
        %4536 = vmatpush1.bf16.msra.mxu0 %v4392
        %4537 = vmatprep.subr.bf16.mxu0 %v4401
        %4538 = vmatpush1.bf16.msra.mxu0 %v4400
        %4539 = vmatprep.subr.bf16.mxu0 %v4409
        %4540 = vmatpush1.bf16.msra.mxu0 %v4408
        %4541 = vmatprep.subr.bf16.mxu0 %v4417
        %4542 = vmatpush1.bf16.msra.mxu0 %v4416
        %4543 = vmatprep.subr.bf16.mxu0 0
        %4544 = vmatpush1.bf16.msra.mxu0 0
        %4545 = vmatprep.subr.bf16.mxu0 0
        %4546 = vmatpush1.bf16.msra.mxu0 0
        %4547 = vmatprep.subr.bf16.mxu0 0
        %4548 = vmatpush1.bf16.msra.mxu0 0
        %4549 = vmatprep.subr.bf16.mxu0 0
        %4550 = vmatpush1.bf16.msra.mxu0 0
        %4551 = vmatprep.subr.bf16.mxu0 0
        %4552 = vmatpush1.bf16.msra.mxu0 0
        %4553 = vmatprep.subr.bf16.mxu0 0
        %4554 = vmatpush1.bf16.msra.mxu0 0
        %4555 = vmatprep.subr.bf16.mxu0 0
        %4556 = vmatpush1.bf16.msra.mxu0 0
        %4557 = vmatprep.subr.bf16.mxu0 0
        %4558 = vmatpush1.bf16.msra.mxu0 0
        %4559 = vmatprep.mubr.bf16.mxu0 0
        %4560 = vmatmul.mubr.bf16.gmra.mrb[0].mxu0 %v4101
        %v4561 = vpop.f32.mrb[0].mxu0
        %v4562 = vadd.f32 0.0, %v4561
        %v4563 = vpop.f32.mrb[0].mxu0
        %v4564 = vadd.f32 0.0, %v4563
        %v4565 = vpop.f32.mrb[0].mxu0
        %v4566 = vpop.f32.mrb[0].mxu0
        %4567 = vdwg.mxu0
        %4568 = vmatprep.subr.bf16.mxu0 %v4363
        %4569 = vmatpush1.bf16.msra.mxu0 %v4362
        %4570 = vmatprep.subr.bf16.mxu0 %v4371
        %4571 = vmatpush1.bf16.msra.mxu0 %v4370
        %4572 = vmatprep.subr.bf16.mxu0 %v4379
        %4573 = vmatpush1.bf16.msra.mxu0 %v4378
        %4574 = vmatprep.subr.bf16.mxu0 %v4387
        %4575 = vmatpush1.bf16.msra.mxu0 %v4386
        %4576 = vmatprep.subr.bf16.mxu0 %v4395
        %4577 = vmatpush1.bf16.msra.mxu0 %v4394
        %4578 = vmatprep.subr.bf16.mxu0 %v4403
        %4579 = vmatpush1.bf16.msra.mxu0 %v4402
        %4580 = vmatprep.subr.bf16.mxu0 %v4411
        %4581 = vmatpush1.bf16.msra.mxu0 %v4410
        %4582 = vmatprep.subr.bf16.mxu0 %v4419
        %4583 = vmatpush1.bf16.msra.mxu0 %v4418
        %4584 = vmatprep.subr.bf16.mxu0 0
        %4585 = vmatpush1.bf16.msra.mxu0 0
        %4586 = vmatprep.subr.bf16.mxu0 0
        %4587 = vmatpush1.bf16.msra.mxu0 0
        %4588 = vmatprep.subr.bf16.mxu0 0
        %4589 = vmatpush1.bf16.msra.mxu0 0
        %4590 = vmatprep.subr.bf16.mxu0 0
        %4591 = vmatpush1.bf16.msra.mxu0 0
        %4592 = vmatprep.subr.bf16.mxu0 0
        %4593 = vmatpush1.bf16.msra.mxu0 0
        %4594 = vmatprep.subr.bf16.mxu0 0
        %4595 = vmatpush1.bf16.msra.mxu0 0
        %4596 = vmatprep.subr.bf16.mxu0 0
        %4597 = vmatpush1.bf16.msra.mxu0 0
        %4598 = vmatprep.subr.bf16.mxu0 0
        %4599 = vmatpush1.bf16.msra.mxu0 0
        %4600 = vmatprep.mubr.bf16.mxu0 0
        %4601 = vmatmul.mubr.bf16.gmra.mrb[0].mxu0 %v4101
        %v4602 = vpop.f32.mrb[0].mxu0
        %v4603 = vadd.f32 0.0, %v4602
        %v4604 = vpop.f32.mrb[0].mxu0
        %v4605 = vadd.f32 0.0, %v4604
        %v4606 = vpop.f32.mrb[0].mxu0
        %v4607 = vpop.f32.mrb[0].mxu0
        %4608 = vdwg.mxu0
        %4609 = vmatprep.subr.bf16.mxu0 %v4365
        %4610 = vmatpush1.bf16.msra.mxu0 %v4364
        %4611 = vmatprep.subr.bf16.mxu0 %v4373
        %4612 = vmatpush1.bf16.msra.mxu0 %v4372
        %4613 = vmatprep.subr.bf16.mxu0 %v4381
        %4614 = vmatpush1.bf16.msra.mxu0 %v4380
        %4615 = vmatprep.subr.bf16.mxu0 %v4389
        %4616 = vmatpush1.bf16.msra.mxu0 %v4388
        %4617 = vmatprep.subr.bf16.mxu0 %v4397
        %4618 = vmatpush1.bf16.msra.mxu0 %v4396
        %4619 = vmatprep.subr.bf16.mxu0 %v4405
        %4620 = vmatpush1.bf16.msra.mxu0 %v4404
        %4621 = vmatprep.subr.bf16.mxu0 %v4413
        %4622 = vmatpush1.bf16.msra.mxu0 %v4412
        %4623 = vmatprep.subr.bf16.mxu0 %v4421
        %4624 = vmatpush1.bf16.msra.mxu0 %v4420
        %4625 = vmatprep.subr.bf16.mxu0 0
        %4626 = vmatpush1.bf16.msra.mxu0 0
        %4627 = vmatprep.subr.bf16.mxu0 0
        %4628 = vmatpush1.bf16.msra.mxu0 0
        %4629 = vmatprep.subr.bf16.mxu0 0
        %4630 = vmatpush1.bf16.msra.mxu0 0
        %4631 = vmatprep.subr.bf16.mxu0 0
        %4632 = vmatpush1.bf16.msra.mxu0 0
        %4633 = vmatprep.subr.bf16.mxu0 0
        %4634 = vmatpush1.bf16.msra.mxu0 0
        %4635 = vmatprep.subr.bf16.mxu0 0
        %4636 = vmatpush1.bf16.msra.mxu0 0
        %4637 = vmatprep.subr.bf16.mxu0 0
        %4638 = vmatpush1.bf16.msra.mxu0 0
        %4639 = vmatprep.subr.bf16.mxu0 0
        %4640 = vmatpush1.bf16.msra.mxu0 0
        %4641 = vmatprep.mubr.bf16.mxu0 0
        %4642 = vmatmul.mubr.bf16.gmra.mrb[0].mxu0 %v4101
        %v4643 = vpop.f32.mrb[0].mxu0
        %v4644 = vadd.f32 0.0, %v4643
        %v4645 = vpop.f32.mrb[0].mxu0
        %v4646 = vadd.f32 0.0, %v4645
        %v4647 = vpop.f32.mrb[0].mxu0
        %v4648 = vpop.f32.mrb[0].mxu0
        %4649 = vdwg.mxu0
        %v4650 = vadd.f32 %v4093, %v4521
        %v4651 = vadd.f32 %v4094, %v4523
        %v4652 = vadd.f32 %v4095, %v4562
        %v4653 = vadd.f32 %v4096, %v4564
        %v4654 = vadd.f32 %v4097, %v4603
        %v4655 = vadd.f32 %v4098, %v4605
        %v4656 = vadd.f32 %v4099, %v4644
        %v4657 = vadd.f32 %v4100, %v4646
        %v4658 = vpack.c.bf16 %v2974, %v2974
        %v4659 = vld [vmem:[%s568 + $0x600] sm:$0xff]
        %v4660 = vld [vmem:[%s568 + $0x608] sm:$0xff]
        %v4661 = vld [vmem:[%s568 + $0x610] sm:$0xff]
        %v4662 = vld [vmem:[%s568 + $0x618] sm:$0xff]
        %v4663 = vld [vmem:[%s568 + $0x620] sm:$0xff]
        %v4664 = vld [vmem:[%s568 + $0x628] sm:$0xff]
        %v4665 = vld [vmem:[%s568 + $0x630] sm:$0xff]
        %v4666 = vld [vmem:[%s568 + $0x638] sm:$0xff]
        %v4667 = vld [vmem:[%s568 + $0x640] sm:$0xff]
        %v4668 = vld [vmem:[%s568 + $0x648] sm:$0xff]
        %v4669 = vld [vmem:[%s568 + $0x650] sm:$0xff]
        %v4670 = vld [vmem:[%s568 + $0x658] sm:$0xff]
        %v4671 = vld [vmem:[%s568 + $0x660] sm:$0xff]
        %v4672 = vld [vmem:[%s568 + $0x668] sm:$0xff]
        %v4673 = vld [vmem:[%s568 + $0x670] sm:$0xff]
        %v4674 = vld [vmem:[%s568 + $0x678] sm:$0xff]
        %v4675 = vld [vmem:[%s568 + $0x680] sm:$0xff]
        %v4676 = vld [vmem:[%s568 + $0x688] sm:$0xff]
        %v4677 = vld [vmem:[%s568 + $0x690] sm:$0xff]
        %v4678 = vld [vmem:[%s568 + $0x698] sm:$0xff]
        %v4679 = vld [vmem:[%s568 + $0x6a0] sm:$0xff]
        %v4680 = vld [vmem:[%s568 + $0x6a8] sm:$0xff]
        %v4681 = vld [vmem:[%s568 + $0x6b0] sm:$0xff]
        %v4682 = vld [vmem:[%s568 + $0x6b8] sm:$0xff]
        %v4683 = vld [vmem:[%s568 + $0x6c0] sm:$0xff]
        %v4684 = vld [vmem:[%s568 + $0x6c8] sm:$0xff]
        %v4685 = vld [vmem:[%s568 + $0x6d0] sm:$0xff]
        %v4686 = vld [vmem:[%s568 + $0x6d8] sm:$0xff]
        %v4687 = vld [vmem:[%s568 + $0x6e0] sm:$0xff]
        %v4688 = vld [vmem:[%s568 + $0x6e8] sm:$0xff]
        %v4689 = vld [vmem:[%s568 + $0x6f0] sm:$0xff]
        %v4690 = vld [vmem:[%s568 + $0x6f8] sm:$0xff]
        %v4691 = vld [vmem:[%s568 + $0x700] sm:$0xff]
        %v4692 = vld [vmem:[%s568 + $0x708] sm:$0xff]
        %v4693 = vld [vmem:[%s568 + $0x710] sm:$0xff]
        %v4694 = vld [vmem:[%s568 + $0x718] sm:$0xff]
        %v4695 = vld [vmem:[%s568 + $0x720] sm:$0xff]
        %v4696 = vld [vmem:[%s568 + $0x728] sm:$0xff]
        %v4697 = vld [vmem:[%s568 + $0x730] sm:$0xff]
        %v4698 = vld [vmem:[%s568 + $0x738] sm:$0xff]
        %v4699 = vld [vmem:[%s568 + $0x740] sm:$0xff]
        %v4700 = vld [vmem:[%s568 + $0x748] sm:$0xff]
        %v4701 = vld [vmem:[%s568 + $0x750] sm:$0xff]
        %v4702 = vld [vmem:[%s568 + $0x758] sm:$0xff]
        %v4703 = vld [vmem:[%s568 + $0x760] sm:$0xff]
        %v4704 = vld [vmem:[%s568 + $0x768] sm:$0xff]
        %v4705 = vld [vmem:[%s568 + $0x770] sm:$0xff]
        %v4706 = vld [vmem:[%s568 + $0x778] sm:$0xff]
        %v4707 = vld [vmem:[%s568 + $0x780] sm:$0xff]
        %v4708 = vld [vmem:[%s568 + $0x788] sm:$0xff]
        %v4709 = vld [vmem:[%s568 + $0x790] sm:$0xff]
        %v4710 = vld [vmem:[%s568 + $0x798] sm:$0xff]
        %v4711 = vld [vmem:[%s568 + $0x7a0] sm:$0xff]
        %v4712 = vld [vmem:[%s568 + $0x7a8] sm:$0xff]
        %v4713 = vld [vmem:[%s568 + $0x7b0] sm:$0xff]
        %v4714 = vld [vmem:[%s568 + $0x7b8] sm:$0xff]
        %v4715 = vld [vmem:[%s568 + $0x7c0] sm:$0xff]
        %v4716 = vld [vmem:[%s568 + $0x7c8] sm:$0xff]
        %v4717 = vld [vmem:[%s568 + $0x7d0] sm:$0xff]
        %v4718 = vld [vmem:[%s568 + $0x7d8] sm:$0xff]
        %v4719 = vld [vmem:[%s568 + $0x7e0] sm:$0xff]
        %v4720 = vld [vmem:[%s568 + $0x7e8] sm:$0xff]
        %v4721 = vld [vmem:[%s568 + $0x7f0] sm:$0xff]
        %v4722 = vld [vmem:[%s568 + $0x7f8] sm:$0xff]
        %v4787 = vunpack.c.l.b16 %v4659
        %v4788 = vunpack.c.h.b16 %v4659
        %v4789 = vunpack.c.l.b16 %v4660
        %v4790 = vunpack.c.h.b16 %v4660
        %v4791 = vunpack.c.l.b16 %v4661
        %v4792 = vunpack.c.h.b16 %v4661
        %v4793 = vunpack.c.l.b16 %v4662
        %v4794 = vunpack.c.h.b16 %v4662
        %v4795 = vunpack.c.l.b16 %v4663
        %v4796 = vunpack.c.h.b16 %v4663
        %v4797 = vunpack.c.l.b16 %v4664
        %v4798 = vunpack.c.h.b16 %v4664
        %v4799 = vunpack.c.l.b16 %v4665
        %v4800 = vunpack.c.h.b16 %v4665
        %v4801 = vunpack.c.l.b16 %v4666
        %v4802 = vunpack.c.h.b16 %v4666
        %v4803 = vunpack.c.l.b16 %v4667
        %v4804 = vunpack.c.h.b16 %v4667
        %v4805 = vunpack.c.l.b16 %v4668
        %v4806 = vunpack.c.h.b16 %v4668
        %v4807 = vunpack.c.l.b16 %v4669
        %v4808 = vunpack.c.h.b16 %v4669
        %v4809 = vunpack.c.l.b16 %v4670
        %v4810 = vunpack.c.h.b16 %v4670
        %v4811 = vunpack.c.l.b16 %v4671
        %v4812 = vunpack.c.h.b16 %v4671
        %v4813 = vunpack.c.l.b16 %v4672
        %v4814 = vunpack.c.h.b16 %v4672
        %v4815 = vunpack.c.l.b16 %v4673
        %v4816 = vunpack.c.h.b16 %v4673
        %v4817 = vunpack.c.l.b16 %v4674
        %v4818 = vunpack.c.h.b16 %v4674
        %v4819 = vunpack.c.l.b16 %v4675
        %v4820 = vunpack.c.h.b16 %v4675
        %v4821 = vunpack.c.l.b16 %v4676
        %v4822 = vunpack.c.h.b16 %v4676
        %v4823 = vunpack.c.l.b16 %v4677
        %v4824 = vunpack.c.h.b16 %v4677
        %v4825 = vunpack.c.l.b16 %v4678
        %v4826 = vunpack.c.h.b16 %v4678
        %v4827 = vunpack.c.l.b16 %v4679
        %v4828 = vunpack.c.h.b16 %v4679
        %v4829 = vunpack.c.l.b16 %v4680
        %v4830 = vunpack.c.h.b16 %v4680
        %v4831 = vunpack.c.l.b16 %v4681
        %v4832 = vunpack.c.h.b16 %v4681
        %v4833 = vunpack.c.l.b16 %v4682
        %v4834 = vunpack.c.h.b16 %v4682
        %v4835 = vunpack.c.l.b16 %v4683
        %v4836 = vunpack.c.h.b16 %v4683
        %v4837 = vunpack.c.l.b16 %v4684
        %v4838 = vunpack.c.h.b16 %v4684
        %v4839 = vunpack.c.l.b16 %v4685
        %v4840 = vunpack.c.h.b16 %v4685
        %v4841 = vunpack.c.l.b16 %v4686
        %v4842 = vunpack.c.h.b16 %v4686
        %v4843 = vunpack.c.l.b16 %v4687
        %v4844 = vunpack.c.h.b16 %v4687
        %v4845 = vunpack.c.l.b16 %v4688
        %v4846 = vunpack.c.h.b16 %v4688
        %v4847 = vunpack.c.l.b16 %v4689
        %v4848 = vunpack.c.h.b16 %v4689
        %v4849 = vunpack.c.l.b16 %v4690
        %v4850 = vunpack.c.h.b16 %v4690
        %v4851 = vunpack.c.l.b16 %v4691
        %v4852 = vunpack.c.h.b16 %v4691
        %v4853 = vunpack.c.l.b16 %v4692
        %v4854 = vunpack.c.h.b16 %v4692
        %v4855 = vunpack.c.l.b16 %v4693
        %v4856 = vunpack.c.h.b16 %v4693
        %v4857 = vunpack.c.l.b16 %v4694
        %v4858 = vunpack.c.h.b16 %v4694
        %v4859 = vunpack.c.l.b16 %v4695
        %v4860 = vunpack.c.h.b16 %v4695
        %v4861 = vunpack.c.l.b16 %v4696
        %v4862 = vunpack.c.h.b16 %v4696
        %v4863 = vunpack.c.l.b16 %v4697
        %v4864 = vunpack.c.h.b16 %v4697
        %v4865 = vunpack.c.l.b16 %v4698
        %v4866 = vunpack.c.h.b16 %v4698
        %v4867 = vunpack.c.l.b16 %v4699
        %v4868 = vunpack.c.h.b16 %v4699
        %v4869 = vunpack.c.l.b16 %v4700
        %v4870 = vunpack.c.h.b16 %v4700
        %v4871 = vunpack.c.l.b16 %v4701
        %v4872 = vunpack.c.h.b16 %v4701
        %v4873 = vunpack.c.l.b16 %v4702
        %v4874 = vunpack.c.h.b16 %v4702
        %v4875 = vunpack.c.l.b16 %v4703
        %v4876 = vunpack.c.h.b16 %v4703
        %v4877 = vunpack.c.l.b16 %v4704
        %v4878 = vunpack.c.h.b16 %v4704
        %v4879 = vunpack.c.l.b16 %v4705
        %v4880 = vunpack.c.h.b16 %v4705
        %v4881 = vunpack.c.l.b16 %v4706
        %v4882 = vunpack.c.h.b16 %v4706
        %v4883 = vunpack.c.l.b16 %v4707
        %v4884 = vunpack.c.h.b16 %v4707
        %v4885 = vunpack.c.l.b16 %v4708
        %v4886 = vunpack.c.h.b16 %v4708
        %v4887 = vunpack.c.l.b16 %v4709
        %v4888 = vunpack.c.h.b16 %v4709
        %v4889 = vunpack.c.l.b16 %v4710
        %v4890 = vunpack.c.h.b16 %v4710
        %v4891 = vunpack.c.l.b16 %v4711
        %v4892 = vunpack.c.h.b16 %v4711
        %v4893 = vunpack.c.l.b16 %v4712
        %v4894 = vunpack.c.h.b16 %v4712
        %v4895 = vunpack.c.l.b16 %v4713
        %v4896 = vunpack.c.h.b16 %v4713
        %v4897 = vunpack.c.l.b16 %v4714
        %v4898 = vunpack.c.h.b16 %v4714
        %v4899 = vunpack.c.l.b16 %v4715
        %v4900 = vunpack.c.h.b16 %v4715
        %v4901 = vunpack.c.l.b16 %v4716
        %v4902 = vunpack.c.h.b16 %v4716
        %v4903 = vunpack.c.l.b16 %v4717
        %v4904 = vunpack.c.h.b16 %v4717
        %v4905 = vunpack.c.l.b16 %v4718
        %v4906 = vunpack.c.h.b16 %v4718
        %v4907 = vunpack.c.l.b16 %v4719
        %v4908 = vunpack.c.h.b16 %v4719
        %v4909 = vunpack.c.l.b16 %v4720
        %v4910 = vunpack.c.h.b16 %v4720
        %v4911 = vunpack.c.l.b16 %v4721
        %v4912 = vunpack.c.h.b16 %v4721
        %v4913 = vunpack.c.l.b16 %v4722
        %v4914 = vunpack.c.h.b16 %v4722
        %v4915 = vpack.c.b16 %v4795, %v4787
        %v4916 = vpack.c.b16 %v4796, %v4788
        %v4917 = vpack.c.b16 %v4797, %v4789
        %v4918 = vpack.c.b16 %v4798, %v4790
        %v4919 = vpack.c.b16 %v4799, %v4791
        %v4920 = vpack.c.b16 %v4800, %v4792
        %v4921 = vpack.c.b16 %v4801, %v4793
        %v4922 = vpack.c.b16 %v4802, %v4794
        %v4923 = vpack.c.b16 %v4811, %v4803
        %v4924 = vpack.c.b16 %v4812, %v4804
        %v4925 = vpack.c.b16 %v4813, %v4805
        %v4926 = vpack.c.b16 %v4814, %v4806
        %v4927 = vpack.c.b16 %v4815, %v4807
        %v4928 = vpack.c.b16 %v4816, %v4808
        %v4929 = vpack.c.b16 %v4817, %v4809
        %v4930 = vpack.c.b16 %v4818, %v4810
        %v4931 = vpack.c.b16 %v4827, %v4819
        %v4932 = vpack.c.b16 %v4828, %v4820
        %v4933 = vpack.c.b16 %v4829, %v4821
        %v4934 = vpack.c.b16 %v4830, %v4822
        %v4935 = vpack.c.b16 %v4831, %v4823
        %v4936 = vpack.c.b16 %v4832, %v4824
        %v4937 = vpack.c.b16 %v4833, %v4825
        %v4938 = vpack.c.b16 %v4834, %v4826
        %v4939 = vpack.c.b16 %v4843, %v4835
        %v4940 = vpack.c.b16 %v4844, %v4836
        %v4941 = vpack.c.b16 %v4845, %v4837
        %v4942 = vpack.c.b16 %v4846, %v4838
        %v4943 = vpack.c.b16 %v4847, %v4839
        %v4944 = vpack.c.b16 %v4848, %v4840
        %v4945 = vpack.c.b16 %v4849, %v4841
        %v4946 = vpack.c.b16 %v4850, %v4842
        %v4947 = vpack.c.b16 %v4859, %v4851
        %v4948 = vpack.c.b16 %v4860, %v4852
        %v4949 = vpack.c.b16 %v4861, %v4853
        %v4950 = vpack.c.b16 %v4862, %v4854
        %v4951 = vpack.c.b16 %v4863, %v4855
        %v4952 = vpack.c.b16 %v4864, %v4856
        %v4953 = vpack.c.b16 %v4865, %v4857
        %v4954 = vpack.c.b16 %v4866, %v4858
        %v4955 = vpack.c.b16 %v4875, %v4867
        %v4956 = vpack.c.b16 %v4876, %v4868
        %v4957 = vpack.c.b16 %v4877, %v4869
        %v4958 = vpack.c.b16 %v4878, %v4870
        %v4959 = vpack.c.b16 %v4879, %v4871
        %v4960 = vpack.c.b16 %v4880, %v4872
        %v4961 = vpack.c.b16 %v4881, %v4873
        %v4962 = vpack.c.b16 %v4882, %v4874
        %v4963 = vpack.c.b16 %v4891, %v4883
        %v4964 = vpack.c.b16 %v4892, %v4884
        %v4965 = vpack.c.b16 %v4893, %v4885
        %v4966 = vpack.c.b16 %v4894, %v4886
        %v4967 = vpack.c.b16 %v4895, %v4887
        %v4968 = vpack.c.b16 %v4896, %v4888
        %v4969 = vpack.c.b16 %v4897, %v4889
        %v4970 = vpack.c.b16 %v4898, %v4890
        %v4971 = vpack.c.b16 %v4907, %v4899
        %v4972 = vpack.c.b16 %v4908, %v4900
        %v4973 = vpack.c.b16 %v4909, %v4901
        %v4974 = vpack.c.b16 %v4910, %v4902
        %v4975 = vpack.c.b16 %v4911, %v4903
        %v4976 = vpack.c.b16 %v4912, %v4904
        %v4977 = vpack.c.b16 %v4913, %v4905
        %v4978 = vpack.c.b16 %v4914, %v4906
        %5043 = vmatprep.subr.bf16.mxu0 %v4916
        %5044 = vmatpush1.bf16.msra.mxu0 %v4915
        %5045 = vmatprep.subr.bf16.mxu0 %v4924
        %5046 = vmatpush1.bf16.msra.mxu0 %v4923
        %5047 = vmatprep.subr.bf16.mxu0 %v4932
        %5048 = vmatpush1.bf16.msra.mxu0 %v4931
        %5049 = vmatprep.subr.bf16.mxu0 %v4940
        %5050 = vmatpush1.bf16.msra.mxu0 %v4939
        %5051 = vmatprep.subr.bf16.mxu0 %v4948
        %5052 = vmatpush1.bf16.msra.mxu0 %v4947
        %5053 = vmatprep.subr.bf16.mxu0 %v4956
        %5054 = vmatpush1.bf16.msra.mxu0 %v4955
        %5055 = vmatprep.subr.bf16.mxu0 %v4964
        %5056 = vmatpush1.bf16.msra.mxu0 %v4963
        %5057 = vmatprep.subr.bf16.mxu0 %v4972
        %5058 = vmatpush1.bf16.msra.mxu0 %v4971
        %5059 = vmatprep.subr.bf16.mxu0 0
        %5060 = vmatpush1.bf16.msra.mxu0 0
        %5061 = vmatprep.subr.bf16.mxu0 0
        %5062 = vmatpush1.bf16.msra.mxu0 0
        %5063 = vmatprep.subr.bf16.mxu0 0
        %5064 = vmatpush1.bf16.msra.mxu0 0
        %5065 = vmatprep.subr.bf16.mxu0 0
        %5066 = vmatpush1.bf16.msra.mxu0 0
        %5067 = vmatprep.subr.bf16.mxu0 0
        %5068 = vmatpush1.bf16.msra.mxu0 0
        %5069 = vmatprep.subr.bf16.mxu0 0
        %5070 = vmatpush1.bf16.msra.mxu0 0
        %5071 = vmatprep.subr.bf16.mxu0 0
        %5072 = vmatpush1.bf16.msra.mxu0 0
        %5073 = vmatprep.subr.bf16.mxu0 0
        %5074 = vmatpush1.bf16.msra.mxu0 0
        %5075 = vmatprep.mubr.bf16.mxu0 0
        %5076 = vmatmul.mubr.bf16.gmra.mrb[0].mxu0 %v4658
        %v5077 = vpop.f32.mrb[0].mxu0
        %v5078 = vadd.f32 0.0, %v5077
        %v5079 = vpop.f32.mrb[0].mxu0
        %v5080 = vadd.f32 0.0, %v5079
        %v5081 = vpop.f32.mrb[0].mxu0
        %v5082 = vpop.f32.mrb[0].mxu0
        %5083 = vdwg.mxu0
        %5084 = vmatprep.subr.bf16.mxu0 %v4918
        %5085 = vmatpush1.bf16.msra.mxu0 %v4917
        %5086 = vmatprep.subr.bf16.mxu0 %v4926
        %5087 = vmatpush1.bf16.msra.mxu0 %v4925
        %5088 = vmatprep.subr.bf16.mxu0 %v4934
        %5089 = vmatpush1.bf16.msra.mxu0 %v4933
        %5090 = vmatprep.subr.bf16.mxu0 %v4942
        %5091 = vmatpush1.bf16.msra.mxu0 %v4941
        %5092 = vmatprep.subr.bf16.mxu0 %v4950
        %5093 = vmatpush1.bf16.msra.mxu0 %v4949
        %5094 = vmatprep.subr.bf16.mxu0 %v4958
        %5095 = vmatpush1.bf16.msra.mxu0 %v4957
        %5096 = vmatprep.subr.bf16.mxu0 %v4966
        %5097 = vmatpush1.bf16.msra.mxu0 %v4965
        %5098 = vmatprep.subr.bf16.mxu0 %v4974
        %5099 = vmatpush1.bf16.msra.mxu0 %v4973
        %5100 = vmatprep.subr.bf16.mxu0 0
        %5101 = vmatpush1.bf16.msra.mxu0 0
        %5102 = vmatprep.subr.bf16.mxu0 0
        %5103 = vmatpush1.bf16.msra.mxu0 0
        %5104 = vmatprep.subr.bf16.mxu0 0
        %5105 = vmatpush1.bf16.msra.mxu0 0
        %5106 = vmatprep.subr.bf16.mxu0 0
        %5107 = vmatpush1.bf16.msra.mxu0 0
        %5108 = vmatprep.subr.bf16.mxu0 0
        %5109 = vmatpush1.bf16.msra.mxu0 0
        %5110 = vmatprep.subr.bf16.mxu0 0
        %5111 = vmatpush1.bf16.msra.mxu0 0
        %5112 = vmatprep.subr.bf16.mxu0 0
        %5113 = vmatpush1.bf16.msra.mxu0 0
        %5114 = vmatprep.subr.bf16.mxu0 0
        %5115 = vmatpush1.bf16.msra.mxu0 0
        %5116 = vmatprep.mubr.bf16.mxu0 0
        %5117 = vmatmul.mubr.bf16.gmra.mrb[0].mxu0 %v4658
        %v5118 = vpop.f32.mrb[0].mxu0
        %v5119 = vadd.f32 0.0, %v5118
        %v5120 = vpop.f32.mrb[0].mxu0
        %v5121 = vadd.f32 0.0, %v5120
        %v5122 = vpop.f32.mrb[0].mxu0
        %v5123 = vpop.f32.mrb[0].mxu0
        %5124 = vdwg.mxu0
        %5125 = vmatprep.subr.bf16.mxu0 %v4920
        %5126 = vmatpush1.bf16.msra.mxu0 %v4919
        %5127 = vmatprep.subr.bf16.mxu0 %v4928
        %5128 = vmatpush1.bf16.msra.mxu0 %v4927
        %5129 = vmatprep.subr.bf16.mxu0 %v4936
        %5130 = vmatpush1.bf16.msra.mxu0 %v4935
        %5131 = vmatprep.subr.bf16.mxu0 %v4944
        %5132 = vmatpush1.bf16.msra.mxu0 %v4943
        %5133 = vmatprep.subr.bf16.mxu0 %v4952
        %5134 = vmatpush1.bf16.msra.mxu0 %v4951
        %5135 = vmatprep.subr.bf16.mxu0 %v4960
        %5136 = vmatpush1.bf16.msra.mxu0 %v4959
        %5137 = vmatprep.subr.bf16.mxu0 %v4968
        %5138 = vmatpush1.bf16.msra.mxu0 %v4967
        %5139 = vmatprep.subr.bf16.mxu0 %v4976
        %5140 = vmatpush1.bf16.msra.mxu0 %v4975
        %5141 = vmatprep.subr.bf16.mxu0 0
        %5142 = vmatpush1.bf16.msra.mxu0 0
        %5143 = vmatprep.subr.bf16.mxu0 0
        %5144 = vmatpush1.bf16.msra.mxu0 0
        %5145 = vmatprep.subr.bf16.mxu0 0
        %5146 = vmatpush1.bf16.msra.mxu0 0
        %5147 = vmatprep.subr.bf16.mxu0 0
        %5148 = vmatpush1.bf16.msra.mxu0 0
        %5149 = vmatprep.subr.bf16.mxu0 0
        %5150 = vmatpush1.bf16.msra.mxu0 0
        %5151 = vmatprep.subr.bf16.mxu0 0
        %5152 = vmatpush1.bf16.msra.mxu0 0
        %5153 = vmatprep.subr.bf16.mxu0 0
        %5154 = vmatpush1.bf16.msra.mxu0 0
        %5155 = vmatprep.subr.bf16.mxu0 0
        %5156 = vmatpush1.bf16.msra.mxu0 0
        %5157 = vmatprep.mubr.bf16.mxu0 0
        %5158 = vmatmul.mubr.bf16.gmra.mrb[0].mxu0 %v4658
        %v5159 = vpop.f32.mrb[0].mxu0
        %v5160 = vadd.f32 0.0, %v5159
        %v5161 = vpop.f32.mrb[0].mxu0
        %v5162 = vadd.f32 0.0, %v5161
        %v5163 = vpop.f32.mrb[0].mxu0
        %v5164 = vpop.f32.mrb[0].mxu0
        %5165 = vdwg.mxu0
        %5166 = vmatprep.subr.bf16.mxu0 %v4922
        %5167 = vmatpush1.bf16.msra.mxu0 %v4921
        %5168 = vmatprep.subr.bf16.mxu0 %v4930
        %5169 = vmatpush1.bf16.msra.mxu0 %v4929
        %5170 = vmatprep.subr.bf16.mxu0 %v4938
        %5171 = vmatpush1.bf16.msra.mxu0 %v4937
        %5172 = vmatprep.subr.bf16.mxu0 %v4946
        %5173 = vmatpush1.bf16.msra.mxu0 %v4945
        %5174 = vmatprep.subr.bf16.mxu0 %v4954
        %5175 = vmatpush1.bf16.msra.mxu0 %v4953
        %5176 = vmatprep.subr.bf16.mxu0 %v4962
        %5177 = vmatpush1.bf16.msra.mxu0 %v4961
        %5178 = vmatprep.subr.bf16.mxu0 %v4970
        %5179 = vmatpush1.bf16.msra.mxu0 %v4969
        %5180 = vmatprep.subr.bf16.mxu0 %v4978
        %5181 = vmatpush1.bf16.msra.mxu0 %v4977
        %5182 = vmatprep.subr.bf16.mxu0 0
        %5183 = vmatpush1.bf16.msra.mxu0 0
        %5184 = vmatprep.subr.bf16.mxu0 0
        %5185 = vmatpush1.bf16.msra.mxu0 0
        %5186 = vmatprep.subr.bf16.mxu0 0
        %5187 = vmatpush1.bf16.msra.mxu0 0
        %5188 = vmatprep.subr.bf16.mxu0 0
        %5189 = vmatpush1.bf16.msra.mxu0 0
        %5190 = vmatprep.subr.bf16.mxu0 0
        %5191 = vmatpush1.bf16.msra.mxu0 0
        %5192 = vmatprep.subr.bf16.mxu0 0
        %5193 = vmatpush1.bf16.msra.mxu0 0
        %5194 = vmatprep.subr.bf16.mxu0 0
        %5195 = vmatpush1.bf16.msra.mxu0 0
        %5196 = vmatprep.subr.bf16.mxu0 0
        %5197 = vmatpush1.bf16.msra.mxu0 0
        %5198 = vmatprep.mubr.bf16.mxu0 0
        %5199 = vmatmul.mubr.bf16.gmra.mrb[0].mxu0 %v4658
        %v5200 = vpop.f32.mrb[0].mxu0
        %v5201 = vadd.f32 0.0, %v5200
        %v5202 = vpop.f32.mrb[0].mxu0
        %v5203 = vadd.f32 0.0, %v5202
        %v5204 = vpop.f32.mrb[0].mxu0
        %v5205 = vpop.f32.mrb[0].mxu0
        %5206 = vdwg.mxu0
        %v5207 = vadd.f32 %v4650, %v5078
        %v5208 = vadd.f32 %v4651, %v5080
        %v5209 = vadd.f32 %v4652, %v5119
        %v5210 = vadd.f32 %v4653, %v5121
        %v5211 = vadd.f32 %v4654, %v5160
        %v5212 = vadd.f32 %v4655, %v5162
        %v5213 = vadd.f32 %v4656, %v5201
        %v5214 = vadd.f32 %v4657, %v5203
        %v5215 = vpack.c.bf16 %v2975, %v2975
        %v5216 = vld [vmem:[%s568 + $0x800] sm:$0xff]
        %v5217 = vld [vmem:[%s568 + $0x808] sm:$0xff]
        %v5218 = vld [vmem:[%s568 + $0x810] sm:$0xff]
        %v5219 = vld [vmem:[%s568 + $0x818] sm:$0xff]
        %v5220 = vld [vmem:[%s568 + $0x820] sm:$0xff]
        %v5221 = vld [vmem:[%s568 + $0x828] sm:$0xff]
        %v5222 = vld [vmem:[%s568 + $0x830] sm:$0xff]
        %v5223 = vld [vmem:[%s568 + $0x838] sm:$0xff]
        %v5224 = vld [vmem:[%s568 + $0x840] sm:$0xff]
        %v5225 = vld [vmem:[%s568 + $0x848] sm:$0xff]
        %v5226 = vld [vmem:[%s568 + $0x850] sm:$0xff]
        %v5227 = vld [vmem:[%s568 + $0x858] sm:$0xff]
        %v5228 = vld [vmem:[%s568 + $0x860] sm:$0xff]
        %v5229 = vld [vmem:[%s568 + $0x868] sm:$0xff]
        %v5230 = vld [vmem:[%s568 + $0x870] sm:$0xff]
        %v5231 = vld [vmem:[%s568 + $0x878] sm:$0xff]
        %v5232 = vld [vmem:[%s568 + $0x880] sm:$0xff]
        %v5233 = vld [vmem:[%s568 + $0x888] sm:$0xff]
        %v5234 = vld [vmem:[%s568 + $0x890] sm:$0xff]
        %v5235 = vld [vmem:[%s568 + $0x898] sm:$0xff]
        %v5236 = vld [vmem:[%s568 + $0x8a0] sm:$0xff]
        %v5237 = vld [vmem:[%s568 + $0x8a8] sm:$0xff]
        %v5238 = vld [vmem:[%s568 + $0x8b0] sm:$0xff]
        %v5239 = vld [vmem:[%s568 + $0x8b8] sm:$0xff]
        %v5240 = vld [vmem:[%s568 + $0x8c0] sm:$0xff]
        %v5241 = vld [vmem:[%s568 + $0x8c8] sm:$0xff]
        %v5242 = vld [vmem:[%s568 + $0x8d0] sm:$0xff]
        %v5243 = vld [vmem:[%s568 + $0x8d8] sm:$0xff]
        %v5244 = vld [vmem:[%s568 + $0x8e0] sm:$0xff]
        %v5245 = vld [vmem:[%s568 + $0x8e8] sm:$0xff]
        %v5246 = vld [vmem:[%s568 + $0x8f0] sm:$0xff]
        %v5247 = vld [vmem:[%s568 + $0x8f8] sm:$0xff]
        %v5248 = vld [vmem:[%s568 + $0x900] sm:$0xff]
        %v5249 = vld [vmem:[%s568 + $0x908] sm:$0xff]
        %v5250 = vld [vmem:[%s568 + $0x910] sm:$0xff]
        %v5251 = vld [vmem:[%s568 + $0x918] sm:$0xff]
        %v5252 = vld [vmem:[%s568 + $0x920] sm:$0xff]
        %v5253 = vld [vmem:[%s568 + $0x928] sm:$0xff]
        %v5254 = vld [vmem:[%s568 + $0x930] sm:$0xff]
        %v5255 = vld [vmem:[%s568 + $0x938] sm:$0xff]
        %v5256 = vld [vmem:[%s568 + $0x940] sm:$0xff]
        %v5257 = vld [vmem:[%s568 + $0x948] sm:$0xff]
        %v5258 = vld [vmem:[%s568 + $0x950] sm:$0xff]
        %v5259 = vld [vmem:[%s568 + $0x958] sm:$0xff]
        %v5260 = vld [vmem:[%s568 + $0x960] sm:$0xff]
        %v5261 = vld [vmem:[%s568 + $0x968] sm:$0xff]
        %v5262 = vld [vmem:[%s568 + $0x970] sm:$0xff]
        %v5263 = vld [vmem:[%s568 + $0x978] sm:$0xff]
        %v5264 = vld [vmem:[%s568 + $0x980] sm:$0xff]
        %v5265 = vld [vmem:[%s568 + $0x988] sm:$0xff]
        %v5266 = vld [vmem:[%s568 + $0x990] sm:$0xff]
        %v5267 = vld [vmem:[%s568 + $0x998] sm:$0xff]
        %v5268 = vld [vmem:[%s568 + $0x9a0] sm:$0xff]
        %v5269 = vld [vmem:[%s568 + $0x9a8] sm:$0xff]
        %v5270 = vld [vmem:[%s568 + $0x9b0] sm:$0xff]
        %v5271 = vld [vmem:[%s568 + $0x9b8] sm:$0xff]
        %v5272 = vld [vmem:[%s568 + $0x9c0] sm:$0xff]
        %v5273 = vld [vmem:[%s568 + $0x9c8] sm:$0xff]
        %v5274 = vld [vmem:[%s568 + $0x9d0] sm:$0xff]
        %v5275 = vld [vmem:[%s568 + $0x9d8] sm:$0xff]
        %v5276 = vld [vmem:[%s568 + $0x9e0] sm:$0xff]
        %v5277 = vld [vmem:[%s568 + $0x9e8] sm:$0xff]
        %v5278 = vld [vmem:[%s568 + $0x9f0] sm:$0xff]
        %v5279 = vld [vmem:[%s568 + $0x9f8] sm:$0xff]
        %v5344 = vunpack.c.l.b16 %v5216
        %v5345 = vunpack.c.h.b16 %v5216
        %v5346 = vunpack.c.l.b16 %v5217
        %v5347 = vunpack.c.h.b16 %v5217
        %v5348 = vunpack.c.l.b16 %v5218
        %v5349 = vunpack.c.h.b16 %v5218
        %v5350 = vunpack.c.l.b16 %v5219
        %v5351 = vunpack.c.h.b16 %v5219
        %v5352 = vunpack.c.l.b16 %v5220
        %v5353 = vunpack.c.h.b16 %v5220
        %v5354 = vunpack.c.l.b16 %v5221
        %v5355 = vunpack.c.h.b16 %v5221
        %v5356 = vunpack.c.l.b16 %v5222
        %v5357 = vunpack.c.h.b16 %v5222
        %v5358 = vunpack.c.l.b16 %v5223
        %v5359 = vunpack.c.h.b16 %v5223
        %v5360 = vunpack.c.l.b16 %v5224
        %v5361 = vunpack.c.h.b16 %v5224
        %v5362 = vunpack.c.l.b16 %v5225
        %v5363 = vunpack.c.h.b16 %v5225
        %v5364 = vunpack.c.l.b16 %v5226
        %v5365 = vunpack.c.h.b16 %v5226
        %v5366 = vunpack.c.l.b16 %v5227
        %v5367 = vunpack.c.h.b16 %v5227
        %v5368 = vunpack.c.l.b16 %v5228
        %v5369 = vunpack.c.h.b16 %v5228
        %v5370 = vunpack.c.l.b16 %v5229
        %v5371 = vunpack.c.h.b16 %v5229
        %v5372 = vunpack.c.l.b16 %v5230
        %v5373 = vunpack.c.h.b16 %v5230
        %v5374 = vunpack.c.l.b16 %v5231
        %v5375 = vunpack.c.h.b16 %v5231
        %v5376 = vunpack.c.l.b16 %v5232
        %v5377 = vunpack.c.h.b16 %v5232
        %v5378 = vunpack.c.l.b16 %v5233
        %v5379 = vunpack.c.h.b16 %v5233
        %v5380 = vunpack.c.l.b16 %v5234
        %v5381 = vunpack.c.h.b16 %v5234
        %v5382 = vunpack.c.l.b16 %v5235
        %v5383 = vunpack.c.h.b16 %v5235
        %v5384 = vunpack.c.l.b16 %v5236
        %v5385 = vunpack.c.h.b16 %v5236
        %v5386 = vunpack.c.l.b16 %v5237
        %v5387 = vunpack.c.h.b16 %v5237
        %v5388 = vunpack.c.l.b16 %v5238
        %v5389 = vunpack.c.h.b16 %v5238
        %v5390 = vunpack.c.l.b16 %v5239
        %v5391 = vunpack.c.h.b16 %v5239
        %v5392 = vunpack.c.l.b16 %v5240
        %v5393 = vunpack.c.h.b16 %v5240
        %v5394 = vunpack.c.l.b16 %v5241
        %v5395 = vunpack.c.h.b16 %v5241
        %v5396 = vunpack.c.l.b16 %v5242
        %v5397 = vunpack.c.h.b16 %v5242
        %v5398 = vunpack.c.l.b16 %v5243
        %v5399 = vunpack.c.h.b16 %v5243
        %v5400 = vunpack.c.l.b16 %v5244
        %v5401 = vunpack.c.h.b16 %v5244
        %v5402 = vunpack.c.l.b16 %v5245
        %v5403 = vunpack.c.h.b16 %v5245
        %v5404 = vunpack.c.l.b16 %v5246
        %v5405 = vunpack.c.h.b16 %v5246
        %v5406 = vunpack.c.l.b16 %v5247
        %v5407 = vunpack.c.h.b16 %v5247
        %v5408 = vunpack.c.l.b16 %v5248
        %v5409 = vunpack.c.h.b16 %v5248
        %v5410 = vunpack.c.l.b16 %v5249
        %v5411 = vunpack.c.h.b16 %v5249
        %v5412 = vunpack.c.l.b16 %v5250
        %v5413 = vunpack.c.h.b16 %v5250
        %v5414 = vunpack.c.l.b16 %v5251
        %v5415 = vunpack.c.h.b16 %v5251
        %v5416 = vunpack.c.l.b16 %v5252
        %v5417 = vunpack.c.h.b16 %v5252
        %v5418 = vunpack.c.l.b16 %v5253
        %v5419 = vunpack.c.h.b16 %v5253
        %v5420 = vunpack.c.l.b16 %v5254
        %v5421 = vunpack.c.h.b16 %v5254
        %v5422 = vunpack.c.l.b16 %v5255
        %v5423 = vunpack.c.h.b16 %v5255
        %v5424 = vunpack.c.l.b16 %v5256
        %v5425 = vunpack.c.h.b16 %v5256
        %v5426 = vunpack.c.l.b16 %v5257
        %v5427 = vunpack.c.h.b16 %v5257
        %v5428 = vunpack.c.l.b16 %v5258
        %v5429 = vunpack.c.h.b16 %v5258
        %v5430 = vunpack.c.l.b16 %v5259
        %v5431 = vunpack.c.h.b16 %v5259
        %v5432 = vunpack.c.l.b16 %v5260
        %v5433 = vunpack.c.h.b16 %v5260
        %v5434 = vunpack.c.l.b16 %v5261
        %v5435 = vunpack.c.h.b16 %v5261
        %v5436 = vunpack.c.l.b16 %v5262
        %v5437 = vunpack.c.h.b16 %v5262
        %v5438 = vunpack.c.l.b16 %v5263
        %v5439 = vunpack.c.h.b16 %v5263
        %v5440 = vunpack.c.l.b16 %v5264
        %v5441 = vunpack.c.h.b16 %v5264
        %v5442 = vunpack.c.l.b16 %v5265
        %v5443 = vunpack.c.h.b16 %v5265
        %v5444 = vunpack.c.l.b16 %v5266
        %v5445 = vunpack.c.h.b16 %v5266
        %v5446 = vunpack.c.l.b16 %v5267
        %v5447 = vunpack.c.h.b16 %v5267
        %v5448 = vunpack.c.l.b16 %v5268
        %v5449 = vunpack.c.h.b16 %v5268
        %v5450 = vunpack.c.l.b16 %v5269
        %v5451 = vunpack.c.h.b16 %v5269
        %v5452 = vunpack.c.l.b16 %v5270
        %v5453 = vunpack.c.h.b16 %v5270
        %v5454 = vunpack.c.l.b16 %v5271
        %v5455 = vunpack.c.h.b16 %v5271
        %v5456 = vunpack.c.l.b16 %v5272
        %v5457 = vunpack.c.h.b16 %v5272
        %v5458 = vunpack.c.l.b16 %v5273
        %v5459 = vunpack.c.h.b16 %v5273
        %v5460 = vunpack.c.l.b16 %v5274
        %v5461 = vunpack.c.h.b16 %v5274
        %v5462 = vunpack.c.l.b16 %v5275
        %v5463 = vunpack.c.h.b16 %v5275
        %v5464 = vunpack.c.l.b16 %v5276
        %v5465 = vunpack.c.h.b16 %v5276
        %v5466 = vunpack.c.l.b16 %v5277
        %v5467 = vunpack.c.h.b16 %v5277
        %v5468 = vunpack.c.l.b16 %v5278
        %v5469 = vunpack.c.h.b16 %v5278
        %v5470 = vunpack.c.l.b16 %v5279
        %v5471 = vunpack.c.h.b16 %v5279
        %v5472 = vpack.c.b16 %v5352, %v5344
        %v5473 = vpack.c.b16 %v5353, %v5345
        %v5474 = vpack.c.b16 %v5354, %v5346
        %v5475 = vpack.c.b16 %v5355, %v5347
        %v5476 = vpack.c.b16 %v5356, %v5348
        %v5477 = vpack.c.b16 %v5357, %v5349
        %v5478 = vpack.c.b16 %v5358, %v5350
        %v5479 = vpack.c.b16 %v5359, %v5351
        %v5480 = vpack.c.b16 %v5368, %v5360
        %v5481 = vpack.c.b16 %v5369, %v5361
        %v5482 = vpack.c.b16 %v5370, %v5362
        %v5483 = vpack.c.b16 %v5371, %v5363
        %v5484 = vpack.c.b16 %v5372, %v5364
        %v5485 = vpack.c.b16 %v5373, %v5365
        %v5486 = vpack.c.b16 %v5374, %v5366
        %v5487 = vpack.c.b16 %v5375, %v5367
        %v5488 = vpack.c.b16 %v5384, %v5376
        %v5489 = vpack.c.b16 %v5385, %v5377
        %v5490 = vpack.c.b16 %v5386, %v5378
        %v5491 = vpack.c.b16 %v5387, %v5379
        %v5492 = vpack.c.b16 %v5388, %v5380
        %v5493 = vpack.c.b16 %v5389, %v5381
        %v5494 = vpack.c.b16 %v5390, %v5382
        %v5495 = vpack.c.b16 %v5391, %v5383
        %v5496 = vpack.c.b16 %v5400, %v5392
        %v5497 = vpack.c.b16 %v5401, %v5393
        %v5498 = vpack.c.b16 %v5402, %v5394
        %v5499 = vpack.c.b16 %v5403, %v5395
        %v5500 = vpack.c.b16 %v5404, %v5396
        %v5501 = vpack.c.b16 %v5405, %v5397
        %v5502 = vpack.c.b16 %v5406, %v5398
        %v5503 = vpack.c.b16 %v5407, %v5399
        %v5504 = vpack.c.b16 %v5416, %v5408
        %v5505 = vpack.c.b16 %v5417, %v5409
        %v5506 = vpack.c.b16 %v5418, %v5410
        %v5507 = vpack.c.b16 %v5419, %v5411
        %v5508 = vpack.c.b16 %v5420, %v5412
        %v5509 = vpack.c.b16 %v5421, %v5413
        %v5510 = vpack.c.b16 %v5422, %v5414
        %v5511 = vpack.c.b16 %v5423, %v5415
        %v5512 = vpack.c.b16 %v5432, %v5424
        %v5513 = vpack.c.b16 %v5433, %v5425
        %v5514 = vpack.c.b16 %v5434, %v5426
        %v5515 = vpack.c.b16 %v5435, %v5427
        %v5516 = vpack.c.b16 %v5436, %v5428
        %v5517 = vpack.c.b16 %v5437, %v5429
        %v5518 = vpack.c.b16 %v5438, %v5430
        %v5519 = vpack.c.b16 %v5439, %v5431
        %v5520 = vpack.c.b16 %v5448, %v5440
        %v5521 = vpack.c.b16 %v5449, %v5441
        %v5522 = vpack.c.b16 %v5450, %v5442
        %v5523 = vpack.c.b16 %v5451, %v5443
        %v5524 = vpack.c.b16 %v5452, %v5444
        %v5525 = vpack.c.b16 %v5453, %v5445
        %v5526 = vpack.c.b16 %v5454, %v5446
        %v5527 = vpack.c.b16 %v5455, %v5447
        %v5528 = vpack.c.b16 %v5464, %v5456
        %v5529 = vpack.c.b16 %v5465, %v5457
        %v5530 = vpack.c.b16 %v5466, %v5458
        %v5531 = vpack.c.b16 %v5467, %v5459
        %v5532 = vpack.c.b16 %v5468, %v5460
        %v5533 = vpack.c.b16 %v5469, %v5461
        %v5534 = vpack.c.b16 %v5470, %v5462
        %v5535 = vpack.c.b16 %v5471, %v5463
        %5600 = vmatprep.subr.bf16.mxu0 %v5473
        %5601 = vmatpush1.bf16.msra.mxu0 %v5472
        %5602 = vmatprep.subr.bf16.mxu0 %v5481
        %5603 = vmatpush1.bf16.msra.mxu0 %v5480
        %5604 = vmatprep.subr.bf16.mxu0 %v5489
        %5605 = vmatpush1.bf16.msra.mxu0 %v5488
        %5606 = vmatprep.subr.bf16.mxu0 %v5497
        %5607 = vmatpush1.bf16.msra.mxu0 %v5496
        %5608 = vmatprep.subr.bf16.mxu0 %v5505
        %5609 = vmatpush1.bf16.msra.mxu0 %v5504
        %5610 = vmatprep.subr.bf16.mxu0 %v5513
        %5611 = vmatpush1.bf16.msra.mxu0 %v5512
        %5612 = vmatprep.subr.bf16.mxu0 %v5521
        %5613 = vmatpush1.bf16.msra.mxu0 %v5520
        %5614 = vmatprep.subr.bf16.mxu0 %v5529
        %5615 = vmatpush1.bf16.msra.mxu0 %v5528
        %5616 = vmatprep.subr.bf16.mxu0 0
        %5617 = vmatpush1.bf16.msra.mxu0 0
        %5618 = vmatprep.subr.bf16.mxu0 0
        %5619 = vmatpush1.bf16.msra.mxu0 0
        %5620 = vmatprep.subr.bf16.mxu0 0
        %5621 = vmatpush1.bf16.msra.mxu0 0
        %5622 = vmatprep.subr.bf16.mxu0 0
        %5623 = vmatpush1.bf16.msra.mxu0 0
        %5624 = vmatprep.subr.bf16.mxu0 0
        %5625 = vmatpush1.bf16.msra.mxu0 0
        %5626 = vmatprep.subr.bf16.mxu0 0
        %5627 = vmatpush1.bf16.msra.mxu0 0
        %5628 = vmatprep.subr.bf16.mxu0 0
        %5629 = vmatpush1.bf16.msra.mxu0 0
        %5630 = vmatprep.subr.bf16.mxu0 0
        %5631 = vmatpush1.bf16.msra.mxu0 0
        %5632 = vmatprep.mubr.bf16.mxu0 0
        %5633 = vmatmul.mubr.bf16.gmra.mrb[0].mxu0 %v5215
        %v5634 = vpop.f32.mrb[0].mxu0
        %v5635 = vadd.f32 0.0, %v5634
        %v5636 = vpop.f32.mrb[0].mxu0
        %v5637 = vadd.f32 0.0, %v5636
        %v5638 = vpop.f32.mrb[0].mxu0
        %v5639 = vpop.f32.mrb[0].mxu0
        %5640 = vdwg.mxu0
        %5641 = vmatprep.subr.bf16.mxu0 %v5475
        %5642 = vmatpush1.bf16.msra.mxu0 %v5474
        %5643 = vmatprep.subr.bf16.mxu0 %v5483
        %5644 = vmatpush1.bf16.msra.mxu0 %v5482
        %5645 = vmatprep.subr.bf16.mxu0 %v5491
        %5646 = vmatpush1.bf16.msra.mxu0 %v5490
        %5647 = vmatprep.subr.bf16.mxu0 %v5499
        %5648 = vmatpush1.bf16.msra.mxu0 %v5498
        %5649 = vmatprep.subr.bf16.mxu0 %v5507
        %5650 = vmatpush1.bf16.msra.mxu0 %v5506
        %5651 = vmatprep.subr.bf16.mxu0 %v5515
        %5652 = vmatpush1.bf16.msra.mxu0 %v5514
        %5653 = vmatprep.subr.bf16.mxu0 %v5523
        %5654 = vmatpush1.bf16.msra.mxu0 %v5522
        %5655 = vmatprep.subr.bf16.mxu0 %v5531
        %5656 = vmatpush1.bf16.msra.mxu0 %v5530
        %5657 = vmatprep.subr.bf16.mxu0 0
        %5658 = vmatpush1.bf16.msra.mxu0 0
        %5659 = vmatprep.subr.bf16.mxu0 0
        %5660 = vmatpush1.bf16.msra.mxu0 0
        %5661 = vmatprep.subr.bf16.mxu0 0
        %5662 = vmatpush1.bf16.msra.mxu0 0
        %5663 = vmatprep.subr.bf16.mxu0 0
        %5664 = vmatpush1.bf16.msra.mxu0 0
        %5665 = vmatprep.subr.bf16.mxu0 0
        %5666 = vmatpush1.bf16.msra.mxu0 0
        %5667 = vmatprep.subr.bf16.mxu0 0
        %5668 = vmatpush1.bf16.msra.mxu0 0
        %5669 = vmatprep.subr.bf16.mxu0 0
        %5670 = vmatpush1.bf16.msra.mxu0 0
        %5671 = vmatprep.subr.bf16.mxu0 0
        %5672 = vmatpush1.bf16.msra.mxu0 0
        %5673 = vmatprep.mubr.bf16.mxu0 0
        %5674 = vmatmul.mubr.bf16.gmra.mrb[0].mxu0 %v5215
        %v5675 = vpop.f32.mrb[0].mxu0
        %v5676 = vadd.f32 0.0, %v5675
        %v5677 = vpop.f32.mrb[0].mxu0
        %v5678 = vadd.f32 0.0, %v5677
        %v5679 = vpop.f32.mrb[0].mxu0
        %v5680 = vpop.f32.mrb[0].mxu0
        %5681 = vdwg.mxu0
        %5682 = vmatprep.subr.bf16.mxu0 %v5477
        %5683 = vmatpush1.bf16.msra.mxu0 %v5476
        %5684 = vmatprep.subr.bf16.mxu0 %v5485
        %5685 = vmatpush1.bf16.msra.mxu0 %v5484
        %5686 = vmatprep.subr.bf16.mxu0 %v5493
        %5687 = vmatpush1.bf16.msra.mxu0 %v5492
        %5688 = vmatprep.subr.bf16.mxu0 %v5501
        %5689 = vmatpush1.bf16.msra.mxu0 %v5500
        %5690 = vmatprep.subr.bf16.mxu0 %v5509
        %5691 = vmatpush1.bf16.msra.mxu0 %v5508
        %5692 = vmatprep.subr.bf16.mxu0 %v5517
        %5693 = vmatpush1.bf16.msra.mxu0 %v5516
        %5694 = vmatprep.subr.bf16.mxu0 %v5525
        %5695 = vmatpush1.bf16.msra.mxu0 %v5524
        %5696 = vmatprep.subr.bf16.mxu0 %v5533
        %5697 = vmatpush1.bf16.msra.mxu0 %v5532
        %5698 = vmatprep.subr.bf16.mxu0 0
        %5699 = vmatpush1.bf16.msra.mxu0 0
        %5700 = vmatprep.subr.bf16.mxu0 0
        %5701 = vmatpush1.bf16.msra.mxu0 0
        %5702 = vmatprep.subr.bf16.mxu0 0
        %5703 = vmatpush1.bf16.msra.mxu0 0
        %5704 = vmatprep.subr.bf16.mxu0 0
        %5705 = vmatpush1.bf16.msra.mxu0 0
        %5706 = vmatprep.subr.bf16.mxu0 0
        %5707 = vmatpush1.bf16.msra.mxu0 0
        %5708 = vmatprep.subr.bf16.mxu0 0
        %5709 = vmatpush1.bf16.msra.mxu0 0
        %5710 = vmatprep.subr.bf16.mxu0 0
        %5711 = vmatpush1.bf16.msra.mxu0 0
        %5712 = vmatprep.subr.bf16.mxu0 0
        %5713 = vmatpush1.bf16.msra.mxu0 0
        %5714 = vmatprep.mubr.bf16.mxu0 0
        %5715 = vmatmul.mubr.bf16.gmra.mrb[0].mxu0 %v5215
        %v5716 = vpop.f32.mrb[0].mxu0
        %v5717 = vadd.f32 0.0, %v5716
        %v5718 = vpop.f32.mrb[0].mxu0
        %v5719 = vadd.f32 0.0, %v5718
        %v5720 = vpop.f32.mrb[0].mxu0
        %v5721 = vpop.f32.mrb[0].mxu0
        %5722 = vdwg.mxu0
        %5723 = vmatprep.subr.bf16.mxu0 %v5479
        %5724 = vmatpush1.bf16.msra.mxu0 %v5478
        %5725 = vmatprep.subr.bf16.mxu0 %v5487
        %5726 = vmatpush1.bf16.msra.mxu0 %v5486
        %5727 = vmatprep.subr.bf16.mxu0 %v5495
        %5728 = vmatpush1.bf16.msra.mxu0 %v5494
        %5729 = vmatprep.subr.bf16.mxu0 %v5503
        %5730 = vmatpush1.bf16.msra.mxu0 %v5502
        %5731 = vmatprep.subr.bf16.mxu0 %v5511
        %5732 = vmatpush1.bf16.msra.mxu0 %v5510
        %5733 = vmatprep.subr.bf16.mxu0 %v5519
        %5734 = vmatpush1.bf16.msra.mxu0 %v5518
        %5735 = vmatprep.subr.bf16.mxu0 %v5527
        %5736 = vmatpush1.bf16.msra.mxu0 %v5526
        %5737 = vmatprep.subr.bf16.mxu0 %v5535
        %5738 = vmatpush1.bf16.msra.mxu0 %v5534
        %5739 = vmatprep.subr.bf16.mxu0 0
        %5740 = vmatpush1.bf16.msra.mxu0 0
        %5741 = vmatprep.subr.bf16.mxu0 0
        %5742 = vmatpush1.bf16.msra.mxu0 0
        %5743 = vmatprep.subr.bf16.mxu0 0
        %5744 = vmatpush1.bf16.msra.mxu0 0
        %5745 = vmatprep.subr.bf16.mxu0 0
        %5746 = vmatpush1.bf16.msra.mxu0 0
        %5747 = vmatprep.subr.bf16.mxu0 0
        %5748 = vmatpush1.bf16.msra.mxu0 0
        %5749 = vmatprep.subr.bf16.mxu0 0
        %5750 = vmatpush1.bf16.msra.mxu0 0
        %5751 = vmatprep.subr.bf16.mxu0 0
        %5752 = vmatpush1.bf16.msra.mxu0 0
        %5753 = vmatprep.subr.bf16.mxu0 0
        %5754 = vmatpush1.bf16.msra.mxu0 0
        %5755 = vmatprep.mubr.bf16.mxu0 0
        %5756 = vmatmul.mubr.bf16.gmra.mrb[0].mxu0 %v5215
        %v5757 = vpop.f32.mrb[0].mxu0
        %v5758 = vadd.f32 0.0, %v5757
        %v5759 = vpop.f32.mrb[0].mxu0
        %v5760 = vadd.f32 0.0, %v5759
        %v5761 = vpop.f32.mrb[0].mxu0
        %v5762 = vpop.f32.mrb[0].mxu0
        %5763 = vdwg.mxu0
        %v5764 = vadd.f32 %v5207, %v5635
        %v5765 = vadd.f32 %v5208, %v5637
        %v5766 = vadd.f32 %v5209, %v5676
        %v5767 = vadd.f32 %v5210, %v5678
        %v5768 = vadd.f32 %v5211, %v5717
        %v5769 = vadd.f32 %v5212, %v5719
        %v5770 = vadd.f32 %v5213, %v5758
        %v5771 = vadd.f32 %v5214, %v5760
        %v5772 = vpack.c.bf16 %v2976, %v2976
        %v5773 = vld [vmem:[%s568 + $0xa00] sm:$0xff]
        %v5774 = vld [vmem:[%s568 + $0xa08] sm:$0xff]
        %v5775 = vld [vmem:[%s568 + $0xa10] sm:$0xff]
        %v5776 = vld [vmem:[%s568 + $0xa18] sm:$0xff]
        %v5777 = vld [vmem:[%s568 + $0xa20] sm:$0xff]
        %v5778 = vld [vmem:[%s568 + $0xa28] sm:$0xff]
        %v5779 = vld [vmem:[%s568 + $0xa30] sm:$0xff]
        %v5780 = vld [vmem:[%s568 + $0xa38] sm:$0xff]
        %v5781 = vld [vmem:[%s568 + $0xa40] sm:$0xff]
        %v5782 = vld [vmem:[%s568 + $0xa48] sm:$0xff]
        %v5783 = vld [vmem:[%s568 + $0xa50] sm:$0xff]
        %v5784 = vld [vmem:[%s568 + $0xa58] sm:$0xff]
        %v5785 = vld [vmem:[%s568 + $0xa60] sm:$0xff]
        %v5786 = vld [vmem:[%s568 + $0xa68] sm:$0xff]
        %v5787 = vld [vmem:[%s568 + $0xa70] sm:$0xff]
        %v5788 = vld [vmem:[%s568 + $0xa78] sm:$0xff]
        %v5789 = vld [vmem:[%s568 + $0xa80] sm:$0xff]
        %v5790 = vld [vmem:[%s568 + $0xa88] sm:$0xff]
        %v5791 = vld [vmem:[%s568 + $0xa90] sm:$0xff]
        %v5792 = vld [vmem:[%s568 + $0xa98] sm:$0xff]
        %v5793 = vld [vmem:[%s568 + $0xaa0] sm:$0xff]
        %v5794 = vld [vmem:[%s568 + $0xaa8] sm:$0xff]
        %v5795 = vld [vmem:[%s568 + $0xab0] sm:$0xff]
        %v5796 = vld [vmem:[%s568 + $0xab8] sm:$0xff]
        %v5797 = vld [vmem:[%s568 + $0xac0] sm:$0xff]
        %v5798 = vld [vmem:[%s568 + $0xac8] sm:$0xff]
        %v5799 = vld [vmem:[%s568 + $0xad0] sm:$0xff]
        %v5800 = vld [vmem:[%s568 + $0xad8] sm:$0xff]
        %v5801 = vld [vmem:[%s568 + $0xae0] sm:$0xff]
        %v5802 = vld [vmem:[%s568 + $0xae8] sm:$0xff]
        %v5803 = vld [vmem:[%s568 + $0xaf0] sm:$0xff]
        %v5804 = vld [vmem:[%s568 + $0xaf8] sm:$0xff]
        %v5805 = vld [vmem:[%s568 + $0xb00] sm:$0xff]
        %v5806 = vld [vmem:[%s568 + $0xb08] sm:$0xff]
        %v5807 = vld [vmem:[%s568 + $0xb10] sm:$0xff]
        %v5808 = vld [vmem:[%s568 + $0xb18] sm:$0xff]
        %v5809 = vld [vmem:[%s568 + $0xb20] sm:$0xff]
        %v5810 = vld [vmem:[%s568 + $0xb28] sm:$0xff]
        %v5811 = vld [vmem:[%s568 + $0xb30] sm:$0xff]
        %v5812 = vld [vmem:[%s568 + $0xb38] sm:$0xff]
        %v5813 = vld [vmem:[%s568 + $0xb40] sm:$0xff]
        %v5814 = vld [vmem:[%s568 + $0xb48] sm:$0xff]
        %v5815 = vld [vmem:[%s568 + $0xb50] sm:$0xff]
        %v5816 = vld [vmem:[%s568 + $0xb58] sm:$0xff]
        %v5817 = vld [vmem:[%s568 + $0xb60] sm:$0xff]
        %v5818 = vld [vmem:[%s568 + $0xb68] sm:$0xff]
        %v5819 = vld [vmem:[%s568 + $0xb70] sm:$0xff]
        %v5820 = vld [vmem:[%s568 + $0xb78] sm:$0xff]
        %v5821 = vld [vmem:[%s568 + $0xb80] sm:$0xff]
        %v5822 = vld [vmem:[%s568 + $0xb88] sm:$0xff]
        %v5823 = vld [vmem:[%s568 + $0xb90] sm:$0xff]
        %v5824 = vld [vmem:[%s568 + $0xb98] sm:$0xff]
        %v5825 = vld [vmem:[%s568 + $0xba0] sm:$0xff]
        %v5826 = vld [vmem:[%s568 + $0xba8] sm:$0xff]
        %v5827 = vld [vmem:[%s568 + $0xbb0] sm:$0xff]
        %v5828 = vld [vmem:[%s568 + $0xbb8] sm:$0xff]
        %v5829 = vld [vmem:[%s568 + $0xbc0] sm:$0xff]
        %v5830 = vld [vmem:[%s568 + $0xbc8] sm:$0xff]
        %v5831 = vld [vmem:[%s568 + $0xbd0] sm:$0xff]
        %v5832 = vld [vmem:[%s568 + $0xbd8] sm:$0xff]
        %v5833 = vld [vmem:[%s568 + $0xbe0] sm:$0xff]
        %v5834 = vld [vmem:[%s568 + $0xbe8] sm:$0xff]
        %v5835 = vld [vmem:[%s568 + $0xbf0] sm:$0xff]
        %v5836 = vld [vmem:[%s568 + $0xbf8] sm:$0xff]
        %v5901 = vunpack.c.l.b16 %v5773
        %v5902 = vunpack.c.h.b16 %v5773
        %v5903 = vunpack.c.l.b16 %v5774
        %v5904 = vunpack.c.h.b16 %v5774
        %v5905 = vunpack.c.l.b16 %v5775
        %v5906 = vunpack.c.h.b16 %v5775
        %v5907 = vunpack.c.l.b16 %v5776
        %v5908 = vunpack.c.h.b16 %v5776
        %v5909 = vunpack.c.l.b16 %v5777
        %v5910 = vunpack.c.h.b16 %v5777
        %v5911 = vunpack.c.l.b16 %v5778
        %v5912 = vunpack.c.h.b16 %v5778
        %v5913 = vunpack.c.l.b16 %v5779
        %v5914 = vunpack.c.h.b16 %v5779
        %v5915 = vunpack.c.l.b16 %v5780
        %v5916 = vunpack.c.h.b16 %v5780
        %v5917 = vunpack.c.l.b16 %v5781
        %v5918 = vunpack.c.h.b16 %v5781
        %v5919 = vunpack.c.l.b16 %v5782
        %v5920 = vunpack.c.h.b16 %v5782
        %v5921 = vunpack.c.l.b16 %v5783
        %v5922 = vunpack.c.h.b16 %v5783
        %v5923 = vunpack.c.l.b16 %v5784
        %v5924 = vunpack.c.h.b16 %v5784
        %v5925 = vunpack.c.l.b16 %v5785
        %v5926 = vunpack.c.h.b16 %v5785
        %v5927 = vunpack.c.l.b16 %v5786
        %v5928 = vunpack.c.h.b16 %v5786
        %v5929 = vunpack.c.l.b16 %v5787
        %v5930 = vunpack.c.h.b16 %v5787
        %v5931 = vunpack.c.l.b16 %v5788
        %v5932 = vunpack.c.h.b16 %v5788
        %v5933 = vunpack.c.l.b16 %v5789
        %v5934 = vunpack.c.h.b16 %v5789
        %v5935 = vunpack.c.l.b16 %v5790
        %v5936 = vunpack.c.h.b16 %v5790
        %v5937 = vunpack.c.l.b16 %v5791
        %v5938 = vunpack.c.h.b16 %v5791
        %v5939 = vunpack.c.l.b16 %v5792
        %v5940 = vunpack.c.h.b16 %v5792
        %v5941 = vunpack.c.l.b16 %v5793
        %v5942 = vunpack.c.h.b16 %v5793
        %v5943 = vunpack.c.l.b16 %v5794
        %v5944 = vunpack.c.h.b16 %v5794
        %v5945 = vunpack.c.l.b16 %v5795
        %v5946 = vunpack.c.h.b16 %v5795
        %v5947 = vunpack.c.l.b16 %v5796
        %v5948 = vunpack.c.h.b16 %v5796
        %v5949 = vunpack.c.l.b16 %v5797
        %v5950 = vunpack.c.h.b16 %v5797
        %v5951 = vunpack.c.l.b16 %v5798
        %v5952 = vunpack.c.h.b16 %v5798
        %v5953 = vunpack.c.l.b16 %v5799
        %v5954 = vunpack.c.h.b16 %v5799
        %v5955 = vunpack.c.l.b16 %v5800
        %v5956 = vunpack.c.h.b16 %v5800
        %v5957 = vunpack.c.l.b16 %v5801
        %v5958 = vunpack.c.h.b16 %v5801
        %v5959 = vunpack.c.l.b16 %v5802
        %v5960 = vunpack.c.h.b16 %v5802
        %v5961 = vunpack.c.l.b16 %v5803
        %v5962 = vunpack.c.h.b16 %v5803
        %v5963 = vunpack.c.l.b16 %v5804
        %v5964 = vunpack.c.h.b16 %v5804
        %v5965 = vunpack.c.l.b16 %v5805
        %v5966 = vunpack.c.h.b16 %v5805
        %v5967 = vunpack.c.l.b16 %v5806
        %v5968 = vunpack.c.h.b16 %v5806
        %v5969 = vunpack.c.l.b16 %v5807
        %v5970 = vunpack.c.h.b16 %v5807
        %v5971 = vunpack.c.l.b16 %v5808
        %v5972 = vunpack.c.h.b16 %v5808
        %v5973 = vunpack.c.l.b16 %v5809
        %v5974 = vunpack.c.h.b16 %v5809
        %v5975 = vunpack.c.l.b16 %v5810
        %v5976 = vunpack.c.h.b16 %v5810
        %v5977 = vunpack.c.l.b16 %v5811
        %v5978 = vunpack.c.h.b16 %v5811
        %v5979 = vunpack.c.l.b16 %v5812
        %v5980 = vunpack.c.h.b16 %v5812
        %v5981 = vunpack.c.l.b16 %v5813
        %v5982 = vunpack.c.h.b16 %v5813
        %v5983 = vunpack.c.l.b16 %v5814
        %v5984 = vunpack.c.h.b16 %v5814
        %v5985 = vunpack.c.l.b16 %v5815
        %v5986 = vunpack.c.h.b16 %v5815
        %v5987 = vunpack.c.l.b16 %v5816
        %v5988 = vunpack.c.h.b16 %v5816
        %v5989 = vunpack.c.l.b16 %v5817
        %v5990 = vunpack.c.h.b16 %v5817
        %v5991 = vunpack.c.l.b16 %v5818
        %v5992 = vunpack.c.h.b16 %v5818
        %v5993 = vunpack.c.l.b16 %v5819
        %v5994 = vunpack.c.h.b16 %v5819
        %v5995 = vunpack.c.l.b16 %v5820
        %v5996 = vunpack.c.h.b16 %v5820
        %v5997 = vunpack.c.l.b16 %v5821
        %v5998 = vunpack.c.h.b16 %v5821
        %v5999 = vunpack.c.l.b16 %v5822
        %v6000 = vunpack.c.h.b16 %v5822
        %v6001 = vunpack.c.l.b16 %v5823
        %v6002 = vunpack.c.h.b16 %v5823
        %v6003 = vunpack.c.l.b16 %v5824
        %v6004 = vunpack.c.h.b16 %v5824
        %v6005 = vunpack.c.l.b16 %v5825
        %v6006 = vunpack.c.h.b16 %v5825
        %v6007 = vunpack.c.l.b16 %v5826
        %v6008 = vunpack.c.h.b16 %v5826
        %v6009 = vunpack.c.l.b16 %v5827
        %v6010 = vunpack.c.h.b16 %v5827
        %v6011 = vunpack.c.l.b16 %v5828
        %v6012 = vunpack.c.h.b16 %v5828
        %v6013 = vunpack.c.l.b16 %v5829
        %v6014 = vunpack.c.h.b16 %v5829
        %v6015 = vunpack.c.l.b16 %v5830
        %v6016 = vunpack.c.h.b16 %v5830
        %v6017 = vunpack.c.l.b16 %v5831
        %v6018 = vunpack.c.h.b16 %v5831
        %v6019 = vunpack.c.l.b16 %v5832
        %v6020 = vunpack.c.h.b16 %v5832
        %v6021 = vunpack.c.l.b16 %v5833
        %v6022 = vunpack.c.h.b16 %v5833
        %v6023 = vunpack.c.l.b16 %v5834
        %v6024 = vunpack.c.h.b16 %v5834
        %v6025 = vunpack.c.l.b16 %v5835
        %v6026 = vunpack.c.h.b16 %v5835
        %v6027 = vunpack.c.l.b16 %v5836
        %v6028 = vunpack.c.h.b16 %v5836
        %v6029 = vpack.c.b16 %v5909, %v5901
        %v6030 = vpack.c.b16 %v5910, %v5902
        %v6031 = vpack.c.b16 %v5911, %v5903
        %v6032 = vpack.c.b16 %v5912, %v5904
        %v6033 = vpack.c.b16 %v5913, %v5905
        %v6034 = vpack.c.b16 %v5914, %v5906
        %v6035 = vpack.c.b16 %v5915, %v5907
        %v6036 = vpack.c.b16 %v5916, %v5908
        %v6037 = vpack.c.b16 %v5925, %v5917
        %v6038 = vpack.c.b16 %v5926, %v5918
        %v6039 = vpack.c.b16 %v5927, %v5919
        %v6040 = vpack.c.b16 %v5928, %v5920
        %v6041 = vpack.c.b16 %v5929, %v5921
        %v6042 = vpack.c.b16 %v5930, %v5922
        %v6043 = vpack.c.b16 %v5931, %v5923
        %v6044 = vpack.c.b16 %v5932, %v5924
        %v6045 = vpack.c.b16 %v5941, %v5933
        %v6046 = vpack.c.b16 %v5942, %v5934
        %v6047 = vpack.c.b16 %v5943, %v5935
        %v6048 = vpack.c.b16 %v5944, %v5936
        %v6049 = vpack.c.b16 %v5945, %v5937
        %v6050 = vpack.c.b16 %v5946, %v5938
        %v6051 = vpack.c.b16 %v5947, %v5939
        %v6052 = vpack.c.b16 %v5948, %v5940
        %v6053 = vpack.c.b16 %v5957, %v5949
        %v6054 = vpack.c.b16 %v5958, %v5950
        %v6055 = vpack.c.b16 %v5959, %v5951
        %v6056 = vpack.c.b16 %v5960, %v5952
        %v6057 = vpack.c.b16 %v5961, %v5953
        %v6058 = vpack.c.b16 %v5962, %v5954
        %v6059 = vpack.c.b16 %v5963, %v5955
        %v6060 = vpack.c.b16 %v5964, %v5956
        %v6061 = vpack.c.b16 %v5973, %v5965
        %v6062 = vpack.c.b16 %v5974, %v5966
        %v6063 = vpack.c.b16 %v5975, %v5967
        %v6064 = vpack.c.b16 %v5976, %v5968
        %v6065 = vpack.c.b16 %v5977, %v5969
        %v6066 = vpack.c.b16 %v5978, %v5970
        %v6067 = vpack.c.b16 %v5979, %v5971
        %v6068 = vpack.c.b16 %v5980, %v5972
        %v6069 = vpack.c.b16 %v5989, %v5981
        %v6070 = vpack.c.b16 %v5990, %v5982
        %v6071 = vpack.c.b16 %v5991, %v5983
        %v6072 = vpack.c.b16 %v5992, %v5984
        %v6073 = vpack.c.b16 %v5993, %v5985
        %v6074 = vpack.c.b16 %v5994, %v5986
        %v6075 = vpack.c.b16 %v5995, %v5987
        %v6076 = vpack.c.b16 %v5996, %v5988
        %v6077 = vpack.c.b16 %v6005, %v5997
        %v6078 = vpack.c.b16 %v6006, %v5998
        %v6079 = vpack.c.b16 %v6007, %v5999
        %v6080 = vpack.c.b16 %v6008, %v6000
        %v6081 = vpack.c.b16 %v6009, %v6001
        %v6082 = vpack.c.b16 %v6010, %v6002
        %v6083 = vpack.c.b16 %v6011, %v6003
        %v6084 = vpack.c.b16 %v6012, %v6004
        %v6085 = vpack.c.b16 %v6021, %v6013
        %v6086 = vpack.c.b16 %v6022, %v6014
        %v6087 = vpack.c.b16 %v6023, %v6015
        %v6088 = vpack.c.b16 %v6024, %v6016
        %v6089 = vpack.c.b16 %v6025, %v6017
        %v6090 = vpack.c.b16 %v6026, %v6018
        %v6091 = vpack.c.b16 %v6027, %v6019
        %v6092 = vpack.c.b16 %v6028, %v6020
        %6157 = vmatprep.subr.bf16.mxu0 %v6030
        %6158 = vmatpush1.bf16.msra.mxu0 %v6029
        %6159 = vmatprep.subr.bf16.mxu0 %v6038
        %6160 = vmatpush1.bf16.msra.mxu0 %v6037
        %6161 = vmatprep.subr.bf16.mxu0 %v6046
        %6162 = vmatpush1.bf16.msra.mxu0 %v6045
        %6163 = vmatprep.subr.bf16.mxu0 %v6054
        %6164 = vmatpush1.bf16.msra.mxu0 %v6053
        %6165 = vmatprep.subr.bf16.mxu0 %v6062
        %6166 = vmatpush1.bf16.msra.mxu0 %v6061
        %6167 = vmatprep.subr.bf16.mxu0 %v6070
        %6168 = vmatpush1.bf16.msra.mxu0 %v6069
        %6169 = vmatprep.subr.bf16.mxu0 %v6078
        %6170 = vmatpush1.bf16.msra.mxu0 %v6077
        %6171 = vmatprep.subr.bf16.mxu0 %v6086
        %6172 = vmatpush1.bf16.msra.mxu0 %v6085
        %6173 = vmatprep.subr.bf16.mxu0 0
        %6174 = vmatpush1.bf16.msra.mxu0 0
        %6175 = vmatprep.subr.bf16.mxu0 0
        %6176 = vmatpush1.bf16.msra.mxu0 0
        %6177 = vmatprep.subr.bf16.mxu0 0
        %6178 = vmatpush1.bf16.msra.mxu0 0
        %6179 = vmatprep.subr.bf16.mxu0 0
        %6180 = vmatpush1.bf16.msra.mxu0 0
        %6181 = vmatprep.subr.bf16.mxu0 0
        %6182 = vmatpush1.bf16.msra.mxu0 0
        %6183 = vmatprep.subr.bf16.mxu0 0
        %6184 = vmatpush1.bf16.msra.mxu0 0
        %6185 = vmatprep.subr.bf16.mxu0 0
        %6186 = vmatpush1.bf16.msra.mxu0 0
        %6187 = vmatprep.subr.bf16.mxu0 0
        %6188 = vmatpush1.bf16.msra.mxu0 0
        %6189 = vmatprep.mubr.bf16.mxu0 0
        %6190 = vmatmul.mubr.bf16.gmra.mrb[0].mxu0 %v5772
        %v6191 = vpop.f32.mrb[0].mxu0
        %v6192 = vadd.f32 0.0, %v6191
        %v6193 = vpop.f32.mrb[0].mxu0
        %v6194 = vadd.f32 0.0, %v6193
        %v6195 = vpop.f32.mrb[0].mxu0
        %v6196 = vpop.f32.mrb[0].mxu0
        %6197 = vdwg.mxu0
        %6198 = vmatprep.subr.bf16.mxu0 %v6032
        %6199 = vmatpush1.bf16.msra.mxu0 %v6031
        %6200 = vmatprep.subr.bf16.mxu0 %v6040
        %6201 = vmatpush1.bf16.msra.mxu0 %v6039
        %6202 = vmatprep.subr.bf16.mxu0 %v6048
        %6203 = vmatpush1.bf16.msra.mxu0 %v6047
        %6204 = vmatprep.subr.bf16.mxu0 %v6056
        %6205 = vmatpush1.bf16.msra.mxu0 %v6055
        %6206 = vmatprep.subr.bf16.mxu0 %v6064
        %6207 = vmatpush1.bf16.msra.mxu0 %v6063
        %6208 = vmatprep.subr.bf16.mxu0 %v6072
        %6209 = vmatpush1.bf16.msra.mxu0 %v6071
        %6210 = vmatprep.subr.bf16.mxu0 %v6080
        %6211 = vmatpush1.bf16.msra.mxu0 %v6079
        %6212 = vmatprep.subr.bf16.mxu0 %v6088
        %6213 = vmatpush1.bf16.msra.mxu0 %v6087
        %6214 = vmatprep.subr.bf16.mxu0 0
        %6215 = vmatpush1.bf16.msra.mxu0 0
        %6216 = vmatprep.subr.bf16.mxu0 0
        %6217 = vmatpush1.bf16.msra.mxu0 0
        %6218 = vmatprep.subr.bf16.mxu0 0
        %6219 = vmatpush1.bf16.msra.mxu0 0
        %6220 = vmatprep.subr.bf16.mxu0 0
        %6221 = vmatpush1.bf16.msra.mxu0 0
        %6222 = vmatprep.subr.bf16.mxu0 0
        %6223 = vmatpush1.bf16.msra.mxu0 0
        %6224 = vmatprep.subr.bf16.mxu0 0
        %6225 = vmatpush1.bf16.msra.mxu0 0
        %6226 = vmatprep.subr.bf16.mxu0 0
        %6227 = vmatpush1.bf16.msra.mxu0 0
        %6228 = vmatprep.subr.bf16.mxu0 0
        %6229 = vmatpush1.bf16.msra.mxu0 0
        %6230 = vmatprep.mubr.bf16.mxu0 0
        %6231 = vmatmul.mubr.bf16.gmra.mrb[0].mxu0 %v5772
        %v6232 = vpop.f32.mrb[0].mxu0
        %v6233 = vadd.f32 0.0, %v6232
        %v6234 = vpop.f32.mrb[0].mxu0
        %v6235 = vadd.f32 0.0, %v6234
        %v6236 = vpop.f32.mrb[0].mxu0
        %v6237 = vpop.f32.mrb[0].mxu0
        %6238 = vdwg.mxu0
        %6239 = vmatprep.subr.bf16.mxu0 %v6034
        %6240 = vmatpush1.bf16.msra.mxu0 %v6033
        %6241 = vmatprep.subr.bf16.mxu0 %v6042
        %6242 = vmatpush1.bf16.msra.mxu0 %v6041
        %6243 = vmatprep.subr.bf16.mxu0 %v6050
        %6244 = vmatpush1.bf16.msra.mxu0 %v6049
        %6245 = vmatprep.subr.bf16.mxu0 %v6058
        %6246 = vmatpush1.bf16.msra.mxu0 %v6057
        %6247 = vmatprep.subr.bf16.mxu0 %v6066
        %6248 = vmatpush1.bf16.msra.mxu0 %v6065
        %6249 = vmatprep.subr.bf16.mxu0 %v6074
        %6250 = vmatpush1.bf16.msra.mxu0 %v6073
        %6251 = vmatprep.subr.bf16.mxu0 %v6082
        %6252 = vmatpush1.bf16.msra.mxu0 %v6081
        %6253 = vmatprep.subr.bf16.mxu0 %v6090
        %6254 = vmatpush1.bf16.msra.mxu0 %v6089
        %6255 = vmatprep.subr.bf16.mxu0 0
        %6256 = vmatpush1.bf16.msra.mxu0 0
        %6257 = vmatprep.subr.bf16.mxu0 0
        %6258 = vmatpush1.bf16.msra.mxu0 0
        %6259 = vmatprep.subr.bf16.mxu0 0
        %6260 = vmatpush1.bf16.msra.mxu0 0
        %6261 = vmatprep.subr.bf16.mxu0 0
        %6262 = vmatpush1.bf16.msra.mxu0 0
        %6263 = vmatprep.subr.bf16.mxu0 0
        %6264 = vmatpush1.bf16.msra.mxu0 0
        %6265 = vmatprep.subr.bf16.mxu0 0
        %6266 = vmatpush1.bf16.msra.mxu0 0
        %6267 = vmatprep.subr.bf16.mxu0 0
        %6268 = vmatpush1.bf16.msra.mxu0 0
        %6269 = vmatprep.subr.bf16.mxu0 0
        %6270 = vmatpush1.bf16.msra.mxu0 0
        %6271 = vmatprep.mubr.bf16.mxu0 0
        %6272 = vmatmul.mubr.bf16.gmra.mrb[0].mxu0 %v5772
        %v6273 = vpop.f32.mrb[0].mxu0
        %v6274 = vadd.f32 0.0, %v6273
        %v6275 = vpop.f32.mrb[0].mxu0
        %v6276 = vadd.f32 0.0, %v6275
        %v6277 = vpop.f32.mrb[0].mxu0
        %v6278 = vpop.f32.mrb[0].mxu0
        %6279 = vdwg.mxu0
        %6280 = vmatprep.subr.bf16.mxu0 %v6036
        %6281 = vmatpush1.bf16.msra.mxu0 %v6035
        %6282 = vmatprep.subr.bf16.mxu0 %v6044
        %6283 = vmatpush1.bf16.msra.mxu0 %v6043
        %6284 = vmatprep.subr.bf16.mxu0 %v6052
        %6285 = vmatpush1.bf16.msra.mxu0 %v6051
        %6286 = vmatprep.subr.bf16.mxu0 %v6060
        %6287 = vmatpush1.bf16.msra.mxu0 %v6059
        %6288 = vmatprep.subr.bf16.mxu0 %v6068
        %6289 = vmatpush1.bf16.msra.mxu0 %v6067
        %6290 = vmatprep.subr.bf16.mxu0 %v6076
        %6291 = vmatpush1.bf16.msra.mxu0 %v6075
        %6292 = vmatprep.subr.bf16.mxu0 %v6084
        %6293 = vmatpush1.bf16.msra.mxu0 %v6083
        %6294 = vmatprep.subr.bf16.mxu0 %v6092
        %6295 = vmatpush1.bf16.msra.mxu0 %v6091
        %6296 = vmatprep.subr.bf16.mxu0 0
        %6297 = vmatpush1.bf16.msra.mxu0 0
        %6298 = vmatprep.subr.bf16.mxu0 0
        %6299 = vmatpush1.bf16.msra.mxu0 0
        %6300 = vmatprep.subr.bf16.mxu0 0
        %6301 = vmatpush1.bf16.msra.mxu0 0
        %6302 = vmatprep.subr.bf16.mxu0 0
        %6303 = vmatpush1.bf16.msra.mxu0 0
        %6304 = vmatprep.subr.bf16.mxu0 0
        %6305 = vmatpush1.bf16.msra.mxu0 0
        %6306 = vmatprep.subr.bf16.mxu0 0
        %6307 = vmatpush1.bf16.msra.mxu0 0
        %6308 = vmatprep.subr.bf16.mxu0 0
        %6309 = vmatpush1.bf16.msra.mxu0 0
        %6310 = vmatprep.subr.bf16.mxu0 0
        %6311 = vmatpush1.bf16.msra.mxu0 0
        %6312 = vmatprep.mubr.bf16.mxu0 0
        %6313 = vmatmul.mubr.bf16.gmra.mrb[0].mxu0 %v5772
        %v6314 = vpop.f32.mrb[0].mxu0
        %v6315 = vadd.f32 0.0, %v6314
        %v6316 = vpop.f32.mrb[0].mxu0
        %v6317 = vadd.f32 0.0, %v6316
        %v6318 = vpop.f32.mrb[0].mxu0
        %v6319 = vpop.f32.mrb[0].mxu0
        %6320 = vdwg.mxu0
        %v6321 = vadd.f32 %v5764, %v6192
        %v6322 = vadd.f32 %v5765, %v6194
        %v6323 = vadd.f32 %v5766, %v6233
        %v6324 = vadd.f32 %v5767, %v6235
        %v6325 = vadd.f32 %v5768, %v6274
        %v6326 = vadd.f32 %v5769, %v6276
        %v6327 = vadd.f32 %v5770, %v6315
        %v6328 = vadd.f32 %v5771, %v6317
        %v6329 = vpack.c.bf16 %v2977, %v2977
        %v6330 = vld [vmem:[%s568 + $0xc00] sm:$0xff]
        %v6331 = vld [vmem:[%s568 + $0xc08] sm:$0xff]
        %v6332 = vld [vmem:[%s568 + $0xc10] sm:$0xff]
        %v6333 = vld [vmem:[%s568 + $0xc18] sm:$0xff]
        %v6334 = vld [vmem:[%s568 + $0xc20] sm:$0xff]
        %v6335 = vld [vmem:[%s568 + $0xc28] sm:$0xff]
        %v6336 = vld [vmem:[%s568 + $0xc30] sm:$0xff]
        %v6337 = vld [vmem:[%s568 + $0xc38] sm:$0xff]
        %v6338 = vld [vmem:[%s568 + $0xc40] sm:$0xff]
        %v6339 = vld [vmem:[%s568 + $0xc48] sm:$0xff]
        %v6340 = vld [vmem:[%s568 + $0xc50] sm:$0xff]
        %v6341 = vld [vmem:[%s568 + $0xc58] sm:$0xff]
        %v6342 = vld [vmem:[%s568 + $0xc60] sm:$0xff]
        %v6343 = vld [vmem:[%s568 + $0xc68] sm:$0xff]
        %v6344 = vld [vmem:[%s568 + $0xc70] sm:$0xff]
        %v6345 = vld [vmem:[%s568 + $0xc78] sm:$0xff]
        %v6346 = vld [vmem:[%s568 + $0xc80] sm:$0xff]
        %v6347 = vld [vmem:[%s568 + $0xc88] sm:$0xff]
        %v6348 = vld [vmem:[%s568 + $0xc90] sm:$0xff]
        %v6349 = vld [vmem:[%s568 + $0xc98] sm:$0xff]
        %v6350 = vld [vmem:[%s568 + $0xca0] sm:$0xff]
        %v6351 = vld [vmem:[%s568 + $0xca8] sm:$0xff]
        %v6352 = vld [vmem:[%s568 + $0xcb0] sm:$0xff]
        %v6353 = vld [vmem:[%s568 + $0xcb8] sm:$0xff]
        %v6354 = vld [vmem:[%s568 + $0xcc0] sm:$0xff]
        %v6355 = vld [vmem:[%s568 + $0xcc8] sm:$0xff]
        %v6356 = vld [vmem:[%s568 + $0xcd0] sm:$0xff]
        %v6357 = vld [vmem:[%s568 + $0xcd8] sm:$0xff]
        %v6358 = vld [vmem:[%s568 + $0xce0] sm:$0xff]
        %v6359 = vld [vmem:[%s568 + $0xce8] sm:$0xff]
        %v6360 = vld [vmem:[%s568 + $0xcf0] sm:$0xff]
        %v6361 = vld [vmem:[%s568 + $0xcf8] sm:$0xff]
        %v6362 = vld [vmem:[%s568 + $0xd00] sm:$0xff]
        %v6363 = vld [vmem:[%s568 + $0xd08] sm:$0xff]
        %v6364 = vld [vmem:[%s568 + $0xd10] sm:$0xff]
        %v6365 = vld [vmem:[%s568 + $0xd18] sm:$0xff]
        %v6366 = vld [vmem:[%s568 + $0xd20] sm:$0xff]
        %v6367 = vld [vmem:[%s568 + $0xd28] sm:$0xff]
        %v6368 = vld [vmem:[%s568 + $0xd30] sm:$0xff]
        %v6369 = vld [vmem:[%s568 + $0xd38] sm:$0xff]
        %v6370 = vld [vmem:[%s568 + $0xd40] sm:$0xff]
        %v6371 = vld [vmem:[%s568 + $0xd48] sm:$0xff]
        %v6372 = vld [vmem:[%s568 + $0xd50] sm:$0xff]
        %v6373 = vld [vmem:[%s568 + $0xd58] sm:$0xff]
        %v6374 = vld [vmem:[%s568 + $0xd60] sm:$0xff]
        %v6375 = vld [vmem:[%s568 + $0xd68] sm:$0xff]
        %v6376 = vld [vmem:[%s568 + $0xd70] sm:$0xff]
        %v6377 = vld [vmem:[%s568 + $0xd78] sm:$0xff]
        %v6378 = vld [vmem:[%s568 + $0xd80] sm:$0xff]
        %v6379 = vld [vmem:[%s568 + $0xd88] sm:$0xff]
        %v6380 = vld [vmem:[%s568 + $0xd90] sm:$0xff]
        %v6381 = vld [vmem:[%s568 + $0xd98] sm:$0xff]
        %v6382 = vld [vmem:[%s568 + $0xda0] sm:$0xff]
        %v6383 = vld [vmem:[%s568 + $0xda8] sm:$0xff]
        %v6384 = vld [vmem:[%s568 + $0xdb0] sm:$0xff]
        %v6385 = vld [vmem:[%s568 + $0xdb8] sm:$0xff]
        %v6386 = vld [vmem:[%s568 + $0xdc0] sm:$0xff]
        %v6387 = vld [vmem:[%s568 + $0xdc8] sm:$0xff]
        %v6388 = vld [vmem:[%s568 + $0xdd0] sm:$0xff]
        %v6389 = vld [vmem:[%s568 + $0xdd8] sm:$0xff]
        %v6390 = vld [vmem:[%s568 + $0xde0] sm:$0xff]
        %v6391 = vld [vmem:[%s568 + $0xde8] sm:$0xff]
        %v6392 = vld [vmem:[%s568 + $0xdf0] sm:$0xff]
        %v6393 = vld [vmem:[%s568 + $0xdf8] sm:$0xff]
        %v6458 = vunpack.c.l.b16 %v6330
        %v6459 = vunpack.c.h.b16 %v6330
        %v6460 = vunpack.c.l.b16 %v6331
        %v6461 = vunpack.c.h.b16 %v6331
        %v6462 = vunpack.c.l.b16 %v6332
        %v6463 = vunpack.c.h.b16 %v6332
        %v6464 = vunpack.c.l.b16 %v6333
        %v6465 = vunpack.c.h.b16 %v6333
        %v6466 = vunpack.c.l.b16 %v6334
        %v6467 = vunpack.c.h.b16 %v6334
        %v6468 = vunpack.c.l.b16 %v6335
        %v6469 = vunpack.c.h.b16 %v6335
        %v6470 = vunpack.c.l.b16 %v6336
        %v6471 = vunpack.c.h.b16 %v6336
        %v6472 = vunpack.c.l.b16 %v6337
        %v6473 = vunpack.c.h.b16 %v6337
        %v6474 = vunpack.c.l.b16 %v6338
        %v6475 = vunpack.c.h.b16 %v6338
        %v6476 = vunpack.c.l.b16 %v6339
        %v6477 = vunpack.c.h.b16 %v6339
        %v6478 = vunpack.c.l.b16 %v6340
        %v6479 = vunpack.c.h.b16 %v6340
        %v6480 = vunpack.c.l.b16 %v6341
        %v6481 = vunpack.c.h.b16 %v6341
        %v6482 = vunpack.c.l.b16 %v6342
        %v6483 = vunpack.c.h.b16 %v6342
        %v6484 = vunpack.c.l.b16 %v6343
        %v6485 = vunpack.c.h.b16 %v6343
        %v6486 = vunpack.c.l.b16 %v6344
        %v6487 = vunpack.c.h.b16 %v6344
        %v6488 = vunpack.c.l.b16 %v6345
        %v6489 = vunpack.c.h.b16 %v6345
        %v6490 = vunpack.c.l.b16 %v6346
        %v6491 = vunpack.c.h.b16 %v6346
        %v6492 = vunpack.c.l.b16 %v6347
        %v6493 = vunpack.c.h.b16 %v6347
        %v6494 = vunpack.c.l.b16 %v6348
        %v6495 = vunpack.c.h.b16 %v6348
        %v6496 = vunpack.c.l.b16 %v6349
        %v6497 = vunpack.c.h.b16 %v6349
        %v6498 = vunpack.c.l.b16 %v6350
        %v6499 = vunpack.c.h.b16 %v6350
        %v6500 = vunpack.c.l.b16 %v6351
        %v6501 = vunpack.c.h.b16 %v6351
        %v6502 = vunpack.c.l.b16 %v6352
        %v6503 = vunpack.c.h.b16 %v6352
        %v6504 = vunpack.c.l.b16 %v6353
        %v6505 = vunpack.c.h.b16 %v6353
        %v6506 = vunpack.c.l.b16 %v6354
        %v6507 = vunpack.c.h.b16 %v6354
        %v6508 = vunpack.c.l.b16 %v6355
        %v6509 = vunpack.c.h.b16 %v6355
        %v6510 = vunpack.c.l.b16 %v6356
        %v6511 = vunpack.c.h.b16 %v6356
        %v6512 = vunpack.c.l.b16 %v6357
        %v6513 = vunpack.c.h.b16 %v6357
        %v6514 = vunpack.c.l.b16 %v6358
        %v6515 = vunpack.c.h.b16 %v6358
        %v6516 = vunpack.c.l.b16 %v6359
        %v6517 = vunpack.c.h.b16 %v6359
        %v6518 = vunpack.c.l.b16 %v6360
        %v6519 = vunpack.c.h.b16 %v6360
        %v6520 = vunpack.c.l.b16 %v6361
        %v6521 = vunpack.c.h.b16 %v6361
        %v6522 = vunpack.c.l.b16 %v6362
        %v6523 = vunpack.c.h.b16 %v6362
        %v6524 = vunpack.c.l.b16 %v6363
        %v6525 = vunpack.c.h.b16 %v6363
        %v6526 = vunpack.c.l.b16 %v6364
        %v6527 = vunpack.c.h.b16 %v6364
        %v6528 = vunpack.c.l.b16 %v6365
        %v6529 = vunpack.c.h.b16 %v6365
        %v6530 = vunpack.c.l.b16 %v6366
        %v6531 = vunpack.c.h.b16 %v6366
        %v6532 = vunpack.c.l.b16 %v6367
        %v6533 = vunpack.c.h.b16 %v6367
        %v6534 = vunpack.c.l.b16 %v6368
        %v6535 = vunpack.c.h.b16 %v6368
        %v6536 = vunpack.c.l.b16 %v6369
        %v6537 = vunpack.c.h.b16 %v6369
        %v6538 = vunpack.c.l.b16 %v6370
        %v6539 = vunpack.c.h.b16 %v6370
        %v6540 = vunpack.c.l.b16 %v6371
        %v6541 = vunpack.c.h.b16 %v6371
        %v6542 = vunpack.c.l.b16 %v6372
        %v6543 = vunpack.c.h.b16 %v6372
        %v6544 = vunpack.c.l.b16 %v6373
        %v6545 = vunpack.c.h.b16 %v6373
        %v6546 = vunpack.c.l.b16 %v6374
        %v6547 = vunpack.c.h.b16 %v6374
        %v6548 = vunpack.c.l.b16 %v6375
        %v6549 = vunpack.c.h.b16 %v6375
        %v6550 = vunpack.c.l.b16 %v6376
        %v6551 = vunpack.c.h.b16 %v6376
        %v6552 = vunpack.c.l.b16 %v6377
        %v6553 = vunpack.c.h.b16 %v6377
        %v6554 = vunpack.c.l.b16 %v6378
        %v6555 = vunpack.c.h.b16 %v6378
        %v6556 = vunpack.c.l.b16 %v6379
        %v6557 = vunpack.c.h.b16 %v6379
        %v6558 = vunpack.c.l.b16 %v6380
        %v6559 = vunpack.c.h.b16 %v6380
        %v6560 = vunpack.c.l.b16 %v6381
        %v6561 = vunpack.c.h.b16 %v6381
        %v6562 = vunpack.c.l.b16 %v6382
        %v6563 = vunpack.c.h.b16 %v6382
        %v6564 = vunpack.c.l.b16 %v6383
        %v6565 = vunpack.c.h.b16 %v6383
        %v6566 = vunpack.c.l.b16 %v6384
        %v6567 = vunpack.c.h.b16 %v6384
        %v6568 = vunpack.c.l.b16 %v6385
        %v6569 = vunpack.c.h.b16 %v6385
        %v6570 = vunpack.c.l.b16 %v6386
        %v6571 = vunpack.c.h.b16 %v6386
        %v6572 = vunpack.c.l.b16 %v6387
        %v6573 = vunpack.c.h.b16 %v6387
        %v6574 = vunpack.c.l.b16 %v6388
        %v6575 = vunpack.c.h.b16 %v6388
        %v6576 = vunpack.c.l.b16 %v6389
        %v6577 = vunpack.c.h.b16 %v6389
        %v6578 = vunpack.c.l.b16 %v6390
        %v6579 = vunpack.c.h.b16 %v6390
        %v6580 = vunpack.c.l.b16 %v6391
        %v6581 = vunpack.c.h.b16 %v6391
        %v6582 = vunpack.c.l.b16 %v6392
        %v6583 = vunpack.c.h.b16 %v6392
        %v6584 = vunpack.c.l.b16 %v6393
        %v6585 = vunpack.c.h.b16 %v6393
        %v6586 = vpack.c.b16 %v6466, %v6458
        %v6587 = vpack.c.b16 %v6467, %v6459
        %v6588 = vpack.c.b16 %v6468, %v6460
        %v6589 = vpack.c.b16 %v6469, %v6461
        %v6590 = vpack.c.b16 %v6470, %v6462
        %v6591 = vpack.c.b16 %v6471, %v6463
        %v6592 = vpack.c.b16 %v6472, %v6464
        %v6593 = vpack.c.b16 %v6473, %v6465
        %v6594 = vpack.c.b16 %v6482, %v6474
        %v6595 = vpack.c.b16 %v6483, %v6475
        %v6596 = vpack.c.b16 %v6484, %v6476
        %v6597 = vpack.c.b16 %v6485, %v6477
        %v6598 = vpack.c.b16 %v6486, %v6478
        %v6599 = vpack.c.b16 %v6487, %v6479
        %v6600 = vpack.c.b16 %v6488, %v6480
        %v6601 = vpack.c.b16 %v6489, %v6481
        %v6602 = vpack.c.b16 %v6498, %v6490
        %v6603 = vpack.c.b16 %v6499, %v6491
        %v6604 = vpack.c.b16 %v6500, %v6492
        %v6605 = vpack.c.b16 %v6501, %v6493
        %v6606 = vpack.c.b16 %v6502, %v6494
        %v6607 = vpack.c.b16 %v6503, %v6495
        %v6608 = vpack.c.b16 %v6504, %v6496
        %v6609 = vpack.c.b16 %v6505, %v6497
        %v6610 = vpack.c.b16 %v6514, %v6506
        %v6611 = vpack.c.b16 %v6515, %v6507
        %v6612 = vpack.c.b16 %v6516, %v6508
        %v6613 = vpack.c.b16 %v6517, %v6509
        %v6614 = vpack.c.b16 %v6518, %v6510
        %v6615 = vpack.c.b16 %v6519, %v6511
        %v6616 = vpack.c.b16 %v6520, %v6512
        %v6617 = vpack.c.b16 %v6521, %v6513
        %v6618 = vpack.c.b16 %v6530, %v6522
        %v6619 = vpack.c.b16 %v6531, %v6523
        %v6620 = vpack.c.b16 %v6532, %v6524
        %v6621 = vpack.c.b16 %v6533, %v6525
        %v6622 = vpack.c.b16 %v6534, %v6526
        %v6623 = vpack.c.b16 %v6535, %v6527
        %v6624 = vpack.c.b16 %v6536, %v6528
        %v6625 = vpack.c.b16 %v6537, %v6529
        %v6626 = vpack.c.b16 %v6546, %v6538
        %v6627 = vpack.c.b16 %v6547, %v6539
        %v6628 = vpack.c.b16 %v6548, %v6540
        %v6629 = vpack.c.b16 %v6549, %v6541
        %v6630 = vpack.c.b16 %v6550, %v6542
        %v6631 = vpack.c.b16 %v6551, %v6543
        %v6632 = vpack.c.b16 %v6552, %v6544
        %v6633 = vpack.c.b16 %v6553, %v6545
        %v6634 = vpack.c.b16 %v6562, %v6554
        %v6635 = vpack.c.b16 %v6563, %v6555
        %v6636 = vpack.c.b16 %v6564, %v6556
        %v6637 = vpack.c.b16 %v6565, %v6557
        %v6638 = vpack.c.b16 %v6566, %v6558
        %v6639 = vpack.c.b16 %v6567, %v6559
        %v6640 = vpack.c.b16 %v6568, %v6560
        %v6641 = vpack.c.b16 %v6569, %v6561
        %v6642 = vpack.c.b16 %v6578, %v6570
        %v6643 = vpack.c.b16 %v6579, %v6571
        %v6644 = vpack.c.b16 %v6580, %v6572
        %v6645 = vpack.c.b16 %v6581, %v6573
        %v6646 = vpack.c.b16 %v6582, %v6574
        %v6647 = vpack.c.b16 %v6583, %v6575
        %v6648 = vpack.c.b16 %v6584, %v6576
        %v6649 = vpack.c.b16 %v6585, %v6577
        %6714 = vmatprep.subr.bf16.mxu0 %v6587
        %6715 = vmatpush1.bf16.msra.mxu0 %v6586
        %6716 = vmatprep.subr.bf16.mxu0 %v6595
        %6717 = vmatpush1.bf16.msra.mxu0 %v6594
        %6718 = vmatprep.subr.bf16.mxu0 %v6603
        %6719 = vmatpush1.bf16.msra.mxu0 %v6602
        %6720 = vmatprep.subr.bf16.mxu0 %v6611
        %6721 = vmatpush1.bf16.msra.mxu0 %v6610
        %6722 = vmatprep.subr.bf16.mxu0 %v6619
        %6723 = vmatpush1.bf16.msra.mxu0 %v6618
        %6724 = vmatprep.subr.bf16.mxu0 %v6627
        %6725 = vmatpush1.bf16.msra.mxu0 %v6626
        %6726 = vmatprep.subr.bf16.mxu0 %v6635
        %6727 = vmatpush1.bf16.msra.mxu0 %v6634
        %6728 = vmatprep.subr.bf16.mxu0 %v6643
        %6729 = vmatpush1.bf16.msra.mxu0 %v6642
        %6730 = vmatprep.subr.bf16.mxu0 0
        %6731 = vmatpush1.bf16.msra.mxu0 0
        %6732 = vmatprep.subr.bf16.mxu0 0
        %6733 = vmatpush1.bf16.msra.mxu0 0
        %6734 = vmatprep.subr.bf16.mxu0 0
        %6735 = vmatpush1.bf16.msra.mxu0 0
        %6736 = vmatprep.subr.bf16.mxu0 0
        %6737 = vmatpush1.bf16.msra.mxu0 0
        %6738 = vmatprep.subr.bf16.mxu0 0
        %6739 = vmatpush1.bf16.msra.mxu0 0
        %6740 = vmatprep.subr.bf16.mxu0 0
        %6741 = vmatpush1.bf16.msra.mxu0 0
        %6742 = vmatprep.subr.bf16.mxu0 0
        %6743 = vmatpush1.bf16.msra.mxu0 0
        %6744 = vmatprep.subr.bf16.mxu0 0
        %6745 = vmatpush1.bf16.msra.mxu0 0
        %6746 = vmatprep.mubr.bf16.mxu0 0
        %6747 = vmatmul.mubr.bf16.gmra.mrb[0].mxu0 %v6329
        %v6748 = vpop.f32.mrb[0].mxu0
        %v6749 = vadd.f32 0.0, %v6748
        %v6750 = vpop.f32.mrb[0].mxu0
        %v6751 = vadd.f32 0.0, %v6750
        %v6752 = vpop.f32.mrb[0].mxu0
        %v6753 = vpop.f32.mrb[0].mxu0
        %6754 = vdwg.mxu0
        %6755 = vmatprep.subr.bf16.mxu0 %v6589
        %6756 = vmatpush1.bf16.msra.mxu0 %v6588
        %6757 = vmatprep.subr.bf16.mxu0 %v6597
        %6758 = vmatpush1.bf16.msra.mxu0 %v6596
        %6759 = vmatprep.subr.bf16.mxu0 %v6605
        %6760 = vmatpush1.bf16.msra.mxu0 %v6604
        %6761 = vmatprep.subr.bf16.mxu0 %v6613
        %6762 = vmatpush1.bf16.msra.mxu0 %v6612
        %6763 = vmatprep.subr.bf16.mxu0 %v6621
        %6764 = vmatpush1.bf16.msra.mxu0 %v6620
        %6765 = vmatprep.subr.bf16.mxu0 %v6629
        %6766 = vmatpush1.bf16.msra.mxu0 %v6628
        %6767 = vmatprep.subr.bf16.mxu0 %v6637
        %6768 = vmatpush1.bf16.msra.mxu0 %v6636
        %6769 = vmatprep.subr.bf16.mxu0 %v6645
        %6770 = vmatpush1.bf16.msra.mxu0 %v6644
        %6771 = vmatprep.subr.bf16.mxu0 0
        %6772 = vmatpush1.bf16.msra.mxu0 0
        %6773 = vmatprep.subr.bf16.mxu0 0
        %6774 = vmatpush1.bf16.msra.mxu0 0
        %6775 = vmatprep.subr.bf16.mxu0 0
        %6776 = vmatpush1.bf16.msra.mxu0 0
        %6777 = vmatprep.subr.bf16.mxu0 0
        %6778 = vmatpush1.bf16.msra.mxu0 0
        %6779 = vmatprep.subr.bf16.mxu0 0
        %6780 = vmatpush1.bf16.msra.mxu0 0
        %6781 = vmatprep.subr.bf16.mxu0 0
        %6782 = vmatpush1.bf16.msra.mxu0 0
        %6783 = vmatprep.subr.bf16.mxu0 0
        %6784 = vmatpush1.bf16.msra.mxu0 0
        %6785 = vmatprep.subr.bf16.mxu0 0
        %6786 = vmatpush1.bf16.msra.mxu0 0
        %6787 = vmatprep.mubr.bf16.mxu0 0
        %6788 = vmatmul.mubr.bf16.gmra.mrb[0].mxu0 %v6329
        %v6789 = vpop.f32.mrb[0].mxu0
        %v6790 = vadd.f32 0.0, %v6789
        %v6791 = vpop.f32.mrb[0].mxu0
        %v6792 = vadd.f32 0.0, %v6791
        %v6793 = vpop.f32.mrb[0].mxu0
        %v6794 = vpop.f32.mrb[0].mxu0
        %6795 = vdwg.mxu0
        %6796 = vmatprep.subr.bf16.mxu0 %v6591
        %6797 = vmatpush1.bf16.msra.mxu0 %v6590
        %6798 = vmatprep.subr.bf16.mxu0 %v6599
        %6799 = vmatpush1.bf16.msra.mxu0 %v6598
        %6800 = vmatprep.subr.bf16.mxu0 %v6607
        %6801 = vmatpush1.bf16.msra.mxu0 %v6606
        %6802 = vmatprep.subr.bf16.mxu0 %v6615
        %6803 = vmatpush1.bf16.msra.mxu0 %v6614
        %6804 = vmatprep.subr.bf16.mxu0 %v6623
        %6805 = vmatpush1.bf16.msra.mxu0 %v6622
        %6806 = vmatprep.subr.bf16.mxu0 %v6631
        %6807 = vmatpush1.bf16.msra.mxu0 %v6630
        %6808 = vmatprep.subr.bf16.mxu0 %v6639
        %6809 = vmatpush1.bf16.msra.mxu0 %v6638
        %6810 = vmatprep.subr.bf16.mxu0 %v6647
        %6811 = vmatpush1.bf16.msra.mxu0 %v6646
        %6812 = vmatprep.subr.bf16.mxu0 0
        %6813 = vmatpush1.bf16.msra.mxu0 0
        %6814 = vmatprep.subr.bf16.mxu0 0
        %6815 = vmatpush1.bf16.msra.mxu0 0
        %6816 = vmatprep.subr.bf16.mxu0 0
        %6817 = vmatpush1.bf16.msra.mxu0 0
        %6818 = vmatprep.subr.bf16.mxu0 0
        %6819 = vmatpush1.bf16.msra.mxu0 0
        %6820 = vmatprep.subr.bf16.mxu0 0
        %6821 = vmatpush1.bf16.msra.mxu0 0
        %6822 = vmatprep.subr.bf16.mxu0 0
        %6823 = vmatpush1.bf16.msra.mxu0 0
        %6824 = vmatprep.subr.bf16.mxu0 0
        %6825 = vmatpush1.bf16.msra.mxu0 0
        %6826 = vmatprep.subr.bf16.mxu0 0
        %6827 = vmatpush1.bf16.msra.mxu0 0
        %6828 = vmatprep.mubr.bf16.mxu0 0
        %6829 = vmatmul.mubr.bf16.gmra.mrb[0].mxu0 %v6329
        %v6830 = vpop.f32.mrb[0].mxu0
        %v6831 = vadd.f32 0.0, %v6830
        %v6832 = vpop.f32.mrb[0].mxu0
        %v6833 = vadd.f32 0.0, %v6832
        %v6834 = vpop.f32.mrb[0].mxu0
        %v6835 = vpop.f32.mrb[0].mxu0
        %6836 = vdwg.mxu0
        %6837 = vmatprep.subr.bf16.mxu0 %v6593
        %6838 = vmatpush1.bf16.msra.mxu0 %v6592
        %6839 = vmatprep.subr.bf16.mxu0 %v6601
        %6840 = vmatpush1.bf16.msra.mxu0 %v6600
        %6841 = vmatprep.subr.bf16.mxu0 %v6609
        %6842 = vmatpush1.bf16.msra.mxu0 %v6608
        %6843 = vmatprep.subr.bf16.mxu0 %v6617
        %6844 = vmatpush1.bf16.msra.mxu0 %v6616
        %6845 = vmatprep.subr.bf16.mxu0 %v6625
        %6846 = vmatpush1.bf16.msra.mxu0 %v6624
        %6847 = vmatprep.subr.bf16.mxu0 %v6633
        %6848 = vmatpush1.bf16.msra.mxu0 %v6632
        %6849 = vmatprep.subr.bf16.mxu0 %v6641
        %6850 = vmatpush1.bf16.msra.mxu0 %v6640
        %6851 = vmatprep.subr.bf16.mxu0 %v6649
        %6852 = vmatpush1.bf16.msra.mxu0 %v6648
        %6853 = vmatprep.subr.bf16.mxu0 0
        %6854 = vmatpush1.bf16.msra.mxu0 0
        %6855 = vmatprep.subr.bf16.mxu0 0
        %6856 = vmatpush1.bf16.msra.mxu0 0
        %6857 = vmatprep.subr.bf16.mxu0 0
        %6858 = vmatpush1.bf16.msra.mxu0 0
        %6859 = vmatprep.subr.bf16.mxu0 0
        %6860 = vmatpush1.bf16.msra.mxu0 0
        %6861 = vmatprep.subr.bf16.mxu0 0
        %6862 = vmatpush1.bf16.msra.mxu0 0
        %6863 = vmatprep.subr.bf16.mxu0 0
        %6864 = vmatpush1.bf16.msra.mxu0 0
        %6865 = vmatprep.subr.bf16.mxu0 0
        %6866 = vmatpush1.bf16.msra.mxu0 0
        %6867 = vmatprep.subr.bf16.mxu0 0
        %6868 = vmatpush1.bf16.msra.mxu0 0
        %6869 = vmatprep.mubr.bf16.mxu0 0
        %6870 = vmatmul.mubr.bf16.gmra.mrb[0].mxu0 %v6329
        %v6871 = vpop.f32.mrb[0].mxu0
        %v6872 = vadd.f32 0.0, %v6871
        %v6873 = vpop.f32.mrb[0].mxu0
        %v6874 = vadd.f32 0.0, %v6873
        %v6875 = vpop.f32.mrb[0].mxu0
        %v6876 = vpop.f32.mrb[0].mxu0
        %6877 = vdwg.mxu0
        %v6878 = vadd.f32 %v6321, %v6749
        %v6879 = vadd.f32 %v6322, %v6751
        %v6880 = vadd.f32 %v6323, %v6790
        %v6881 = vadd.f32 %v6324, %v6792
        %v6882 = vadd.f32 %v6325, %v6831
        %v6883 = vadd.f32 %v6326, %v6833
        %v6884 = vadd.f32 %v6327, %v6872
        %v6885 = vadd.f32 %v6328, %v6874
        %v6886 = vpack.c.bf16 %v2978, %v2978
        %v6887 = vld [vmem:[%s568 + $0xe00] sm:$0xff]
        %v6888 = vld [vmem:[%s568 + $0xe08] sm:$0xff]
        %v6889 = vld [vmem:[%s568 + $0xe10] sm:$0xff]
        %v6890 = vld [vmem:[%s568 + $0xe18] sm:$0xff]
        %v6891 = vld [vmem:[%s568 + $0xe20] sm:$0xff]
        %v6892 = vld [vmem:[%s568 + $0xe28] sm:$0xff]
        %v6893 = vld [vmem:[%s568 + $0xe30] sm:$0xff]
        %v6894 = vld [vmem:[%s568 + $0xe38] sm:$0xff]
        %v6895 = vld [vmem:[%s568 + $0xe40] sm:$0xff]
        %v6896 = vld [vmem:[%s568 + $0xe48] sm:$0xff]
        %v6897 = vld [vmem:[%s568 + $0xe50] sm:$0xff]
        %v6898 = vld [vmem:[%s568 + $0xe58] sm:$0xff]
        %v6899 = vld [vmem:[%s568 + $0xe60] sm:$0xff]
        %v6900 = vld [vmem:[%s568 + $0xe68] sm:$0xff]
        %v6901 = vld [vmem:[%s568 + $0xe70] sm:$0xff]
        %v6902 = vld [vmem:[%s568 + $0xe78] sm:$0xff]
        %v6903 = vld [vmem:[%s568 + $0xe80] sm:$0xff]
        %v6904 = vld [vmem:[%s568 + $0xe88] sm:$0xff]
        %v6905 = vld [vmem:[%s568 + $0xe90] sm:$0xff]
        %v6906 = vld [vmem:[%s568 + $0xe98] sm:$0xff]
        %v6907 = vld [vmem:[%s568 + $0xea0] sm:$0xff]
        %v6908 = vld [vmem:[%s568 + $0xea8] sm:$0xff]
        %v6909 = vld [vmem:[%s568 + $0xeb0] sm:$0xff]
        %v6910 = vld [vmem:[%s568 + $0xeb8] sm:$0xff]
        %v6911 = vld [vmem:[%s568 + $0xec0] sm:$0xff]
        %v6912 = vld [vmem:[%s568 + $0xec8] sm:$0xff]
        %v6913 = vld [vmem:[%s568 + $0xed0] sm:$0xff]
        %v6914 = vld [vmem:[%s568 + $0xed8] sm:$0xff]
        %v6915 = vld [vmem:[%s568 + $0xee0] sm:$0xff]
        %v6916 = vld [vmem:[%s568 + $0xee8] sm:$0xff]
        %v6917 = vld [vmem:[%s568 + $0xef0] sm:$0xff]
        %v6918 = vld [vmem:[%s568 + $0xef8] sm:$0xff]
        %v6919 = vld [vmem:[%s568 + $0xf00] sm:$0xff]
        %v6920 = vld [vmem:[%s568 + $0xf08] sm:$0xff]
        %v6921 = vld [vmem:[%s568 + $0xf10] sm:$0xff]
        %v6922 = vld [vmem:[%s568 + $0xf18] sm:$0xff]
        %v6923 = vld [vmem:[%s568 + $0xf20] sm:$0xff]
        %v6924 = vld [vmem:[%s568 + $0xf28] sm:$0xff]
        %v6925 = vld [vmem:[%s568 + $0xf30] sm:$0xff]
        %v6926 = vld [vmem:[%s568 + $0xf38] sm:$0xff]
        %v6927 = vld [vmem:[%s568 + $0xf40] sm:$0xff]
        %v6928 = vld [vmem:[%s568 + $0xf48] sm:$0xff]
        %v6929 = vld [vmem:[%s568 + $0xf50] sm:$0xff]
        %v6930 = vld [vmem:[%s568 + $0xf58] sm:$0xff]
        %v6931 = vld [vmem:[%s568 + $0xf60] sm:$0xff]
        %v6932 = vld [vmem:[%s568 + $0xf68] sm:$0xff]
        %v6933 = vld [vmem:[%s568 + $0xf70] sm:$0xff]
        %v6934 = vld [vmem:[%s568 + $0xf78] sm:$0xff]
        %v6935 = vld [vmem:[%s568 + $0xf80] sm:$0xff]
        %v6936 = vld [vmem:[%s568 + $0xf88] sm:$0xff]
        %v6937 = vld [vmem:[%s568 + $0xf90] sm:$0xff]
        %v6938 = vld [vmem:[%s568 + $0xf98] sm:$0xff]
        %v6939 = vld [vmem:[%s568 + $0xfa0] sm:$0xff]
        %v6940 = vld [vmem:[%s568 + $0xfa8] sm:$0xff]
        %v6941 = vld [vmem:[%s568 + $0xfb0] sm:$0xff]
        %v6942 = vld [vmem:[%s568 + $0xfb8] sm:$0xff]
        %v6943 = vld [vmem:[%s568 + $0xfc0] sm:$0xff]
        %v6944 = vld [vmem:[%s568 + $0xfc8] sm:$0xff]
        %v6945 = vld [vmem:[%s568 + $0xfd0] sm:$0xff]
        %v6946 = vld [vmem:[%s568 + $0xfd8] sm:$0xff]
        %v6947 = vld [vmem:[%s568 + $0xfe0] sm:$0xff]
        %v6948 = vld [vmem:[%s568 + $0xfe8] sm:$0xff]
        %v6949 = vld [vmem:[%s568 + $0xff0] sm:$0xff]
        %v6950 = vld [vmem:[%s568 + $0xff8] sm:$0xff]
        %v7015 = vunpack.c.l.b16 %v6887
        %v7016 = vunpack.c.h.b16 %v6887
        %v7017 = vunpack.c.l.b16 %v6888
        %v7018 = vunpack.c.h.b16 %v6888
        %v7019 = vunpack.c.l.b16 %v6889
        %v7020 = vunpack.c.h.b16 %v6889
        %v7021 = vunpack.c.l.b16 %v6890
        %v7022 = vunpack.c.h.b16 %v6890
        %v7023 = vunpack.c.l.b16 %v6891
        %v7024 = vunpack.c.h.b16 %v6891
        %v7025 = vunpack.c.l.b16 %v6892
        %v7026 = vunpack.c.h.b16 %v6892
        %v7027 = vunpack.c.l.b16 %v6893
        %v7028 = vunpack.c.h.b16 %v6893
        %v7029 = vunpack.c.l.b16 %v6894
        %v7030 = vunpack.c.h.b16 %v6894
        %v7031 = vunpack.c.l.b16 %v6895
        %v7032 = vunpack.c.h.b16 %v6895
        %v7033 = vunpack.c.l.b16 %v6896
        %v7034 = vunpack.c.h.b16 %v6896
        %v7035 = vunpack.c.l.b16 %v6897
        %v7036 = vunpack.c.h.b16 %v6897
        %v7037 = vunpack.c.l.b16 %v6898
        %v7038 = vunpack.c.h.b16 %v6898
        %v7039 = vunpack.c.l.b16 %v6899
        %v7040 = vunpack.c.h.b16 %v6899
        %v7041 = vunpack.c.l.b16 %v6900
        %v7042 = vunpack.c.h.b16 %v6900
        %v7043 = vunpack.c.l.b16 %v6901
        %v7044 = vunpack.c.h.b16 %v6901
        %v7045 = vunpack.c.l.b16 %v6902
        %v7046 = vunpack.c.h.b16 %v6902
        %v7047 = vunpack.c.l.b16 %v6903
        %v7048 = vunpack.c.h.b16 %v6903
        %v7049 = vunpack.c.l.b16 %v6904
        %v7050 = vunpack.c.h.b16 %v6904
        %v7051 = vunpack.c.l.b16 %v6905
        %v7052 = vunpack.c.h.b16 %v6905
        %v7053 = vunpack.c.l.b16 %v6906
        %v7054 = vunpack.c.h.b16 %v6906
        %v7055 = vunpack.c.l.b16 %v6907
        %v7056 = vunpack.c.h.b16 %v6907
        %v7057 = vunpack.c.l.b16 %v6908
        %v7058 = vunpack.c.h.b16 %v6908
        %v7059 = vunpack.c.l.b16 %v6909
        %v7060 = vunpack.c.h.b16 %v6909
        %v7061 = vunpack.c.l.b16 %v6910
        %v7062 = vunpack.c.h.b16 %v6910
        %v7063 = vunpack.c.l.b16 %v6911
        %v7064 = vunpack.c.h.b16 %v6911
        %v7065 = vunpack.c.l.b16 %v6912
        %v7066 = vunpack.c.h.b16 %v6912
        %v7067 = vunpack.c.l.b16 %v6913
        %v7068 = vunpack.c.h.b16 %v6913
        %v7069 = vunpack.c.l.b16 %v6914
        %v7070 = vunpack.c.h.b16 %v6914
        %v7071 = vunpack.c.l.b16 %v6915
        %v7072 = vunpack.c.h.b16 %v6915
        %v7073 = vunpack.c.l.b16 %v6916
        %v7074 = vunpack.c.h.b16 %v6916
        %v7075 = vunpack.c.l.b16 %v6917
        %v7076 = vunpack.c.h.b16 %v6917
        %v7077 = vunpack.c.l.b16 %v6918
        %v7078 = vunpack.c.h.b16 %v6918
        %v7079 = vunpack.c.l.b16 %v6919
        %v7080 = vunpack.c.h.b16 %v6919
        %v7081 = vunpack.c.l.b16 %v6920
        %v7082 = vunpack.c.h.b16 %v6920
        %v7083 = vunpack.c.l.b16 %v6921
        %v7084 = vunpack.c.h.b16 %v6921
        %v7085 = vunpack.c.l.b16 %v6922
        %v7086 = vunpack.c.h.b16 %v6922
        %v7087 = vunpack.c.l.b16 %v6923
        %v7088 = vunpack.c.h.b16 %v6923
        %v7089 = vunpack.c.l.b16 %v6924
        %v7090 = vunpack.c.h.b16 %v6924
        %v7091 = vunpack.c.l.b16 %v6925
        %v7092 = vunpack.c.h.b16 %v6925
        %v7093 = vunpack.c.l.b16 %v6926
        %v7094 = vunpack.c.h.b16 %v6926
        %v7095 = vunpack.c.l.b16 %v6927
        %v7096 = vunpack.c.h.b16 %v6927
        %v7097 = vunpack.c.l.b16 %v6928
        %v7098 = vunpack.c.h.b16 %v6928
        %v7099 = vunpack.c.l.b16 %v6929
        %v7100 = vunpack.c.h.b16 %v6929
        %v7101 = vunpack.c.l.b16 %v6930
        %v7102 = vunpack.c.h.b16 %v6930
        %v7103 = vunpack.c.l.b16 %v6931
        %v7104 = vunpack.c.h.b16 %v6931
        %v7105 = vunpack.c.l.b16 %v6932
        %v7106 = vunpack.c.h.b16 %v6932
        %v7107 = vunpack.c.l.b16 %v6933
        %v7108 = vunpack.c.h.b16 %v6933
        %v7109 = vunpack.c.l.b16 %v6934
        %v7110 = vunpack.c.h.b16 %v6934
        %v7111 = vunpack.c.l.b16 %v6935
        %v7112 = vunpack.c.h.b16 %v6935
        %v7113 = vunpack.c.l.b16 %v6936
        %v7114 = vunpack.c.h.b16 %v6936
        %v7115 = vunpack.c.l.b16 %v6937
        %v7116 = vunpack.c.h.b16 %v6937
        %v7117 = vunpack.c.l.b16 %v6938
        %v7118 = vunpack.c.h.b16 %v6938
        %v7119 = vunpack.c.l.b16 %v6939
        %v7120 = vunpack.c.h.b16 %v6939
        %v7121 = vunpack.c.l.b16 %v6940
        %v7122 = vunpack.c.h.b16 %v6940
        %v7123 = vunpack.c.l.b16 %v6941
        %v7124 = vunpack.c.h.b16 %v6941
        %v7125 = vunpack.c.l.b16 %v6942
        %v7126 = vunpack.c.h.b16 %v6942
        %v7127 = vunpack.c.l.b16 %v6943
        %v7128 = vunpack.c.h.b16 %v6943
        %v7129 = vunpack.c.l.b16 %v6944
        %v7130 = vunpack.c.h.b16 %v6944
        %v7131 = vunpack.c.l.b16 %v6945
        %v7132 = vunpack.c.h.b16 %v6945
        %v7133 = vunpack.c.l.b16 %v6946
        %v7134 = vunpack.c.h.b16 %v6946
        %v7135 = vunpack.c.l.b16 %v6947
        %v7136 = vunpack.c.h.b16 %v6947
        %v7137 = vunpack.c.l.b16 %v6948
        %v7138 = vunpack.c.h.b16 %v6948
        %v7139 = vunpack.c.l.b16 %v6949
        %v7140 = vunpack.c.h.b16 %v6949
        %v7141 = vunpack.c.l.b16 %v6950
        %v7142 = vunpack.c.h.b16 %v6950
        %v7143 = vpack.c.b16 %v7023, %v7015
        %v7144 = vpack.c.b16 %v7024, %v7016
        %v7145 = vpack.c.b16 %v7025, %v7017
        %v7146 = vpack.c.b16 %v7026, %v7018
        %v7147 = vpack.c.b16 %v7027, %v7019
        %v7148 = vpack.c.b16 %v7028, %v7020
        %v7149 = vpack.c.b16 %v7029, %v7021
        %v7150 = vpack.c.b16 %v7030, %v7022
        %v7151 = vpack.c.b16 %v7039, %v7031
        %v7152 = vpack.c.b16 %v7040, %v7032
        %v7153 = vpack.c.b16 %v7041, %v7033
        %v7154 = vpack.c.b16 %v7042, %v7034
        %v7155 = vpack.c.b16 %v7043, %v7035
        %v7156 = vpack.c.b16 %v7044, %v7036
        %v7157 = vpack.c.b16 %v7045, %v7037
        %v7158 = vpack.c.b16 %v7046, %v7038
        %v7159 = vpack.c.b16 %v7055, %v7047
        %v7160 = vpack.c.b16 %v7056, %v7048
        %v7161 = vpack.c.b16 %v7057, %v7049
        %v7162 = vpack.c.b16 %v7058, %v7050
        %v7163 = vpack.c.b16 %v7059, %v7051
        %v7164 = vpack.c.b16 %v7060, %v7052
        %v7165 = vpack.c.b16 %v7061, %v7053
        %v7166 = vpack.c.b16 %v7062, %v7054
        %v7167 = vpack.c.b16 %v7071, %v7063
        %v7168 = vpack.c.b16 %v7072, %v7064
        %v7169 = vpack.c.b16 %v7073, %v7065
        %v7170 = vpack.c.b16 %v7074, %v7066
        %v7171 = vpack.c.b16 %v7075, %v7067
        %v7172 = vpack.c.b16 %v7076, %v7068
        %v7173 = vpack.c.b16 %v7077, %v7069
        %v7174 = vpack.c.b16 %v7078, %v7070
        %v7175 = vpack.c.b16 %v7087, %v7079
        %v7176 = vpack.c.b16 %v7088, %v7080
        %v7177 = vpack.c.b16 %v7089, %v7081
        %v7178 = vpack.c.b16 %v7090, %v7082
        %v7179 = vpack.c.b16 %v7091, %v7083
        %v7180 = vpack.c.b16 %v7092, %v7084
        %v7181 = vpack.c.b16 %v7093, %v7085
        %v7182 = vpack.c.b16 %v7094, %v7086
        %v7183 = vpack.c.b16 %v7103, %v7095
        %v7184 = vpack.c.b16 %v7104, %v7096
        %v7185 = vpack.c.b16 %v7105, %v7097
        %v7186 = vpack.c.b16 %v7106, %v7098
        %v7187 = vpack.c.b16 %v7107, %v7099
        %v7188 = vpack.c.b16 %v7108, %v7100
        %v7189 = vpack.c.b16 %v7109, %v7101
        %v7190 = vpack.c.b16 %v7110, %v7102
        %v7191 = vpack.c.b16 %v7119, %v7111
        %v7192 = vpack.c.b16 %v7120, %v7112
        %v7193 = vpack.c.b16 %v7121, %v7113
        %v7194 = vpack.c.b16 %v7122, %v7114
        %v7195 = vpack.c.b16 %v7123, %v7115
        %v7196 = vpack.c.b16 %v7124, %v7116
        %v7197 = vpack.c.b16 %v7125, %v7117
        %v7198 = vpack.c.b16 %v7126, %v7118
        %v7199 = vpack.c.b16 %v7135, %v7127
        %v7200 = vpack.c.b16 %v7136, %v7128
        %v7201 = vpack.c.b16 %v7137, %v7129
        %v7202 = vpack.c.b16 %v7138, %v7130
        %v7203 = vpack.c.b16 %v7139, %v7131
        %v7204 = vpack.c.b16 %v7140, %v7132
        %v7205 = vpack.c.b16 %v7141, %v7133
        %v7206 = vpack.c.b16 %v7142, %v7134
        %7271 = vmatprep.subr.bf16.mxu0 %v7144
        %7272 = vmatpush1.bf16.msra.mxu0 %v7143
        %7273 = vmatprep.subr.bf16.mxu0 %v7152
        %7274 = vmatpush1.bf16.msra.mxu0 %v7151
        %7275 = vmatprep.subr.bf16.mxu0 %v7160
        %7276 = vmatpush1.bf16.msra.mxu0 %v7159
        %7277 = vmatprep.subr.bf16.mxu0 %v7168
        %7278 = vmatpush1.bf16.msra.mxu0 %v7167
        %7279 = vmatprep.subr.bf16.mxu0 %v7176
        %7280 = vmatpush1.bf16.msra.mxu0 %v7175
        %7281 = vmatprep.subr.bf16.mxu0 %v7184
        %7282 = vmatpush1.bf16.msra.mxu0 %v7183
        %7283 = vmatprep.subr.bf16.mxu0 %v7192
        %7284 = vmatpush1.bf16.msra.mxu0 %v7191
        %7285 = vmatprep.subr.bf16.mxu0 %v7200
        %7286 = vmatpush1.bf16.msra.mxu0 %v7199
        %7287 = vmatprep.subr.bf16.mxu0 0
        %7288 = vmatpush1.bf16.msra.mxu0 0
        %7289 = vmatprep.subr.bf16.mxu0 0
        %7290 = vmatpush1.bf16.msra.mxu0 0
        %7291 = vmatprep.subr.bf16.mxu0 0
        %7292 = vmatpush1.bf16.msra.mxu0 0
        %7293 = vmatprep.subr.bf16.mxu0 0
        %7294 = vmatpush1.bf16.msra.mxu0 0
        %7295 = vmatprep.subr.bf16.mxu0 0
        %7296 = vmatpush1.bf16.msra.mxu0 0
        %7297 = vmatprep.subr.bf16.mxu0 0
        %7298 = vmatpush1.bf16.msra.mxu0 0
        %7299 = vmatprep.subr.bf16.mxu0 0
        %7300 = vmatpush1.bf16.msra.mxu0 0
        %7301 = vmatprep.subr.bf16.mxu0 0
        %7302 = vmatpush1.bf16.msra.mxu0 0
        %7303 = vmatprep.mubr.bf16.mxu0 0
        %7304 = vmatmul.mubr.bf16.gmra.mrb[0].mxu0 %v6886
        %v7305 = vpop.f32.mrb[0].mxu0
        %v7306 = vadd.f32 0.0, %v7305
        %v7307 = vpop.f32.mrb[0].mxu0
        %v7308 = vadd.f32 0.0, %v7307
        %v7309 = vpop.f32.mrb[0].mxu0
        %v7310 = vpop.f32.mrb[0].mxu0
        %7311 = vdwg.mxu0
        %7312 = vmatprep.subr.bf16.mxu0 %v7146
        %7313 = vmatpush1.bf16.msra.mxu0 %v7145
        %7314 = vmatprep.subr.bf16.mxu0 %v7154
        %7315 = vmatpush1.bf16.msra.mxu0 %v7153
        %7316 = vmatprep.subr.bf16.mxu0 %v7162
        %7317 = vmatpush1.bf16.msra.mxu0 %v7161
        %7318 = vmatprep.subr.bf16.mxu0 %v7170
        %7319 = vmatpush1.bf16.msra.mxu0 %v7169
        %7320 = vmatprep.subr.bf16.mxu0 %v7178
        %7321 = vmatpush1.bf16.msra.mxu0 %v7177
        %7322 = vmatprep.subr.bf16.mxu0 %v7186
        %7323 = vmatpush1.bf16.msra.mxu0 %v7185
        %7324 = vmatprep.subr.bf16.mxu0 %v7194
        %7325 = vmatpush1.bf16.msra.mxu0 %v7193
        %7326 = vmatprep.subr.bf16.mxu0 %v7202
        %7327 = vmatpush1.bf16.msra.mxu0 %v7201
        %7328 = vmatprep.subr.bf16.mxu0 0
        %7329 = vmatpush1.bf16.msra.mxu0 0
        %7330 = vmatprep.subr.bf16.mxu0 0
        %7331 = vmatpush1.bf16.msra.mxu0 0
        %7332 = vmatprep.subr.bf16.mxu0 0
        %7333 = vmatpush1.bf16.msra.mxu0 0
        %7334 = vmatprep.subr.bf16.mxu0 0
        %7335 = vmatpush1.bf16.msra.mxu0 0
        %7336 = vmatprep.subr.bf16.mxu0 0
        %7337 = vmatpush1.bf16.msra.mxu0 0
        %7338 = vmatprep.subr.bf16.mxu0 0
        %7339 = vmatpush1.bf16.msra.mxu0 0
        %7340 = vmatprep.subr.bf16.mxu0 0
        %7341 = vmatpush1.bf16.msra.mxu0 0
        %7342 = vmatprep.subr.bf16.mxu0 0
        %7343 = vmatpush1.bf16.msra.mxu0 0
        %7344 = vmatprep.mubr.bf16.mxu0 0
        %7345 = vmatmul.mubr.bf16.gmra.mrb[0].mxu0 %v6886
        %v7346 = vpop.f32.mrb[0].mxu0
        %v7347 = vadd.f32 0.0, %v7346
        %v7348 = vpop.f32.mrb[0].mxu0
        %v7349 = vadd.f32 0.0, %v7348
        %v7350 = vpop.f32.mrb[0].mxu0
        %v7351 = vpop.f32.mrb[0].mxu0
        %7352 = vdwg.mxu0
        %7353 = vmatprep.subr.bf16.mxu0 %v7148
        %7354 = vmatpush1.bf16.msra.mxu0 %v7147
        %7355 = vmatprep.subr.bf16.mxu0 %v7156
        %7356 = vmatpush1.bf16.msra.mxu0 %v7155
        %7357 = vmatprep.subr.bf16.mxu0 %v7164
        %7358 = vmatpush1.bf16.msra.mxu0 %v7163
        %7359 = vmatprep.subr.bf16.mxu0 %v7172
        %7360 = vmatpush1.bf16.msra.mxu0 %v7171
        %7361 = vmatprep.subr.bf16.mxu0 %v7180
        %7362 = vmatpush1.bf16.msra.mxu0 %v7179
        %7363 = vmatprep.subr.bf16.mxu0 %v7188
        %7364 = vmatpush1.bf16.msra.mxu0 %v7187
        %7365 = vmatprep.subr.bf16.mxu0 %v7196
        %7366 = vmatpush1.bf16.msra.mxu0 %v7195
        %7367 = vmatprep.subr.bf16.mxu0 %v7204
        %7368 = vmatpush1.bf16.msra.mxu0 %v7203
        %7369 = vmatprep.subr.bf16.mxu0 0
        %7370 = vmatpush1.bf16.msra.mxu0 0
        %7371 = vmatprep.subr.bf16.mxu0 0
        %7372 = vmatpush1.bf16.msra.mxu0 0
        %7373 = vmatprep.subr.bf16.mxu0 0
        %7374 = vmatpush1.bf16.msra.mxu0 0
        %7375 = vmatprep.subr.bf16.mxu0 0
        %7376 = vmatpush1.bf16.msra.mxu0 0
        %7377 = vmatprep.subr.bf16.mxu0 0
        %7378 = vmatpush1.bf16.msra.mxu0 0
        %7379 = vmatprep.subr.bf16.mxu0 0
        %7380 = vmatpush1.bf16.msra.mxu0 0
        %7381 = vmatprep.subr.bf16.mxu0 0
        %7382 = vmatpush1.bf16.msra.mxu0 0
        %7383 = vmatprep.subr.bf16.mxu0 0
        %7384 = vmatpush1.bf16.msra.mxu0 0
        %7385 = vmatprep.mubr.bf16.mxu0 0
        %7386 = vmatmul.mubr.bf16.gmra.mrb[0].mxu0 %v6886
        %v7387 = vpop.f32.mrb[0].mxu0
        %v7388 = vadd.f32 0.0, %v7387
        %v7389 = vpop.f32.mrb[0].mxu0
        %v7390 = vadd.f32 0.0, %v7389
        %v7391 = vpop.f32.mrb[0].mxu0
        %v7392 = vpop.f32.mrb[0].mxu0
        %7393 = vdwg.mxu0
        %7394 = vmatprep.subr.bf16.mxu0 %v7150
        %7395 = vmatpush1.bf16.msra.mxu0 %v7149
        %7396 = vmatprep.subr.bf16.mxu0 %v7158
        %7397 = vmatpush1.bf16.msra.mxu0 %v7157
        %7398 = vmatprep.subr.bf16.mxu0 %v7166
        %7399 = vmatpush1.bf16.msra.mxu0 %v7165
        %7400 = vmatprep.subr.bf16.mxu0 %v7174
        %7401 = vmatpush1.bf16.msra.mxu0 %v7173
        %7402 = vmatprep.subr.bf16.mxu0 %v7182
        %7403 = vmatpush1.bf16.msra.mxu0 %v7181
        %7404 = vmatprep.subr.bf16.mxu0 %v7190
        %7405 = vmatpush1.bf16.msra.mxu0 %v7189
        %7406 = vmatprep.subr.bf16.mxu0 %v7198
        %7407 = vmatpush1.bf16.msra.mxu0 %v7197
        %7408 = vmatprep.subr.bf16.mxu0 %v7206
        %7409 = vmatpush1.bf16.msra.mxu0 %v7205
        %7410 = vmatprep.subr.bf16.mxu0 0
        %7411 = vmatpush1.bf16.msra.mxu0 0
        %7412 = vmatprep.subr.bf16.mxu0 0
        %7413 = vmatpush1.bf16.msra.mxu0 0
        %7414 = vmatprep.subr.bf16.mxu0 0
        %7415 = vmatpush1.bf16.msra.mxu0 0
        %7416 = vmatprep.subr.bf16.mxu0 0
        %7417 = vmatpush1.bf16.msra.mxu0 0
        %7418 = vmatprep.subr.bf16.mxu0 0
        %7419 = vmatpush1.bf16.msra.mxu0 0
        %7420 = vmatprep.subr.bf16.mxu0 0
        %7421 = vmatpush1.bf16.msra.mxu0 0
        %7422 = vmatprep.subr.bf16.mxu0 0
        %7423 = vmatpush1.bf16.msra.mxu0 0
        %7424 = vmatprep.subr.bf16.mxu0 0
        %7425 = vmatpush1.bf16.msra.mxu0 0
        %7426 = vmatprep.mubr.bf16.mxu0 0
        %7427 = vmatmul.mubr.bf16.gmra.mrb[0].mxu0 %v6886
        %v7428 = vpop.f32.mrb[0].mxu0
        %v7429 = vadd.f32 0.0, %v7428
        %v7430 = vpop.f32.mrb[0].mxu0
        %v7431 = vadd.f32 0.0, %v7430
        %v7432 = vpop.f32.mrb[0].mxu0
        %v7433 = vpop.f32.mrb[0].mxu0
        %7434 = vdwg.mxu0
        %v7435 = vadd.f32 %v6878, %v7306
        %v7436 = vadd.f32 %v6879, %v7308
        %v7437 = vadd.f32 %v6880, %v7347
        %v7438 = vadd.f32 %v6881, %v7349
        %v7439 = vadd.f32 %v6882, %v7388
        %v7440 = vadd.f32 %v6883, %v7390
        %v7441 = vadd.f32 %v6884, %v7429
        %v7442 = vadd.f32 %v6885, %v7431
        %7443 = vst [vmem:[#allocation3] sm:$0xff] %v7435
        %7444 = vst [vmem:[#allocation3 + $0x8] sm:$0xff] %v7436
        %7445 = vst [vmem:[#allocation3 + $0x10] sm:$0xff] %v7437
        %7446 = vst [vmem:[#allocation3 + $0x18] sm:$0xff] %v7438
        %7447 = vst [vmem:[#allocation3 + $0x20] sm:$0xff] %v7439
        %7448 = vst [vmem:[#allocation3 + $0x28] sm:$0xff] %v7440
        %7449 = vst [vmem:[#allocation3 + $0x30] sm:$0xff] %v7441
        %7450 = vst [vmem:[#allocation3 + $0x38] sm:$0xff] %v7442
        %p7451 = scmp.eq.s32.totalorder %s39, 2
        // Predicated region
        $region105: #{actor_forward.1} parent=63 // pred_check
          %p7452 = pneg %p7451
        $region106: #{actor_forward.1} parent=63 // pred_check_branch
          %7454 = sbr.rel (%p7452) target = $region108
        $region107: #{actor_forward.1} parent=63 // pred_region
          %v7455 = vld [vmem:[#allocation3] sm:$0xff]
          %v7456 = vld [vmem:[#allocation3 + $0x8] sm:$0xff]
          %v7457 = vld [vmem:[#allocation3 + $0x10] sm:$0xff]
          %v7458 = vld [vmem:[#allocation3 + $0x18] sm:$0xff]
          %v7459 = vld [vmem:[#allocation3 + $0x20] sm:$0xff]
          %v7460 = vld [vmem:[#allocation3 + $0x28] sm:$0xff]
          %v7461 = vld [vmem:[#allocation3 + $0x30] sm:$0xff]
          %v7462 = vld [vmem:[#allocation3 + $0x38] sm:$0xff]
          %v7463 = vld [vmem:[#allocation16] sm:$0xf]
          %v7464 = vld [vmem:[#allocation15] sm:$0xff]
          %v7465 = vld [vmem:[#allocation15 + $0x8] sm:$0xff]
          %v7466 = vld [vmem:[#allocation15 + $0x10] sm:$0xff]
          %v7467 = vld [vmem:[#allocation15 + $0x18] sm:$0xff]
          %v7468 = vld [vmem:[#allocation15 + $0x20] sm:$0xff]
          %v7469 = vld [vmem:[#allocation15 + $0x28] sm:$0xff]
          %v7470 = vld [vmem:[#allocation15 + $0x30] sm:$0xff]
          %v7471 = vld [vmem:[#allocation15 + $0x38] sm:$0xff]
          %v7472 = vld [vmem:[#allocation15 + $0x40] sm:$0xff]
          %v7473 = vld [vmem:[#allocation15 + $0x48] sm:$0xff]
          %v7474 = vld [vmem:[#allocation15 + $0x50] sm:$0xff]
          %v7475 = vld [vmem:[#allocation15 + $0x58] sm:$0xff]
          %v7476 = vld [vmem:[#allocation15 + $0x60] sm:$0xff]
          %v7477 = vld [vmem:[#allocation15 + $0x68] sm:$0xff]
          %v7478 = vld [vmem:[#allocation15 + $0x70] sm:$0xff]
          %v7479 = vld [vmem:[#allocation15 + $0x78] sm:$0xff]
          %v7480 = vld [vmem:[#allocation15 + $0x80] sm:$0xff]
          %v7481 = vld [vmem:[#allocation15 + $0x88] sm:$0xff]
          %v7482 = vld [vmem:[#allocation15 + $0x90] sm:$0xff]
          %v7483 = vld [vmem:[#allocation15 + $0x98] sm:$0xff]
          %v7484 = vld [vmem:[#allocation15 + $0xa0] sm:$0xff]
          %v7485 = vld [vmem:[#allocation15 + $0xa8] sm:$0xff]
          %v7486 = vld [vmem:[#allocation15 + $0xb0] sm:$0xff]
          %v7487 = vld [vmem:[#allocation15 + $0xb8] sm:$0xff]
          %v7488 = vld [vmem:[#allocation15 + $0xc0] sm:$0xff]
          %v7489 = vld [vmem:[#allocation15 + $0xc8] sm:$0xff]
          %v7490 = vld [vmem:[#allocation15 + $0xd0] sm:$0xff]
          %v7491 = vld [vmem:[#allocation15 + $0xd8] sm:$0xff]
          %v7492 = vld [vmem:[#allocation15 + $0xe0] sm:$0xff]
          %v7493 = vld [vmem:[#allocation15 + $0xe8] sm:$0xff]
          %v7494 = vld [vmem:[#allocation15 + $0xf0] sm:$0xff]
          %v7495 = vld [vmem:[#allocation15 + $0xf8] sm:$0xff]
          %v7496 = vld [vmem:[#allocation15 + $0x100] sm:$0xff]
          %v7497 = vld [vmem:[#allocation15 + $0x108] sm:$0xff]
          %v7498 = vld [vmem:[#allocation15 + $0x110] sm:$0xff]
          %v7499 = vld [vmem:[#allocation15 + $0x118] sm:$0xff]
          %v7500 = vld [vmem:[#allocation15 + $0x120] sm:$0xff]
          %v7501 = vld [vmem:[#allocation15 + $0x128] sm:$0xff]
          %v7502 = vld [vmem:[#allocation15 + $0x130] sm:$0xff]
          %v7503 = vld [vmem:[#allocation15 + $0x138] sm:$0xff]
          %v7504 = vld [vmem:[#allocation15 + $0x140] sm:$0xff]
          %v7505 = vld [vmem:[#allocation15 + $0x148] sm:$0xff]
          %v7506 = vld [vmem:[#allocation15 + $0x150] sm:$0xff]
          %v7507 = vld [vmem:[#allocation15 + $0x158] sm:$0xff]
          %v7508 = vld [vmem:[#allocation15 + $0x160] sm:$0xff]
          %v7509 = vld [vmem:[#allocation15 + $0x168] sm:$0xff]
          %v7510 = vld [vmem:[#allocation15 + $0x170] sm:$0xff]
          %v7511 = vld [vmem:[#allocation15 + $0x178] sm:$0xff]
          %v7512 = vld [vmem:[#allocation15 + $0x180] sm:$0xff]
          %v7513 = vld [vmem:[#allocation15 + $0x188] sm:$0xff]
          %v7514 = vld [vmem:[#allocation15 + $0x190] sm:$0xff]
          %v7515 = vld [vmem:[#allocation15 + $0x198] sm:$0xff]
          %v7516 = vld [vmem:[#allocation15 + $0x1a0] sm:$0xff]
          %v7517 = vld [vmem:[#allocation15 + $0x1a8] sm:$0xff]
          %v7518 = vld [vmem:[#allocation15 + $0x1b0] sm:$0xff]
          %v7519 = vld [vmem:[#allocation15 + $0x1b8] sm:$0xff]
          %v7520 = vld [vmem:[#allocation15 + $0x1c0] sm:$0xff]
          %v7521 = vld [vmem:[#allocation15 + $0x1c8] sm:$0xff]
          %v7522 = vld [vmem:[#allocation15 + $0x1d0] sm:$0xff]
          %v7523 = vld [vmem:[#allocation15 + $0x1d8] sm:$0xff]
          %v7524 = vld [vmem:[#allocation15 + $0x1e0] sm:$0xff]
          %v7525 = vld [vmem:[#allocation15 + $0x1e8] sm:$0xff]
          %v7526 = vld [vmem:[#allocation15 + $0x1f0] sm:$0xff]
          %v7527 = vld [vmem:[#allocation15 + $0x1f8] sm:$0xff]
          %v7528 = vld [vmem:[#allocation15 + $0x200] sm:$0xff]
          %v7529 = vld [vmem:[#allocation15 + $0x208] sm:$0xff]
          %v7530 = vld [vmem:[#allocation15 + $0x210] sm:$0xff]
          %v7531 = vld [vmem:[#allocation15 + $0x218] sm:$0xff]
          %v7532 = vld [vmem:[#allocation15 + $0x220] sm:$0xff]
          %v7533 = vld [vmem:[#allocation15 + $0x228] sm:$0xff]
          %v7534 = vld [vmem:[#allocation15 + $0x230] sm:$0xff]
          %v7535 = vld [vmem:[#allocation15 + $0x238] sm:$0xff]
          %v7536 = vld [vmem:[#allocation15 + $0x240] sm:$0xff]
          %v7537 = vld [vmem:[#allocation15 + $0x248] sm:$0xff]
          %v7538 = vld [vmem:[#allocation15 + $0x250] sm:$0xff]
          %v7539 = vld [vmem:[#allocation15 + $0x258] sm:$0xff]
          %v7540 = vld [vmem:[#allocation15 + $0x260] sm:$0xff]
          %v7541 = vld [vmem:[#allocation15 + $0x268] sm:$0xff]
          %v7542 = vld [vmem:[#allocation15 + $0x270] sm:$0xff]
          %v7543 = vld [vmem:[#allocation15 + $0x278] sm:$0xff]
          %v7544 = vld [vmem:[#allocation15 + $0x280] sm:$0xff]
          %v7545 = vld [vmem:[#allocation15 + $0x288] sm:$0xff]
          %v7546 = vld [vmem:[#allocation15 + $0x290] sm:$0xff]
          %v7547 = vld [vmem:[#allocation15 + $0x298] sm:$0xff]
          %v7548 = vld [vmem:[#allocation15 + $0x2a0] sm:$0xff]
          %v7549 = vld [vmem:[#allocation15 + $0x2a8] sm:$0xff]
          %v7550 = vld [vmem:[#allocation15 + $0x2b0] sm:$0xff]
          %v7551 = vld [vmem:[#allocation15 + $0x2b8] sm:$0xff]
          %v7552 = vld [vmem:[#allocation15 + $0x2c0] sm:$0xff]
          %v7553 = vld [vmem:[#allocation15 + $0x2c8] sm:$0xff]
          %v7554 = vld [vmem:[#allocation15 + $0x2d0] sm:$0xff]
          %v7555 = vld [vmem:[#allocation15 + $0x2d8] sm:$0xff]
          %v7556 = vld [vmem:[#allocation15 + $0x2e0] sm:$0xff]
          %v7557 = vld [vmem:[#allocation15 + $0x2e8] sm:$0xff]
          %v7558 = vld [vmem:[#allocation15 + $0x2f0] sm:$0xff]
          %v7559 = vld [vmem:[#allocation15 + $0x2f8] sm:$0xff]
          %v7560 = vld [vmem:[#allocation15 + $0x300] sm:$0xff]
          %v7561 = vld [vmem:[#allocation15 + $0x308] sm:$0xff]
          %v7562 = vld [vmem:[#allocation15 + $0x310] sm:$0xff]
          %v7563 = vld [vmem:[#allocation15 + $0x318] sm:$0xff]
          %v7564 = vld [vmem:[#allocation15 + $0x320] sm:$0xff]
          %v7565 = vld [vmem:[#allocation15 + $0x328] sm:$0xff]
          %v7566 = vld [vmem:[#allocation15 + $0x330] sm:$0xff]
          %v7567 = vld [vmem:[#allocation15 + $0x338] sm:$0xff]
          %v7568 = vld [vmem:[#allocation15 + $0x340] sm:$0xff]
          %v7569 = vld [vmem:[#allocation15 + $0x348] sm:$0xff]
          %v7570 = vld [vmem:[#allocation15 + $0x350] sm:$0xff]
          %v7571 = vld [vmem:[#allocation15 + $0x358] sm:$0xff]
          %v7572 = vld [vmem:[#allocation15 + $0x360] sm:$0xff]
          %v7573 = vld [vmem:[#allocation15 + $0x368] sm:$0xff]
          %v7574 = vld [vmem:[#allocation15 + $0x370] sm:$0xff]
          %v7575 = vld [vmem:[#allocation15 + $0x378] sm:$0xff]
          %v7576 = vld [vmem:[#allocation15 + $0x380] sm:$0xff]
          %v7577 = vld [vmem:[#allocation15 + $0x388] sm:$0xff]
          %v7578 = vld [vmem:[#allocation15 + $0x390] sm:$0xff]
          %v7579 = vld [vmem:[#allocation15 + $0x398] sm:$0xff]
          %v7580 = vld [vmem:[#allocation15 + $0x3a0] sm:$0xff]
          %v7581 = vld [vmem:[#allocation15 + $0x3a8] sm:$0xff]
          %v7582 = vld [vmem:[#allocation15 + $0x3b0] sm:$0xff]
          %v7583 = vld [vmem:[#allocation15 + $0x3b8] sm:$0xff]
          %v7584 = vld [vmem:[#allocation15 + $0x3c0] sm:$0xff]
          %v7585 = vld [vmem:[#allocation15 + $0x3c8] sm:$0xff]
          %v7586 = vld [vmem:[#allocation15 + $0x3d0] sm:$0xff]
          %v7587 = vld [vmem:[#allocation15 + $0x3d8] sm:$0xff]
          %v7588 = vld [vmem:[#allocation15 + $0x3e0] sm:$0xff]
          %v7589 = vld [vmem:[#allocation15 + $0x3e8] sm:$0xff]
          %v7590 = vld [vmem:[#allocation15 + $0x3f0] sm:$0xff]
          %v7591 = vld [vmem:[#allocation15 + $0x3f8] sm:$0xff]
          %v7592 = vld [vmem:[#allocation15 + $0x400] sm:$0xff]
          %v7593 = vld [vmem:[#allocation15 + $0x408] sm:$0xff]
          %v7594 = vld [vmem:[#allocation15 + $0x410] sm:$0xff]
          %v7595 = vld [vmem:[#allocation15 + $0x418] sm:$0xff]
          %v7596 = vld [vmem:[#allocation15 + $0x420] sm:$0xff]
          %v7597 = vld [vmem:[#allocation15 + $0x428] sm:$0xff]
          %v7598 = vld [vmem:[#allocation15 + $0x430] sm:$0xff]
          %v7599 = vld [vmem:[#allocation15 + $0x438] sm:$0xff]
          %v7600 = vld [vmem:[#allocation15 + $0x440] sm:$0xff]
          %v7601 = vld [vmem:[#allocation15 + $0x448] sm:$0xff]
          %v7602 = vld [vmem:[#allocation15 + $0x450] sm:$0xff]
          %v7603 = vld [vmem:[#allocation15 + $0x458] sm:$0xff]
          %v7604 = vld [vmem:[#allocation15 + $0x460] sm:$0xff]
          %v7605 = vld [vmem:[#allocation15 + $0x468] sm:$0xff]
          %v7606 = vld [vmem:[#allocation15 + $0x470] sm:$0xff]
          %v7607 = vld [vmem:[#allocation15 + $0x478] sm:$0xff]
          %v7608 = vld [vmem:[#allocation15 + $0x480] sm:$0xff]
          %v7609 = vld [vmem:[#allocation15 + $0x488] sm:$0xff]
          %v7610 = vld [vmem:[#allocation15 + $0x490] sm:$0xff]
          %v7611 = vld [vmem:[#allocation15 + $0x498] sm:$0xff]
          %v7612 = vld [vmem:[#allocation15 + $0x4a0] sm:$0xff]
          %v7613 = vld [vmem:[#allocation15 + $0x4a8] sm:$0xff]
          %v7614 = vld [vmem:[#allocation15 + $0x4b0] sm:$0xff]
          %v7615 = vld [vmem:[#allocation15 + $0x4b8] sm:$0xff]
          %v7616 = vld [vmem:[#allocation15 + $0x4c0] sm:$0xff]
          %v7617 = vld [vmem:[#allocation15 + $0x4c8] sm:$0xff]
          %v7618 = vld [vmem:[#allocation15 + $0x4d0] sm:$0xff]
          %v7619 = vld [vmem:[#allocation15 + $0x4d8] sm:$0xff]
          %v7620 = vld [vmem:[#allocation15 + $0x4e0] sm:$0xff]
          %v7621 = vld [vmem:[#allocation15 + $0x4e8] sm:$0xff]
          %v7622 = vld [vmem:[#allocation15 + $0x4f0] sm:$0xff]
          %v7623 = vld [vmem:[#allocation15 + $0x4f8] sm:$0xff]
          %v7624 = vld [vmem:[#allocation15 + $0x500] sm:$0xff]
          %v7625 = vld [vmem:[#allocation15 + $0x508] sm:$0xff]
          %v7626 = vld [vmem:[#allocation15 + $0x510] sm:$0xff]
          %v7627 = vld [vmem:[#allocation15 + $0x518] sm:$0xff]
          %v7628 = vld [vmem:[#allocation15 + $0x520] sm:$0xff]
          %v7629 = vld [vmem:[#allocation15 + $0x528] sm:$0xff]
          %v7630 = vld [vmem:[#allocation15 + $0x530] sm:$0xff]
          %v7631 = vld [vmem:[#allocation15 + $0x538] sm:$0xff]
          %v7632 = vld [vmem:[#allocation15 + $0x540] sm:$0xff]
          %v7633 = vld [vmem:[#allocation15 + $0x548] sm:$0xff]
          %v7634 = vld [vmem:[#allocation15 + $0x550] sm:$0xff]
          %v7635 = vld [vmem:[#allocation15 + $0x558] sm:$0xff]
          %v7636 = vld [vmem:[#allocation15 + $0x560] sm:$0xff]
          %v7637 = vld [vmem:[#allocation15 + $0x568] sm:$0xff]
          %v7638 = vld [vmem:[#allocation15 + $0x570] sm:$0xff]
          %v7639 = vld [vmem:[#allocation15 + $0x578] sm:$0xff]
          %v7640 = vld [vmem:[#allocation15 + $0x580] sm:$0xff]
          %v7641 = vld [vmem:[#allocation15 + $0x588] sm:$0xff]
          %v7642 = vld [vmem:[#allocation15 + $0x590] sm:$0xff]
          %v7643 = vld [vmem:[#allocation15 + $0x598] sm:$0xff]
          %v7644 = vld [vmem:[#allocation15 + $0x5a0] sm:$0xff]
          %v7645 = vld [vmem:[#allocation15 + $0x5a8] sm:$0xff]
          %v7646 = vld [vmem:[#allocation15 + $0x5b0] sm:$0xff]
          %v7647 = vld [vmem:[#allocation15 + $0x5b8] sm:$0xff]
          %v7648 = vld [vmem:[#allocation15 + $0x5c0] sm:$0xff]
          %v7649 = vld [vmem:[#allocation15 + $0x5c8] sm:$0xff]
          %v7650 = vld [vmem:[#allocation15 + $0x5d0] sm:$0xff]
          %v7651 = vld [vmem:[#allocation15 + $0x5d8] sm:$0xff]
          %v7652 = vld [vmem:[#allocation15 + $0x5e0] sm:$0xff]
          %v7653 = vld [vmem:[#allocation15 + $0x5e8] sm:$0xff]
          %v7654 = vld [vmem:[#allocation15 + $0x5f0] sm:$0xff]
          %v7655 = vld [vmem:[#allocation15 + $0x5f8] sm:$0xff]
          %v7656 = vld [vmem:[#allocation15 + $0x600] sm:$0xff]
          %v7657 = vld [vmem:[#allocation15 + $0x608] sm:$0xff]
          %v7658 = vld [vmem:[#allocation15 + $0x610] sm:$0xff]
          %v7659 = vld [vmem:[#allocation15 + $0x618] sm:$0xff]
          %v7660 = vld [vmem:[#allocation15 + $0x620] sm:$0xff]
          %v7661 = vld [vmem:[#allocation15 + $0x628] sm:$0xff]
          %v7662 = vld [vmem:[#allocation15 + $0x630] sm:$0xff]
          %v7663 = vld [vmem:[#allocation15 + $0x638] sm:$0xff]
          %v7664 = vld [vmem:[#allocation15 + $0x640] sm:$0xff]
          %v7665 = vld [vmem:[#allocation15 + $0x648] sm:$0xff]
          %v7666 = vld [vmem:[#allocation15 + $0x650] sm:$0xff]
          %v7667 = vld [vmem:[#allocation15 + $0x658] sm:$0xff]
          %v7668 = vld [vmem:[#allocation15 + $0x660] sm:$0xff]
          %v7669 = vld [vmem:[#allocation15 + $0x668] sm:$0xff]
          %v7670 = vld [vmem:[#allocation15 + $0x670] sm:$0xff]
          %v7671 = vld [vmem:[#allocation15 + $0x678] sm:$0xff]
          %v7672 = vld [vmem:[#allocation15 + $0x680] sm:$0xff]
          %v7673 = vld [vmem:[#allocation15 + $0x688] sm:$0xff]
          %v7674 = vld [vmem:[#allocation15 + $0x690] sm:$0xff]
          %v7675 = vld [vmem:[#allocation15 + $0x698] sm:$0xff]
          %v7676 = vld [vmem:[#allocation15 + $0x6a0] sm:$0xff]
          %v7677 = vld [vmem:[#allocation15 + $0x6a8] sm:$0xff]
          %v7678 = vld [vmem:[#allocation15 + $0x6b0] sm:$0xff]
          %v7679 = vld [vmem:[#allocation15 + $0x6b8] sm:$0xff]
          %v7680 = vld [vmem:[#allocation15 + $0x6c0] sm:$0xff]
          %v7681 = vld [vmem:[#allocation15 + $0x6c8] sm:$0xff]
          %v7682 = vld [vmem:[#allocation15 + $0x6d0] sm:$0xff]
          %v7683 = vld [vmem:[#allocation15 + $0x6d8] sm:$0xff]
          %v7684 = vld [vmem:[#allocation15 + $0x6e0] sm:$0xff]
          %v7685 = vld [vmem:[#allocation15 + $0x6e8] sm:$0xff]
          %v7686 = vld [vmem:[#allocation15 + $0x6f0] sm:$0xff]
          %v7687 = vld [vmem:[#allocation15 + $0x6f8] sm:$0xff]
          %v7688 = vld [vmem:[#allocation15 + $0x700] sm:$0xff]
          %v7689 = vld [vmem:[#allocation15 + $0x708] sm:$0xff]
          %v7690 = vld [vmem:[#allocation15 + $0x710] sm:$0xff]
          %v7691 = vld [vmem:[#allocation15 + $0x718] sm:$0xff]
          %v7692 = vld [vmem:[#allocation15 + $0x720] sm:$0xff]
          %v7693 = vld [vmem:[#allocation15 + $0x728] sm:$0xff]
          %v7694 = vld [vmem:[#allocation15 + $0x730] sm:$0xff]
          %v7695 = vld [vmem:[#allocation15 + $0x738] sm:$0xff]
          %v7696 = vld [vmem:[#allocation15 + $0x740] sm:$0xff]
          %v7697 = vld [vmem:[#allocation15 + $0x748] sm:$0xff]
          %v7698 = vld [vmem:[#allocation15 + $0x750] sm:$0xff]
          %v7699 = vld [vmem:[#allocation15 + $0x758] sm:$0xff]
          %v7700 = vld [vmem:[#allocation15 + $0x760] sm:$0xff]
          %v7701 = vld [vmem:[#allocation15 + $0x768] sm:$0xff]
          %v7702 = vld [vmem:[#allocation15 + $0x770] sm:$0xff]
          %v7703 = vld [vmem:[#allocation15 + $0x778] sm:$0xff]
          %v7704 = vld [vmem:[#allocation15 + $0x780] sm:$0xff]
          %v7705 = vld [vmem:[#allocation15 + $0x788] sm:$0xff]
          %v7706 = vld [vmem:[#allocation15 + $0x790] sm:$0xff]
          %v7707 = vld [vmem:[#allocation15 + $0x798] sm:$0xff]
          %v7708 = vld [vmem:[#allocation15 + $0x7a0] sm:$0xff]
          %v7709 = vld [vmem:[#allocation15 + $0x7a8] sm:$0xff]
          %v7710 = vld [vmem:[#allocation15 + $0x7b0] sm:$0xff]
          %v7711 = vld [vmem:[#allocation15 + $0x7b8] sm:$0xff]
          %v7712 = vld [vmem:[#allocation15 + $0x7c0] sm:$0xff]
          %v7713 = vld [vmem:[#allocation15 + $0x7c8] sm:$0xff]
          %v7714 = vld [vmem:[#allocation15 + $0x7d0] sm:$0xff]
          %v7715 = vld [vmem:[#allocation15 + $0x7d8] sm:$0xff]
          %v7716 = vld [vmem:[#allocation15 + $0x7e0] sm:$0xff]
          %v7717 = vld [vmem:[#allocation15 + $0x7e8] sm:$0xff]
          %v7718 = vld [vmem:[#allocation15 + $0x7f0] sm:$0xff]
          %v7719 = vld [vmem:[#allocation15 + $0x7f8] sm:$0xff]
          %v7722 = vunpack.c.l.s4 1983009808
          %v7723 = vunpack.c.0.s8 %v7722
          %v7724 = vlaneseq
          %v7725 = vshrl.u32 %v7724, 7
          %v7726 = vsub.s32 %v7723, %v7725
          %v7727 = vrot.slane %v7463, %v7726
          %v7728 = vcombine.high %v7727, %v7727
          %7731 = vmatprep.subr.mxu0 %v7465
          %7732 = vmatpush1.msra.mxu0 %v7464
          %7733 = vmatprep.subr.mxu0 %v7473
          %7734 = vmatpush1.msra.mxu0 %v7472
          %7735 = vmatprep.subr.mxu0 %v7481
          %7736 = vmatpush1.msra.mxu0 %v7480
          %7737 = vmatprep.subr.mxu0 %v7489
          %7738 = vmatpush1.msra.mxu0 %v7488
          %7739 = vmatprep.subr.mxu0 %v7497
          %7740 = vmatpush1.msra.mxu0 %v7496
          %7741 = vmatprep.subr.mxu0 %v7505
          %7742 = vmatpush1.msra.mxu0 %v7504
          %7743 = vmatprep.subr.mxu0 %v7513
          %7744 = vmatpush1.msra.mxu0 %v7512
          %7745 = vmatprep.subr.mxu0 %v7521
          %7746 = vmatpush1.msra.mxu0 %v7520
          %7747 = vmatprep.subr.mxu0 %v7529
          %7748 = vmatpush1.msra.mxu0 %v7528
          %7749 = vmatprep.subr.mxu0 %v7537
          %7750 = vmatpush1.msra.mxu0 %v7536
          %7751 = vmatprep.subr.mxu0 %v7545
          %7752 = vmatpush1.msra.mxu0 %v7544
          %7753 = vmatprep.subr.mxu0 %v7553
          %7754 = vmatpush1.msra.mxu0 %v7552
          %7755 = vmatprep.subr.mxu0 %v7561
          %7756 = vmatpush1.msra.mxu0 %v7560
          %7757 = vmatprep.subr.mxu0 %v7569
          %7758 = vmatpush1.msra.mxu0 %v7568
          %7759 = vmatprep.subr.mxu0 %v7577
          %7760 = vmatpush1.msra.mxu0 %v7576
          %7761 = vmatprep.subr.mxu0 %v7585
          %7762 = vmatpush1.msra.mxu0 %v7584
          %7763 = vmatprep.subr.mxu0 %v7593
          %7764 = vmatpush1.msra.mxu0 %v7592
          %7765 = vmatprep.subr.mxu0 %v7601
          %7766 = vmatpush1.msra.mxu0 %v7600
          %7767 = vmatprep.subr.mxu0 %v7609
          %7768 = vmatpush1.msra.mxu0 %v7608
          %7769 = vmatprep.subr.mxu0 %v7617
          %7770 = vmatpush1.msra.mxu0 %v7616
          %7771 = vmatprep.subr.mxu0 %v7625
          %7772 = vmatpush1.msra.mxu0 %v7624
          %7773 = vmatprep.subr.mxu0 %v7633
          %7774 = vmatpush1.msra.mxu0 %v7632
          %7775 = vmatprep.subr.mxu0 %v7641
          %7776 = vmatpush1.msra.mxu0 %v7640
          %7777 = vmatprep.subr.mxu0 %v7649
          %7778 = vmatpush1.msra.mxu0 %v7648
          %7779 = vmatprep.subr.mxu0 %v7657
          %7780 = vmatpush1.msra.mxu0 %v7656
          %7781 = vmatprep.subr.mxu0 %v7665
          %7782 = vmatpush1.msra.mxu0 %v7664
          %7783 = vmatprep.subr.mxu0 %v7673
          %7784 = vmatpush1.msra.mxu0 %v7672
          %7785 = vmatprep.subr.mxu0 %v7681
          %7786 = vmatpush1.msra.mxu0 %v7680
          %7787 = vmatprep.subr.mxu0 %v7689
          %7788 = vmatpush1.msra.mxu0 %v7688
          %7789 = vmatprep.subr.mxu0 %v7697
          %7790 = vmatpush1.msra.mxu0 %v7696
          %7791 = vmatprep.subr.mxu0 %v7705
          %7792 = vmatpush1.msra.mxu0 %v7704
          %7793 = vmatprep.subr.mxu0 %v7713
          %7794 = vmatpush1.msra.mxu0 %v7712
          %7795 = vmatprep.mubr.f32.mxu0 %v7728
          %7796 = vmatmul.mubr.f32.gmra.mrb[0].mxu0 %v7727
          %v7797 = vpop.f32.mrb[0].mxu0
          %v7798 = vadd.f32 0.0, %v7797
          %v7799 = vpop.f32.mrb[0].mxu0
          %v7800 = vadd.f32 0.0, %v7799
          %7801 = vdwg.mxu0
          %7802 = vmatprep.subr.mxu0 %v7467
          %7803 = vmatpush1.msra.mxu0 %v7466
          %7804 = vmatprep.subr.mxu0 %v7475
          %7805 = vmatpush1.msra.mxu0 %v7474
          %7806 = vmatprep.subr.mxu0 %v7483
          %7807 = vmatpush1.msra.mxu0 %v7482
          %7808 = vmatprep.subr.mxu0 %v7491
          %7809 = vmatpush1.msra.mxu0 %v7490
          %7810 = vmatprep.subr.mxu0 %v7499
          %7811 = vmatpush1.msra.mxu0 %v7498
          %7812 = vmatprep.subr.mxu0 %v7507
          %7813 = vmatpush1.msra.mxu0 %v7506
          %7814 = vmatprep.subr.mxu0 %v7515
          %7815 = vmatpush1.msra.mxu0 %v7514
          %7816 = vmatprep.subr.mxu0 %v7523
          %7817 = vmatpush1.msra.mxu0 %v7522
          %7818 = vmatprep.subr.mxu0 %v7531
          %7819 = vmatpush1.msra.mxu0 %v7530
          %7820 = vmatprep.subr.mxu0 %v7539
          %7821 = vmatpush1.msra.mxu0 %v7538
          %7822 = vmatprep.subr.mxu0 %v7547
          %7823 = vmatpush1.msra.mxu0 %v7546
          %7824 = vmatprep.subr.mxu0 %v7555
          %7825 = vmatpush1.msra.mxu0 %v7554
          %7826 = vmatprep.subr.mxu0 %v7563
          %7827 = vmatpush1.msra.mxu0 %v7562
          %7828 = vmatprep.subr.mxu0 %v7571
          %7829 = vmatpush1.msra.mxu0 %v7570
          %7830 = vmatprep.subr.mxu0 %v7579
          %7831 = vmatpush1.msra.mxu0 %v7578
          %7832 = vmatprep.subr.mxu0 %v7587
          %7833 = vmatpush1.msra.mxu0 %v7586
          %7834 = vmatprep.subr.mxu0 %v7595
          %7835 = vmatpush1.msra.mxu0 %v7594
          %7836 = vmatprep.subr.mxu0 %v7603
          %7837 = vmatpush1.msra.mxu0 %v7602
          %7838 = vmatprep.subr.mxu0 %v7611
          %7839 = vmatpush1.msra.mxu0 %v7610
          %7840 = vmatprep.subr.mxu0 %v7619
          %7841 = vmatpush1.msra.mxu0 %v7618
          %7842 = vmatprep.subr.mxu0 %v7627
          %7843 = vmatpush1.msra.mxu0 %v7626
          %7844 = vmatprep.subr.mxu0 %v7635
          %7845 = vmatpush1.msra.mxu0 %v7634
          %7846 = vmatprep.subr.mxu0 %v7643
          %7847 = vmatpush1.msra.mxu0 %v7642
          %7848 = vmatprep.subr.mxu0 %v7651
          %7849 = vmatpush1.msra.mxu0 %v7650
          %7850 = vmatprep.subr.mxu0 %v7659
          %7851 = vmatpush1.msra.mxu0 %v7658
          %7852 = vmatprep.subr.mxu0 %v7667
          %7853 = vmatpush1.msra.mxu0 %v7666
          %7854 = vmatprep.subr.mxu0 %v7675
          %7855 = vmatpush1.msra.mxu0 %v7674
          %7856 = vmatprep.subr.mxu0 %v7683
          %7857 = vmatpush1.msra.mxu0 %v7682
          %7858 = vmatprep.subr.mxu0 %v7691
          %7859 = vmatpush1.msra.mxu0 %v7690
          %7860 = vmatprep.subr.mxu0 %v7699
          %7861 = vmatpush1.msra.mxu0 %v7698
          %7862 = vmatprep.subr.mxu0 %v7707
          %7863 = vmatpush1.msra.mxu0 %v7706
          %7864 = vmatprep.subr.mxu0 %v7715
          %7865 = vmatpush1.msra.mxu0 %v7714
          %7866 = vmatprep.mubr.f32.mxu0 %v7728
          %7867 = vmatmul.mubr.f32.gmra.mrb[0].mxu0 %v7727
          %v7868 = vpop.f32.mrb[0].mxu0
          %v7869 = vadd.f32 0.0, %v7868
          %v7870 = vpop.f32.mrb[0].mxu0
          %v7871 = vadd.f32 0.0, %v7870
          %7872 = vdwg.mxu0
          %7873 = vmatprep.subr.mxu0 %v7469
          %7874 = vmatpush1.msra.mxu0 %v7468
          %7875 = vmatprep.subr.mxu0 %v7477
          %7876 = vmatpush1.msra.mxu0 %v7476
          %7877 = vmatprep.subr.mxu0 %v7485
          %7878 = vmatpush1.msra.mxu0 %v7484
          %7879 = vmatprep.subr.mxu0 %v7493
          %7880 = vmatpush1.msra.mxu0 %v7492
          %7881 = vmatprep.subr.mxu0 %v7501
          %7882 = vmatpush1.msra.mxu0 %v7500
          %7883 = vmatprep.subr.mxu0 %v7509
          %7884 = vmatpush1.msra.mxu0 %v7508
          %7885 = vmatprep.subr.mxu0 %v7517
          %7886 = vmatpush1.msra.mxu0 %v7516
          %7887 = vmatprep.subr.mxu0 %v7525
          %7888 = vmatpush1.msra.mxu0 %v7524
          %7889 = vmatprep.subr.mxu0 %v7533
          %7890 = vmatpush1.msra.mxu0 %v7532
          %7891 = vmatprep.subr.mxu0 %v7541
          %7892 = vmatpush1.msra.mxu0 %v7540
          %7893 = vmatprep.subr.mxu0 %v7549
          %7894 = vmatpush1.msra.mxu0 %v7548
          %7895 = vmatprep.subr.mxu0 %v7557
          %7896 = vmatpush1.msra.mxu0 %v7556
          %7897 = vmatprep.subr.mxu0 %v7565
          %7898 = vmatpush1.msra.mxu0 %v7564
          %7899 = vmatprep.subr.mxu0 %v7573
          %7900 = vmatpush1.msra.mxu0 %v7572
          %7901 = vmatprep.subr.mxu0 %v7581
          %7902 = vmatpush1.msra.mxu0 %v7580
          %7903 = vmatprep.subr.mxu0 %v7589
          %7904 = vmatpush1.msra.mxu0 %v7588
          %7905 = vmatprep.subr.mxu0 %v7597
          %7906 = vmatpush1.msra.mxu0 %v7596
          %7907 = vmatprep.subr.mxu0 %v7605
          %7908 = vmatpush1.msra.mxu0 %v7604
          %7909 = vmatprep.subr.mxu0 %v7613
          %7910 = vmatpush1.msra.mxu0 %v7612
          %7911 = vmatprep.subr.mxu0 %v7621
          %7912 = vmatpush1.msra.mxu0 %v7620
          %7913 = vmatprep.subr.mxu0 %v7629
          %7914 = vmatpush1.msra.mxu0 %v7628
          %7915 = vmatprep.subr.mxu0 %v7637
          %7916 = vmatpush1.msra.mxu0 %v7636
          %7917 = vmatprep.subr.mxu0 %v7645
          %7918 = vmatpush1.msra.mxu0 %v7644
          %7919 = vmatprep.subr.mxu0 %v7653
          %7920 = vmatpush1.msra.mxu0 %v7652
          %7921 = vmatprep.subr.mxu0 %v7661
          %7922 = vmatpush1.msra.mxu0 %v7660
          %7923 = vmatprep.subr.mxu0 %v7669
          %7924 = vmatpush1.msra.mxu0 %v7668
          %7925 = vmatprep.subr.mxu0 %v7677
          %7926 = vmatpush1.msra.mxu0 %v7676
          %7927 = vmatprep.subr.mxu0 %v7685
          %7928 = vmatpush1.msra.mxu0 %v7684
          %7929 = vmatprep.subr.mxu0 %v7693
          %7930 = vmatpush1.msra.mxu0 %v7692
          %7931 = vmatprep.subr.mxu0 %v7701
          %7932 = vmatpush1.msra.mxu0 %v7700
          %7933 = vmatprep.subr.mxu0 %v7709
          %7934 = vmatpush1.msra.mxu0 %v7708
          %7935 = vmatprep.subr.mxu0 %v7717
          %7936 = vmatpush1.msra.mxu0 %v7716
          %7937 = vmatprep.mubr.f32.mxu0 %v7728
          %7938 = vmatmul.mubr.f32.gmra.mrb[0].mxu0 %v7727
          %v7939 = vpop.f32.mrb[0].mxu0
          %v7940 = vadd.f32 0.0, %v7939
          %v7941 = vpop.f32.mrb[0].mxu0
          %v7942 = vadd.f32 0.0, %v7941
          %7943 = vdwg.mxu0
          %7944 = vmatprep.subr.mxu0 %v7471
          %7945 = vmatpush1.msra.mxu0 %v7470
          %7946 = vmatprep.subr.mxu0 %v7479
          %7947 = vmatpush1.msra.mxu0 %v7478
          %7948 = vmatprep.subr.mxu0 %v7487
          %7949 = vmatpush1.msra.mxu0 %v7486
          %7950 = vmatprep.subr.mxu0 %v7495
          %7951 = vmatpush1.msra.mxu0 %v7494
          %7952 = vmatprep.subr.mxu0 %v7503
          %7953 = vmatpush1.msra.mxu0 %v7502
          %7954 = vmatprep.subr.mxu0 %v7511
          %7955 = vmatpush1.msra.mxu0 %v7510
          %7956 = vmatprep.subr.mxu0 %v7519
          %7957 = vmatpush1.msra.mxu0 %v7518
          %7958 = vmatprep.subr.mxu0 %v7527
          %7959 = vmatpush1.msra.mxu0 %v7526
          %7960 = vmatprep.subr.mxu0 %v7535
          %7961 = vmatpush1.msra.mxu0 %v7534
          %7962 = vmatprep.subr.mxu0 %v7543
          %7963 = vmatpush1.msra.mxu0 %v7542
          %7964 = vmatprep.subr.mxu0 %v7551
          %7965 = vmatpush1.msra.mxu0 %v7550
          %7966 = vmatprep.subr.mxu0 %v7559
          %7967 = vmatpush1.msra.mxu0 %v7558
          %7968 = vmatprep.subr.mxu0 %v7567
          %7969 = vmatpush1.msra.mxu0 %v7566
          %7970 = vmatprep.subr.mxu0 %v7575
          %7971 = vmatpush1.msra.mxu0 %v7574
          %7972 = vmatprep.subr.mxu0 %v7583
          %7973 = vmatpush1.msra.mxu0 %v7582
          %7974 = vmatprep.subr.mxu0 %v7591
          %7975 = vmatpush1.msra.mxu0 %v7590
          %7976 = vmatprep.subr.mxu0 %v7599
          %7977 = vmatpush1.msra.mxu0 %v7598
          %7978 = vmatprep.subr.mxu0 %v7607
          %7979 = vmatpush1.msra.mxu0 %v7606
          %7980 = vmatprep.subr.mxu0 %v7615
          %7981 = vmatpush1.msra.mxu0 %v7614
          %7982 = vmatprep.subr.mxu0 %v7623
          %7983 = vmatpush1.msra.mxu0 %v7622
          %7984 = vmatprep.subr.mxu0 %v7631
          %7985 = vmatpush1.msra.mxu0 %v7630
          %7986 = vmatprep.subr.mxu0 %v7639
          %7987 = vmatpush1.msra.mxu0 %v7638
          %7988 = vmatprep.subr.mxu0 %v7647
          %7989 = vmatpush1.msra.mxu0 %v7646
          %7990 = vmatprep.subr.mxu0 %v7655
          %7991 = vmatpush1.msra.mxu0 %v7654
          %7992 = vmatprep.subr.mxu0 %v7663
          %7993 = vmatpush1.msra.mxu0 %v7662
          %7994 = vmatprep.subr.mxu0 %v7671
          %7995 = vmatpush1.msra.mxu0 %v7670
          %7996 = vmatprep.subr.mxu0 %v7679
          %7997 = vmatpush1.msra.mxu0 %v7678
          %7998 = vmatprep.subr.mxu0 %v7687
          %7999 = vmatpush1.msra.mxu0 %v7686
          %8000 = vmatprep.subr.mxu0 %v7695
          %8001 = vmatpush1.msra.mxu0 %v7694
          %8002 = vmatprep.subr.mxu0 %v7703
          %8003 = vmatpush1.msra.mxu0 %v7702
          %8004 = vmatprep.subr.mxu0 %v7711
          %8005 = vmatpush1.msra.mxu0 %v7710
          %8006 = vmatprep.subr.mxu0 %v7719
          %8007 = vmatpush1.msra.mxu0 %v7718
          %8008 = vmatprep.mubr.f32.mxu0 %v7728
          %8009 = vmatmul.mubr.f32.gmra.mrb[0].mxu0 %v7727
          %v8010 = vpop.f32.mrb[0].mxu0
          %v8011 = vadd.f32 0.0, %v8010
          %v8012 = vpop.f32.mrb[0].mxu0
          %v8013 = vadd.f32 0.0, %v8012
          %8014 = vdwg.mxu0
          %v8015 = vadd.f32 %v7455, %v7798
          %v8016 = vadd.f32 %v7456, %v7800
          %v8017 = vadd.f32 %v7457, %v7869
          %v8018 = vadd.f32 %v7458, %v7871
          %v8019 = vadd.f32 %v7459, %v7940
          %v8020 = vadd.f32 %v7460, %v7942
          %v8021 = vadd.f32 %v7461, %v8011
          %v8022 = vadd.f32 %v7462, %v8013
          %v8023 = vld [vmem:[#allocation12] sm:$0xff]
          %v8025 = vlaneseq
          %v8026 = vshrl.u32 %v8025, 7
          %v8027 = vsub.s32 0, %v8026
          %v8028 = vrot.slane %v8023, %v8027
          %v8029 = vlaneseq
          %v8030 = vshrl.u32 %v8029, 7
          %v8031 = vsub.s32 1, %v8030
          %v8032 = vrot.slane %v8023, %v8031
          %v8033 = vlaneseq
          %v8034 = vshrl.u32 %v8033, 7
          %v8035 = vsub.s32 2, %v8034
          %v8036 = vrot.slane %v8023, %v8035
          %v8037 = vlaneseq
          %v8038 = vshrl.u32 %v8037, 7
          %v8039 = vsub.s32 3, %v8038
          %v8040 = vrot.slane %v8023, %v8039
          %v8041 = vlaneseq
          %v8042 = vshrl.u32 %v8041, 7
          %v8043 = vsub.s32 4, %v8042
          %v8044 = vrot.slane %v8023, %v8043
          %v8045 = vlaneseq
          %v8046 = vshrl.u32 %v8045, 7
          %v8047 = vsub.s32 5, %v8046
          %v8048 = vrot.slane %v8023, %v8047
          %v8049 = vlaneseq
          %v8050 = vshrl.u32 %v8049, 7
          %v8051 = vsub.s32 6, %v8050
          %v8052 = vrot.slane %v8023, %v8051
          %v8053 = vlaneseq
          %v8054 = vshrl.u32 %v8053, 7
          %v8055 = vsub.s32 7, %v8054
          %v8056 = vrot.slane %v8023, %v8055
          %v8065 = vadd.f32 %v8015, %v8028
          %v8066 = vadd.f32 %v8016, %v8032
          %v8067 = vadd.f32 %v8017, %v8036
          %v8068 = vadd.f32 %v8018, %v8040
          %v8069 = vadd.f32 %v8019, %v8044
          %v8070 = vadd.f32 %v8020, %v8048
          %v8071 = vadd.f32 %v8021, %v8052
          %v8072 = vadd.f32 %v8022, %v8056
          %v8073 = vxor.u32 %v8065, 2147483648
          %v8074 = vxor.u32 %v8066, 2147483648
          %v8075 = vmul.f32 %v8073, 1.442695
          %v8076 = vpow.pop %v8075
          %v8077 = vmul.f32 %v8074, 1.442695
          %v8078 = vpow.pop %v8077
          %v8079 = vadd.f32 %v8076, 1.0
          %v8080 = vadd.f32 %v8078, 1.0
          %v8081 = vrcp.pop %v8079
          %v8082 = vmul.f32 1.0, %v8081
          %v8083 = vrcp.pop %v8080
          %v8084 = vmul.f32 1.0, %v8083
          %v8085 = vxor.u32 %v8067, 2147483648
          %v8086 = vxor.u32 %v8068, 2147483648
          %v8087 = vmul.f32 %v8085, 1.442695
          %v8088 = vpow.pop %v8087
          %v8089 = vmul.f32 %v8086, 1.442695
          %v8090 = vpow.pop %v8089
          %v8091 = vadd.f32 %v8088, 1.0
          %v8092 = vadd.f32 %v8090, 1.0
          %v8093 = vrcp.pop %v8091
          %v8094 = vmul.f32 1.0, %v8093
          %v8095 = vrcp.pop %v8092
          %v8096 = vmul.f32 1.0, %v8095
          %v8097 = vtanh.pop %v8069
          %v8098 = vtanh.pop %v8070
          %v8099 = vxor.u32 %v8071, 2147483648
          %v8100 = vxor.u32 %v8072, 2147483648
          %v8101 = vmul.f32 %v8099, 1.442695
          %v8102 = vpow.pop %v8101
          %v8103 = vmul.f32 %v8100, 1.442695
          %v8104 = vpow.pop %v8103
          %v8105 = vadd.f32 %v8102, 1.0
          %v8106 = vadd.f32 %v8104, 1.0
          %v8107 = vrcp.pop %v8105
          %v8108 = vmul.f32 1.0, %v8107
          %v8109 = vrcp.pop %v8106
          %v8110 = vmul.f32 1.0, %v8109
          %v8111 = vld [vmem:[#allocation18] sm:$0xf]
          %v8114 = vunpack.c.l.s4 1983009808
          %v8115 = vunpack.c.0.s8 %v8114
          %v8116 = vlaneseq
          %v8117 = vshrl.u32 %v8116, 7
          %v8118 = vsub.s32 %v8115, %v8117
          %v8119 = vrot.slane %v8111, %v8118
          %v8120 = vcombine.high %v8119, %v8119
          %v8123 = vmul.f32 %v8094, %v8119
          %v8124 = vmul.f32 %v8096, %v8120
          %v8125 = vmul.f32 %v8082, %v8097
          %v8126 = vmul.f32 %v8084, %v8098
          %v8127 = vadd.f32 %v8123, %v8125
          %v8128 = vadd.f32 %v8124, %v8126
          %v8129 = vtanh.pop %v8127
          %v8130 = vtanh.pop %v8128
          %v8131 = vmul.f32 %v8108, %v8129
          %v8132 = vmul.f32 %v8110, %v8130
          %v8135 = vcombine.low %v8131, %v8132
          %v8137 = vunpack.c.l.s4 1983009808
          %v8138 = vunpack.c.0.s8 %v8137
          %v8139 = vlaneseq
          %v8140 = vshrl.u32 %v8139, 7
          %v8141 = vsub.s32 %v8138, %v8140
          %v8142 = vrot.slane %v8135, %v8141
          %8144 = vst [vmem:[#allocation19] sm:$0xf] %v8142
          %v8147 = vcombine.low %v8127, %v8128
          %v8149 = vunpack.c.l.s4 1983009808
          %v8150 = vunpack.c.0.s8 %v8149
          %v8151 = vlaneseq
          %v8152 = vshrl.u32 %v8151, 7
          %v8153 = vsub.s32 %v8150, %v8152
          %v8154 = vrot.slane %v8147, %v8153
          %8156 = vst [vmem:[#allocation20] sm:$0xf] %v8154
          %v8157 = vld [vmem:[%s636] sm:$0xff]
          %v8158 = vld [vmem:[%s636 + $0x8] sm:$0xff]
          %v8159 = vld [vmem:[%s636 + $0x10] sm:$0xff]
          %v8160 = vld [vmem:[%s636 + $0x18] sm:$0xff]
          %v8161 = vld [vmem:[%s636 + $0x20] sm:$0xff]
          %v8162 = vld [vmem:[%s636 + $0x28] sm:$0xff]
          %v8163 = vld [vmem:[%s636 + $0x30] sm:$0xff]
          %v8164 = vld [vmem:[%s636 + $0x38] sm:$0xff]
          %v8165 = vld [vmem:[%s636 + $0x40] sm:$0xff]
          %v8166 = vld [vmem:[%s636 + $0x48] sm:$0xff]
          %v8167 = vld [vmem:[%s636 + $0x50] sm:$0xff]
          %v8168 = vld [vmem:[%s636 + $0x58] sm:$0xff]
          %v8169 = vld [vmem:[%s636 + $0x60] sm:$0xff]
          %v8170 = vld [vmem:[%s636 + $0x68] sm:$0xff]
          %v8171 = vld [vmem:[%s636 + $0x70] sm:$0xff]
          %v8172 = vld [vmem:[%s636 + $0x78] sm:$0xff]
          %v8173 = vld [vmem:[%s636 + $0x80] sm:$0xff]
          %v8174 = vld [vmem:[%s636 + $0x88] sm:$0xff]
          %v8175 = vld [vmem:[%s636 + $0x90] sm:$0xff]
          %v8176 = vld [vmem:[%s636 + $0x98] sm:$0xff]
          %v8177 = vld [vmem:[%s636 + $0xa0] sm:$0xff]
          %v8178 = vld [vmem:[%s636 + $0xa8] sm:$0xff]
          %v8179 = vld [vmem:[%s636 + $0xb0] sm:$0xff]
          %v8180 = vld [vmem:[%s636 + $0xb8] sm:$0xff]
          %v8181 = vld [vmem:[%s636 + $0xc0] sm:$0xff]
          %v8182 = vld [vmem:[%s636 + $0xc8] sm:$0xff]
          %v8183 = vld [vmem:[%s636 + $0xd0] sm:$0xff]
          %v8184 = vld [vmem:[%s636 + $0xd8] sm:$0xff]
          %v8185 = vld [vmem:[%s636 + $0xe0] sm:$0xff]
          %v8186 = vld [vmem:[%s636 + $0xe8] sm:$0xff]
          %v8187 = vld [vmem:[%s636 + $0xf0] sm:$0xff]
          %v8188 = vld [vmem:[%s636 + $0xf8] sm:$0xff]
          %8189 = vmatprep.subr.mxu0 0.0
          %8190 = vmatpush1.msra.mxu0 %v8157
          %8191 = vmatprep.subr.mxu0 0.0
          %8192 = vmatpush1.msra.mxu0 %v8158
          %8193 = vmatprep.subr.mxu0 0.0
          %8194 = vmatpush1.msra.mxu0 %v8159
          %8195 = vmatprep.subr.mxu0 0.0
          %8196 = vmatpush1.msra.mxu0 %v8160
          %8197 = vmatprep.subr.mxu0 0.0
          %8198 = vmatpush1.msra.mxu0 %v8161
          %8199 = vmatprep.subr.mxu0 0.0
          %8200 = vmatpush1.msra.mxu0 %v8162
          %8201 = vmatprep.subr.mxu0 0.0
          %8202 = vmatpush1.msra.mxu0 %v8163
          %8203 = vmatprep.subr.mxu0 0.0
          %8204 = vmatpush1.msra.mxu0 %v8164
          %8205 = vmatprep.subr.mxu0 0.0
          %8206 = vmatpush1.msra.mxu0 %v8165
          %8207 = vmatprep.subr.mxu0 0.0
          %8208 = vmatpush1.msra.mxu0 %v8166
          %8209 = vmatprep.subr.mxu0 0.0
          %8210 = vmatpush1.msra.mxu0 %v8167
          %8211 = vmatprep.subr.mxu0 0.0
          %8212 = vmatpush1.msra.mxu0 %v8168
          %8213 = vmatprep.subr.mxu0 0.0
          %8214 = vmatpush1.msra.mxu0 %v8169
          %8215 = vmatprep.subr.mxu0 0.0
          %8216 = vmatpush1.msra.mxu0 %v8170
          %8217 = vmatprep.subr.mxu0 0.0
          %8218 = vmatpush1.msra.mxu0 %v8171
          %8219 = vmatprep.subr.mxu0 0.0
          %8220 = vmatpush1.msra.mxu0 %v8172
          %8221 = vmatprep.subr.mxu0 0.0
          %8222 = vmatpush1.msra.mxu0 %v8173
          %8223 = vmatprep.subr.mxu0 0.0
          %8224 = vmatpush1.msra.mxu0 %v8174
          %8225 = vmatprep.subr.mxu0 0.0
          %8226 = vmatpush1.msra.mxu0 %v8175
          %8227 = vmatprep.subr.mxu0 0.0
          %8228 = vmatpush1.msra.mxu0 %v8176
          %8229 = vmatprep.subr.mxu0 0.0
          %8230 = vmatpush1.msra.mxu0 %v8177
          %8231 = vmatprep.subr.mxu0 0.0
          %8232 = vmatpush1.msra.mxu0 %v8178
          %8233 = vmatprep.subr.mxu0 0.0
          %8234 = vmatpush1.msra.mxu0 %v8179
          %8235 = vmatprep.subr.mxu0 0.0
          %8236 = vmatpush1.msra.mxu0 %v8180
          %8237 = vmatprep.subr.mxu0 0.0
          %8238 = vmatpush1.msra.mxu0 %v8181
          %8239 = vmatprep.subr.mxu0 0.0
          %8240 = vmatpush1.msra.mxu0 %v8182
          %8241 = vmatprep.subr.mxu0 0.0
          %8242 = vmatpush1.msra.mxu0 %v8183
          %8243 = vmatprep.subr.mxu0 0.0
          %8244 = vmatpush1.msra.mxu0 %v8184
          %8245 = vmatprep.subr.mxu0 0.0
          %8246 = vmatpush1.msra.mxu0 %v8185
          %8247 = vmatprep.subr.mxu0 0.0
          %8248 = vmatpush1.msra.mxu0 %v8186
          %8249 = vmatprep.subr.mxu0 0.0
          %8250 = vmatpush1.msra.mxu0 %v8187
          %8251 = vmatprep.subr.mxu0 0.0
          %8252 = vmatpush1.msra.mxu0 %v8188
          %8253 = vmatprep.mubr.f32.mxu0 %v8132
          %8254 = vmatmul.mubr.f32.gmra.mrb[0].mxu0 %v8131
          %v8255 = vpop.f32.mrb[0].mxu0
          %v8256 = vadd.f32 0.0, %v8255
          %v8257 = vpop.f32.mrb[0].mxu0
          %8258 = vdwg.mxu0
          %vm8259 = vcmask 41984
          %8260 = vst.msk [vmem:[%s641] sm:$0x3] %vm8259, %v8256
        $region108: #{actor_forward.1} parent=63 // pred_fallthru
          _
        %p8261 = scmp.lt.s32.totalorder %s38, 0
        %s8262 = scalar_select %p8261, %s38, 0
        %s8263 = smul.addr %s8262, 2
        %s8264 = scalar_lea.vmem %s11, %s8263
        // Predicated region
        $region109: #{actor_forward.1} parent=63 // pred_check
          %p8265 = pneg %p322
        $region110: #{actor_forward.1} parent=63 // pred_check_branch
          %8267 = sbr.rel (%p8265) target = $region112
        $region111: #{actor_forward.1} parent=63 // pred_region
          _
        $region112: #{actor_forward.1} parent=63 // pred_fallthru
          _
        // Predicated region
        $region113: #{actor_forward.1} parent=63 // pred_check
          %p8268 = pneg %p348
        $region114: #{actor_forward.1} parent=63 // pred_check_branch
          %8270 = sbr.rel (%p8268) target = $region116
        $region115: #{actor_forward.1} parent=63 // pred_region
          %s8271 = smul.u32 2, %s38
          %s8273 = ssub.s32 64, 64
          %8274 = vsyncadd [#allocation6], %s8273
          %s8275 = smul.addr %s8271, 32
          %s8276 = scalar_lea.hbm %s12, %s8275
          %s8278 = sshll.u32 [#allocation19], 4
          %s8279 = int_to_ptr.vmem [resolvable:$true] %s8278
          %8281 = dma.vmem_to_hbm [thread:$0]  %s8279, 64, %s8276, [#allocation6]
        $region116: #{actor_forward.1} parent=63 // pred_fallthru
          _
        // Predicated region
        $region117: #{actor_forward.1} parent=63 // pred_check
          %p8282 = pneg %p374
        $region118: #{actor_forward.1} parent=63 // pred_check_branch
          %8284 = sbr.rel (%p8282) target = $region120
        $region119: #{actor_forward.1} parent=63 // pred_region
          %s8285 = smul.u32 2, %s38
          %s8287 = ssub.s32 64, 64
          %8288 = vsyncadd [#allocation21], %s8287
          %s8289 = smul.addr %s8285, 32
          %s8290 = scalar_lea.hbm %s13, %s8289
          %s8292 = sshll.u32 [#allocation20], 4
          %s8293 = int_to_ptr.vmem [resolvable:$true] %s8292
          %8295 = dma.vmem_to_hbm [thread:$0]  %s8293, 64, %s8290, [#allocation21]
        $region120: #{actor_forward.1} parent=63 // pred_fallthru
          _
        // Predicated region
        $region121: #{actor_forward.1} parent=63 // pred_check
          %p8296 = pneg %p322
        $region122: #{actor_forward.1} parent=63 // pred_check_branch
          %8298 = sbr.rel (%p8296) target = $region124
        $region123: #{actor_forward.1} parent=63 // pred_region
          %p8299 = scmp.lt.s32.totalorder %s38, 0
          %s8300 = scalar_select %p8299, %s38, 0
          %s8301 = smul.addr %s8300, 2
          %s8302 = scalar_lea.vmem %s11, %s8301
        $region124: #{actor_forward.1} parent=63 // pred_fallthru
          _
        // Predicated region
        $region125: #{actor_forward.1} parent=63 // pred_check
          %p8303 = pneg %p348
        $region126: #{actor_forward.1} parent=63 // pred_check_branch
          %8305 = sbr.rel (%p8303) target = $region128
        $region127: #{actor_forward.1} parent=63 // pred_region
          %8306 = dma.done [#allocation6], 64
        $region128: #{actor_forward.1} parent=63 // pred_fallthru
          _
        // Predicated region
        $region129: #{actor_forward.1} parent=63 // pred_check
          %p8307 = pneg %p374
        $region130: #{actor_forward.1} parent=63 // pred_check_branch
          %8309 = sbr.rel (%p8307) target = $region132
        $region131: #{actor_forward.1} parent=63 // pred_region
          %8310 = dma.done [#allocation21], 64
        $region132: #{actor_forward.1} parent=63 // pred_fallthru
          _
      $region64: #{actor_forward.1} parent=5 // pred_fallthru
        _
      %p8311 = scmp.le.s32.totalorder 2, %s29
      // Predicated region
      $region133: #{actor_forward.1} parent=5 // pred_check
        %p8312 = pneg %p8311
      $region134: #{actor_forward.1} parent=5 // pred_check_branch
        %8314 = sbr.rel (%p8312) target = $region136
      $region135: #{actor_forward.1} parent=5 // pred_region
        %s8315 = ssub.s32 %s29, 2
      $region136: #{actor_forward.1} parent=5 // pred_fallthru
        _
    $region6: #{actor_forward.1} parent=1 // loop_footer
      %s33 = sadd.s32 1, %s29
    $region7: #{actor_forward.1} parent=1 // loop_footer_branch
      %28 = sbr.rel target = $region3
    $region8: #{actor_forward.1} parent=1 // loop_exit
      _
    %8316 = vsyncpa [#allocation5], 1
    %s8317 = scalar_lea.sflag [#allocation5], 1
    %8318 = vsyncpa %s8317, 1
    %8319 = vsyncpa [#allocation8], 1
    %8320 = vsyncpa [#allocation11], 1
    %8321 = vsyncpa [#allocation14], 1
    %s8322 = scalar_lea.sflag [#allocation14], 1
    %8323 = vsyncpa %s8322, 1
    %8324 = vsyncpa [#allocation17], 1
    %8325 = vsyncpa [#allocation6], 1
    %s8326 = scalar_lea.sflag [#allocation6], 1
    %8327 = vsyncpa %s8326, 1
    %8328 = vsyncpa [#allocation21], 1

</llo_original>
